<compile_context>
chip_gen: v6e
topology: v6e:2x2x1
jax: 0.10.0
libtpu: 0.0.40
codegen_flags: <defaults>
</compile_context>

<pallas_src>
import functools
import math

import jax
import jax.numpy as jnp
import numpy as np
from jax.experimental import pallas as pl
from jax.experimental.pallas import tpu as pltpu


# ----------------------------------------------------------------------------
# Fused network kernel
# ----------------------------------------------------------------------------
def _network_kernel(meta,
                    # inputs
                    xpat_ref, imask_ref, sel_ref,
                    w_in_ref, s_in_ref, b_in_ref,
                    wt_ref, st_ref, bt_ref,
                    wpc_ref, spc_ref, bpc_ref, wpfa_ref, wpfb_ref, bpf_ref,
                    wvc_ref, svc_ref, bvc_ref, wv1_ref, bv1_ref, wv2_ref,
                    bv2_ref,
                    # outputs
                    pol_ref, val_ref, resids_ref, blocks_ref, mids_ref,
                    # scratch
                    pad_ref, patch_ref):
    guard, m_pad, wp, num_layers, group = meta
    # Tap t (t//3-1, t%3-1) == torch conv weight (ky, kx) with dy=ky-1, dx=kx-1.
    taps = tuple((t // 3 - 1) * wp + (t % 3 - 1) for t in range(9))
    imask = imask_ref[...]                       # (M_pad, 1) interior-row mask

    # Zero the padded-activation scratch once; only the interior rows are
    # rewritten per conv, so the guard / padding-ring rows stay zero and
    # provide the conv's zero padding for free (no per-tap masks needed).
    pad_ref[...] = jnp.zeros(pad_ref.shape, pad_ref.dtype)

    def conv3x3(act, w_bf16, scale, bias, relu):
        """3x3 pad-1 conv over the padded-row layout as ONE im2col matmul."""
        pad_ref[guard:guard + m_pad, :] = act
        # Build the (M_pad, 9C) bf16 patch matrix with lane-aligned slab
        # stores: `group` taps are concatenated to a full 128-lane slab so the
        # store is an unmasked full-width vst (vs 9 masked 32-lane stores).
        col = 0
        for t0 in range(0, 9, group):
            ts = range(t0, min(t0 + group, 9))
            pieces = [pad_ref[guard + taps[t]:guard + taps[t] + m_pad, :]
                      for t in ts]
            slab = pieces[0] if len(pieces) == 1 else jnp.concatenate(pieces,
                                                                      axis=1)
            patch_ref[:, col:col + slab.shape[1]] = slab.astype(patch_ref.dtype)
            col += slab.shape[1]
        y = jnp.dot(patch_ref[...], w_bf16,          # bf16 x bf16 -> f32 acc
                    preferred_element_type=jnp.float32)
        y = y * scale + bias                         # fused inference BN + beta
        if relu:
            y = jnp.maximum(y, 0.0)
        return y * imask                             # re-zero padding-ring rows

    # ---- input conv (im2col patches pre-laid-out by the wrapper) -----------
    a0 = jnp.dot(xpat_ref[...], w_in_ref[...],
                 preferred_element_type=jnp.float32)
    a0 = jnp.maximum(a0 * s_in_ref[...] + b_in_ref[...], 0.0) * imask
    resids_ref[0] = a0

    # ---- residual tower -----------------------------------------------------
    # The running activation is round-tripped through resids_ref (its value is
    # recorded anyway) which also bounds vreg live ranges across layers.
    for li in range(num_layers):
        act = resids_ref[li]
        mid = conv3x3(act, wt_ref[2 * li], st_ref[2 * li], bt_ref[2 * li],
                      relu=True)
        out = conv3x3(mid, wt_ref[2 * li + 1], st_ref[2 * li + 1],
                      bt_ref[2 * li + 1], relu=False)
        new_act = jnp.maximum(act + out, 0.0)        # relu(identity + branch)
        blocks_ref[li] = new_act - act               # == where(act+out>0,out,-act)
        mids_ref[li] = mid
        resids_ref[li + 1] = new_act

    act = resids_ref[num_layers]

    # ---- policy head (f32: tiny, keeps reference fidelity) ------------------
    polact = jnp.dot(act, wpc_ref[...], preferred_element_type=jnp.float32)
    polact = jnp.maximum(polact * spc_ref[...] + bpc_ref[...], 0.0)  # (M_pad,2)
    z = polact[:, 0:1] * wpfa_ref[...] + polact[:, 1:2] * wpfb_ref[...]
    pol_ref[...] = (jnp.dot(sel_ref[...], z,
                            preferred_element_type=jnp.float32) + bpf_ref[...])

    # ---- value head ----------------------------------------------------------
    valact = jnp.dot(act, wvc_ref[...], preferred_element_type=jnp.float32)
    valact = jnp.maximum(valact * svc_ref[...] + bvc_ref[...], 0.0)  # (M_pad,1)
    v = (jnp.dot(sel_ref[...], valact * wv1_ref[...],
                 preferred_element_type=jnp.float32) + bv1_ref[...])  # (N, 256)
    v = jnp.maximum(v, 0.0)
    val_ref[...] = jnp.tanh(
        jnp.dot(v, wv2_ref[...], preferred_element_type=jnp.float32)
        + bv2_ref[...])


# ----------------------------------------------------------------------------
# Wrapper: layout prep, pallas_call, output reassembly
# ----------------------------------------------------------------------------
def _vmem_bytes(shape, dtype):
    item = np.dtype(dtype).itemsize
    if len(shape) == 0:
        return 512
    lanes = -(-int(shape[-1]) // 128) * 128
    sub_mult = 8 * max(1, 4 // item)
    second = int(shape[-2]) if len(shape) > 1 else 1
    subs = -(-second // sub_mult) * sub_mult
    lead = 1
    for s in shape[:-2]:
        lead *= int(s)
    return lead * subs * lanes * item


def network_forward(x_nchw, params):
    n, cin, h, w = x_nchw.shape
    hw = h * w
    hp, wp = h + 2, w + 2
    m_pad = n * hp * wp                               # padded-layout row count
    guard = ((wp + 1 + 7) // 8) * 8                   # >= max tap shift (Wp+1)
    c = params["conv_input"][0].shape[1]
    num_layers = params["residual_tower_w"].shape[0]
    group = 128 // c if (c <= 128 and 128 % c == 0) else 1

    # ---- input im2col (pure data movement, no arithmetic hoisted) ----------
    x_nhwc = jnp.transpose(x_nchw, (0, 2, 3, 1))
    xp2 = jnp.pad(x_nhwc, ((0, 0), (2, 2), (2, 2), (0, 0)))
    cols = []
    for t in range(9):
        dy, dx = t // 3 - 1, t % 3 - 1
        cols.append(xp2[:, 1 + dy:1 + dy + hp, 1 + dx:1 + dx + wp, :])
    x_pat = jnp.concatenate(cols, axis=-1).reshape(m_pad, 9 * cin)
    x_pat = x_pat.astype(jnp.bfloat16)

    # Interior-row mask over the padded layout and the per-batch row selector.
    q = jnp.arange(hp * wp)
    interior = (((q // wp) >= 1) & ((q // wp) <= h) &
                ((q % wp) >= 1) & ((q % wp) <= w))
    imask = jnp.tile(interior.astype(jnp.float32), (n,)).reshape(m_pad, 1)
    sel = (jnp.arange(m_pad)[None, :] // (hp * wp) ==
           jnp.arange(n)[:, None]).astype(jnp.float32)          # (N, M_pad)

    w_in, s_in, b_in = params["conv_input"]
    wt = params["residual_tower_w"].reshape(2 * num_layers, 9 * c, c)
    st = params["residual_tower_s"].reshape(2 * num_layers, 1, c)
    bt = params["residual_tower_b"].reshape(2 * num_layers, 1, c)
    wpc, spc, bpc = params["policy_conv"]
    wpf, bpf = params["policy_fc"]                    # (2*HW, HW+1), (1, HW+1)
    wvc, svc, bvc = params["value_conv"]
    wv1, bv1 = params["value_fc_1"]                   # (HW, 256), (1, 256)
    wv2, bv2 = params["value_fc_2"]                   # (256, 1), (1, 1)

    # bf16 only for the conv-tower MXU operands; BN scale/bias + heads stay f32.
    w_in = w_in.astype(jnp.bfloat16)
    wt = wt.astype(jnp.bfloat16)

    def pad_rows(wmat):
        # (HW, D) FC rows -> (Hp*Wp, D) with zero rows on the padding ring.
        d = wmat.shape[1]
        return jnp.pad(wmat.reshape(h, w, d),
                       ((1, 1), (1, 1), (0, 0))).reshape(hp * wp, d)

    wpfa = jnp.tile(pad_rows(wpf[:hw]), (n, 1))       # (M_pad, HW+1)
    wpfb = jnp.tile(pad_rows(wpf[hw:]), (n, 1))       # (M_pad, HW+1)
    wv1b = jnp.tile(pad_rows(wv1), (n, 1))            # (M_pad, 256)

    operands = (x_pat, imask, sel,
                w_in, s_in, b_in, wt, st, bt,
                wpc, spc, bpc, wpfa, wpfb, bpf,
                wvc, svc, bvc, wv1b, bv1, wv2, bv2)

    out_shape = (
        jax.ShapeDtypeStruct((n, hw + 1), jnp.float32),              # policy
        jax.ShapeDtypeStruct((n, 1), jnp.float32),                   # value
        jax.ShapeDtypeStruct((num_layers + 1, m_pad, c), jnp.float32),  # resids
        jax.ShapeDtypeStruct((num_layers, m_pad, c), jnp.float32),   # blocks
        jax.ShapeDtypeStruct((num_layers, m_pad, c), jnp.float32),   # mids
    )
    scratch_shapes = [
        pltpu.VMEM((m_pad + 2 * guard, c), jnp.float32),   # padded activation
        pltpu.VMEM((m_pad, 9 * c), jnp.bfloat16),          # im2col patches
    ]

    # VMEM budget: everything is resident (no grid), so size the scoped limit
    # from the tiled footprint with headroom.
    resident = (sum(_vmem_bytes(a.shape, a.dtype) for a in operands)
                + sum(_vmem_bytes(s.shape, s.dtype) for s in out_shape)
                + _vmem_bytes((m_pad + 2 * guard, c), jnp.float32)
                + _vmem_bytes((m_pad, 9 * c), jnp.bfloat16))
    vmem_limit = int(min(2 * resident + (8 << 20), 96 << 20))

    flops = 2 * m_pad * (9 * cin * c
                         + 2 * num_layers * 9 * c * c
                         + 3 * c
                         + (hw + 1) * (2 + n)
                         + 256 * (1 + n)) + 2 * n * 256
    bytes_acc = (sum(int(a.size) * int(a.dtype.itemsize) for a in operands)
                 + sum(4 * int(math.prod(s.shape)) for s in out_shape))

    kernel = functools.partial(_network_kernel,
                               (guard, m_pad, wp, num_layers, group))
    pol, val, resids_k, blocks_k, mids_k = pl.pallas_call(
        kernel,
        out_shape=out_shape,
        scratch_shapes=scratch_shapes,
        compiler_params=pltpu.CompilerParams(vmem_limit_bytes=vmem_limit),
        cost_estimate=pl.CostEstimate(flops=int(flops),
                                      transcendentals=int(n),
                                      bytes_accessed=int(bytes_acc)),
    )(*operands)

    # (k, M_pad, C) padded layout -> (k, N, C, H, W); tiny XLA glue.
    def to_nchw(a):
        k = a.shape[0]
        a = a.reshape(k, n, hp, wp, c)[:, :, 1:h + 1, 1:w + 1, :]
        return jnp.transpose(a, (0, 1, 4, 2, 3))

    resids = to_nchw(resids_k)
    blocks = to_nchw(blocks_k)
    mids = to_nchw(mids_k)
    ram = jnp.stack([resids[0]] + [t for i in range(num_layers)
                                   for t in (mids[i], resids[i + 1])])
    return pol, val, resids, blocks, ram


# ----------------------------------------------------------------------------
# Deterministic parameter initialization (synthetic, shapes from __init__)
# ----------------------------------------------------------------------------
def init_network(key, board_size, in_channels, residual_channels,
                 residual_layers):
    hw = board_size * board_size
    keys = jax.random.split(key, 6 + 2 * residual_layers)
    eps = 1e-5

    def conv_block(k, cin, cout, ksize):
        # kaiming_normal_(mode='fan_out', nonlinearity='relu') equivalent.
        # 3x3 weights stored matmul-ready as (9*cin, cout) with row index
        # ((ky*3+kx)*cin + cin_idx)  == torch weight[cout, cin, ky, kx].
        fan_out = cout * ksize * ksize
        std = (2.0 / fan_out) ** 0.5
        shape = (9 * cin, cout) if ksize == 3 else (cin, cout)
        wmat = std * jax.random.normal(k, shape, jnp.float32)
        # Fused inference-mode BN + beta:  y = conv*scale + bias
        beta = jnp.zeros((cout,), jnp.float32)
        running_mean = jnp.zeros((cout,), jnp.float32)
        running_var = jnp.ones((cout,), jnp.float32)
        scale = 1.0 / jnp.sqrt(running_var + eps)
        bias = beta - running_mean * scale
        return wmat, scale.reshape(1, cout), bias.reshape(1, cout)

    def dense(k, din, dout):
        k1, k2 = jax.random.split(k)
        bound = 1.0 / (din ** 0.5)
        wmat = jax.random.uniform(k1, (din, dout), jnp.float32, -bound, bound)
        b = jax.random.uniform(k2, (1, dout), jnp.float32, -bound, bound)
        return wmat, b

    params = {}
    params["conv_input"] = conv_block(keys[0], in_channels,
                                      residual_channels, 3)
    w_l, s_l, b_l = [], [], []
    for i in range(residual_layers):
        c1 = conv_block(keys[1 + 2 * i], residual_channels,
                        residual_channels, 3)
        c2 = conv_block(keys[2 + 2 * i], residual_channels,
                        residual_channels, 3)
        w_l.append(jnp.stack([c1[0], c2[0]]))
        s_l.append(jnp.stack([c1[1], c2[1]]))
        b_l.append(jnp.stack([c1[2], c2[2]]))
    params["residual_tower_w"] = jnp.stack(w_l)      # (L, 2, 9C, C)
    params["residual_tower_s"] = jnp.stack(s_l)      # (L, 2, 1, C)
    params["residual_tower_b"] = jnp.stack(b_l)      # (L, 2, 1, C)
    base = 1 + 2 * residual_layers
    params["policy_conv"] = conv_block(keys[base], residual_channels, 2, 1)
    params["policy_fc"] = dense(keys[base + 1], 2 * hw, hw + 1)
    params["value_conv"] = conv_block(keys[base + 2], residual_channels, 1, 1)
    params["value_fc_1"] = dense(keys[base + 3], hw, 256)
    params["value_fc_2"] = dense(keys[base + 4], 256, 1)
    return params


# ----------------------------------------------------------------------------
if __name__ == "__main__":
    board_size = 8
    in_channels = 4
    residual_channels = 32
    residual_layers = 2
    batch = 2

    key = jax.random.PRNGKey(0)
    kx, kp = jax.random.split(key)
    x = jax.random.normal(kx, (batch, in_channels, board_size, board_size),
                          jnp.float32)
    params = init_network(kp, board_size, in_channels, residual_channels,
                          residual_layers)

    fwd = jax.jit(lambda inp: network_forward(inp, params))
    pol, val, resids, block_outputs, resids_and_mids = fwd(x)
    jax.block_until_ready((pol, val, resids, block_outputs, resids_and_mids))

    assert pol.shape == (batch, board_size * board_size + 1)
    assert val.shape == (batch, 1)
    assert resids.shape == (1 + residual_layers, batch, residual_channels,
                            board_size, board_size)
    assert block_outputs.shape == (residual_layers, batch, residual_channels,
                                   board_size, board_size)
    assert resids_and_mids.shape == (1 + 2 * residual_layers, batch,
                                     residual_channels, board_size, board_size)
    assert bool(jnp.all(jnp.isfinite(pol))) and bool(jnp.all(jnp.isfinite(val)))
    print("KERNEL_OK")
</pallas_src>

<mosaic_0001>
module attributes {stable_mosaic.version = 11 : i64} {
  func.func @_network_kernel(%arg0: memref<200x36xbf16, #tpu.memory_space<vmem>>, %arg1: memref<200x1xf32, #tpu.memory_space<vmem>>, %arg2: memref<2x200xf32, #tpu.memory_space<vmem>>, %arg3: memref<36x32xbf16, #tpu.memory_space<vmem>>, %arg4: memref<1x32xf32, #tpu.memory_space<vmem>>, %arg5: memref<1x32xf32, #tpu.memory_space<vmem>>, %arg6: memref<4x288x32xbf16, #tpu.memory_space<vmem>>, %arg7: memref<4x1x32xf32, #tpu.memory_space<vmem>>, %arg8: memref<4x1x32xf32, #tpu.memory_space<vmem>>, %arg9: memref<32x2xf32, #tpu.memory_space<vmem>>, %arg10: memref<1x2xf32, #tpu.memory_space<vmem>>, %arg11: memref<1x2xf32, #tpu.memory_space<vmem>>, %arg12: memref<200x65xf32, #tpu.memory_space<vmem>>, %arg13: memref<200x65xf32, #tpu.memory_space<vmem>>, %arg14: memref<1x65xf32, #tpu.memory_space<vmem>>, %arg15: memref<32x1xf32, #tpu.memory_space<vmem>>, %arg16: memref<1x1xf32, #tpu.memory_space<vmem>>, %arg17: memref<1x1xf32, #tpu.memory_space<vmem>>, %arg18: memref<200x256xf32, #tpu.memory_space<vmem>>, %arg19: memref<1x256xf32, #tpu.memory_space<vmem>>, %arg20: memref<256x1xf32, #tpu.memory_space<vmem>>, %arg21: memref<1x1xf32, #tpu.memory_space<vmem>>, %arg22: memref<2x65xf32, #tpu.memory_space<vmem>>, %arg23: memref<2x1xf32, #tpu.memory_space<vmem>>, %arg24: memref<3x200x32xf32, #tpu.memory_space<vmem>>, %arg25: memref<2x200x32xf32, #tpu.memory_space<vmem>>, %arg26: memref<2x200x32xf32, #tpu.memory_space<vmem>>, %arg27: memref<232x32xf32, #tpu.memory_space<vmem>>, %arg28: memref<200x288xbf16, #tpu.memory_space<vmem>>) attributes {dimension_semantics = [], scalar_prefetch = 0 : i64, scratch_operands = 2 : i64, tpu.core_type = #tpu.core_type<tc>} {
    %c0 = arith.constant 0 : index
    %c0_0 = arith.constant 0 : index
    %0 = vector.load %arg1[%c0, %c0_0] : memref<200x1xf32, #tpu.memory_space<vmem>>, vector<200x1xf32>
    %cst = arith.constant 0.000000e+00 : f32
    %1 = vector.broadcast %cst : f32 to vector<232x32xf32>
    %c0_1 = arith.constant 0 : index
    %c0_2 = arith.constant 0 : index
    %2 = vector.load %arg27[%c0_1, %c0_2] : memref<232x32xf32, #tpu.memory_space<vmem>>, vector<232x32xf32>
    tpu.vector_store %arg27[%c0_1, %c0_2], %1 {strides = array<i32>} : memref<232x32xf32, #tpu.memory_space<vmem>>, vector<232x32xf32>,
    %c0_3 = arith.constant 0 : index
    %c0_4 = arith.constant 0 : index
    %3 = vector.load %arg0[%c0_3, %c0_4] : memref<200x36xbf16, #tpu.memory_space<vmem>>, vector<200x36xbf16>
    %c0_5 = arith.constant 0 : index
    %c0_6 = arith.constant 0 : index
    %4 = vector.load %arg3[%c0_5, %c0_6] : memref<36x32xbf16, #tpu.memory_space<vmem>>, vector<36x32xbf16>
    %cst_7 = arith.constant dense<0.000000e+00> : vector<200x32xf32>
    %5 = tpu.matmul %3, %4, %cst_7 {dimension_numbers = #tpu.dot_dimension_numbers<[1], [0], [0], [1], [0, 0, 1, 1], [], []>} : vector<200x36xbf16>, vector<36x32xbf16>, vector<200x32xf32> -> vector<200x32xf32>
    %c0_8 = arith.constant 0 : index
    %c0_9 = arith.constant 0 : index
    %6 = vector.load %arg4[%c0_8, %c0_9] : memref<1x32xf32, #tpu.memory_space<vmem>>, vector<1x32xf32>
    %7 = vector.broadcast %6 : vector<1x32xf32> to vector<200x32xf32>
    %8 = arith.mulf %5, %7 : vector<200x32xf32>
    %c0_10 = arith.constant 0 : index
    %c0_11 = arith.constant 0 : index
    %9 = vector.load %arg5[%c0_10, %c0_11] : memref<1x32xf32, #tpu.memory_space<vmem>>, vector<1x32xf32>
    %10 = vector.broadcast %9 : vector<1x32xf32> to vector<200x32xf32>
    %11 = arith.addf %8, %10 : vector<200x32xf32>
    %cst_12 = arith.constant 0.000000e+00 : f32
    %12 = vector.broadcast %cst_12 : f32 to vector<200x32xf32>
    %13 = arith.maximumf %11, %12 : vector<200x32xf32>
    %14 = vector.broadcast %0 : vector<200x1xf32> to vector<200x32xf32>
    %15 = arith.mulf %13, %14 : vector<200x32xf32>
    %c0_13 = arith.constant 0 : index
    %c0_14 = arith.constant 0 : index
    %c0_15 = arith.constant 0 : index
    %16 = vector.load %arg24[%c0_13, %c0_14, %c0_15] : memref<3x200x32xf32, #tpu.memory_space<vmem>>, vector<1x200x32xf32>
    %17 = vector.shape_cast %16 : vector<1x200x32xf32> to vector<200x32xf32>
    %18 = vector.shape_cast %15 : vector<200x32xf32> to vector<1x200x32xf32>
    tpu.vector_store %arg24[%c0_13, %c0_14, %c0_15], %18 {strides = array<i32>} : memref<3x200x32xf32, #tpu.memory_space<vmem>>, vector<1x200x32xf32>,
    %c0_16 = arith.constant 0 : index
    %c0_17 = arith.constant 0 : index
    %c0_18 = arith.constant 0 : index
    %19 = vector.load %arg24[%c0_16, %c0_17, %c0_18] : memref<3x200x32xf32, #tpu.memory_space<vmem>>, vector<1x200x32xf32>
    %20 = vector.shape_cast %19 : vector<1x200x32xf32> to vector<200x32xf32>
    %c0_19 = arith.constant 0 : index
    %c0_20 = arith.constant 0 : index
    %c0_21 = arith.constant 0 : index
    %21 = vector.load %arg6[%c0_19, %c0_20, %c0_21] : memref<4x288x32xbf16, #tpu.memory_space<vmem>>, vector<1x288x32xbf16>
    %22 = vector.shape_cast %21 : vector<1x288x32xbf16> to vector<288x32xbf16>
    %c0_22 = arith.constant 0 : index
    %c0_23 = arith.constant 0 : index
    %c0_24 = arith.constant 0 : index
    %23 = vector.load %arg7[%c0_22, %c0_23, %c0_24] : memref<4x1x32xf32, #tpu.memory_space<vmem>>, vector<1x1x32xf32>
    %24 = vector.shape_cast %23 : vector<1x1x32xf32> to vector<1x32xf32>
    %c0_25 = arith.constant 0 : index
    %c0_26 = arith.constant 0 : index
    %c0_27 = arith.constant 0 : index
    %25 = vector.load %arg8[%c0_25, %c0_26, %c0_27] : memref<4x1x32xf32, #tpu.memory_space<vmem>>, vector<1x1x32xf32>
    %26 = vector.shape_cast %25 : vector<1x1x32xf32> to vector<1x32xf32>
    %c16 = arith.constant 16 : index
    %c0_28 = arith.constant 0 : index
    %27 = vector.load %arg27[%c16, %c0_28] : memref<232x32xf32, #tpu.memory_space<vmem>>, vector<200x32xf32>
    tpu.vector_store %arg27[%c16, %c0_28], %20 {strides = array<i32>} : memref<232x32xf32, #tpu.memory_space<vmem>>, vector<200x32xf32>,
    %c5 = arith.constant 5 : index
    %c0_29 = arith.constant 0 : index
    %28 = vector.load %arg27[%c5, %c0_29] : memref<232x32xf32, #tpu.memory_space<vmem>>, vector<200x32xf32>
    %c6 = arith.constant 6 : index
    %c0_30 = arith.constant 0 : index
    %29 = vector.load %arg27[%c6, %c0_30] : memref<232x32xf32, #tpu.memory_space<vmem>>, vector<200x32xf32>
    %c7 = arith.constant 7 : index
    %c0_31 = arith.constant 0 : index
    %30 = vector.load %arg27[%c7, %c0_31] : memref<232x32xf32, #tpu.memory_space<vmem>>, vector<200x32xf32>
    %c15 = arith.constant 15 : index
    %c0_32 = arith.constant 0 : index
    %31 = vector.load %arg27[%c15, %c0_32] : memref<232x32xf32, #tpu.memory_space<vmem>>, vector<200x32xf32>
    %32 = tpu.concatenate %28, %29, %30, %31 in 1 : vector<200x32xf32>, vector<200x32xf32>, vector<200x32xf32>, vector<200x32xf32> -> vector<200x128xf32>
    %33 = arith.truncf %32 : vector<200x128xf32> to vector<200x128xbf16>
    %c0_33 = arith.constant 0 : index
    %c0_34 = arith.constant 0 : index
    %34 = vector.load %arg28[%c0_33, %c0_34] : memref<200x288xbf16, #tpu.memory_space<vmem>>, vector<200x128xbf16>
    tpu.vector_store %arg28[%c0_33, %c0_34], %33 {strides = array<i32>} : memref<200x288xbf16, #tpu.memory_space<vmem>>, vector<200x128xbf16>,
    %c16_35 = arith.constant 16 : index
    %c0_36 = arith.constant 0 : index
    %35 = vector.load %arg27[%c16_35, %c0_36] : memref<232x32xf32, #tpu.memory_space<vmem>>, vector<200x32xf32>
    %c17 = arith.constant 17 : index
    %c0_37 = arith.constant 0 : index
    %36 = vector.load %arg27[%c17, %c0_37] : memref<232x32xf32, #tpu.memory_space<vmem>>, vector<200x32xf32>
    %c25 = arith.constant 25 : index
    %c0_38 = arith.constant 0 : index
    %37 = vector.load %arg27[%c25, %c0_38] : memref<232x32xf32, #tpu.memory_space<vmem>>, vector<200x32xf32>
    %c26 = arith.constant 26 : index
    %c0_39 = arith.constant 0 : index
    %38 = vector.load %arg27[%c26, %c0_39] : memref<232x32xf32, #tpu.memory_space<vmem>>, vector<200x32xf32>
    %39 = tpu.concatenate %35, %36, %37, %38 in 1 : vector<200x32xf32>, vector<200x32xf32>, vector<200x32xf32>, vector<200x32xf32> -> vector<200x128xf32>
    %40 = arith.truncf %39 : vector<200x128xf32> to vector<200x128xbf16>
    %c0_40 = arith.constant 0 : index
    %c128 = arith.constant 128 : index
    %41 = vector.load %arg28[%c0_40, %c128] : memref<200x288xbf16, #tpu.memory_space<vmem>>, vector<200x128xbf16>
    tpu.vector_store %arg28[%c0_40, %c128], %40 {strides = array<i32>} : memref<200x288xbf16, #tpu.memory_space<vmem>>, vector<200x128xbf16>,
    %c27 = arith.constant 27 : index
    %c0_41 = arith.constant 0 : index
    %42 = vector.load %arg27[%c27, %c0_41] : memref<232x32xf32, #tpu.memory_space<vmem>>, vector<200x32xf32>
    %43 = arith.truncf %42 : vector<200x32xf32> to vector<200x32xbf16>
    %c0_42 = arith.constant 0 : index
    %c256 = arith.constant 256 : index
    %44 = vector.load %arg28[%c0_42, %c256] : memref<200x288xbf16, #tpu.memory_space<vmem>>, vector<200x32xbf16>
    tpu.vector_store %arg28[%c0_42, %c256], %43 {strides = array<i32>} : memref<200x288xbf16, #tpu.memory_space<vmem>>, vector<200x32xbf16>,
    %c0_43 = arith.constant 0 : index
    %c0_44 = arith.constant 0 : index
    %45 = vector.load %arg28[%c0_43, %c0_44] : memref<200x288xbf16, #tpu.memory_space<vmem>>, vector<200x288xbf16>
    %cst_45 = arith.constant dense<0.000000e+00> : vector<200x32xf32>
    %46 = tpu.matmul %45, %22, %cst_45 {dimension_numbers = #tpu.dot_dimension_numbers<[1], [0], [0], [1], [0, 0, 1, 1], [], []>} : vector<200x288xbf16>, vector<288x32xbf16>, vector<200x32xf32> -> vector<200x32xf32>
    %47 = vector.broadcast %24 : vector<1x32xf32> to vector<200x32xf32>
    %48 = arith.mulf %46, %47 : vector<200x32xf32>
    %49 = vector.broadcast %26 : vector<1x32xf32> to vector<200x32xf32>
    %50 = arith.addf %48, %49 : vector<200x32xf32>
    %cst_46 = arith.constant 0.000000e+00 : f32
    %51 = vector.broadcast %cst_46 : f32 to vector<200x32xf32>
    %52 = arith.maximumf %50, %51 : vector<200x32xf32>
    %53 = vector.broadcast %0 : vector<200x1xf32> to vector<200x32xf32>
    %54 = arith.mulf %52, %53 : vector<200x32xf32>
    %c1 = arith.constant 1 : index
    %c0_47 = arith.constant 0 : index
    %c0_48 = arith.constant 0 : index
    %55 = vector.load %arg6[%c1, %c0_47, %c0_48] : memref<4x288x32xbf16, #tpu.memory_space<vmem>>, vector<1x288x32xbf16>
    %56 = vector.shape_cast %55 : vector<1x288x32xbf16> to vector<288x32xbf16>
    %c1_49 = arith.constant 1 : index
    %c0_50 = arith.constant 0 : index
    %c0_51 = arith.constant 0 : index
    %57 = vector.load %arg7[%c1_49, %c0_50, %c0_51] : memref<4x1x32xf32, #tpu.memory_space<vmem>>, vector<1x1x32xf32>
    %58 = vector.shape_cast %57 : vector<1x1x32xf32> to vector<1x32xf32>
    %c1_52 = arith.constant 1 : index
    %c0_53 = arith.constant 0 : index
    %c0_54 = arith.constant 0 : index
    %59 = vector.load %arg8[%c1_52, %c0_53, %c0_54] : memref<4x1x32xf32, #tpu.memory_space<vmem>>, vector<1x1x32xf32>
    %60 = vector.shape_cast %59 : vector<1x1x32xf32> to vector<1x32xf32>
    %c16_55 = arith.constant 16 : index
    %c0_56 = arith.constant 0 : index
    %61 = vector.load %arg27[%c16_55, %c0_56] : memref<232x32xf32, #tpu.memory_space<vmem>>, vector<200x32xf32>
    tpu.vector_store %arg27[%c16_55, %c0_56], %54 {strides = array<i32>} : memref<232x32xf32, #tpu.memory_space<vmem>>, vector<200x32xf32>,
    %c5_57 = arith.constant 5 : index
    %c0_58 = arith.constant 0 : index
    %62 = vector.load %arg27[%c5_57, %c0_58] : memref<232x32xf32, #tpu.memory_space<vmem>>, vector<200x32xf32>
    %c6_59 = arith.constant 6 : index
    %c0_60 = arith.constant 0 : index
    %63 = vector.load %arg27[%c6_59, %c0_60] : memref<232x32xf32, #tpu.memory_space<vmem>>, vector<200x32xf32>
    %c7_61 = arith.constant 7 : index
    %c0_62 = arith.constant 0 : index
    %64 = vector.load %arg27[%c7_61, %c0_62] : memref<232x32xf32, #tpu.memory_space<vmem>>, vector<200x32xf32>
    %c15_63 = arith.constant 15 : index
    %c0_64 = arith.constant 0 : index
    %65 = vector.load %arg27[%c15_63, %c0_64] : memref<232x32xf32, #tpu.memory_space<vmem>>, vector<200x32xf32>
    %66 = tpu.concatenate %62, %63, %64, %65 in 1 : vector<200x32xf32>, vector<200x32xf32>, vector<200x32xf32>, vector<200x32xf32> -> vector<200x128xf32>
    %67 = arith.truncf %66 : vector<200x128xf32> to vector<200x128xbf16>
    %c0_65 = arith.constant 0 : index
    %c0_66 = arith.constant 0 : index
    %68 = vector.load %arg28[%c0_65, %c0_66] : memref<200x288xbf16, #tpu.memory_space<vmem>>, vector<200x128xbf16>
    tpu.vector_store %arg28[%c0_65, %c0_66], %67 {strides = array<i32>} : memref<200x288xbf16, #tpu.memory_space<vmem>>, vector<200x128xbf16>,
    %c16_67 = arith.constant 16 : index
    %c0_68 = arith.constant 0 : index
    %69 = vector.load %arg27[%c16_67, %c0_68] : memref<232x32xf32, #tpu.memory_space<vmem>>, vector<200x32xf32>
    %c17_69 = arith.constant 17 : index
    %c0_70 = arith.constant 0 : index
    %70 = vector.load %arg27[%c17_69, %c0_70] : memref<232x32xf32, #tpu.memory_space<vmem>>, vector<200x32xf32>
    %c25_71 = arith.constant 25 : index
    %c0_72 = arith.constant 0 : index
    %71 = vector.load %arg27[%c25_71, %c0_72] : memref<232x32xf32, #tpu.memory_space<vmem>>, vector<200x32xf32>
    %c26_73 = arith.constant 26 : index
    %c0_74 = arith.constant 0 : index
    %72 = vector.load %arg27[%c26_73, %c0_74] : memref<232x32xf32, #tpu.memory_space<vmem>>, vector<200x32xf32>
    %73 = tpu.concatenate %69, %70, %71, %72 in 1 : vector<200x32xf32>, vector<200x32xf32>, vector<200x32xf32>, vector<200x32xf32> -> vector<200x128xf32>
    %74 = arith.truncf %73 : vector<200x128xf32> to vector<200x128xbf16>
    %c0_75 = arith.constant 0 : index
    %c128_76 = arith.constant 128 : index
    %75 = vector.load %arg28[%c0_75, %c128_76] : memref<200x288xbf16, #tpu.memory_space<vmem>>, vector<200x128xbf16>
    tpu.vector_store %arg28[%c0_75, %c128_76], %74 {strides = array<i32>} : memref<200x288xbf16, #tpu.memory_space<vmem>>, vector<200x128xbf16>,
    %c27_77 = arith.constant 27 : index
    %c0_78 = arith.constant 0 : index
    %76 = vector.load %arg27[%c27_77, %c0_78] : memref<232x32xf32, #tpu.memory_space<vmem>>, vector<200x32xf32>
    %77 = arith.truncf %76 : vector<200x32xf32> to vector<200x32xbf16>
    %c0_79 = arith.constant 0 : index
    %c256_80 = arith.constant 256 : index
    %78 = vector.load %arg28[%c0_79, %c256_80] : memref<200x288xbf16, #tpu.memory_space<vmem>>, vector<200x32xbf16>
    tpu.vector_store %arg28[%c0_79, %c256_80], %77 {strides = array<i32>} : memref<200x288xbf16, #tpu.memory_space<vmem>>, vector<200x32xbf16>,
    %c0_81 = arith.constant 0 : index
    %c0_82 = arith.constant 0 : index
    %79 = vector.load %arg28[%c0_81, %c0_82] : memref<200x288xbf16, #tpu.memory_space<vmem>>, vector<200x288xbf16>
    %cst_83 = arith.constant dense<0.000000e+00> : vector<200x32xf32>
    %80 = tpu.matmul %79, %56, %cst_83 {dimension_numbers = #tpu.dot_dimension_numbers<[1], [0], [0], [1], [0, 0, 1, 1], [], []>} : vector<200x288xbf16>, vector<288x32xbf16>, vector<200x32xf32> -> vector<200x32xf32>
    %81 = vector.broadcast %58 : vector<1x32xf32> to vector<200x32xf32>
    %82 = arith.mulf %80, %81 : vector<200x32xf32>
    %83 = vector.broadcast %60 : vector<1x32xf32> to vector<200x32xf32>
    %84 = arith.addf %82, %83 : vector<200x32xf32>
    %85 = vector.broadcast %0 : vector<200x1xf32> to vector<200x32xf32>
    %86 = arith.mulf %84, %85 : vector<200x32xf32>
    %87 = arith.addf %20, %86 : vector<200x32xf32>
    %cst_84 = arith.constant 0.000000e+00 : f32
    %88 = vector.broadcast %cst_84 : f32 to vector<200x32xf32>
    %89 = arith.maximumf %87, %88 : vector<200x32xf32>
    %90 = arith.subf %89, %20 : vector<200x32xf32>
    %c0_85 = arith.constant 0 : index
    %c0_86 = arith.constant 0 : index
    %c0_87 = arith.constant 0 : index
    %91 = vector.load %arg25[%c0_85, %c0_86, %c0_87] : memref<2x200x32xf32, #tpu.memory_space<vmem>>, vector<1x200x32xf32>
    %92 = vector.shape_cast %91 : vector<1x200x32xf32> to vector<200x32xf32>
    %93 = vector.shape_cast %90 : vector<200x32xf32> to vector<1x200x32xf32>
    tpu.vector_store %arg25[%c0_85, %c0_86, %c0_87], %93 {strides = array<i32>} : memref<2x200x32xf32, #tpu.memory_space<vmem>>, vector<1x200x32xf32>,
    %c0_88 = arith.constant 0 : index
    %c0_89 = arith.constant 0 : index
    %c0_90 = arith.constant 0 : index
    %94 = vector.load %arg26[%c0_88, %c0_89, %c0_90] : memref<2x200x32xf32, #tpu.memory_space<vmem>>, vector<1x200x32xf32>
    %95 = vector.shape_cast %94 : vector<1x200x32xf32> to vector<200x32xf32>
    %96 = vector.shape_cast %54 : vector<200x32xf32> to vector<1x200x32xf32>
    tpu.vector_store %arg26[%c0_88, %c0_89, %c0_90], %96 {strides = array<i32>} : memref<2x200x32xf32, #tpu.memory_space<vmem>>, vector<1x200x32xf32>,
    %c1_91 = arith.constant 1 : index
    %c0_92 = arith.constant 0 : index
    %c0_93 = arith.constant 0 : index
    %97 = vector.load %arg24[%c1_91, %c0_92, %c0_93] : memref<3x200x32xf32, #tpu.memory_space<vmem>>, vector<1x200x32xf32>
    %98 = vector.shape_cast %97 : vector<1x200x32xf32> to vector<200x32xf32>
    %99 = vector.shape_cast %89 : vector<200x32xf32> to vector<1x200x32xf32>
    tpu.vector_store %arg24[%c1_91, %c0_92, %c0_93], %99 {strides = array<i32>} : memref<3x200x32xf32, #tpu.memory_space<vmem>>, vector<1x200x32xf32>,
    %c1_94 = arith.constant 1 : index
    %c0_95 = arith.constant 0 : index
    %c0_96 = arith.constant 0 : index
    %100 = vector.load %arg24[%c1_94, %c0_95, %c0_96] : memref<3x200x32xf32, #tpu.memory_space<vmem>>, vector<1x200x32xf32>
    %101 = vector.shape_cast %100 : vector<1x200x32xf32> to vector<200x32xf32>
    %c2 = arith.constant 2 : index
    %c0_97 = arith.constant 0 : index
    %c0_98 = arith.constant 0 : index
    %102 = vector.load %arg6[%c2, %c0_97, %c0_98] : memref<4x288x32xbf16, #tpu.memory_space<vmem>>, vector<1x288x32xbf16>
    %103 = vector.shape_cast %102 : vector<1x288x32xbf16> to vector<288x32xbf16>
    %c2_99 = arith.constant 2 : index
    %c0_100 = arith.constant 0 : index
    %c0_101 = arith.constant 0 : index
    %104 = vector.load %arg7[%c2_99, %c0_100, %c0_101] : memref<4x1x32xf32, #tpu.memory_space<vmem>>, vector<1x1x32xf32>
    %105 = vector.shape_cast %104 : vector<1x1x32xf32> to vector<1x32xf32>
    %c2_102 = arith.constant 2 : index
    %c0_103 = arith.constant 0 : index
    %c0_104 = arith.constant 0 : index
    %106 = vector.load %arg8[%c2_102, %c0_103, %c0_104] : memref<4x1x32xf32, #tpu.memory_space<vmem>>, vector<1x1x32xf32>
    %107 = vector.shape_cast %106 : vector<1x1x32xf32> to vector<1x32xf32>
    %c16_105 = arith.constant 16 : index
    %c0_106 = arith.constant 0 : index
    %108 = vector.load %arg27[%c16_105, %c0_106] : memref<232x32xf32, #tpu.memory_space<vmem>>, vector<200x32xf32>
    tpu.vector_store %arg27[%c16_105, %c0_106], %101 {strides = array<i32>} : memref<232x32xf32, #tpu.memory_space<vmem>>, vector<200x32xf32>,
    %c5_107 = arith.constant 5 : index
    %c0_108 = arith.constant 0 : index
    %109 = vector.load %arg27[%c5_107, %c0_108] : memref<232x32xf32, #tpu.memory_space<vmem>>, vector<200x32xf32>
    %c6_109 = arith.constant 6 : index
    %c0_110 = arith.constant 0 : index
    %110 = vector.load %arg27[%c6_109, %c0_110] : memref<232x32xf32, #tpu.memory_space<vmem>>, vector<200x32xf32>
    %c7_111 = arith.constant 7 : index
    %c0_112 = arith.constant 0 : index
    %111 = vector.load %arg27[%c7_111, %c0_112] : memref<232x32xf32, #tpu.memory_space<vmem>>, vector<200x32xf32>
    %c15_113 = arith.constant 15 : index
    %c0_114 = arith.constant 0 : index
    %112 = vector.load %arg27[%c15_113, %c0_114] : memref<232x32xf32, #tpu.memory_space<vmem>>, vector<200x32xf32>
    %113 = tpu.concatenate %109, %110, %111, %112 in 1 : vector<200x32xf32>, vector<200x32xf32>, vector<200x32xf32>, vector<200x32xf32> -> vector<200x128xf32>
    %114 = arith.truncf %113 : vector<200x128xf32> to vector<200x128xbf16>
    %c0_115 = arith.constant 0 : index
    %c0_116 = arith.constant 0 : index
    %115 = vector.load %arg28[%c0_115, %c0_116] : memref<200x288xbf16, #tpu.memory_space<vmem>>, vector<200x128xbf16>
    tpu.vector_store %arg28[%c0_115, %c0_116], %114 {strides = array<i32>} : memref<200x288xbf16, #tpu.memory_space<vmem>>, vector<200x128xbf16>,
    %c16_117 = arith.constant 16 : index
    %c0_118 = arith.constant 0 : index
    %116 = vector.load %arg27[%c16_117, %c0_118] : memref<232x32xf32, #tpu.memory_space<vmem>>, vector<200x32xf32>
    %c17_119 = arith.constant 17 : index
    %c0_120 = arith.constant 0 : index
    %117 = vector.load %arg27[%c17_119, %c0_120] : memref<232x32xf32, #tpu.memory_space<vmem>>, vector<200x32xf32>
    %c25_121 = arith.constant 25 : index
    %c0_122 = arith.constant 0 : index
    %118 = vector.load %arg27[%c25_121, %c0_122] : memref<232x32xf32, #tpu.memory_space<vmem>>, vector<200x32xf32>
    %c26_123 = arith.constant 26 : index
    %c0_124 = arith.constant 0 : index
    %119 = vector.load %arg27[%c26_123, %c0_124] : memref<232x32xf32, #tpu.memory_space<vmem>>, vector<200x32xf32>
    %120 = tpu.concatenate %116, %117, %118, %119 in 1 : vector<200x32xf32>, vector<200x32xf32>, vector<200x32xf32>, vector<200x32xf32> -> vector<200x128xf32>
    %121 = arith.truncf %120 : vector<200x128xf32> to vector<200x128xbf16>
    %c0_125 = arith.constant 0 : index
    %c128_126 = arith.constant 128 : index
    %122 = vector.load %arg28[%c0_125, %c128_126] : memref<200x288xbf16, #tpu.memory_space<vmem>>, vector<200x128xbf16>
    tpu.vector_store %arg28[%c0_125, %c128_126], %121 {strides = array<i32>} : memref<200x288xbf16, #tpu.memory_space<vmem>>, vector<200x128xbf16>,
    %c27_127 = arith.constant 27 : index
    %c0_128 = arith.constant 0 : index
    %123 = vector.load %arg27[%c27_127, %c0_128] : memref<232x32xf32, #tpu.memory_space<vmem>>, vector<200x32xf32>
    %124 = arith.truncf %123 : vector<200x32xf32> to vector<200x32xbf16>
    %c0_129 = arith.constant 0 : index
    %c256_130 = arith.constant 256 : index
    %125 = vector.load %arg28[%c0_129, %c256_130] : memref<200x288xbf16, #tpu.memory_space<vmem>>, vector<200x32xbf16>
    tpu.vector_store %arg28[%c0_129, %c256_130], %124 {strides = array<i32>} : memref<200x288xbf16, #tpu.memory_space<vmem>>, vector<200x32xbf16>,
    %c0_131 = arith.constant 0 : index
    %c0_132 = arith.constant 0 : index
    %126 = vector.load %arg28[%c0_131, %c0_132] : memref<200x288xbf16, #tpu.memory_space<vmem>>, vector<200x288xbf16>
    %cst_133 = arith.constant dense<0.000000e+00> : vector<200x32xf32>
    %127 = tpu.matmul %126, %103, %cst_133 {dimension_numbers = #tpu.dot_dimension_numbers<[1], [0], [0], [1], [0, 0, 1, 1], [], []>} : vector<200x288xbf16>, vector<288x32xbf16>, vector<200x32xf32> -> vector<200x32xf32>
    %128 = vector.broadcast %105 : vector<1x32xf32> to vector<200x32xf32>
    %129 = arith.mulf %127, %128 : vector<200x32xf32>
    %130 = vector.broadcast %107 : vector<1x32xf32> to vector<200x32xf32>
    %131 = arith.addf %129, %130 : vector<200x32xf32>
    %cst_134 = arith.constant 0.000000e+00 : f32
    %132 = vector.broadcast %cst_134 : f32 to vector<200x32xf32>
    %133 = arith.maximumf %131, %132 : vector<200x32xf32>
    %134 = vector.broadcast %0 : vector<200x1xf32> to vector<200x32xf32>
    %135 = arith.mulf %133, %134 : vector<200x32xf32>
    %c3 = arith.constant 3 : index
    %c0_135 = arith.constant 0 : index
    %c0_136 = arith.constant 0 : index
    %136 = vector.load %arg6[%c3, %c0_135, %c0_136] : memref<4x288x32xbf16, #tpu.memory_space<vmem>>, vector<1x288x32xbf16>
    %137 = vector.shape_cast %136 : vector<1x288x32xbf16> to vector<288x32xbf16>
    %c3_137 = arith.constant 3 : index
    %c0_138 = arith.constant 0 : index
    %c0_139 = arith.constant 0 : index
    %138 = vector.load %arg7[%c3_137, %c0_138, %c0_139] : memref<4x1x32xf32, #tpu.memory_space<vmem>>, vector<1x1x32xf32>
    %139 = vector.shape_cast %138 : vector<1x1x32xf32> to vector<1x32xf32>
    %c3_140 = arith.constant 3 : index
    %c0_141 = arith.constant 0 : index
    %c0_142 = arith.constant 0 : index
    %140 = vector.load %arg8[%c3_140, %c0_141, %c0_142] : memref<4x1x32xf32, #tpu.memory_space<vmem>>, vector<1x1x32xf32>
    %141 = vector.shape_cast %140 : vector<1x1x32xf32> to vector<1x32xf32>
    %c16_143 = arith.constant 16 : index
    %c0_144 = arith.constant 0 : index
    %142 = vector.load %arg27[%c16_143, %c0_144] : memref<232x32xf32, #tpu.memory_space<vmem>>, vector<200x32xf32>
    tpu.vector_store %arg27[%c16_143, %c0_144], %135 {strides = array<i32>} : memref<232x32xf32, #tpu.memory_space<vmem>>, vector<200x32xf32>,
    %c5_145 = arith.constant 5 : index
    %c0_146 = arith.constant 0 : index
    %143 = vector.load %arg27[%c5_145, %c0_146] : memref<232x32xf32, #tpu.memory_space<vmem>>, vector<200x32xf32>
    %c6_147 = arith.constant 6 : index
    %c0_148 = arith.constant 0 : index
    %144 = vector.load %arg27[%c6_147, %c0_148] : memref<232x32xf32, #tpu.memory_space<vmem>>, vector<200x32xf32>
    %c7_149 = arith.constant 7 : index
    %c0_150 = arith.constant 0 : index
    %145 = vector.load %arg27[%c7_149, %c0_150] : memref<232x32xf32, #tpu.memory_space<vmem>>, vector<200x32xf32>
    %c15_151 = arith.constant 15 : index
    %c0_152 = arith.constant 0 : index
    %146 = vector.load %arg27[%c15_151, %c0_152] : memref<232x32xf32, #tpu.memory_space<vmem>>, vector<200x32xf32>
    %147 = tpu.concatenate %143, %144, %145, %146 in 1 : vector<200x32xf32>, vector<200x32xf32>, vector<200x32xf32>, vector<200x32xf32> -> vector<200x128xf32>
    %148 = arith.truncf %147 : vector<200x128xf32> to vector<200x128xbf16>
    %c0_153 = arith.constant 0 : index
    %c0_154 = arith.constant 0 : index
    %149 = vector.load %arg28[%c0_153, %c0_154] : memref<200x288xbf16, #tpu.memory_space<vmem>>, vector<200x128xbf16>
    tpu.vector_store %arg28[%c0_153, %c0_154], %148 {strides = array<i32>} : memref<200x288xbf16, #tpu.memory_space<vmem>>, vector<200x128xbf16>,
    %c16_155 = arith.constant 16 : index
    %c0_156 = arith.constant 0 : index
    %150 = vector.load %arg27[%c16_155, %c0_156] : memref<232x32xf32, #tpu.memory_space<vmem>>, vector<200x32xf32>
    %c17_157 = arith.constant 17 : index
    %c0_158 = arith.constant 0 : index
    %151 = vector.load %arg27[%c17_157, %c0_158] : memref<232x32xf32, #tpu.memory_space<vmem>>, vector<200x32xf32>
    %c25_159 = arith.constant 25 : index
    %c0_160 = arith.constant 0 : index
    %152 = vector.load %arg27[%c25_159, %c0_160] : memref<232x32xf32, #tpu.memory_space<vmem>>, vector<200x32xf32>
    %c26_161 = arith.constant 26 : index
    %c0_162 = arith.constant 0 : index
    %153 = vector.load %arg27[%c26_161, %c0_162] : memref<232x32xf32, #tpu.memory_space<vmem>>, vector<200x32xf32>
    %154 = tpu.concatenate %150, %151, %152, %153 in 1 : vector<200x32xf32>, vector<200x32xf32>, vector<200x32xf32>, vector<200x32xf32> -> vector<200x128xf32>
    %155 = arith.truncf %154 : vector<200x128xf32> to vector<200x128xbf16>
    %c0_163 = arith.constant 0 : index
    %c128_164 = arith.constant 128 : index
    %156 = vector.load %arg28[%c0_163, %c128_164] : memref<200x288xbf16, #tpu.memory_space<vmem>>, vector<200x128xbf16>
    tpu.vector_store %arg28[%c0_163, %c128_164], %155 {strides = array<i32>} : memref<200x288xbf16, #tpu.memory_space<vmem>>, vector<200x128xbf16>,
    %c27_165 = arith.constant 27 : index
    %c0_166 = arith.constant 0 : index
    %157 = vector.load %arg27[%c27_165, %c0_166] : memref<232x32xf32, #tpu.memory_space<vmem>>, vector<200x32xf32>
    %158 = arith.truncf %157 : vector<200x32xf32> to vector<200x32xbf16>
    %c0_167 = arith.constant 0 : index
    %c256_168 = arith.constant 256 : index
    %159 = vector.load %arg28[%c0_167, %c256_168] : memref<200x288xbf16, #tpu.memory_space<vmem>>, vector<200x32xbf16>
    tpu.vector_store %arg28[%c0_167, %c256_168], %158 {strides = array<i32>} : memref<200x288xbf16, #tpu.memory_space<vmem>>, vector<200x32xbf16>,
    %c0_169 = arith.constant 0 : index
    %c0_170 = arith.constant 0 : index
    %160 = vector.load %arg28[%c0_169, %c0_170] : memref<200x288xbf16, #tpu.memory_space<vmem>>, vector<200x288xbf16>
    %cst_171 = arith.constant dense<0.000000e+00> : vector<200x32xf32>
    %161 = tpu.matmul %160, %137, %cst_171 {dimension_numbers = #tpu.dot_dimension_numbers<[1], [0], [0], [1], [0, 0, 1, 1], [], []>} : vector<200x288xbf16>, vector<288x32xbf16>, vector<200x32xf32> -> vector<200x32xf32>
    %162 = vector.broadcast %139 : vector<1x32xf32> to vector<200x32xf32>
    %163 = arith.mulf %161, %162 : vector<200x32xf32>
    %164 = vector.broadcast %141 : vector<1x32xf32> to vector<200x32xf32>
    %165 = arith.addf %163, %164 : vector<200x32xf32>
    %166 = vector.broadcast %0 : vector<200x1xf32> to vector<200x32xf32>
    %167 = arith.mulf %165, %166 : vector<200x32xf32>
    %168 = arith.addf %101, %167 : vector<200x32xf32>
    %cst_172 = arith.constant 0.000000e+00 : f32
    %169 = vector.broadcast %cst_172 : f32 to vector<200x32xf32>
    %170 = arith.maximumf %168, %169 : vector<200x32xf32>
    %171 = arith.subf %170, %101 : vector<200x32xf32>
    %c1_173 = arith.constant 1 : index
    %c0_174 = arith.constant 0 : index
    %c0_175 = arith.constant 0 : index
    %172 = vector.load %arg25[%c1_173, %c0_174, %c0_175] : memref<2x200x32xf32, #tpu.memory_space<vmem>>, vector<1x200x32xf32>
    %173 = vector.shape_cast %172 : vector<1x200x32xf32> to vector<200x32xf32>
    %174 = vector.shape_cast %171 : vector<200x32xf32> to vector<1x200x32xf32>
    tpu.vector_store %arg25[%c1_173, %c0_174, %c0_175], %174 {strides = array<i32>} : memref<2x200x32xf32, #tpu.memory_space<vmem>>, vector<1x200x32xf32>,
    %c1_176 = arith.constant 1 : index
    %c0_177 = arith.constant 0 : index
    %c0_178 = arith.constant 0 : index
    %175 = vector.load %arg26[%c1_176, %c0_177, %c0_178] : memref<2x200x32xf32, #tpu.memory_space<vmem>>, vector<1x200x32xf32>
    %176 = vector.shape_cast %175 : vector<1x200x32xf32> to vector<200x32xf32>
    %177 = vector.shape_cast %135 : vector<200x32xf32> to vector<1x200x32xf32>
    tpu.vector_store %arg26[%c1_176, %c0_177, %c0_178], %177 {strides = array<i32>} : memref<2x200x32xf32, #tpu.memory_space<vmem>>, vector<1x200x32xf32>,
    %c2_179 = arith.constant 2 : index
    %c0_180 = arith.constant 0 : index
    %c0_181 = arith.constant 0 : index
    %178 = vector.load %arg24[%c2_179, %c0_180, %c0_181] : memref<3x200x32xf32, #tpu.memory_space<vmem>>, vector<1x200x32xf32>
    %179 = vector.shape_cast %178 : vector<1x200x32xf32> to vector<200x32xf32>
    %180 = vector.shape_cast %170 : vector<200x32xf32> to vector<1x200x32xf32>
    tpu.vector_store %arg24[%c2_179, %c0_180, %c0_181], %180 {strides = array<i32>} : memref<3x200x32xf32, #tpu.memory_space<vmem>>, vector<1x200x32xf32>,
    %c2_182 = arith.constant 2 : index
    %c0_183 = arith.constant 0 : index
    %c0_184 = arith.constant 0 : index
    %181 = vector.load %arg24[%c2_182, %c0_183, %c0_184] : memref<3x200x32xf32, #tpu.memory_space<vmem>>, vector<1x200x32xf32>
    %182 = vector.shape_cast %181 : vector<1x200x32xf32> to vector<200x32xf32>
    %c0_185 = arith.constant 0 : index
    %c0_186 = arith.constant 0 : index
    %183 = vector.load %arg9[%c0_185, %c0_186] : memref<32x2xf32, #tpu.memory_space<vmem>>, vector<32x2xf32>
    %cst_187 = arith.constant dense<0.000000e+00> : vector<200x2xf32>
    %184 = tpu.matmul %182, %183, %cst_187 {dimension_numbers = #tpu.dot_dimension_numbers<[1], [0], [0], [1], [0, 0, 1, 1], [], []>} : vector<200x32xf32>, vector<32x2xf32>, vector<200x2xf32> -> vector<200x2xf32>
    %c0_188 = arith.constant 0 : index
    %c0_189 = arith.constant 0 : index
    %185 = vector.load %arg10[%c0_188, %c0_189] : memref<1x2xf32, #tpu.memory_space<vmem>>, vector<1x2xf32>
    %186 = vector.broadcast %185 : vector<1x2xf32> to vector<200x2xf32>
    %187 = arith.mulf %184, %186 : vector<200x2xf32>
    %c0_190 = arith.constant 0 : index
    %c0_191 = arith.constant 0 : index
    %188 = vector.load %arg11[%c0_190, %c0_191] : memref<1x2xf32, #tpu.memory_space<vmem>>, vector<1x2xf32>
    %189 = vector.broadcast %188 : vector<1x2xf32> to vector<200x2xf32>
    %190 = arith.addf %187, %189 : vector<200x2xf32>
    %cst_192 = arith.constant 0.000000e+00 : f32
    %191 = vector.broadcast %cst_192 : f32 to vector<200x2xf32>
    %192 = arith.maximumf %190, %191 : vector<200x2xf32>
    %193 = vector.extract_strided_slice %192 {offsets = [0, 0], sizes = [200, 1], strides = [1, 1]} : vector<200x2xf32> to vector<200x1xf32>
    %c0_193 = arith.constant 0 : index
    %c0_194 = arith.constant 0 : index
    %194 = vector.load %arg12[%c0_193, %c0_194] : memref<200x65xf32, #tpu.memory_space<vmem>>, vector<200x65xf32>
    %195 = vector.broadcast %193 : vector<200x1xf32> to vector<200x65xf32>
    %196 = arith.mulf %195, %194 : vector<200x65xf32>
    %197 = vector.extract_strided_slice %192 {offsets = [0, 1], sizes = [200, 1], strides = [1, 1]} : vector<200x2xf32> to vector<200x1xf32>
    %c0_195 = arith.constant 0 : index
    %c0_196 = arith.constant 0 : index
    %198 = vector.load %arg13[%c0_195, %c0_196] : memref<200x65xf32, #tpu.memory_space<vmem>>, vector<200x65xf32>
    %199 = vector.broadcast %197 : vector<200x1xf32> to vector<200x65xf32>
    %200 = arith.mulf %199, %198 : vector<200x65xf32>
    %201 = arith.addf %196, %200 : vector<200x65xf32>
    %c0_197 = arith.constant 0 : index
    %c0_198 = arith.constant 0 : index
    %202 = vector.load %arg2[%c0_197, %c0_198] : memref<2x200xf32, #tpu.memory_space<vmem>>, vector<2x200xf32>
    %cst_199 = arith.constant dense<0.000000e+00> : vector<2x65xf32>
    %203 = tpu.matmul %202, %201, %cst_199 {dimension_numbers = #tpu.dot_dimension_numbers<[1], [0], [0], [1], [0, 0, 1, 1], [], []>} : vector<2x200xf32>, vector<200x65xf32>, vector<2x65xf32> -> vector<2x65xf32>
    %c0_200 = arith.constant 0 : index
    %c0_201 = arith.constant 0 : index
    %204 = vector.load %arg14[%c0_200, %c0_201] : memref<1x65xf32, #tpu.memory_space<vmem>>, vector<1x65xf32>
    %205 = vector.broadcast %204 : vector<1x65xf32> to vector<2x65xf32>
    %206 = arith.addf %203, %205 : vector<2x65xf32>
    %c0_202 = arith.constant 0 : index
    %c0_203 = arith.constant 0 : index
    %207 = vector.load %arg22[%c0_202, %c0_203] : memref<2x65xf32, #tpu.memory_space<vmem>>, vector<2x65xf32>
    tpu.vector_store %arg22[%c0_202, %c0_203], %206 {strides = array<i32>} : memref<2x65xf32, #tpu.memory_space<vmem>>, vector<2x65xf32>,
    %c0_204 = arith.constant 0 : index
    %c0_205 = arith.constant 0 : index
    %208 = vector.load %arg15[%c0_204, %c0_205] : memref<32x1xf32, #tpu.memory_space<vmem>>, vector<32x1xf32>
    %cst_206 = arith.constant dense<0.000000e+00> : vector<200x1xf32>
    %209 = tpu.matmul %182, %208, %cst_206 {dimension_numbers = #tpu.dot_dimension_numbers<[1], [0], [0], [1], [0, 0, 1, 1], [], []>} : vector<200x32xf32>, vector<32x1xf32>, vector<200x1xf32> -> vector<200x1xf32>
    %c0_207 = arith.constant 0 : index
    %c0_208 = arith.constant 0 : index
    %210 = vector.load %arg16[%c0_207, %c0_208] : memref<1x1xf32, #tpu.memory_space<vmem>>, vector<1x1xf32>
    %211 = vector.broadcast %210 : vector<1x1xf32> to vector<200x1xf32>
    %212 = arith.mulf %209, %211 : vector<200x1xf32>
    %c0_209 = arith.constant 0 : index
    %c0_210 = arith.constant 0 : index
    %213 = vector.load %arg17[%c0_209, %c0_210] : memref<1x1xf32, #tpu.memory_space<vmem>>, vector<1x1xf32>
    %214 = vector.broadcast %213 : vector<1x1xf32> to vector<200x1xf32>
    %215 = arith.addf %212, %214 : vector<200x1xf32>
    %cst_211 = arith.constant 0.000000e+00 : f32
    %216 = vector.broadcast %cst_211 : f32 to vector<200x1xf32>
    %217 = arith.maximumf %215, %216 : vector<200x1xf32>
    %c0_212 = arith.constant 0 : index
    %c0_213 = arith.constant 0 : index
    %218 = vector.load %arg2[%c0_212, %c0_213] : memref<2x200xf32, #tpu.memory_space<vmem>>, vector<2x200xf32>
    %c0_214 = arith.constant 0 : index
    %c0_215 = arith.constant 0 : index
    %219 = vector.load %arg18[%c0_214, %c0_215] : memref<200x256xf32, #tpu.memory_space<vmem>>, vector<200x256xf32>
    %220 = vector.broadcast %217 : vector<200x1xf32> to vector<200x256xf32>
    %221 = arith.mulf %220, %219 : vector<200x256xf32>
    %cst_216 = arith.constant dense<0.000000e+00> : vector<2x256xf32>
    %222 = tpu.matmul %218, %221, %cst_216 {dimension_numbers = #tpu.dot_dimension_numbers<[1], [0], [0], [1], [0, 0, 1, 1], [], []>} : vector<2x200xf32>, vector<200x256xf32>, vector<2x256xf32> -> vector<2x256xf32>
    %c0_217 = arith.constant 0 : index
    %c0_218 = arith.constant 0 : index
    %223 = vector.load %arg19[%c0_217, %c0_218] : memref<1x256xf32, #tpu.memory_space<vmem>>, vector<1x256xf32>
    %224 = vector.broadcast %223 : vector<1x256xf32> to vector<2x256xf32>
    %225 = arith.addf %222, %224 : vector<2x256xf32>
    %cst_219 = arith.constant 0.000000e+00 : f32
    %226 = vector.broadcast %cst_219 : f32 to vector<2x256xf32>
    %227 = arith.maximumf %225, %226 : vector<2x256xf32>
    %c0_220 = arith.constant 0 : index
    %c0_221 = arith.constant 0 : index
    %228 = vector.load %arg20[%c0_220, %c0_221] : memref<256x1xf32, #tpu.memory_space<vmem>>, vector<256x1xf32>
    %cst_222 = arith.constant dense<0.000000e+00> : vector<2x1xf32>
    %229 = tpu.matmul %227, %228, %cst_222 {dimension_numbers = #tpu.dot_dimension_numbers<[1], [0], [0], [1], [0, 0, 1, 1], [], []>} : vector<2x256xf32>, vector<256x1xf32>, vector<2x1xf32> -> vector<2x1xf32>
    %c0_223 = arith.constant 0 : index
    %c0_224 = arith.constant 0 : index
    %230 = vector.load %arg21[%c0_223, %c0_224] : memref<1x1xf32, #tpu.memory_space<vmem>>, vector<1x1xf32>
    %231 = vector.broadcast %230 : vector<1x1xf32> to vector<2x1xf32>
    %232 = arith.addf %229, %231 : vector<2x1xf32>
    %233 = math.tanh %232 : vector<2x1xf32>
    %c0_225 = arith.constant 0 : index
    %c0_226 = arith.constant 0 : index
    %234 = vector.load %arg23[%c0_225, %c0_226] : memref<2x1xf32, #tpu.memory_space<vmem>>, vector<2x1xf32>
    tpu.vector_store %arg23[%c0_225, %c0_226], %233 {strides = array<i32>} : memref<2x1xf32, #tpu.memory_space<vmem>>, vector<2x1xf32>,
    return
  }
}

</mosaic_0001>

<llo_original>
// kernel: tile.20
$region0: #{tile.20}
  #allocation0 [shape = 's32[1]{0}', space=sflag, size = 0x4, scoped, tag = 'scoped memory for tile.20']
  %s0 = inlined_call_operand.vmem [shape: f32[100], index: 0, kind: input, shape index: {}]
  %s1 = inlined_call_operand.vmem [shape: f32[2,100], index: 1, kind: output, shape index: {}]
  // Predicated region
  $region2: #{tile.20} parent=0 // pred_check
    _
  $region3: #{tile.20} parent=0 // pred_check_branch
    %3 = sbr.rel (0) target = $region5
  $region4: #{tile.20} parent=0 // pred_region
    _
  $region5: #{tile.20} parent=0 // pred_fallthru
    _
  %v4 = vld [vmem:[%s0] ss:$0 sm:$0xff]
  %5 = vst [vmem:[%s1] sm:$0x3] %v4

// kernel: tile.25
$region0: #{tile.25}
  %s0 = inlined_call_operand.vmem [shape: f32[2,100,65], index: 0, kind: input, shape index: {}]
  %s1 = inlined_call_operand.vmem [shape: f32[200,65], index: 1, kind: output, shape index: {}]
  $region1: #{tile.25} parent=0
    #allocation0 [shape = 'u8[266240]{0}', space=vmem, size = 0x41000, scoped, tag = 'scoped mem for input reshape']
    %s3 = sshll.u32 1, 2
    %s4 = ssub.s32 %s3, 1
    %s5 = smul.addr 2, 64
    %s6 = scalar_lea.vmem %s0, %s5
    %v7 = vld [vmem:[%s6] sm:%s4]
    %s8 = scalar_lea.vmem [#allocation0], 512
    %9 = vst [vmem:[%s8] sm:%s4] %v7
    %s10 = smul.addr 2, 63
    %s11 = scalar_lea.vmem %s0, %s10
    %v12 = vld [vmem:[%s11] sm:%s4]
    %s13 = scalar_lea.vmem [#allocation0], 504
    %14 = vst [vmem:[%s13] sm:%s4] %v12
    %s15 = smul.addr 2, 62
    %s16 = scalar_lea.vmem %s0, %s15
    %v17 = vld [vmem:[%s16] sm:%s4]
    %s18 = scalar_lea.vmem [#allocation0], 496
    %19 = vst [vmem:[%s18] sm:%s4] %v17
    %s20 = smul.addr 2, 61
    %s21 = scalar_lea.vmem %s0, %s20
    %v22 = vld [vmem:[%s21] sm:%s4]
    %s23 = scalar_lea.vmem [#allocation0], 488
    %24 = vst [vmem:[%s23] sm:%s4] %v22
    %s25 = smul.addr 2, 60
    %s26 = scalar_lea.vmem %s0, %s25
    %v27 = vld [vmem:[%s26] sm:%s4]
    %s28 = scalar_lea.vmem [#allocation0], 480
    %29 = vst [vmem:[%s28] sm:%s4] %v27
    %s30 = smul.addr 2, 59
    %s31 = scalar_lea.vmem %s0, %s30
    %v32 = vld [vmem:[%s31] sm:%s4]
    %s33 = scalar_lea.vmem [#allocation0], 472
    %34 = vst [vmem:[%s33] sm:%s4] %v32
    %s35 = smul.addr 2, 58
    %s36 = scalar_lea.vmem %s0, %s35
    %v37 = vld [vmem:[%s36] sm:%s4]
    %s38 = scalar_lea.vmem [#allocation0], 464
    %39 = vst [vmem:[%s38] sm:%s4] %v37
    %s40 = smul.addr 2, 57
    %s41 = scalar_lea.vmem %s0, %s40
    %v42 = vld [vmem:[%s41] sm:%s4]
    %s43 = scalar_lea.vmem [#allocation0], 456
    %44 = vst [vmem:[%s43] sm:%s4] %v42
    %s45 = smul.addr 2, 56
    %s46 = scalar_lea.vmem %s0, %s45
    %v47 = vld [vmem:[%s46] sm:%s4]
    %s48 = scalar_lea.vmem [#allocation0], 448
    %49 = vst [vmem:[%s48] sm:%s4] %v47
    %s50 = smul.addr 2, 55
    %s51 = scalar_lea.vmem %s0, %s50
    %v52 = vld [vmem:[%s51] sm:%s4]
    %s53 = scalar_lea.vmem [#allocation0], 440
    %54 = vst [vmem:[%s53] sm:%s4] %v52
    %s55 = smul.addr 2, 54
    %s56 = scalar_lea.vmem %s0, %s55
    %v57 = vld [vmem:[%s56] sm:%s4]
    %s58 = scalar_lea.vmem [#allocation0], 432
    %59 = vst [vmem:[%s58] sm:%s4] %v57
    %s60 = smul.addr 2, 53
    %s61 = scalar_lea.vmem %s0, %s60
    %v62 = vld [vmem:[%s61] sm:%s4]
    %s63 = scalar_lea.vmem [#allocation0], 424
    %64 = vst [vmem:[%s63] sm:%s4] %v62
    %s65 = smul.addr 2, 52
    %s66 = scalar_lea.vmem %s0, %s65
    %v67 = vld [vmem:[%s66] sm:%s4]
    %s68 = scalar_lea.vmem [#allocation0], 416
    %69 = vst [vmem:[%s68] sm:%s4] %v67
    %s70 = smul.addr 2, 51
    %s71 = scalar_lea.vmem %s0, %s70
    %v72 = vld [vmem:[%s71] sm:%s4]
    %s73 = scalar_lea.vmem [#allocation0], 408
    %74 = vst [vmem:[%s73] sm:%s4] %v72
    %s75 = smul.addr 2, 50
    %s76 = scalar_lea.vmem %s0, %s75
    %v77 = vld [vmem:[%s76] sm:%s4]
    %s78 = scalar_lea.vmem [#allocation0], 400
    %79 = vst [vmem:[%s78] sm:%s4] %v77
    %s80 = smul.addr 2, 49
    %s81 = scalar_lea.vmem %s0, %s80
    %v82 = vld [vmem:[%s81] sm:%s4]
    %s83 = scalar_lea.vmem [#allocation0], 392
    %84 = vst [vmem:[%s83] sm:%s4] %v82
    %s85 = smul.addr 2, 48
    %s86 = scalar_lea.vmem %s0, %s85
    %v87 = vld [vmem:[%s86] sm:%s4]
    %s88 = scalar_lea.vmem [#allocation0], 384
    %89 = vst [vmem:[%s88] sm:%s4] %v87
    %s90 = smul.addr 2, 47
    %s91 = scalar_lea.vmem %s0, %s90
    %v92 = vld [vmem:[%s91] sm:%s4]
    %s93 = scalar_lea.vmem [#allocation0], 376
    %94 = vst [vmem:[%s93] sm:%s4] %v92
    %s95 = smul.addr 2, 46
    %s96 = scalar_lea.vmem %s0, %s95
    %v97 = vld [vmem:[%s96] sm:%s4]
    %s98 = scalar_lea.vmem [#allocation0], 368
    %99 = vst [vmem:[%s98] sm:%s4] %v97
    %s100 = smul.addr 2, 45
    %s101 = scalar_lea.vmem %s0, %s100
    %v102 = vld [vmem:[%s101] sm:%s4]
    %s103 = scalar_lea.vmem [#allocation0], 360
    %104 = vst [vmem:[%s103] sm:%s4] %v102
    %s105 = smul.addr 2, 44
    %s106 = scalar_lea.vmem %s0, %s105
    %v107 = vld [vmem:[%s106] sm:%s4]
    %s108 = scalar_lea.vmem [#allocation0], 352
    %109 = vst [vmem:[%s108] sm:%s4] %v107
    %s110 = smul.addr 2, 43
    %s111 = scalar_lea.vmem %s0, %s110
    %v112 = vld [vmem:[%s111] sm:%s4]
    %s113 = scalar_lea.vmem [#allocation0], 344
    %114 = vst [vmem:[%s113] sm:%s4] %v112
    %s115 = smul.addr 2, 42
    %s116 = scalar_lea.vmem %s0, %s115
    %v117 = vld [vmem:[%s116] sm:%s4]
    %s118 = scalar_lea.vmem [#allocation0], 336
    %119 = vst [vmem:[%s118] sm:%s4] %v117
    %s120 = smul.addr 2, 41
    %s121 = scalar_lea.vmem %s0, %s120
    %v122 = vld [vmem:[%s121] sm:%s4]
    %s123 = scalar_lea.vmem [#allocation0], 328
    %124 = vst [vmem:[%s123] sm:%s4] %v122
    %s125 = smul.addr 2, 40
    %s126 = scalar_lea.vmem %s0, %s125
    %v127 = vld [vmem:[%s126] sm:%s4]
    %s128 = scalar_lea.vmem [#allocation0], 320
    %129 = vst [vmem:[%s128] sm:%s4] %v127
    %s130 = smul.addr 2, 39
    %s131 = scalar_lea.vmem %s0, %s130
    %v132 = vld [vmem:[%s131] sm:%s4]
    %s133 = scalar_lea.vmem [#allocation0], 312
    %134 = vst [vmem:[%s133] sm:%s4] %v132
    %s135 = smul.addr 2, 38
    %s136 = scalar_lea.vmem %s0, %s135
    %v137 = vld [vmem:[%s136] sm:%s4]
    %s138 = scalar_lea.vmem [#allocation0], 304
    %139 = vst [vmem:[%s138] sm:%s4] %v137
    %s140 = smul.addr 2, 37
    %s141 = scalar_lea.vmem %s0, %s140
    %v142 = vld [vmem:[%s141] sm:%s4]
    %s143 = scalar_lea.vmem [#allocation0], 296
    %144 = vst [vmem:[%s143] sm:%s4] %v142
    %s145 = smul.addr 2, 36
    %s146 = scalar_lea.vmem %s0, %s145
    %v147 = vld [vmem:[%s146] sm:%s4]
    %s148 = scalar_lea.vmem [#allocation0], 288
    %149 = vst [vmem:[%s148] sm:%s4] %v147
    %s150 = smul.addr 2, 35
    %s151 = scalar_lea.vmem %s0, %s150
    %v152 = vld [vmem:[%s151] sm:%s4]
    %s153 = scalar_lea.vmem [#allocation0], 280
    %154 = vst [vmem:[%s153] sm:%s4] %v152
    %s155 = smul.addr 2, 34
    %s156 = scalar_lea.vmem %s0, %s155
    %v157 = vld [vmem:[%s156] sm:%s4]
    %s158 = scalar_lea.vmem [#allocation0], 272
    %159 = vst [vmem:[%s158] sm:%s4] %v157
    %s160 = smul.addr 2, 33
    %s161 = scalar_lea.vmem %s0, %s160
    %v162 = vld [vmem:[%s161] sm:%s4]
    %s163 = scalar_lea.vmem [#allocation0], 264
    %164 = vst [vmem:[%s163] sm:%s4] %v162
    %s165 = smul.addr 2, 32
    %s166 = scalar_lea.vmem %s0, %s165
    %v167 = vld [vmem:[%s166] sm:%s4]
    %s168 = scalar_lea.vmem [#allocation0], 256
    %169 = vst [vmem:[%s168] sm:%s4] %v167
    %s170 = smul.addr 2, 31
    %s171 = scalar_lea.vmem %s0, %s170
    %v172 = vld [vmem:[%s171] sm:%s4]
    %s173 = scalar_lea.vmem [#allocation0], 248
    %174 = vst [vmem:[%s173] sm:%s4] %v172
    %s175 = smul.addr 2, 30
    %s176 = scalar_lea.vmem %s0, %s175
    %v177 = vld [vmem:[%s176] sm:%s4]
    %s178 = scalar_lea.vmem [#allocation0], 240
    %179 = vst [vmem:[%s178] sm:%s4] %v177
    %s180 = smul.addr 2, 29
    %s181 = scalar_lea.vmem %s0, %s180
    %v182 = vld [vmem:[%s181] sm:%s4]
    %s183 = scalar_lea.vmem [#allocation0], 232
    %184 = vst [vmem:[%s183] sm:%s4] %v182
    %s185 = smul.addr 2, 28
    %s186 = scalar_lea.vmem %s0, %s185
    %v187 = vld [vmem:[%s186] sm:%s4]
    %s188 = scalar_lea.vmem [#allocation0], 224
    %189 = vst [vmem:[%s188] sm:%s4] %v187
    %s190 = smul.addr 2, 27
    %s191 = scalar_lea.vmem %s0, %s190
    %v192 = vld [vmem:[%s191] sm:%s4]
    %s193 = scalar_lea.vmem [#allocation0], 216
    %194 = vst [vmem:[%s193] sm:%s4] %v192
    %s195 = smul.addr 2, 26
    %s196 = scalar_lea.vmem %s0, %s195
    %v197 = vld [vmem:[%s196] sm:%s4]
    %s198 = scalar_lea.vmem [#allocation0], 208
    %199 = vst [vmem:[%s198] sm:%s4] %v197
    %s200 = smul.addr 2, 25
    %s201 = scalar_lea.vmem %s0, %s200
    %v202 = vld [vmem:[%s201] sm:%s4]
    %s203 = scalar_lea.vmem [#allocation0], 200
    %204 = vst [vmem:[%s203] sm:%s4] %v202
    %s205 = smul.addr 2, 24
    %s206 = scalar_lea.vmem %s0, %s205
    %v207 = vld [vmem:[%s206] sm:%s4]
    %s208 = scalar_lea.vmem [#allocation0], 192
    %209 = vst [vmem:[%s208] sm:%s4] %v207
    %s210 = smul.addr 2, 23
    %s211 = scalar_lea.vmem %s0, %s210
    %v212 = vld [vmem:[%s211] sm:%s4]
    %s213 = scalar_lea.vmem [#allocation0], 184
    %214 = vst [vmem:[%s213] sm:%s4] %v212
    %s215 = smul.addr 2, 22
    %s216 = scalar_lea.vmem %s0, %s215
    %v217 = vld [vmem:[%s216] sm:%s4]
    %s218 = scalar_lea.vmem [#allocation0], 176
    %219 = vst [vmem:[%s218] sm:%s4] %v217
    %s220 = smul.addr 2, 21
    %s221 = scalar_lea.vmem %s0, %s220
    %v222 = vld [vmem:[%s221] sm:%s4]
    %s223 = scalar_lea.vmem [#allocation0], 168
    %224 = vst [vmem:[%s223] sm:%s4] %v222
    %s225 = smul.addr 2, 20
    %s226 = scalar_lea.vmem %s0, %s225
    %v227 = vld [vmem:[%s226] sm:%s4]
    %s228 = scalar_lea.vmem [#allocation0], 160
    %229 = vst [vmem:[%s228] sm:%s4] %v227
    %s230 = smul.addr 2, 19
    %s231 = scalar_lea.vmem %s0, %s230
    %v232 = vld [vmem:[%s231] sm:%s4]
    %s233 = scalar_lea.vmem [#allocation0], 152
    %234 = vst [vmem:[%s233] sm:%s4] %v232
    %s235 = smul.addr 2, 18
    %s236 = scalar_lea.vmem %s0, %s235
    %v237 = vld [vmem:[%s236] sm:%s4]
    %s238 = scalar_lea.vmem [#allocation0], 144
    %239 = vst [vmem:[%s238] sm:%s4] %v237
    %s240 = smul.addr 2, 17
    %s241 = scalar_lea.vmem %s0, %s240
    %v242 = vld [vmem:[%s241] sm:%s4]
    %s243 = scalar_lea.vmem [#allocation0], 136
    %244 = vst [vmem:[%s243] sm:%s4] %v242
    %s245 = smul.addr 2, 16
    %s246 = scalar_lea.vmem %s0, %s245
    %v247 = vld [vmem:[%s246] sm:%s4]
    %s248 = scalar_lea.vmem [#allocation0], 128
    %249 = vst [vmem:[%s248] sm:%s4] %v247
    %s250 = smul.addr 2, 15
    %s251 = scalar_lea.vmem %s0, %s250
    %v252 = vld [vmem:[%s251] sm:%s4]
    %s253 = scalar_lea.vmem [#allocation0], 120
    %254 = vst [vmem:[%s253] sm:%s4] %v252
    %s255 = smul.addr 2, 14
    %s256 = scalar_lea.vmem %s0, %s255
    %v257 = vld [vmem:[%s256] sm:%s4]
    %s258 = scalar_lea.vmem [#allocation0], 112
    %259 = vst [vmem:[%s258] sm:%s4] %v257
    %s260 = smul.addr 2, 13
    %s261 = scalar_lea.vmem %s0, %s260
    %v262 = vld [vmem:[%s261] sm:%s4]
    %s263 = scalar_lea.vmem [#allocation0], 104
    %264 = vst [vmem:[%s263] sm:%s4] %v262
    %s265 = smul.addr 2, 12
    %s266 = scalar_lea.vmem %s0, %s265
    %v267 = vld [vmem:[%s266] sm:%s4]
    %s268 = scalar_lea.vmem [#allocation0], 96
    %269 = vst [vmem:[%s268] sm:%s4] %v267
    %s270 = smul.addr 2, 11
    %s271 = scalar_lea.vmem %s0, %s270
    %v272 = vld [vmem:[%s271] sm:%s4]
    %s273 = scalar_lea.vmem [#allocation0], 88
    %274 = vst [vmem:[%s273] sm:%s4] %v272
    %s275 = smul.addr 2, 10
    %s276 = scalar_lea.vmem %s0, %s275
    %v277 = vld [vmem:[%s276] sm:%s4]
    %s278 = scalar_lea.vmem [#allocation0], 80
    %279 = vst [vmem:[%s278] sm:%s4] %v277
    %s280 = smul.addr 2, 9
    %s281 = scalar_lea.vmem %s0, %s280
    %v282 = vld [vmem:[%s281] sm:%s4]
    %s283 = scalar_lea.vmem [#allocation0], 72
    %284 = vst [vmem:[%s283] sm:%s4] %v282
    %s285 = smul.addr 2, 8
    %s286 = scalar_lea.vmem %s0, %s285
    %v287 = vld [vmem:[%s286] sm:%s4]
    %s288 = scalar_lea.vmem [#allocation0], 64
    %289 = vst [vmem:[%s288] sm:%s4] %v287
    %s290 = smul.addr 2, 7
    %s291 = scalar_lea.vmem %s0, %s290
    %v292 = vld [vmem:[%s291] sm:%s4]
    %s293 = scalar_lea.vmem [#allocation0], 56
    %294 = vst [vmem:[%s293] sm:%s4] %v292
    %s295 = smul.addr 2, 6
    %s296 = scalar_lea.vmem %s0, %s295
    %v297 = vld [vmem:[%s296] sm:%s4]
    %s298 = scalar_lea.vmem [#allocation0], 48
    %299 = vst [vmem:[%s298] sm:%s4] %v297
    %s300 = smul.addr 2, 5
    %s301 = scalar_lea.vmem %s0, %s300
    %v302 = vld [vmem:[%s301] sm:%s4]
    %s303 = scalar_lea.vmem [#allocation0], 40
    %304 = vst [vmem:[%s303] sm:%s4] %v302
    %s305 = smul.addr 2, 4
    %s306 = scalar_lea.vmem %s0, %s305
    %v307 = vld [vmem:[%s306] sm:%s4]
    %s308 = scalar_lea.vmem [#allocation0], 32
    %309 = vst [vmem:[%s308] sm:%s4] %v307
    %s310 = smul.addr 2, 3
    %s311 = scalar_lea.vmem %s0, %s310
    %v312 = vld [vmem:[%s311] sm:%s4]
    %s313 = scalar_lea.vmem [#allocation0], 24
    %314 = vst [vmem:[%s313] sm:%s4] %v312
    %s315 = smul.addr 2, 2
    %s316 = scalar_lea.vmem %s0, %s315
    %v317 = vld [vmem:[%s316] sm:%s4]
    %s318 = scalar_lea.vmem [#allocation0], 16
    %319 = vst [vmem:[%s318] sm:%s4] %v317
    %s320 = scalar_lea.vmem %s0, 2
    %v321 = vld [vmem:[%s320] sm:%s4]
    %s322 = scalar_lea.vmem [#allocation0], 8
    %323 = vst [vmem:[%s322] sm:%s4] %v321
    %v324 = vld [vmem:[%s0] sm:%s4]
    %325 = vst [vmem:[#allocation0] sm:%s4] %v324
    %v326 = vld [vmem:[#allocation0] ss:$8 sm:$0xf]
    %v327 = vld [vmem:[#allocation0] ss:$8 sm:$0xf0]
    %vm328 = vcmask 1047556
    %v329 = vsel %vm328, %v327, %v326
    %vm330 = vcmask 818176
    %331 = vst.msk [vmem:[%s1] sm:$0xff] %vm330, %v329
    %s332 = scalar_lea.vmem [#allocation0], 64
    %v333 = vld [vmem:[%s332] ss:$8 sm:$0xf]
    %s334 = scalar_lea.vmem [#allocation0], 64
    %v335 = vld [vmem:[%s334] ss:$8 sm:$0xf0]
    %vm336 = vcmask 1047556
    %v337 = vsel %vm336, %v335, %v333
    %vm338 = vcmask 818176
    %s339 = scalar_lea.vmem %s1, 16
    %340 = vst.msk [vmem:[%s339] sm:$0xff] %vm338, %v337
    %s341 = scalar_lea.vmem [#allocation0], 128
    %v342 = vld [vmem:[%s341] ss:$8 sm:$0xf]
    %s343 = scalar_lea.vmem [#allocation0], 128
    %v344 = vld [vmem:[%s343] ss:$8 sm:$0xf0]
    %vm345 = vcmask 1047556
    %v346 = vsel %vm345, %v344, %v342
    %vm347 = vcmask 818176
    %s348 = scalar_lea.vmem %s1, 32
    %349 = vst.msk [vmem:[%s348] sm:$0xff] %vm347, %v346
    %s350 = scalar_lea.vmem [#allocation0], 192
    %v351 = vld [vmem:[%s350] ss:$8 sm:$0xf]
    %s352 = scalar_lea.vmem [#allocation0], 192
    %v353 = vld [vmem:[%s352] ss:$8 sm:$0xf0]
    %vm354 = vcmask 1047556
    %v355 = vsel %vm354, %v353, %v351
    %vm356 = vcmask 818176
    %s357 = scalar_lea.vmem %s1, 48
    %358 = vst.msk [vmem:[%s357] sm:$0xff] %vm356, %v355
    %s359 = scalar_lea.vmem [#allocation0], 256
    %v360 = vld [vmem:[%s359] ss:$8 sm:$0xf]
    %s361 = scalar_lea.vmem [#allocation0], 256
    %v362 = vld [vmem:[%s361] ss:$8 sm:$0xf0]
    %vm363 = vcmask 1047556
    %v364 = vsel %vm363, %v362, %v360
    %vm365 = vcmask 818176
    %s366 = scalar_lea.vmem %s1, 64
    %367 = vst.msk [vmem:[%s366] sm:$0xff] %vm365, %v364
    %s368 = scalar_lea.vmem [#allocation0], 320
    %v369 = vld [vmem:[%s368] ss:$8 sm:$0xf]
    %s370 = scalar_lea.vmem [#allocation0], 320
    %v371 = vld [vmem:[%s370] ss:$8 sm:$0xf0]
    %vm372 = vcmask 1047556
    %v373 = vsel %vm372, %v371, %v369
    %vm374 = vcmask 818176
    %s375 = scalar_lea.vmem %s1, 80
    %376 = vst.msk [vmem:[%s375] sm:$0xff] %vm374, %v373
    %s377 = scalar_lea.vmem [#allocation0], 384
    %v378 = vld [vmem:[%s377] ss:$8 sm:$0xf]
    %s379 = scalar_lea.vmem [#allocation0], 384
    %v380 = vld [vmem:[%s379] ss:$8 sm:$0xf0]
    %vm381 = vcmask 1047556
    %v382 = vsel %vm381, %v380, %v378
    %vm383 = vcmask 818176
    %s384 = scalar_lea.vmem %s1, 96
    %385 = vst.msk [vmem:[%s384] sm:$0xff] %vm383, %v382
    %s386 = scalar_lea.vmem [#allocation0], 448
    %v387 = vld [vmem:[%s386] ss:$8 sm:$0xf]
    %s388 = scalar_lea.vmem [#allocation0], 448
    %v389 = vld [vmem:[%s388] ss:$8 sm:$0xf0]
    %vm390 = vcmask 1047556
    %v391 = vsel %vm390, %v389, %v387
    %vm392 = vcmask 818176
    %s393 = scalar_lea.vmem %s1, 112
    %394 = vst.msk [vmem:[%s393] sm:$0xff] %vm392, %v391
    %s395 = scalar_lea.vmem [#allocation0], 512
    %v396 = vld [vmem:[%s395] sm:$0x1]
    %vm397 = vcmask 818176
    %s398 = scalar_lea.vmem %s1, 128
    %399 = vst.msk [vmem:[%s398] sm:$0x1] %vm397, %v396
    %s400 = scalar_lea.vmem [#allocation0], 1
    %v401 = vld [vmem:[%s400] ss:$8 sm:$0xf]
    %s402 = scalar_lea.vmem [#allocation0], 1
    %v403 = vld [vmem:[%s402] ss:$8 sm:$0xf0]
    %vm404 = vcmask 1047556
    %v405 = vsel %vm404, %v403, %v401
    %s406 = scalar_lea.vmem [#allocation0], 1
    %v407 = vld [vmem:[%s406] ss:$8 sm:$0xf]
    %s408 = scalar_lea.vmem [#allocation0], 1
    %v409 = vld [vmem:[%s408] ss:$8 sm:$0xf0]
    %vm410 = vcmask 1047556
    %v411 = vsel %vm410, %v409, %v407
    %vm412 = vcmask 228352
    %v413 = vsel %vm412, %v411, %v405
    %414 = vrot.lane.b32.xlu0 %v413, 100
    %v415 = vpop.permute.xlu0 %414
    %vm416 = vcmask 588800
    %s417 = scalar_lea.vmem %s1, 8
    %418 = vst.msk [vmem:[%s417] sm:$0xff] %vm416, %v415
    %vm419 = vcmask 1048352
    %420 = vst.msk [vmem:[%s1] sm:$0xff] %vm419, %v415
    %s421 = scalar_lea.vmem [#allocation0], 129
    %v422 = vld [vmem:[%s421] ss:$8 sm:$0xf]
    %s423 = scalar_lea.vmem [#allocation0], 129
    %v424 = vld [vmem:[%s423] ss:$8 sm:$0xf0]
    %vm425 = vcmask 1047556
    %v426 = vsel %vm425, %v424, %v422
    %s427 = scalar_lea.vmem [#allocation0], 129
    %v428 = vld [vmem:[%s427] ss:$8 sm:$0xf]
    %s429 = scalar_lea.vmem [#allocation0], 129
    %v430 = vld [vmem:[%s429] ss:$8 sm:$0xf0]
    %vm431 = vcmask 1047556
    %v432 = vsel %vm431, %v430, %v428
    %vm433 = vcmask 228352
    %v434 = vsel %vm433, %v432, %v426
    %435 = vrot.lane.b32.xlu0 %v434, 100
    %v436 = vpop.permute.xlu0 %435
    %vm437 = vcmask 588800
    %s438 = scalar_lea.vmem %s1, 40
    %439 = vst.msk [vmem:[%s438] sm:$0xff] %vm437, %v436
    %vm440 = vcmask 1048352
    %s441 = scalar_lea.vmem %s1, 32
    %442 = vst.msk [vmem:[%s441] sm:$0xff] %vm440, %v436
    %s443 = scalar_lea.vmem [#allocation0], 257
    %v444 = vld [vmem:[%s443] ss:$8 sm:$0xf]
    %s445 = scalar_lea.vmem [#allocation0], 257
    %v446 = vld [vmem:[%s445] ss:$8 sm:$0xf0]
    %vm447 = vcmask 1047556
    %v448 = vsel %vm447, %v446, %v444
    %s449 = scalar_lea.vmem [#allocation0], 257
    %v450 = vld [vmem:[%s449] ss:$8 sm:$0xf]
    %s451 = scalar_lea.vmem [#allocation0], 257
    %v452 = vld [vmem:[%s451] ss:$8 sm:$0xf0]
    %vm453 = vcmask 1047556
    %v454 = vsel %vm453, %v452, %v450
    %vm455 = vcmask 228352
    %v456 = vsel %vm455, %v454, %v448
    %457 = vrot.lane.b32.xlu0 %v456, 100
    %v458 = vpop.permute.xlu0 %457
    %vm459 = vcmask 588800
    %s460 = scalar_lea.vmem %s1, 72
    %461 = vst.msk [vmem:[%s460] sm:$0xff] %vm459, %v458
    %vm462 = vcmask 1048352
    %s463 = scalar_lea.vmem %s1, 64
    %464 = vst.msk [vmem:[%s463] sm:$0xff] %vm462, %v458
    %s465 = scalar_lea.vmem [#allocation0], 385
    %v466 = vld [vmem:[%s465] ss:$8 sm:$0xf]
    %s467 = scalar_lea.vmem [#allocation0], 385
    %v468 = vld [vmem:[%s467] ss:$8 sm:$0xf0]
    %vm469 = vcmask 1047556
    %v470 = vsel %vm469, %v468, %v466
    %s471 = scalar_lea.vmem [#allocation0], 385
    %v472 = vld [vmem:[%s471] ss:$8 sm:$0xf]
    %s473 = scalar_lea.vmem [#allocation0], 385
    %v474 = vld [vmem:[%s473] ss:$8 sm:$0xf0]
    %vm475 = vcmask 1047556
    %v476 = vsel %vm475, %v474, %v472
    %vm477 = vcmask 228352
    %v478 = vsel %vm477, %v476, %v470
    %479 = vrot.lane.b32.xlu0 %v478, 100
    %v480 = vpop.permute.xlu0 %479
    %vm481 = vcmask 588800
    %s482 = scalar_lea.vmem %s1, 104
    %483 = vst.msk [vmem:[%s482] sm:$0xff] %vm481, %v480
    %vm484 = vcmask 1048352
    %s485 = scalar_lea.vmem %s1, 96
    %486 = vst.msk [vmem:[%s485] sm:$0xff] %vm484, %v480
    %s487 = scalar_lea.vmem [#allocation0], 513
    %v488 = vld [vmem:[%s487] sm:$0x1]
    %s489 = scalar_lea.vmem [#allocation0], 57
    %v490 = vld [vmem:[%s489] ss:$8 sm:$0x1e]
    %vm491 = vcmask 1044481
    %v492 = vsel %vm491, %v490, %v488
    %s493 = scalar_lea.vmem [#allocation0], 57
    %v494 = vld [vmem:[%s493] ss:$8 sm:$0xe0]
    %vm495 = vcmask 1047557
    %v496 = vsel %vm495, %v494, %v492
    %s497 = scalar_lea.vmem [#allocation0], 513
    %v498 = vld [vmem:[%s497] sm:$0x1]
    %s499 = scalar_lea.vmem [#allocation0], 57
    %v500 = vld [vmem:[%s499] ss:$8 sm:$0x1e]
    %vm501 = vcmask 1044481
    %v502 = vsel %vm501, %v500, %v498
    %s503 = scalar_lea.vmem [#allocation0], 57
    %v504 = vld [vmem:[%s503] ss:$8 sm:$0xe0]
    %vm505 = vcmask 1047557
    %v506 = vsel %vm505, %v504, %v502
    %vm507 = vcmask 228352
    %v508 = vsel %vm507, %v506, %v496
    %509 = vrot.lane.b32.xlu0 %v508, 100
    %v510 = vpop.permute.xlu0 %509
    %vm511 = vcmask 588800
    %s512 = scalar_lea.vmem %s1, 136
    %513 = vst.msk [vmem:[%s512] ss:$-112 sm:$0x3] %vm511, %v510
    %s514 = scalar_lea.vmem %s1, 23
    %515 = vst.msk [vmem:[%s514] sm:$0xfc] %vm511, %v510
    %vm516 = vcmask 1048352
    %s517 = scalar_lea.vmem %s1, 128
    %518 = vst.msk [vmem:[%s517] ss:$-112 sm:$0x3] %vm516, %v510
    %s519 = scalar_lea.vmem %s1, 15
    %520 = vst.msk [vmem:[%s519] sm:$0xfc] %vm516, %v510
    %s521 = scalar_lea.vmem [#allocation0], 193
    %v522 = vld [vmem:[%s521] ss:$8 sm:$0xf]
    %s523 = scalar_lea.vmem [#allocation0], 193
    %v524 = vld [vmem:[%s523] ss:$8 sm:$0x70]
    %vm525 = vcmask 1046532
    %v526 = vsel %vm525, %v524, %v522
    %s527 = scalar_lea.vmem [#allocation0], 114
    %v528 = vld [vmem:[%s527] sm:$0x80]
    %vm529 = vcmask 1047559
    %v530 = vsel %vm529, %v528, %v526
    %s531 = scalar_lea.vmem [#allocation0], 193
    %v532 = vld [vmem:[%s531] ss:$8 sm:$0xf]
    %s533 = scalar_lea.vmem [#allocation0], 193
    %v534 = vld [vmem:[%s533] ss:$8 sm:$0x70]
    %vm535 = vcmask 1046532
    %v536 = vsel %vm535, %v534, %v532
    %s537 = scalar_lea.vmem [#allocation0], 114
    %v538 = vld [vmem:[%s537] sm:$0x80]
    %vm539 = vcmask 1047559
    %v540 = vsel %vm539, %v538, %v536
    %vm541 = vcmask 228352
    %v542 = vsel %vm541, %v540, %v530
    %543 = vrot.lane.b32.xlu0 %v542, 100
    %v544 = vpop.permute.xlu0 %543
    %vm545 = vcmask 588800
    %s546 = scalar_lea.vmem %s1, 56
    %547 = vst.msk [vmem:[%s546] sm:$0x7f] %vm545, %v544
    %s548 = scalar_lea.vmem %s1, 24
    %549 = vst.msk [vmem:[%s548] sm:$0x80] %vm545, %v544
    %vm550 = vcmask 1048352
    %s551 = scalar_lea.vmem %s1, 48
    %552 = vst.msk [vmem:[%s551] sm:$0x7f] %vm550, %v544
    %s553 = scalar_lea.vmem %s1, 16
    %554 = vst.msk [vmem:[%s553] sm:$0x80] %vm550, %v544
    %s555 = scalar_lea.vmem [#allocation0], 321
    %v556 = vld [vmem:[%s555] ss:$8 sm:$0xf]
    %s557 = scalar_lea.vmem [#allocation0], 321
    %v558 = vld [vmem:[%s557] ss:$8 sm:$0x70]
    %vm559 = vcmask 1046532
    %v560 = vsel %vm559, %v558, %v556
    %s561 = scalar_lea.vmem [#allocation0], 242
    %v562 = vld [vmem:[%s561] sm:$0x80]
    %vm563 = vcmask 1047559
    %v564 = vsel %vm563, %v562, %v560
    %s565 = scalar_lea.vmem [#allocation0], 321
    %v566 = vld [vmem:[%s565] ss:$8 sm:$0xf]
    %s567 = scalar_lea.vmem [#allocation0], 321
    %v568 = vld [vmem:[%s567] ss:$8 sm:$0x70]
    %vm569 = vcmask 1046532
    %v570 = vsel %vm569, %v568, %v566
    %s571 = scalar_lea.vmem [#allocation0], 242
    %v572 = vld [vmem:[%s571] sm:$0x80]
    %vm573 = vcmask 1047559
    %v574 = vsel %vm573, %v572, %v570
    %vm575 = vcmask 228352
    %v576 = vsel %vm575, %v574, %v564
    %577 = vrot.lane.b32.xlu0 %v576, 100
    %v578 = vpop.permute.xlu0 %577
    %vm579 = vcmask 588800
    %s580 = scalar_lea.vmem %s1, 88
    %581 = vst.msk [vmem:[%s580] sm:$0x7f] %vm579, %v578
    %s582 = scalar_lea.vmem %s1, 56
    %583 = vst.msk [vmem:[%s582] sm:$0x80] %vm579, %v578
    %vm584 = vcmask 1048352
    %s585 = scalar_lea.vmem %s1, 80
    %586 = vst.msk [vmem:[%s585] sm:$0x7f] %vm584, %v578
    %s587 = scalar_lea.vmem %s1, 48
    %588 = vst.msk [vmem:[%s587] sm:$0x80] %vm584, %v578
    %s589 = scalar_lea.vmem [#allocation0], 449
    %v590 = vld [vmem:[%s589] ss:$8 sm:$0xf]
    %s591 = scalar_lea.vmem [#allocation0], 449
    %v592 = vld [vmem:[%s591] ss:$8 sm:$0x70]
    %vm593 = vcmask 1046532
    %v594 = vsel %vm593, %v592, %v590
    %s595 = scalar_lea.vmem [#allocation0], 370
    %v596 = vld [vmem:[%s595] sm:$0x80]
    %vm597 = vcmask 1047559
    %v598 = vsel %vm597, %v596, %v594
    %s599 = scalar_lea.vmem [#allocation0], 449
    %v600 = vld [vmem:[%s599] ss:$8 sm:$0xf]
    %s601 = scalar_lea.vmem [#allocation0], 449
    %v602 = vld [vmem:[%s601] ss:$8 sm:$0x70]
    %vm603 = vcmask 1046532
    %v604 = vsel %vm603, %v602, %v600
    %s605 = scalar_lea.vmem [#allocation0], 370
    %v606 = vld [vmem:[%s605] sm:$0x80]
    %vm607 = vcmask 1047559
    %v608 = vsel %vm607, %v606, %v604
    %vm609 = vcmask 228352
    %v610 = vsel %vm609, %v608, %v598
    %611 = vrot.lane.b32.xlu0 %v610, 100
    %v612 = vpop.permute.xlu0 %611
    %vm613 = vcmask 588800
    %s614 = scalar_lea.vmem %s1, 120
    %615 = vst.msk [vmem:[%s614] sm:$0x7f] %vm613, %v612
    %s616 = scalar_lea.vmem %s1, 88
    %617 = vst.msk [vmem:[%s616] sm:$0x80] %vm613, %v612
    %vm618 = vcmask 1048352
    %s619 = scalar_lea.vmem %s1, 112
    %620 = vst.msk [vmem:[%s619] sm:$0x7f] %vm618, %v612
    %s621 = scalar_lea.vmem %s1, 80
    %622 = vst.msk [vmem:[%s621] sm:$0x80] %vm618, %v612
    %s623 = scalar_lea.vmem [#allocation0], 505
    %v624 = vld [vmem:[%s623] sm:$0x1]
    %s625 = scalar_lea.vmem [#allocation0], 505
    %v626 = vld [vmem:[%s625] sm:$0x1]
    %vm627 = vcmask 228352
    %v628 = vsel %vm627, %v626, %v624
    %629 = vrot.lane.b32.xlu0 %v628, 100
    %v630 = vpop.permute.xlu0 %629
    %vm631 = vcmask 588800
    %s632 = scalar_lea.vmem %s1, 127
    %633 = vst.msk [vmem:[%s632] sm:$0x1] %vm631, %v630
    %vm634 = vcmask 1048352
    %s635 = scalar_lea.vmem %s1, 119
    %636 = vst.msk [vmem:[%s635] sm:$0x1] %vm634, %v630

// kernel: tile.33
$region0: #{tile.33}
  %s0 = inlined_call_operand.vmem [shape: f32[2,100,256], index: 0, kind: input, shape index: {}]
  %s1 = inlined_call_operand.vmem [shape: f32[200,256], index: 1, kind: output, shape index: {}]
  %v2 = vld [vmem:[%s0] sm:$0xff]
  %3 = vst [vmem:[%s1] sm:$0xff] %v2
  %s4 = scalar_lea.vmem %s0, 8
  %v5 = vld [vmem:[%s4] sm:$0xff]
  %s6 = scalar_lea.vmem %s1, 8
  %7 = vst [vmem:[%s6] sm:$0xff] %v5
  %s8 = scalar_lea.vmem %s0, 16
  %v9 = vld [vmem:[%s8] sm:$0xff]
  %s10 = scalar_lea.vmem %s1, 16
  %11 = vst [vmem:[%s10] sm:$0xff] %v9
  %s12 = scalar_lea.vmem %s0, 24
  %v13 = vld [vmem:[%s12] sm:$0xff]
  %s14 = scalar_lea.vmem %s1, 24
  %15 = vst [vmem:[%s14] sm:$0xff] %v13
  %s16 = scalar_lea.vmem %s0, 32
  %v17 = vld [vmem:[%s16] sm:$0xff]
  %s18 = scalar_lea.vmem %s1, 32
  %19 = vst [vmem:[%s18] sm:$0xff] %v17
  %s20 = scalar_lea.vmem %s0, 40
  %v21 = vld [vmem:[%s20] sm:$0xff]
  %s22 = scalar_lea.vmem %s1, 40
  %23 = vst [vmem:[%s22] sm:$0xff] %v21
  %s24 = scalar_lea.vmem %s0, 48
  %v25 = vld [vmem:[%s24] sm:$0xff]
  %s26 = scalar_lea.vmem %s1, 48
  %27 = vst [vmem:[%s26] sm:$0xff] %v25
  %s28 = scalar_lea.vmem %s0, 56
  %v29 = vld [vmem:[%s28] sm:$0xff]
  %s30 = scalar_lea.vmem %s1, 56
  %31 = vst [vmem:[%s30] sm:$0xff] %v29
  %s32 = scalar_lea.vmem %s0, 64
  %v33 = vld [vmem:[%s32] sm:$0xff]
  %s34 = scalar_lea.vmem %s1, 64
  %35 = vst [vmem:[%s34] sm:$0xff] %v33
  %s36 = scalar_lea.vmem %s0, 72
  %v37 = vld [vmem:[%s36] sm:$0xff]
  %s38 = scalar_lea.vmem %s1, 72
  %39 = vst [vmem:[%s38] sm:$0xff] %v37
  %s40 = scalar_lea.vmem %s0, 80
  %v41 = vld [vmem:[%s40] sm:$0xff]
  %s42 = scalar_lea.vmem %s1, 80
  %43 = vst [vmem:[%s42] sm:$0xff] %v41
  %s44 = scalar_lea.vmem %s0, 88
  %v45 = vld [vmem:[%s44] sm:$0xff]
  %s46 = scalar_lea.vmem %s1, 88
  %47 = vst [vmem:[%s46] sm:$0xff] %v45
  %s48 = scalar_lea.vmem %s0, 96
  %v49 = vld [vmem:[%s48] sm:$0xff]
  %s50 = scalar_lea.vmem %s1, 96
  %51 = vst [vmem:[%s50] sm:$0xff] %v49
  %s52 = scalar_lea.vmem %s0, 104
  %v53 = vld [vmem:[%s52] sm:$0xff]
  %s54 = scalar_lea.vmem %s1, 104
  %55 = vst [vmem:[%s54] sm:$0xff] %v53
  %s56 = scalar_lea.vmem %s0, 112
  %v57 = vld [vmem:[%s56] sm:$0xff]
  %s58 = scalar_lea.vmem %s1, 112
  %59 = vst [vmem:[%s58] sm:$0xff] %v57
  %s60 = scalar_lea.vmem %s0, 120
  %v61 = vld [vmem:[%s60] sm:$0xff]
  %s62 = scalar_lea.vmem %s1, 120
  %63 = vst [vmem:[%s62] sm:$0xff] %v61
  %s64 = scalar_lea.vmem %s0, 128
  %v65 = vld [vmem:[%s64] sm:$0xff]
  %s66 = scalar_lea.vmem %s1, 128
  %67 = vst [vmem:[%s66] sm:$0xff] %v65
  %s68 = scalar_lea.vmem %s0, 136
  %v69 = vld [vmem:[%s68] sm:$0xff]
  %s70 = scalar_lea.vmem %s1, 136
  %71 = vst [vmem:[%s70] sm:$0xff] %v69
  %s72 = scalar_lea.vmem %s0, 144
  %v73 = vld [vmem:[%s72] sm:$0xff]
  %s74 = scalar_lea.vmem %s1, 144
  %75 = vst [vmem:[%s74] sm:$0xff] %v73
  %s76 = scalar_lea.vmem %s0, 152
  %v77 = vld [vmem:[%s76] sm:$0xff]
  %s78 = scalar_lea.vmem %s1, 152
  %79 = vst [vmem:[%s78] sm:$0xff] %v77
  %s80 = scalar_lea.vmem %s0, 160
  %v81 = vld [vmem:[%s80] sm:$0xff]
  %s82 = scalar_lea.vmem %s1, 160
  %83 = vst [vmem:[%s82] sm:$0xff] %v81
  %s84 = scalar_lea.vmem %s0, 168
  %v85 = vld [vmem:[%s84] sm:$0xff]
  %s86 = scalar_lea.vmem %s1, 168
  %87 = vst [vmem:[%s86] sm:$0xff] %v85
  %s88 = scalar_lea.vmem %s0, 176
  %v89 = vld [vmem:[%s88] sm:$0xff]
  %s90 = scalar_lea.vmem %s1, 176
  %91 = vst [vmem:[%s90] sm:$0xff] %v89
  %s92 = scalar_lea.vmem %s0, 184
  %v93 = vld [vmem:[%s92] sm:$0xff]
  %s94 = scalar_lea.vmem %s1, 184
  %95 = vst [vmem:[%s94] sm:$0xff] %v93
  %s96 = scalar_lea.vmem %s0, 192
  %v97 = vld [vmem:[%s96] sm:$0xf]
  %s98 = scalar_lea.vmem %s1, 192
  %99 = vst [vmem:[%s98] sm:$0xf] %v97
  %s100 = scalar_lea.vmem %s0, 200
  %v101 = vld [vmem:[%s100] sm:$0xf]
  %s102 = scalar_lea.vmem %s1, 200
  %103 = vst [vmem:[%s102] sm:$0xf] %v101
  %s104 = scalar_lea.vmem %s0, 208
  %v105 = vld [vmem:[%s104] sm:$0xff]
  %s106 = scalar_lea.vmem %s1, 196
  %107 = vst [vmem:[%s106] sm:$0xf] %v105
  %s108 = scalar_lea.vmem %s1, 204
  %109 = vst [vmem:[%s108] sm:$0xf0] %v105
  %s110 = scalar_lea.vmem %s0, 216
  %v111 = vld [vmem:[%s110] sm:$0xff]
  %s112 = scalar_lea.vmem %s1, 204
  %113 = vst [vmem:[%s112] sm:$0xf] %v111
  %s114 = scalar_lea.vmem %s1, 212
  %115 = vst [vmem:[%s114] sm:$0xf0] %v111
  %s116 = scalar_lea.vmem %s0, 224
  %v117 = vld [vmem:[%s116] sm:$0xff]
  %s118 = scalar_lea.vmem %s1, 212
  %119 = vst [vmem:[%s118] sm:$0xf] %v117
  %s120 = scalar_lea.vmem %s1, 220
  %121 = vst [vmem:[%s120] sm:$0xf0] %v117
  %s122 = scalar_lea.vmem %s0, 232
  %v123 = vld [vmem:[%s122] sm:$0xff]
  %s124 = scalar_lea.vmem %s1, 220
  %125 = vst [vmem:[%s124] sm:$0xf] %v123
  %s126 = scalar_lea.vmem %s1, 228
  %127 = vst [vmem:[%s126] sm:$0xf0] %v123
  %s128 = scalar_lea.vmem %s0, 240
  %v129 = vld [vmem:[%s128] sm:$0xff]
  %s130 = scalar_lea.vmem %s1, 228
  %131 = vst [vmem:[%s130] sm:$0xf] %v129
  %s132 = scalar_lea.vmem %s1, 236
  %133 = vst [vmem:[%s132] sm:$0xf0] %v129
  %s134 = scalar_lea.vmem %s0, 248
  %v135 = vld [vmem:[%s134] sm:$0xff]
  %s136 = scalar_lea.vmem %s1, 236
  %137 = vst [vmem:[%s136] sm:$0xf] %v135
  %s138 = scalar_lea.vmem %s1, 244
  %139 = vst [vmem:[%s138] sm:$0xf0] %v135
  %s140 = scalar_lea.vmem %s0, 256
  %v141 = vld [vmem:[%s140] sm:$0xff]
  %s142 = scalar_lea.vmem %s1, 244
  %143 = vst [vmem:[%s142] sm:$0xf] %v141
  %s144 = scalar_lea.vmem %s1, 252
  %145 = vst [vmem:[%s144] sm:$0xf0] %v141
  %s146 = scalar_lea.vmem %s0, 264
  %v147 = vld [vmem:[%s146] sm:$0xff]
  %s148 = scalar_lea.vmem %s1, 252
  %149 = vst [vmem:[%s148] sm:$0xf] %v147
  %s150 = scalar_lea.vmem %s1, 260
  %151 = vst [vmem:[%s150] sm:$0xf0] %v147
  %s152 = scalar_lea.vmem %s0, 272
  %v153 = vld [vmem:[%s152] sm:$0xff]
  %s154 = scalar_lea.vmem %s1, 260
  %155 = vst [vmem:[%s154] sm:$0xf] %v153
  %s156 = scalar_lea.vmem %s1, 268
  %157 = vst [vmem:[%s156] sm:$0xf0] %v153
  %s158 = scalar_lea.vmem %s0, 280
  %v159 = vld [vmem:[%s158] sm:$0xff]
  %s160 = scalar_lea.vmem %s1, 268
  %161 = vst [vmem:[%s160] sm:$0xf] %v159
  %s162 = scalar_lea.vmem %s1, 276
  %163 = vst [vmem:[%s162] sm:$0xf0] %v159
  %s164 = scalar_lea.vmem %s0, 288
  %v165 = vld [vmem:[%s164] sm:$0xff]
  %s166 = scalar_lea.vmem %s1, 276
  %167 = vst [vmem:[%s166] sm:$0xf] %v165
  %s168 = scalar_lea.vmem %s1, 284
  %169 = vst [vmem:[%s168] sm:$0xf0] %v165
  %s170 = scalar_lea.vmem %s0, 296
  %v171 = vld [vmem:[%s170] sm:$0xff]
  %s172 = scalar_lea.vmem %s1, 284
  %173 = vst [vmem:[%s172] sm:$0xf] %v171
  %s174 = scalar_lea.vmem %s1, 292
  %175 = vst [vmem:[%s174] sm:$0xf0] %v171
  %s176 = scalar_lea.vmem %s0, 304
  %v177 = vld [vmem:[%s176] sm:$0xff]
  %s178 = scalar_lea.vmem %s1, 292
  %179 = vst [vmem:[%s178] sm:$0xf] %v177
  %s180 = scalar_lea.vmem %s1, 300
  %181 = vst [vmem:[%s180] sm:$0xf0] %v177
  %s182 = scalar_lea.vmem %s0, 312
  %v183 = vld [vmem:[%s182] sm:$0xff]
  %s184 = scalar_lea.vmem %s1, 300
  %185 = vst [vmem:[%s184] sm:$0xf] %v183
  %s186 = scalar_lea.vmem %s1, 308
  %187 = vst [vmem:[%s186] sm:$0xf0] %v183
  %s188 = scalar_lea.vmem %s0, 320
  %v189 = vld [vmem:[%s188] sm:$0xff]
  %s190 = scalar_lea.vmem %s1, 308
  %191 = vst [vmem:[%s190] sm:$0xf] %v189
  %s192 = scalar_lea.vmem %s1, 316
  %193 = vst [vmem:[%s192] sm:$0xf0] %v189
  %s194 = scalar_lea.vmem %s0, 328
  %v195 = vld [vmem:[%s194] sm:$0xff]
  %s196 = scalar_lea.vmem %s1, 316
  %197 = vst [vmem:[%s196] sm:$0xf] %v195
  %s198 = scalar_lea.vmem %s1, 324
  %199 = vst [vmem:[%s198] sm:$0xf0] %v195
  %s200 = scalar_lea.vmem %s0, 336
  %v201 = vld [vmem:[%s200] sm:$0xff]
  %s202 = scalar_lea.vmem %s1, 324
  %203 = vst [vmem:[%s202] sm:$0xf] %v201
  %s204 = scalar_lea.vmem %s1, 332
  %205 = vst [vmem:[%s204] sm:$0xf0] %v201
  %s206 = scalar_lea.vmem %s0, 344
  %v207 = vld [vmem:[%s206] sm:$0xff]
  %s208 = scalar_lea.vmem %s1, 332
  %209 = vst [vmem:[%s208] sm:$0xf] %v207
  %s210 = scalar_lea.vmem %s1, 340
  %211 = vst [vmem:[%s210] sm:$0xf0] %v207
  %s212 = scalar_lea.vmem %s0, 352
  %v213 = vld [vmem:[%s212] sm:$0xff]
  %s214 = scalar_lea.vmem %s1, 340
  %215 = vst [vmem:[%s214] sm:$0xf] %v213
  %s216 = scalar_lea.vmem %s1, 348
  %217 = vst [vmem:[%s216] sm:$0xf0] %v213
  %s218 = scalar_lea.vmem %s0, 360
  %v219 = vld [vmem:[%s218] sm:$0xff]
  %s220 = scalar_lea.vmem %s1, 348
  %221 = vst [vmem:[%s220] sm:$0xf] %v219
  %s222 = scalar_lea.vmem %s1, 356
  %223 = vst [vmem:[%s222] sm:$0xf0] %v219
  %s224 = scalar_lea.vmem %s0, 368
  %v225 = vld [vmem:[%s224] sm:$0xff]
  %s226 = scalar_lea.vmem %s1, 356
  %227 = vst [vmem:[%s226] sm:$0xf] %v225
  %s228 = scalar_lea.vmem %s1, 364
  %229 = vst [vmem:[%s228] sm:$0xf0] %v225
  %s230 = scalar_lea.vmem %s0, 376
  %v231 = vld [vmem:[%s230] sm:$0xff]
  %s232 = scalar_lea.vmem %s1, 364
  %233 = vst [vmem:[%s232] sm:$0xf] %v231
  %s234 = scalar_lea.vmem %s1, 372
  %235 = vst [vmem:[%s234] sm:$0xf0] %v231
  %s236 = scalar_lea.vmem %s0, 384
  %v237 = vld [vmem:[%s236] sm:$0xff]
  %s238 = scalar_lea.vmem %s1, 372
  %239 = vst [vmem:[%s238] sm:$0xf] %v237
  %s240 = scalar_lea.vmem %s1, 380
  %241 = vst [vmem:[%s240] sm:$0xf0] %v237
  %s242 = scalar_lea.vmem %s0, 392
  %v243 = vld [vmem:[%s242] sm:$0xff]
  %s244 = scalar_lea.vmem %s1, 380
  %245 = vst [vmem:[%s244] sm:$0xf] %v243
  %s246 = scalar_lea.vmem %s1, 388
  %247 = vst [vmem:[%s246] sm:$0xf0] %v243
  %s248 = scalar_lea.vmem %s0, 400
  %v249 = vld [vmem:[%s248] sm:$0xf]
  %s250 = scalar_lea.vmem %s1, 388
  %251 = vst [vmem:[%s250] sm:$0xf] %v249
  %s252 = scalar_lea.vmem %s0, 408
  %v253 = vld [vmem:[%s252] sm:$0xf]
  %s254 = scalar_lea.vmem %s1, 396
  %255 = vst [vmem:[%s254] sm:$0xf] %v253

// kernel: tile.0
$region0: #{tile.0}
  %s0 = inlined_call_operand.vmem [shape: f32[2,100], index: 0, kind: input, shape index: {}]
  %s1 = inlined_call_operand.vmem [shape: f32[200,1], index: 1, kind: output, shape index: {}]
  $region1: #{tile.0} parent=0
    #allocation0 [shape = 'u8[4096]{0}', space=vmem, size = 0x1000, scoped, tag = 'scoped mem for input reshape']
    %s3 = sshll.u32 1, 2
    %s4 = ssub.s32 %s3, 1
    %v5 = vld [vmem:[%s0] sm:%s4]
    %6 = vst [vmem:[#allocation0] sm:%s4] %v5
    %v7 = vld [vmem:[#allocation0] sm:$0x3]
    %vm8 = vcmask 7168
    %9 = vst.msk [vmem:[%s1] ss:$100 sm:$0x3] %vm8, %v7
    %v10 = vld [vmem:[#allocation0] sm:$0x3]
    %11 = vrot.lane.b32.xlu0 %v10, 127
    %v12 = vpop.permute.xlu0 %11
    %vm13 = vcmask 7168
    %s14 = scalar_lea.vmem %s1, 1
    %15 = vst.msk [vmem:[%s14] ss:$100 sm:$0x3] %vm13, %v12
    %v16 = vld [vmem:[#allocation0] sm:$0x3]
    %17 = vrot.lane.b32.xlu0 %v16, 126
    %v18 = vpop.permute.xlu0 %17
    %vm19 = vcmask 7168
    %s20 = scalar_lea.vmem %s1, 2
    %21 = vst.msk [vmem:[%s20] ss:$100 sm:$0x3] %vm19, %v18
    %v22 = vld [vmem:[#allocation0] sm:$0x3]
    %23 = vrot.lane.b32.xlu0 %v22, 125
    %v24 = vpop.permute.xlu0 %23
    %vm25 = vcmask 7168
    %s26 = scalar_lea.vmem %s1, 3
    %27 = vst.msk [vmem:[%s26] ss:$100 sm:$0x3] %vm25, %v24
    %v28 = vld [vmem:[#allocation0] sm:$0x3]
    %29 = vrot.lane.b32.xlu0 %v28, 124
    %v30 = vpop.permute.xlu0 %29
    %vm31 = vcmask 7168
    %s32 = scalar_lea.vmem %s1, 4
    %33 = vst.msk [vmem:[%s32] ss:$100 sm:$0x3] %vm31, %v30
    %v34 = vld [vmem:[#allocation0] sm:$0x3]
    %35 = vrot.lane.b32.xlu0 %v34, 123
    %v36 = vpop.permute.xlu0 %35
    %vm37 = vcmask 7168
    %s38 = scalar_lea.vmem %s1, 5
    %39 = vst.msk [vmem:[%s38] ss:$100 sm:$0x3] %vm37, %v36
    %v40 = vld [vmem:[#allocation0] sm:$0x3]
    %41 = vrot.lane.b32.xlu0 %v40, 122
    %v42 = vpop.permute.xlu0 %41
    %vm43 = vcmask 7168
    %s44 = scalar_lea.vmem %s1, 6
    %45 = vst.msk [vmem:[%s44] ss:$100 sm:$0x3] %vm43, %v42
    %v46 = vld [vmem:[#allocation0] sm:$0x3]
    %47 = vrot.lane.b32.xlu0 %v46, 121
    %v48 = vpop.permute.xlu0 %47
    %vm49 = vcmask 7168
    %s50 = scalar_lea.vmem %s1, 7
    %51 = vst.msk [vmem:[%s50] ss:$100 sm:$0x3] %vm49, %v48
    %v52 = vld [vmem:[#allocation0] sm:$0x3]
    %53 = vrot.lane.b32.xlu0 %v52, 120
    %v54 = vpop.permute.xlu0 %53
    %vm55 = vcmask 7168
    %s56 = scalar_lea.vmem %s1, 8
    %57 = vst.msk [vmem:[%s56] ss:$100 sm:$0x3] %vm55, %v54
    %v58 = vld [vmem:[#allocation0] sm:$0x3]
    %59 = vrot.lane.b32.xlu0 %v58, 119
    %v60 = vpop.permute.xlu0 %59
    %vm61 = vcmask 7168
    %s62 = scalar_lea.vmem %s1, 9
    %63 = vst.msk [vmem:[%s62] ss:$100 sm:$0x3] %vm61, %v60
    %v64 = vld [vmem:[#allocation0] sm:$0x3]
    %65 = vrot.lane.b32.xlu0 %v64, 118
    %v66 = vpop.permute.xlu0 %65
    %vm67 = vcmask 7168
    %s68 = scalar_lea.vmem %s1, 10
    %69 = vst.msk [vmem:[%s68] ss:$100 sm:$0x3] %vm67, %v66
    %v70 = vld [vmem:[#allocation0] sm:$0x3]
    %71 = vrot.lane.b32.xlu0 %v70, 117
    %v72 = vpop.permute.xlu0 %71
    %vm73 = vcmask 7168
    %s74 = scalar_lea.vmem %s1, 11
    %75 = vst.msk [vmem:[%s74] ss:$100 sm:$0x3] %vm73, %v72
    %v76 = vld [vmem:[#allocation0] sm:$0x3]
    %77 = vrot.lane.b32.xlu0 %v76, 116
    %v78 = vpop.permute.xlu0 %77
    %vm79 = vcmask 7168
    %s80 = scalar_lea.vmem %s1, 12
    %81 = vst.msk [vmem:[%s80] ss:$100 sm:$0x3] %vm79, %v78
    %v82 = vld [vmem:[#allocation0] sm:$0x3]
    %83 = vrot.lane.b32.xlu0 %v82, 115
    %v84 = vpop.permute.xlu0 %83
    %vm85 = vcmask 7168
    %s86 = scalar_lea.vmem %s1, 13
    %87 = vst.msk [vmem:[%s86] ss:$100 sm:$0x3] %vm85, %v84
    %v88 = vld [vmem:[#allocation0] sm:$0x3]
    %89 = vrot.lane.b32.xlu0 %v88, 114
    %v90 = vpop.permute.xlu0 %89
    %vm91 = vcmask 7168
    %s92 = scalar_lea.vmem %s1, 14
    %93 = vst.msk [vmem:[%s92] ss:$100 sm:$0x3] %vm91, %v90
    %v94 = vld [vmem:[#allocation0] sm:$0x3]
    %95 = vrot.lane.b32.xlu0 %v94, 113
    %v96 = vpop.permute.xlu0 %95
    %vm97 = vcmask 7168
    %s98 = scalar_lea.vmem %s1, 15
    %99 = vst.msk [vmem:[%s98] ss:$100 sm:$0x3] %vm97, %v96
    %v100 = vld [vmem:[#allocation0] sm:$0x3]
    %101 = vrot.lane.b32.xlu0 %v100, 112
    %v102 = vpop.permute.xlu0 %101
    %vm103 = vcmask 7168
    %s104 = scalar_lea.vmem %s1, 16
    %105 = vst.msk [vmem:[%s104] ss:$100 sm:$0x3] %vm103, %v102
    %v106 = vld [vmem:[#allocation0] sm:$0x3]
    %107 = vrot.lane.b32.xlu0 %v106, 111
    %v108 = vpop.permute.xlu0 %107
    %vm109 = vcmask 7168
    %s110 = scalar_lea.vmem %s1, 17
    %111 = vst.msk [vmem:[%s110] ss:$100 sm:$0x3] %vm109, %v108
    %v112 = vld [vmem:[#allocation0] sm:$0x3]
    %113 = vrot.lane.b32.xlu0 %v112, 110
    %v114 = vpop.permute.xlu0 %113
    %vm115 = vcmask 7168
    %s116 = scalar_lea.vmem %s1, 18
    %117 = vst.msk [vmem:[%s116] ss:$100 sm:$0x3] %vm115, %v114
    %v118 = vld [vmem:[#allocation0] sm:$0x3]
    %119 = vrot.lane.b32.xlu0 %v118, 109
    %v120 = vpop.permute.xlu0 %119
    %vm121 = vcmask 7168
    %s122 = scalar_lea.vmem %s1, 19
    %123 = vst.msk [vmem:[%s122] ss:$100 sm:$0x3] %vm121, %v120
    %v124 = vld [vmem:[#allocation0] sm:$0x3]
    %125 = vrot.lane.b32.xlu0 %v124, 108
    %v126 = vpop.permute.xlu0 %125
    %vm127 = vcmask 7168
    %s128 = scalar_lea.vmem %s1, 20
    %129 = vst.msk [vmem:[%s128] ss:$100 sm:$0x3] %vm127, %v126
    %v130 = vld [vmem:[#allocation0] sm:$0x3]
    %131 = vrot.lane.b32.xlu0 %v130, 107
    %v132 = vpop.permute.xlu0 %131
    %vm133 = vcmask 7168
    %s134 = scalar_lea.vmem %s1, 21
    %135 = vst.msk [vmem:[%s134] ss:$100 sm:$0x3] %vm133, %v132
    %v136 = vld [vmem:[#allocation0] sm:$0x3]
    %137 = vrot.lane.b32.xlu0 %v136, 106
    %v138 = vpop.permute.xlu0 %137
    %vm139 = vcmask 7168
    %s140 = scalar_lea.vmem %s1, 22
    %141 = vst.msk [vmem:[%s140] ss:$100 sm:$0x3] %vm139, %v138
    %v142 = vld [vmem:[#allocation0] sm:$0x3]
    %143 = vrot.lane.b32.xlu0 %v142, 105
    %v144 = vpop.permute.xlu0 %143
    %vm145 = vcmask 7168
    %s146 = scalar_lea.vmem %s1, 23
    %147 = vst.msk [vmem:[%s146] ss:$100 sm:$0x3] %vm145, %v144
    %v148 = vld [vmem:[#allocation0] sm:$0x3]
    %149 = vrot.lane.b32.xlu0 %v148, 104
    %v150 = vpop.permute.xlu0 %149
    %vm151 = vcmask 7168
    %s152 = scalar_lea.vmem %s1, 24
    %153 = vst.msk [vmem:[%s152] ss:$100 sm:$0x3] %vm151, %v150
    %v154 = vld [vmem:[#allocation0] sm:$0x3]
    %155 = vrot.lane.b32.xlu0 %v154, 103
    %v156 = vpop.permute.xlu0 %155
    %vm157 = vcmask 7168
    %s158 = scalar_lea.vmem %s1, 25
    %159 = vst.msk [vmem:[%s158] ss:$100 sm:$0x3] %vm157, %v156
    %v160 = vld [vmem:[#allocation0] sm:$0x3]
    %161 = vrot.lane.b32.xlu0 %v160, 102
    %v162 = vpop.permute.xlu0 %161
    %vm163 = vcmask 7168
    %s164 = scalar_lea.vmem %s1, 26
    %165 = vst.msk [vmem:[%s164] ss:$100 sm:$0x3] %vm163, %v162
    %v166 = vld [vmem:[#allocation0] sm:$0x3]
    %167 = vrot.lane.b32.xlu0 %v166, 101
    %v168 = vpop.permute.xlu0 %167
    %vm169 = vcmask 7168
    %s170 = scalar_lea.vmem %s1, 27
    %171 = vst.msk [vmem:[%s170] ss:$100 sm:$0x3] %vm169, %v168
    %s172 = scalar_lea.vmem [#allocation0], 1
    %s173 = smov 3
    %v174 = vld [vmem:[%s172] ss:$-1 sm:%s173]
    %175 = vrot.lane.b32.xlu0 %v174, 100
    %v176 = vpop.permute.xlu0 %175
    %vm177 = vcmask 7168
    %s178 = scalar_lea.vmem %s1, 128
    %179 = vst.msk [vmem:[%s178] ss:$-100 sm:$0x3] %vm177, %v176
    %s180 = scalar_lea.vmem [#allocation0], 1
    %s181 = smov 3
    %v182 = vld [vmem:[%s180] ss:$-1 sm:%s181]
    %183 = vrot.lane.b32.xlu0 %v182, 99
    %v184 = vpop.permute.xlu0 %183
    %vm185 = vcmask 7168
    %s186 = scalar_lea.vmem %s1, 129
    %187 = vst.msk [vmem:[%s186] ss:$-100 sm:$0x3] %vm185, %v184
    %s188 = scalar_lea.vmem [#allocation0], 1
    %s189 = smov 3
    %v190 = vld [vmem:[%s188] ss:$-1 sm:%s189]
    %191 = vrot.lane.b32.xlu0 %v190, 98
    %v192 = vpop.permute.xlu0 %191
    %vm193 = vcmask 7168
    %s194 = scalar_lea.vmem %s1, 130
    %195 = vst.msk [vmem:[%s194] ss:$-100 sm:$0x3] %vm193, %v192
    %s196 = scalar_lea.vmem [#allocation0], 1
    %s197 = smov 3
    %v198 = vld [vmem:[%s196] ss:$-1 sm:%s197]
    %199 = vrot.lane.b32.xlu0 %v198, 97
    %v200 = vpop.permute.xlu0 %199
    %vm201 = vcmask 7168
    %s202 = scalar_lea.vmem %s1, 131
    %203 = vst.msk [vmem:[%s202] ss:$-100 sm:$0x3] %vm201, %v200
    %v204 = vld [vmem:[#allocation0] sm:$0x3]
    %205 = vrot.lane.b32.xlu0 %v204, 96
    %v206 = vpop.permute.xlu0 %205
    %vm207 = vcmask 7168
    %s208 = scalar_lea.vmem %s1, 32
    %209 = vst.msk [vmem:[%s208] ss:$100 sm:$0x3] %vm207, %v206
    %v210 = vld [vmem:[#allocation0] sm:$0x3]
    %211 = vrot.lane.b32.xlu0 %v210, 95
    %v212 = vpop.permute.xlu0 %211
    %vm213 = vcmask 7168
    %s214 = scalar_lea.vmem %s1, 33
    %215 = vst.msk [vmem:[%s214] ss:$100 sm:$0x3] %vm213, %v212
    %v216 = vld [vmem:[#allocation0] sm:$0x3]
    %217 = vrot.lane.b32.xlu0 %v216, 94
    %v218 = vpop.permute.xlu0 %217
    %vm219 = vcmask 7168
    %s220 = scalar_lea.vmem %s1, 34
    %221 = vst.msk [vmem:[%s220] ss:$100 sm:$0x3] %vm219, %v218
    %v222 = vld [vmem:[#allocation0] sm:$0x3]
    %223 = vrot.lane.b32.xlu0 %v222, 93
    %v224 = vpop.permute.xlu0 %223
    %vm225 = vcmask 7168
    %s226 = scalar_lea.vmem %s1, 35
    %227 = vst.msk [vmem:[%s226] ss:$100 sm:$0x3] %vm225, %v224
    %v228 = vld [vmem:[#allocation0] sm:$0x3]
    %229 = vrot.lane.b32.xlu0 %v228, 92
    %v230 = vpop.permute.xlu0 %229
    %vm231 = vcmask 7168
    %s232 = scalar_lea.vmem %s1, 36
    %233 = vst.msk [vmem:[%s232] ss:$100 sm:$0x3] %vm231, %v230
    %v234 = vld [vmem:[#allocation0] sm:$0x3]
    %235 = vrot.lane.b32.xlu0 %v234, 91
    %v236 = vpop.permute.xlu0 %235
    %vm237 = vcmask 7168
    %s238 = scalar_lea.vmem %s1, 37
    %239 = vst.msk [vmem:[%s238] ss:$100 sm:$0x3] %vm237, %v236
    %v240 = vld [vmem:[#allocation0] sm:$0x3]
    %241 = vrot.lane.b32.xlu0 %v240, 90
    %v242 = vpop.permute.xlu0 %241
    %vm243 = vcmask 7168
    %s244 = scalar_lea.vmem %s1, 38
    %245 = vst.msk [vmem:[%s244] ss:$100 sm:$0x3] %vm243, %v242
    %v246 = vld [vmem:[#allocation0] sm:$0x3]
    %247 = vrot.lane.b32.xlu0 %v246, 89
    %v248 = vpop.permute.xlu0 %247
    %vm249 = vcmask 7168
    %s250 = scalar_lea.vmem %s1, 39
    %251 = vst.msk [vmem:[%s250] ss:$100 sm:$0x3] %vm249, %v248
    %v252 = vld [vmem:[#allocation0] sm:$0x3]
    %253 = vrot.lane.b32.xlu0 %v252, 88
    %v254 = vpop.permute.xlu0 %253
    %vm255 = vcmask 7168
    %s256 = scalar_lea.vmem %s1, 40
    %257 = vst.msk [vmem:[%s256] ss:$100 sm:$0x3] %vm255, %v254
    %v258 = vld [vmem:[#allocation0] sm:$0x3]
    %259 = vrot.lane.b32.xlu0 %v258, 87
    %v260 = vpop.permute.xlu0 %259
    %vm261 = vcmask 7168
    %s262 = scalar_lea.vmem %s1, 41
    %263 = vst.msk [vmem:[%s262] ss:$100 sm:$0x3] %vm261, %v260
    %v264 = vld [vmem:[#allocation0] sm:$0x3]
    %265 = vrot.lane.b32.xlu0 %v264, 86
    %v266 = vpop.permute.xlu0 %265
    %vm267 = vcmask 7168
    %s268 = scalar_lea.vmem %s1, 42
    %269 = vst.msk [vmem:[%s268] ss:$100 sm:$0x3] %vm267, %v266
    %v270 = vld [vmem:[#allocation0] sm:$0x3]
    %271 = vrot.lane.b32.xlu0 %v270, 85
    %v272 = vpop.permute.xlu0 %271
    %vm273 = vcmask 7168
    %s274 = scalar_lea.vmem %s1, 43
    %275 = vst.msk [vmem:[%s274] ss:$100 sm:$0x3] %vm273, %v272
    %v276 = vld [vmem:[#allocation0] sm:$0x3]
    %277 = vrot.lane.b32.xlu0 %v276, 84
    %v278 = vpop.permute.xlu0 %277
    %vm279 = vcmask 7168
    %s280 = scalar_lea.vmem %s1, 44
    %281 = vst.msk [vmem:[%s280] ss:$100 sm:$0x3] %vm279, %v278
    %v282 = vld [vmem:[#allocation0] sm:$0x3]
    %283 = vrot.lane.b32.xlu0 %v282, 83
    %v284 = vpop.permute.xlu0 %283
    %vm285 = vcmask 7168
    %s286 = scalar_lea.vmem %s1, 45
    %287 = vst.msk [vmem:[%s286] ss:$100 sm:$0x3] %vm285, %v284
    %v288 = vld [vmem:[#allocation0] sm:$0x3]
    %289 = vrot.lane.b32.xlu0 %v288, 82
    %v290 = vpop.permute.xlu0 %289
    %vm291 = vcmask 7168
    %s292 = scalar_lea.vmem %s1, 46
    %293 = vst.msk [vmem:[%s292] ss:$100 sm:$0x3] %vm291, %v290
    %v294 = vld [vmem:[#allocation0] sm:$0x3]
    %295 = vrot.lane.b32.xlu0 %v294, 81
    %v296 = vpop.permute.xlu0 %295
    %vm297 = vcmask 7168
    %s298 = scalar_lea.vmem %s1, 47
    %299 = vst.msk [vmem:[%s298] ss:$100 sm:$0x3] %vm297, %v296
    %v300 = vld [vmem:[#allocation0] sm:$0x3]
    %301 = vrot.lane.b32.xlu0 %v300, 80
    %v302 = vpop.permute.xlu0 %301
    %vm303 = vcmask 7168
    %s304 = scalar_lea.vmem %s1, 48
    %305 = vst.msk [vmem:[%s304] ss:$100 sm:$0x3] %vm303, %v302
    %v306 = vld [vmem:[#allocation0] sm:$0x3]
    %307 = vrot.lane.b32.xlu0 %v306, 79
    %v308 = vpop.permute.xlu0 %307
    %vm309 = vcmask 7168
    %s310 = scalar_lea.vmem %s1, 49
    %311 = vst.msk [vmem:[%s310] ss:$100 sm:$0x3] %vm309, %v308
    %v312 = vld [vmem:[#allocation0] sm:$0x3]
    %313 = vrot.lane.b32.xlu0 %v312, 78
    %v314 = vpop.permute.xlu0 %313
    %vm315 = vcmask 7168
    %s316 = scalar_lea.vmem %s1, 50
    %317 = vst.msk [vmem:[%s316] ss:$100 sm:$0x3] %vm315, %v314
    %v318 = vld [vmem:[#allocation0] sm:$0x3]
    %319 = vrot.lane.b32.xlu0 %v318, 77
    %v320 = vpop.permute.xlu0 %319
    %vm321 = vcmask 7168
    %s322 = scalar_lea.vmem %s1, 51
    %323 = vst.msk [vmem:[%s322] ss:$100 sm:$0x3] %vm321, %v320
    %v324 = vld [vmem:[#allocation0] sm:$0x3]
    %325 = vrot.lane.b32.xlu0 %v324, 76
    %v326 = vpop.permute.xlu0 %325
    %vm327 = vcmask 7168
    %s328 = scalar_lea.vmem %s1, 52
    %329 = vst.msk [vmem:[%s328] ss:$100 sm:$0x3] %vm327, %v326
    %v330 = vld [vmem:[#allocation0] sm:$0x3]
    %331 = vrot.lane.b32.xlu0 %v330, 75
    %v332 = vpop.permute.xlu0 %331
    %vm333 = vcmask 7168
    %s334 = scalar_lea.vmem %s1, 53
    %335 = vst.msk [vmem:[%s334] ss:$100 sm:$0x3] %vm333, %v332
    %v336 = vld [vmem:[#allocation0] sm:$0x3]
    %337 = vrot.lane.b32.xlu0 %v336, 74
    %v338 = vpop.permute.xlu0 %337
    %vm339 = vcmask 7168
    %s340 = scalar_lea.vmem %s1, 54
    %341 = vst.msk [vmem:[%s340] ss:$100 sm:$0x3] %vm339, %v338
    %v342 = vld [vmem:[#allocation0] sm:$0x3]
    %343 = vrot.lane.b32.xlu0 %v342, 73
    %v344 = vpop.permute.xlu0 %343
    %vm345 = vcmask 7168
    %s346 = scalar_lea.vmem %s1, 55
    %347 = vst.msk [vmem:[%s346] ss:$100 sm:$0x3] %vm345, %v344
    %v348 = vld [vmem:[#allocation0] sm:$0x3]
    %349 = vrot.lane.b32.xlu0 %v348, 72
    %v350 = vpop.permute.xlu0 %349
    %vm351 = vcmask 7168
    %s352 = scalar_lea.vmem %s1, 56
    %353 = vst.msk [vmem:[%s352] ss:$100 sm:$0x3] %vm351, %v350
    %v354 = vld [vmem:[#allocation0] sm:$0x3]
    %355 = vrot.lane.b32.xlu0 %v354, 71
    %v356 = vpop.permute.xlu0 %355
    %vm357 = vcmask 7168
    %s358 = scalar_lea.vmem %s1, 57
    %359 = vst.msk [vmem:[%s358] ss:$100 sm:$0x3] %vm357, %v356
    %v360 = vld [vmem:[#allocation0] sm:$0x3]
    %361 = vrot.lane.b32.xlu0 %v360, 70
    %v362 = vpop.permute.xlu0 %361
    %vm363 = vcmask 7168
    %s364 = scalar_lea.vmem %s1, 58
    %365 = vst.msk [vmem:[%s364] ss:$100 sm:$0x3] %vm363, %v362
    %v366 = vld [vmem:[#allocation0] sm:$0x3]
    %367 = vrot.lane.b32.xlu0 %v366, 69
    %v368 = vpop.permute.xlu0 %367
    %vm369 = vcmask 7168
    %s370 = scalar_lea.vmem %s1, 59
    %371 = vst.msk [vmem:[%s370] ss:$100 sm:$0x3] %vm369, %v368
    %s372 = scalar_lea.vmem [#allocation0], 1
    %s373 = smov 3
    %v374 = vld [vmem:[%s372] ss:$-1 sm:%s373]
    %375 = vrot.lane.b32.xlu0 %v374, 68
    %v376 = vpop.permute.xlu0 %375
    %vm377 = vcmask 7168
    %s378 = scalar_lea.vmem %s1, 160
    %379 = vst.msk [vmem:[%s378] ss:$-100 sm:$0x3] %vm377, %v376
    %s380 = scalar_lea.vmem [#allocation0], 1
    %s381 = smov 3
    %v382 = vld [vmem:[%s380] ss:$-1 sm:%s381]
    %383 = vrot.lane.b32.xlu0 %v382, 67
    %v384 = vpop.permute.xlu0 %383
    %vm385 = vcmask 7168
    %s386 = scalar_lea.vmem %s1, 161
    %387 = vst.msk [vmem:[%s386] ss:$-100 sm:$0x3] %vm385, %v384
    %s388 = scalar_lea.vmem [#allocation0], 1
    %s389 = smov 3
    %v390 = vld [vmem:[%s388] ss:$-1 sm:%s389]
    %391 = vrot.lane.b32.xlu0 %v390, 66
    %v392 = vpop.permute.xlu0 %391
    %vm393 = vcmask 7168
    %s394 = scalar_lea.vmem %s1, 162
    %395 = vst.msk [vmem:[%s394] ss:$-100 sm:$0x3] %vm393, %v392
    %s396 = scalar_lea.vmem [#allocation0], 1
    %s397 = smov 3
    %v398 = vld [vmem:[%s396] ss:$-1 sm:%s397]
    %399 = vrot.lane.b32.xlu0 %v398, 65
    %v400 = vpop.permute.xlu0 %399
    %vm401 = vcmask 7168
    %s402 = scalar_lea.vmem %s1, 163
    %403 = vst.msk [vmem:[%s402] ss:$-100 sm:$0x3] %vm401, %v400
    %v404 = vld [vmem:[#allocation0] sm:$0x3]
    %405 = vrot.lane.b32.xlu0 %v404, 64
    %v406 = vpop.permute.xlu0 %405
    %vm407 = vcmask 7168
    %s408 = scalar_lea.vmem %s1, 64
    %409 = vst.msk [vmem:[%s408] ss:$100 sm:$0x3] %vm407, %v406
    %v410 = vld [vmem:[#allocation0] sm:$0x3]
    %411 = vrot.lane.b32.xlu0 %v410, 63
    %v412 = vpop.permute.xlu0 %411
    %vm413 = vcmask 7168
    %s414 = scalar_lea.vmem %s1, 65
    %415 = vst.msk [vmem:[%s414] ss:$100 sm:$0x3] %vm413, %v412
    %v416 = vld [vmem:[#allocation0] sm:$0x3]
    %417 = vrot.lane.b32.xlu0 %v416, 62
    %v418 = vpop.permute.xlu0 %417
    %vm419 = vcmask 7168
    %s420 = scalar_lea.vmem %s1, 66
    %421 = vst.msk [vmem:[%s420] ss:$100 sm:$0x3] %vm419, %v418
    %v422 = vld [vmem:[#allocation0] sm:$0x3]
    %423 = vrot.lane.b32.xlu0 %v422, 61
    %v424 = vpop.permute.xlu0 %423
    %vm425 = vcmask 7168
    %s426 = scalar_lea.vmem %s1, 67
    %427 = vst.msk [vmem:[%s426] ss:$100 sm:$0x3] %vm425, %v424
    %v428 = vld [vmem:[#allocation0] sm:$0x3]
    %429 = vrot.lane.b32.xlu0 %v428, 60
    %v430 = vpop.permute.xlu0 %429
    %vm431 = vcmask 7168
    %s432 = scalar_lea.vmem %s1, 68
    %433 = vst.msk [vmem:[%s432] ss:$100 sm:$0x3] %vm431, %v430
    %v434 = vld [vmem:[#allocation0] sm:$0x3]
    %435 = vrot.lane.b32.xlu0 %v434, 59
    %v436 = vpop.permute.xlu0 %435
    %vm437 = vcmask 7168
    %s438 = scalar_lea.vmem %s1, 69
    %439 = vst.msk [vmem:[%s438] ss:$100 sm:$0x3] %vm437, %v436
    %v440 = vld [vmem:[#allocation0] sm:$0x3]
    %441 = vrot.lane.b32.xlu0 %v440, 58
    %v442 = vpop.permute.xlu0 %441
    %vm443 = vcmask 7168
    %s444 = scalar_lea.vmem %s1, 70
    %445 = vst.msk [vmem:[%s444] ss:$100 sm:$0x3] %vm443, %v442
    %v446 = vld [vmem:[#allocation0] sm:$0x3]
    %447 = vrot.lane.b32.xlu0 %v446, 57
    %v448 = vpop.permute.xlu0 %447
    %vm449 = vcmask 7168
    %s450 = scalar_lea.vmem %s1, 71
    %451 = vst.msk [vmem:[%s450] ss:$100 sm:$0x3] %vm449, %v448
    %v452 = vld [vmem:[#allocation0] sm:$0x3]
    %453 = vrot.lane.b32.xlu0 %v452, 56
    %v454 = vpop.permute.xlu0 %453
    %vm455 = vcmask 7168
    %s456 = scalar_lea.vmem %s1, 72
    %457 = vst.msk [vmem:[%s456] ss:$100 sm:$0x3] %vm455, %v454
    %v458 = vld [vmem:[#allocation0] sm:$0x3]
    %459 = vrot.lane.b32.xlu0 %v458, 55
    %v460 = vpop.permute.xlu0 %459
    %vm461 = vcmask 7168
    %s462 = scalar_lea.vmem %s1, 73
    %463 = vst.msk [vmem:[%s462] ss:$100 sm:$0x3] %vm461, %v460
    %v464 = vld [vmem:[#allocation0] sm:$0x3]
    %465 = vrot.lane.b32.xlu0 %v464, 54
    %v466 = vpop.permute.xlu0 %465
    %vm467 = vcmask 7168
    %s468 = scalar_lea.vmem %s1, 74
    %469 = vst.msk [vmem:[%s468] ss:$100 sm:$0x3] %vm467, %v466
    %v470 = vld [vmem:[#allocation0] sm:$0x3]
    %471 = vrot.lane.b32.xlu0 %v470, 53
    %v472 = vpop.permute.xlu0 %471
    %vm473 = vcmask 7168
    %s474 = scalar_lea.vmem %s1, 75
    %475 = vst.msk [vmem:[%s474] ss:$100 sm:$0x3] %vm473, %v472
    %v476 = vld [vmem:[#allocation0] sm:$0x3]
    %477 = vrot.lane.b32.xlu0 %v476, 52
    %v478 = vpop.permute.xlu0 %477
    %vm479 = vcmask 7168
    %s480 = scalar_lea.vmem %s1, 76
    %481 = vst.msk [vmem:[%s480] ss:$100 sm:$0x3] %vm479, %v478
    %v482 = vld [vmem:[#allocation0] sm:$0x3]
    %483 = vrot.lane.b32.xlu0 %v482, 51
    %v484 = vpop.permute.xlu0 %483
    %vm485 = vcmask 7168
    %s486 = scalar_lea.vmem %s1, 77
    %487 = vst.msk [vmem:[%s486] ss:$100 sm:$0x3] %vm485, %v484
    %v488 = vld [vmem:[#allocation0] sm:$0x3]
    %489 = vrot.lane.b32.xlu0 %v488, 50
    %v490 = vpop.permute.xlu0 %489
    %vm491 = vcmask 7168
    %s492 = scalar_lea.vmem %s1, 78
    %493 = vst.msk [vmem:[%s492] ss:$100 sm:$0x3] %vm491, %v490
    %v494 = vld [vmem:[#allocation0] sm:$0x3]
    %495 = vrot.lane.b32.xlu0 %v494, 49
    %v496 = vpop.permute.xlu0 %495
    %vm497 = vcmask 7168
    %s498 = scalar_lea.vmem %s1, 79
    %499 = vst.msk [vmem:[%s498] ss:$100 sm:$0x3] %vm497, %v496
    %v500 = vld [vmem:[#allocation0] sm:$0x3]
    %501 = vrot.lane.b32.xlu0 %v500, 48
    %v502 = vpop.permute.xlu0 %501
    %vm503 = vcmask 7168
    %s504 = scalar_lea.vmem %s1, 80
    %505 = vst.msk [vmem:[%s504] ss:$100 sm:$0x3] %vm503, %v502
    %v506 = vld [vmem:[#allocation0] sm:$0x3]
    %507 = vrot.lane.b32.xlu0 %v506, 47
    %v508 = vpop.permute.xlu0 %507
    %vm509 = vcmask 7168
    %s510 = scalar_lea.vmem %s1, 81
    %511 = vst.msk [vmem:[%s510] ss:$100 sm:$0x3] %vm509, %v508
    %v512 = vld [vmem:[#allocation0] sm:$0x3]
    %513 = vrot.lane.b32.xlu0 %v512, 46
    %v514 = vpop.permute.xlu0 %513
    %vm515 = vcmask 7168
    %s516 = scalar_lea.vmem %s1, 82
    %517 = vst.msk [vmem:[%s516] ss:$100 sm:$0x3] %vm515, %v514
    %v518 = vld [vmem:[#allocation0] sm:$0x3]
    %519 = vrot.lane.b32.xlu0 %v518, 45
    %v520 = vpop.permute.xlu0 %519
    %vm521 = vcmask 7168
    %s522 = scalar_lea.vmem %s1, 83
    %523 = vst.msk [vmem:[%s522] ss:$100 sm:$0x3] %vm521, %v520
    %v524 = vld [vmem:[#allocation0] sm:$0x3]
    %525 = vrot.lane.b32.xlu0 %v524, 44
    %v526 = vpop.permute.xlu0 %525
    %vm527 = vcmask 7168
    %s528 = scalar_lea.vmem %s1, 84
    %529 = vst.msk [vmem:[%s528] ss:$100 sm:$0x3] %vm527, %v526
    %v530 = vld [vmem:[#allocation0] sm:$0x3]
    %531 = vrot.lane.b32.xlu0 %v530, 43
    %v532 = vpop.permute.xlu0 %531
    %vm533 = vcmask 7168
    %s534 = scalar_lea.vmem %s1, 85
    %535 = vst.msk [vmem:[%s534] ss:$100 sm:$0x3] %vm533, %v532
    %v536 = vld [vmem:[#allocation0] sm:$0x3]
    %537 = vrot.lane.b32.xlu0 %v536, 42
    %v538 = vpop.permute.xlu0 %537
    %vm539 = vcmask 7168
    %s540 = scalar_lea.vmem %s1, 86
    %541 = vst.msk [vmem:[%s540] ss:$100 sm:$0x3] %vm539, %v538
    %v542 = vld [vmem:[#allocation0] sm:$0x3]
    %543 = vrot.lane.b32.xlu0 %v542, 41
    %v544 = vpop.permute.xlu0 %543
    %vm545 = vcmask 7168
    %s546 = scalar_lea.vmem %s1, 87
    %547 = vst.msk [vmem:[%s546] ss:$100 sm:$0x3] %vm545, %v544
    %v548 = vld [vmem:[#allocation0] sm:$0x3]
    %549 = vrot.lane.b32.xlu0 %v548, 40
    %v550 = vpop.permute.xlu0 %549
    %vm551 = vcmask 7168
    %s552 = scalar_lea.vmem %s1, 88
    %553 = vst.msk [vmem:[%s552] ss:$100 sm:$0x3] %vm551, %v550
    %v554 = vld [vmem:[#allocation0] sm:$0x3]
    %555 = vrot.lane.b32.xlu0 %v554, 39
    %v556 = vpop.permute.xlu0 %555
    %vm557 = vcmask 7168
    %s558 = scalar_lea.vmem %s1, 89
    %559 = vst.msk [vmem:[%s558] ss:$100 sm:$0x3] %vm557, %v556
    %v560 = vld [vmem:[#allocation0] sm:$0x3]
    %561 = vrot.lane.b32.xlu0 %v560, 38
    %v562 = vpop.permute.xlu0 %561
    %vm563 = vcmask 7168
    %s564 = scalar_lea.vmem %s1, 90
    %565 = vst.msk [vmem:[%s564] ss:$100 sm:$0x3] %vm563, %v562
    %v566 = vld [vmem:[#allocation0] sm:$0x3]
    %567 = vrot.lane.b32.xlu0 %v566, 37
    %v568 = vpop.permute.xlu0 %567
    %vm569 = vcmask 7168
    %s570 = scalar_lea.vmem %s1, 91
    %571 = vst.msk [vmem:[%s570] ss:$100 sm:$0x3] %vm569, %v568
    %s572 = scalar_lea.vmem [#allocation0], 1
    %s573 = smov 3
    %v574 = vld [vmem:[%s572] ss:$-1 sm:%s573]
    %575 = vrot.lane.b32.xlu0 %v574, 36
    %v576 = vpop.permute.xlu0 %575
    %vm577 = vcmask 7168
    %s578 = scalar_lea.vmem %s1, 192
    %579 = vst.msk [vmem:[%s578] ss:$-100 sm:$0x3] %vm577, %v576
    %s580 = scalar_lea.vmem [#allocation0], 1
    %s581 = smov 3
    %v582 = vld [vmem:[%s580] ss:$-1 sm:%s581]
    %583 = vrot.lane.b32.xlu0 %v582, 35
    %v584 = vpop.permute.xlu0 %583
    %vm585 = vcmask 7168
    %s586 = scalar_lea.vmem %s1, 193
    %587 = vst.msk [vmem:[%s586] ss:$-100 sm:$0x3] %vm585, %v584
    %s588 = scalar_lea.vmem [#allocation0], 1
    %s589 = smov 3
    %v590 = vld [vmem:[%s588] ss:$-1 sm:%s589]
    %591 = vrot.lane.b32.xlu0 %v590, 34
    %v592 = vpop.permute.xlu0 %591
    %vm593 = vcmask 7168
    %s594 = scalar_lea.vmem %s1, 194
    %595 = vst.msk [vmem:[%s594] ss:$-100 sm:$0x3] %vm593, %v592
    %s596 = scalar_lea.vmem [#allocation0], 1
    %s597 = smov 3
    %v598 = vld [vmem:[%s596] ss:$-1 sm:%s597]
    %599 = vrot.lane.b32.xlu0 %v598, 33
    %v600 = vpop.permute.xlu0 %599
    %vm601 = vcmask 7168
    %s602 = scalar_lea.vmem %s1, 195
    %603 = vst.msk [vmem:[%s602] ss:$-100 sm:$0x3] %vm601, %v600
    %v604 = vld [vmem:[#allocation0] sm:$0x3]
    %605 = vrot.lane.b32.xlu0 %v604, 32
    %v606 = vpop.permute.xlu0 %605
    %vm607 = vcmask 7168
    %s608 = scalar_lea.vmem %s1, 96
    %609 = vst.msk [vmem:[%s608] ss:$100 sm:$0x3] %vm607, %v606
    %v610 = vld [vmem:[#allocation0] sm:$0x3]
    %611 = vrot.lane.b32.xlu0 %v610, 31
    %v612 = vpop.permute.xlu0 %611
    %vm613 = vcmask 7168
    %s614 = scalar_lea.vmem %s1, 97
    %615 = vst.msk [vmem:[%s614] ss:$100 sm:$0x3] %vm613, %v612
    %v616 = vld [vmem:[#allocation0] sm:$0x3]
    %617 = vrot.lane.b32.xlu0 %v616, 30
    %v618 = vpop.permute.xlu0 %617
    %vm619 = vcmask 7168
    %s620 = scalar_lea.vmem %s1, 98
    %621 = vst.msk [vmem:[%s620] ss:$100 sm:$0x3] %vm619, %v618
    %v622 = vld [vmem:[#allocation0] sm:$0x3]
    %623 = vrot.lane.b32.xlu0 %v622, 29
    %v624 = vpop.permute.xlu0 %623
    %vm625 = vcmask 7168
    %s626 = scalar_lea.vmem %s1, 99
    %627 = vst.msk [vmem:[%s626] ss:$100 sm:$0x3] %vm625, %v624

// kernel: _lambda_.1
$region0: #{_lambda_.1}
  #allocation0 [shape = 'u32[]', space=smem, size = 0x4, offset = 0x4, fixed_abs, tag = 'smem constant byte address 0x4 - core index']
  #allocation1 [shape = 'u32[144,128]{1,0:T(1,128)}', space=vmem, size = 0x12000, scoped, tag = 'internal scratch']
  #allocation2 [shape = 'f32[232,32]{1,0:T(8,128)}', space=vmem, size = 0x1d000, scoped, tag = 'scratch operand']
  #allocation3 [shape = 'bf16[200,288]{1,0:T(8,128)(2,1)}', space=vmem, size = 0x25800, scoped, tag = 'scratch operand']
  #allocation4 [shape = 'f32[1,1]{1,0:T(1,128)S(1)}', space=vmem, size = 0x200, scoped, tag = 'scoped memory for _lambda_.1']
  #allocation5 [shape = 'f32[1,1]{1,0:T(1,128)S(1)}', space=vmem, size = 0x200, scoped, tag = 'scoped memory for _lambda_.1']
  #allocation6 [shape = 'f32[1,1]{1,0:T(1,128)S(1)}', space=vmem, size = 0x200, scoped, tag = 'scoped memory for _lambda_.1']
  %s0 = inlined_call_operand.vmem [shape: bf16[200,36], index: 0, kind: input, shape index: {}]
  %s1 = inlined_call_operand.vmem [shape: f32[200,1], index: 1, kind: input, shape index: {}]
  %s2 = inlined_call_operand.vmem [shape: f32[2,200], index: 2, kind: input, shape index: {}]
  %s3 = inlined_call_operand.vmem [shape: bf16[36,32], index: 3, kind: input, shape index: {}]
  %s4 = inlined_call_operand.vmem [shape: f32[1,32], index: 4, kind: input, shape index: {}]
  %s5 = inlined_call_operand.vmem [shape: f32[1,32], index: 5, kind: input, shape index: {}]
  %s6 = inlined_call_operand.vmem [shape: bf16[4,288,32], index: 6, kind: input, shape index: {}]
  %s7 = inlined_call_operand.vmem [shape: f32[4,1,32], index: 7, kind: input, shape index: {}]
  %s8 = inlined_call_operand.vmem [shape: f32[4,1,32], index: 8, kind: input, shape index: {}]
  %s9 = inlined_call_operand.vmem [shape: f32[32,2], index: 9, kind: input, shape index: {}]
  %s10 = inlined_call_operand.vmem [shape: f32[1,2], index: 10, kind: input, shape index: {}]
  %s11 = inlined_call_operand.vmem [shape: f32[1,2], index: 11, kind: input, shape index: {}]
  %s12 = inlined_call_operand.vmem [shape: f32[200,65], index: 12, kind: input, shape index: {}]
  %s13 = inlined_call_operand.vmem [shape: f32[200,65], index: 13, kind: input, shape index: {}]
  %s14 = inlined_call_operand.vmem [shape: f32[1,65], index: 14, kind: input, shape index: {}]
  %s15 = inlined_call_operand.vmem [shape: f32[32,1], index: 15, kind: input, shape index: {}]
  %s16 = inlined_call_operand.<no memory space> [shape: f32[1,1], index: 16, kind: input, shape index: {}]
  %s17 = inlined_call_operand.<no memory space> [shape: f32[1,1], index: 17, kind: input, shape index: {}]
  %s18 = inlined_call_operand.vmem [shape: f32[200,256], index: 18, kind: input, shape index: {}]
  %s19 = inlined_call_operand.vmem [shape: f32[1,256], index: 19, kind: input, shape index: {}]
  %s20 = inlined_call_operand.vmem [shape: f32[256,1], index: 20, kind: input, shape index: {}]
  %s21 = inlined_call_operand.<no memory space> [shape: f32[1,1], index: 21, kind: input, shape index: {}]
  %s22 = inlined_call_operand.hbm [shape: f32[2,65], index: 22, kind: output, shape index: {0}]
  %s23 = inlined_call_operand.vmem [shape: f32[2,1], index: 23, kind: output, shape index: {1}]
  %s24 = inlined_call_operand.vmem [shape: f32[3,200,32], index: 24, kind: output, shape index: {2}]
  %s25 = inlined_call_operand.vmem [shape: f32[2,200,32], index: 25, kind: output, shape index: {3}]
  %s26 = inlined_call_operand.vmem [shape: f32[2,200,32], index: 26, kind: output, shape index: {4}]
  %27 = xla_tuple %s22, %s23, %s24, %s25, %s26
  %s28 = sld [smem:[#allocation0]]
  $region130: #{_lambda_.1} parent=0
    _
  %s30 = ssub.s32 1, %s28
  %s31 = scalar_select 0, %s30, %s28
  %v32 = vstv %s16
  %33 = vst [vmem:[#allocation4] sm:$0x1] %v32
  %v34 = vstv %s17
  %35 = vst [vmem:[#allocation5] sm:$0x1] %v34
  %v36 = vstv %s21
  %37 = vst [vmem:[#allocation6] sm:$0x1] %v36
  $region1: #{_lambda_.1} parent=0
    #allocation7 [shape = 'u8[1024]{0}', space=vmem, size = 0x400, scoped, tag = 'output window, operand 0, single buffered']
    #allocation8 [shape = 's32[1]{0}', space=sflag, size = 0x4, scoped, tag = 'scoped memory for _lambda_.1']
    %38 = vsyncpa [#allocation8], 0
    // Predicated region
    $region2: #{_lambda_.1} parent=1 // pred_check
      _
    $region3: #{_lambda_.1} parent=1 // pred_check_branch
      %40 = sbr.rel (0) target = $region5
    $region4: #{_lambda_.1} parent=1 // pred_region
      _
    $region5: #{_lambda_.1} parent=1 // pred_fallthru
      _
    // Predicated region
    $region6: #{_lambda_.1} parent=1 // pred_check
      _
    $region7: #{_lambda_.1} parent=1 // pred_check_branch
      %42 = sbr.rel (0) target = $region9
    $region8: #{_lambda_.1} parent=1 // pred_region
      _
    $region9: #{_lambda_.1} parent=1 // pred_fallthru
      _
    // Predicated region
    $region10: #{_lambda_.1} parent=1 // pred_check
      _
    $region11: #{_lambda_.1} parent=1 // pred_check_branch
      %44 = sbr.rel (0) target = $region13
    $region12: #{_lambda_.1} parent=1 // pred_region
      _
    $region13: #{_lambda_.1} parent=1 // pred_fallthru
      _
    // Predicated region
    $region14: #{_lambda_.1} parent=1 // pred_check
      _
    $region15: #{_lambda_.1} parent=1 // pred_check_branch
      %46 = sbr.rel (0) target = $region17
    $region16: #{_lambda_.1} parent=1 // pred_region
      _
    $region17: #{_lambda_.1} parent=1 // pred_fallthru
      _
    // Predicated region
    $region18: #{_lambda_.1} parent=1 // pred_check
      _
    $region19: #{_lambda_.1} parent=1 // pred_check_branch
      %48 = sbr.rel (0) target = $region21
    $region20: #{_lambda_.1} parent=1 // pred_region
      _
    $region21: #{_lambda_.1} parent=1 // pred_fallthru
      _
    // Predicated region
    $region22: #{_lambda_.1} parent=1 // pred_check
      _
    $region23: #{_lambda_.1} parent=1 // pred_check_branch
      %50 = sbr.rel (0) target = $region25
    $region24: #{_lambda_.1} parent=1 // pred_region
      _
    $region25: #{_lambda_.1} parent=1 // pred_fallthru
      _
    // Predicated region
    $region26: #{_lambda_.1} parent=1 // pred_check
      _
    $region27: #{_lambda_.1} parent=1 // pred_check_branch
      %52 = sbr.rel (0) target = $region29
    $region28: #{_lambda_.1} parent=1 // pred_region
      _
    $region29: #{_lambda_.1} parent=1 // pred_fallthru
      _
    // Predicated region
    $region30: #{_lambda_.1} parent=1 // pred_check
      _
    $region31: #{_lambda_.1} parent=1 // pred_check_branch
      %54 = sbr.rel (0) target = $region33
    $region32: #{_lambda_.1} parent=1 // pred_region
      _
    $region33: #{_lambda_.1} parent=1 // pred_fallthru
      _
    // Predicated region
    $region34: #{_lambda_.1} parent=1 // pred_check
      _
    $region35: #{_lambda_.1} parent=1 // pred_check_branch
      %56 = sbr.rel (0) target = $region37
    $region36: #{_lambda_.1} parent=1 // pred_region
      _
    $region37: #{_lambda_.1} parent=1 // pred_fallthru
      _
    // Predicated region
    $region38: #{_lambda_.1} parent=1 // pred_check
      _
    $region39: #{_lambda_.1} parent=1 // pred_check_branch
      %58 = sbr.rel (0) target = $region41
    $region40: #{_lambda_.1} parent=1 // pred_region
      _
    $region41: #{_lambda_.1} parent=1 // pred_fallthru
      _
    // Predicated region
    $region42: #{_lambda_.1} parent=1 // pred_check
      _
    $region43: #{_lambda_.1} parent=1 // pred_check_branch
      %60 = sbr.rel (0) target = $region45
    $region44: #{_lambda_.1} parent=1 // pred_region
      _
    $region45: #{_lambda_.1} parent=1 // pred_fallthru
      _
    // Predicated region
    $region46: #{_lambda_.1} parent=1 // pred_check
      _
    $region47: #{_lambda_.1} parent=1 // pred_check_branch
      %62 = sbr.rel (0) target = $region49
    $region48: #{_lambda_.1} parent=1 // pred_region
      _
    $region49: #{_lambda_.1} parent=1 // pred_fallthru
      _
    // Predicated region
    $region50: #{_lambda_.1} parent=1 // pred_check
      _
    $region51: #{_lambda_.1} parent=1 // pred_check_branch
      %64 = sbr.rel (0) target = $region53
    $region52: #{_lambda_.1} parent=1 // pred_region
      _
    $region53: #{_lambda_.1} parent=1 // pred_fallthru
      _
    // Predicated region
    $region54: #{_lambda_.1} parent=1 // pred_check
      _
    $region55: #{_lambda_.1} parent=1 // pred_check_branch
      %66 = sbr.rel (0) target = $region57
    $region56: #{_lambda_.1} parent=1 // pred_region
      _
    $region57: #{_lambda_.1} parent=1 // pred_fallthru
      _
    // Predicated region
    $region58: #{_lambda_.1} parent=1 // pred_check
      _
    $region59: #{_lambda_.1} parent=1 // pred_check_branch
      %68 = sbr.rel (0) target = $region61
    $region60: #{_lambda_.1} parent=1 // pred_region
      _
    $region61: #{_lambda_.1} parent=1 // pred_fallthru
      _
    // Predicated region
    $region62: #{_lambda_.1} parent=1 // pred_check
      _
    $region63: #{_lambda_.1} parent=1 // pred_check_branch
      %70 = sbr.rel (0) target = $region65
    $region64: #{_lambda_.1} parent=1 // pred_region
      _
    $region65: #{_lambda_.1} parent=1 // pred_fallthru
      _
    // Predicated region
    $region66: #{_lambda_.1} parent=1 // pred_check
      _
    $region67: #{_lambda_.1} parent=1 // pred_check_branch
      %72 = sbr.rel (0) target = $region69
    $region68: #{_lambda_.1} parent=1 // pred_region
      _
    $region69: #{_lambda_.1} parent=1 // pred_fallthru
      _
    // Predicated region
    $region70: #{_lambda_.1} parent=1 // pred_check
      _
    $region71: #{_lambda_.1} parent=1 // pred_check_branch
      %74 = sbr.rel (0) target = $region73
    $region72: #{_lambda_.1} parent=1 // pred_region
      _
    $region73: #{_lambda_.1} parent=1 // pred_fallthru
      _
    // Predicated region
    $region74: #{_lambda_.1} parent=1 // pred_check
      _
    $region75: #{_lambda_.1} parent=1 // pred_check_branch
      %76 = sbr.rel (0) target = $region77
    $region76: #{_lambda_.1} parent=1 // pred_region
      _
    $region77: #{_lambda_.1} parent=1 // pred_fallthru
      _
    // Predicated region
    $region78: #{_lambda_.1} parent=1 // pred_check
      _
    $region79: #{_lambda_.1} parent=1 // pred_check_branch
      %78 = sbr.rel (0) target = $region81
    $region80: #{_lambda_.1} parent=1 // pred_region
      _
    $region81: #{_lambda_.1} parent=1 // pred_fallthru
      _
    // Predicated region
    $region82: #{_lambda_.1} parent=1 // pred_check
      _
    $region83: #{_lambda_.1} parent=1 // pred_check_branch
      %80 = sbr.rel (0) target = $region85
    $region84: #{_lambda_.1} parent=1 // pred_region
      _
    $region85: #{_lambda_.1} parent=1 // pred_fallthru
      _
    // Predicated region
    $region86: #{_lambda_.1} parent=1 // pred_check
      _
    $region87: #{_lambda_.1} parent=1 // pred_check_branch
      %82 = sbr.rel (0) target = $region89
    $region88: #{_lambda_.1} parent=1 // pred_region
      _
    $region89: #{_lambda_.1} parent=1 // pred_fallthru
      _
    %v84 = vld [vmem:[%s1] sm:$0xff]
    %v85 = vld [vmem:[%s1 + $0x8] sm:$0xff]
    %v86 = vld [vmem:[%s1 + $0x10] sm:$0xff]
    %v87 = vld [vmem:[%s1 + $0x18] sm:$0xff]
    %v88 = vld [vmem:[%s1 + $0x20] sm:$0xff]
    %v89 = vld [vmem:[%s1 + $0x28] sm:$0xff]
    %v90 = vld [vmem:[%s1 + $0x30] sm:$0xff]
    %v91 = vld [vmem:[%s1 + $0x38] sm:$0xff]
    %v92 = vld [vmem:[%s1 + $0x40] sm:$0xff]
    %v93 = vld [vmem:[%s1 + $0x48] sm:$0xff]
    %v94 = vld [vmem:[%s1 + $0x50] sm:$0xff]
    %v95 = vld [vmem:[%s1 + $0x58] sm:$0xff]
    %v96 = vld [vmem:[%s1 + $0x60] sm:$0xff]
    %v97 = vld [vmem:[%s1 + $0x68] sm:$0xff]
    %v98 = vld [vmem:[%s1 + $0x70] sm:$0xff]
    %v99 = vld [vmem:[%s1 + $0x78] sm:$0xff]
    %v100 = vld [vmem:[%s1 + $0x80] sm:$0xff]
    %v101 = vld [vmem:[%s1 + $0x88] sm:$0xff]
    %v102 = vld [vmem:[%s1 + $0x90] sm:$0xff]
    %v103 = vld [vmem:[%s1 + $0x98] sm:$0xff]
    %v104 = vld [vmem:[%s1 + $0xa0] sm:$0xff]
    %v105 = vld [vmem:[%s1 + $0xa8] sm:$0xff]
    %v106 = vld [vmem:[%s1 + $0xb0] sm:$0xff]
    %v107 = vld [vmem:[%s1 + $0xb8] sm:$0xff]
    %v108 = vld [vmem:[%s1 + $0xc0] sm:$0xff]
    %vm109 = vcmask 261120
    %110 = vst.msk [vmem:[#allocation2] sm:$0xff] %vm109, 0.0
    %111 = vst.msk [vmem:[#allocation2 + $0x8] sm:$0xff] %vm109, 0.0
    %112 = vst.msk [vmem:[#allocation2 + $0x10] sm:$0xff] %vm109, 0.0
    %113 = vst.msk [vmem:[#allocation2 + $0x18] sm:$0xff] %vm109, 0.0
    %114 = vst.msk [vmem:[#allocation2 + $0x20] sm:$0xff] %vm109, 0.0
    %115 = vst.msk [vmem:[#allocation2 + $0x28] sm:$0xff] %vm109, 0.0
    %116 = vst.msk [vmem:[#allocation2 + $0x30] sm:$0xff] %vm109, 0.0
    %117 = vst.msk [vmem:[#allocation2 + $0x38] sm:$0xff] %vm109, 0.0
    %118 = vst.msk [vmem:[#allocation2 + $0x40] sm:$0xff] %vm109, 0.0
    %119 = vst.msk [vmem:[#allocation2 + $0x48] sm:$0xff] %vm109, 0.0
    %120 = vst.msk [vmem:[#allocation2 + $0x50] sm:$0xff] %vm109, 0.0
    %121 = vst.msk [vmem:[#allocation2 + $0x58] sm:$0xff] %vm109, 0.0
    %122 = vst.msk [vmem:[#allocation2 + $0x60] sm:$0xff] %vm109, 0.0
    %123 = vst.msk [vmem:[#allocation2 + $0x68] sm:$0xff] %vm109, 0.0
    %124 = vst.msk [vmem:[#allocation2 + $0x70] sm:$0xff] %vm109, 0.0
    %125 = vst.msk [vmem:[#allocation2 + $0x78] sm:$0xff] %vm109, 0.0
    %126 = vst.msk [vmem:[#allocation2 + $0x80] sm:$0xff] %vm109, 0.0
    %127 = vst.msk [vmem:[#allocation2 + $0x88] sm:$0xff] %vm109, 0.0
    %128 = vst.msk [vmem:[#allocation2 + $0x90] sm:$0xff] %vm109, 0.0
    %129 = vst.msk [vmem:[#allocation2 + $0x98] sm:$0xff] %vm109, 0.0
    %130 = vst.msk [vmem:[#allocation2 + $0xa0] sm:$0xff] %vm109, 0.0
    %131 = vst.msk [vmem:[#allocation2 + $0xa8] sm:$0xff] %vm109, 0.0
    %132 = vst.msk [vmem:[#allocation2 + $0xb0] sm:$0xff] %vm109, 0.0
    %133 = vst.msk [vmem:[#allocation2 + $0xb8] sm:$0xff] %vm109, 0.0
    %134 = vst.msk [vmem:[#allocation2 + $0xc0] sm:$0xff] %vm109, 0.0
    %135 = vst.msk [vmem:[#allocation2 + $0xc8] sm:$0xff] %vm109, 0.0
    %136 = vst.msk [vmem:[#allocation2 + $0xd0] sm:$0xff] %vm109, 0.0
    %137 = vst.msk [vmem:[#allocation2 + $0xd8] sm:$0xff] %vm109, 0.0
    %138 = vst.msk [vmem:[#allocation2 + $0xe0] sm:$0xff] %vm109, 0.0
    %v139 = vld [vmem:[%s0] sm:$0xf]
    %v140 = vld [vmem:[%s0 + $0x4] sm:$0xf]
    %v141 = vld [vmem:[%s0 + $0x8] sm:$0xf]
    %v142 = vld [vmem:[%s0 + $0xc] sm:$0xf]
    %v143 = vld [vmem:[%s0 + $0x10] sm:$0xf]
    %v144 = vld [vmem:[%s0 + $0x14] sm:$0xf]
    %v145 = vld [vmem:[%s0 + $0x18] sm:$0xf]
    %v146 = vld [vmem:[%s0 + $0x1c] sm:$0xf]
    %v147 = vld [vmem:[%s0 + $0x20] sm:$0xf]
    %v148 = vld [vmem:[%s0 + $0x24] sm:$0xf]
    %v149 = vld [vmem:[%s0 + $0x28] sm:$0xf]
    %v150 = vld [vmem:[%s0 + $0x2c] sm:$0xf]
    %v151 = vld [vmem:[%s0 + $0x30] sm:$0xf]
    %v152 = vld [vmem:[%s0 + $0x34] sm:$0xf]
    %v153 = vld [vmem:[%s0 + $0x38] sm:$0xf]
    %v154 = vld [vmem:[%s0 + $0x3c] sm:$0xf]
    %v155 = vld [vmem:[%s0 + $0x40] sm:$0xf]
    %v156 = vld [vmem:[%s0 + $0x44] sm:$0xf]
    %v157 = vld [vmem:[%s0 + $0x48] sm:$0xf]
    %v158 = vld [vmem:[%s0 + $0x4c] sm:$0xf]
    %v159 = vld [vmem:[%s0 + $0x50] sm:$0xf]
    %v160 = vld [vmem:[%s0 + $0x54] sm:$0xf]
    %v161 = vld [vmem:[%s0 + $0x58] sm:$0xf]
    %v162 = vld [vmem:[%s0 + $0x5c] sm:$0xf]
    %v163 = vld [vmem:[%s0 + $0x60] sm:$0xf]
    %v164 = vld [vmem:[%s3] sm:$0xf]
    %v165 = vld [vmem:[%s3 + $0x4] sm:$0xf]
    %v166 = vld [vmem:[%s3 + $0x8] sm:$0xf]
    %v167 = vld [vmem:[%s3 + $0xc] sm:$0xf]
    %v168 = vld [vmem:[%s3 + $0x10] sm:$0x3]
    %v194 = vunpack.c.l.b16 %v139
    %v195 = vunpack.c.l.b16 %v140
    %v196 = vunpack.c.l.b16 %v141
    %v197 = vunpack.c.l.b16 %v142
    %v198 = vunpack.c.l.b16 %v143
    %v199 = vunpack.c.l.b16 %v144
    %v200 = vunpack.c.l.b16 %v145
    %v201 = vunpack.c.l.b16 %v146
    %v202 = vunpack.c.l.b16 %v147
    %v203 = vunpack.c.l.b16 %v148
    %v204 = vunpack.c.l.b16 %v149
    %v205 = vunpack.c.l.b16 %v150
    %v206 = vunpack.c.l.b16 %v151
    %v207 = vunpack.c.l.b16 %v152
    %v208 = vunpack.c.l.b16 %v153
    %v209 = vunpack.c.l.b16 %v154
    %v210 = vunpack.c.l.b16 %v155
    %v211 = vunpack.c.l.b16 %v156
    %v212 = vunpack.c.l.b16 %v157
    %v213 = vunpack.c.l.b16 %v158
    %v214 = vunpack.c.l.b16 %v159
    %v215 = vunpack.c.l.b16 %v160
    %v216 = vunpack.c.l.b16 %v161
    %v217 = vunpack.c.l.b16 %v162
    %v218 = vunpack.c.l.b16 %v163
    %v219 = vpack.c.b16 %v195, %v194
    %v220 = vpack.c.b16 %v197, %v196
    %v221 = vpack.c.b16 %v199, %v198
    %v222 = vpack.c.b16 %v201, %v200
    %v223 = vpack.c.b16 %v203, %v202
    %v224 = vpack.c.b16 %v205, %v204
    %v225 = vpack.c.b16 %v207, %v206
    %v226 = vpack.c.b16 %v209, %v208
    %v227 = vpack.c.b16 %v211, %v210
    %v228 = vpack.c.b16 %v213, %v212
    %v229 = vpack.c.b16 %v215, %v214
    %v230 = vpack.c.b16 %v217, %v216
    %v231 = vpack.c.b16 %v218, %v218
    %v237 = vunpack.c.l.b16 %v164
    %v238 = vunpack.c.l.b16 %v165
    %v239 = vunpack.c.l.b16 %v166
    %v240 = vunpack.c.l.b16 %v167
    %v241 = vunpack.c.l.b16 %v168
    %v242 = vpack.c.b16 %v238, %v237
    %v243 = vpack.c.b16 %v240, %v239
    %v244 = vpack.c.b16 %v241, %v241
    %vm247 = vcmask 293888
    %v249 = vsel %vm247, %v219, 0
    %v252 = vsel %vm247, %v220, 0
    %v255 = vsel %vm247, %v221, 0
    %v258 = vsel %vm247, %v222, 0
    %v261 = vsel %vm247, %v223, 0
    %v264 = vsel %vm247, %v224, 0
    %v267 = vsel %vm247, %v225, 0
    %v270 = vsel %vm247, %v226, 0
    %v273 = vsel %vm247, %v227, 0
    %v276 = vsel %vm247, %v228, 0
    %v279 = vsel %vm247, %v229, 0
    %v282 = vsel %vm247, %v230, 0
    %v285 = vsel %vm247, %v231, 0
    %vm287 = vcmask 1041408
    %v289 = vsel %vm287, %v244, 0
    %291 = vmatprep.subr.bf16.mxu0 0
    %292 = vmatpush1.bf16.msra.mxu0 0
    %293 = vmatprep.subr.bf16.mxu0 0
    %294 = vmatpush1.bf16.msra.mxu0 0
    %295 = vmatprep.subr.bf16.mxu0 0
    %296 = vmatpush1.bf16.msra.mxu0 0
    %297 = vmatprep.subr.bf16.mxu0 0
    %298 = vmatpush1.bf16.msra.mxu0 0
    %299 = vmatprep.subr.bf16.mxu0 0
    %300 = vmatpush1.bf16.msra.mxu0 0
    %301 = vmatprep.subr.bf16.mxu0 0
    %302 = vmatpush1.bf16.msra.mxu0 %v289
    %303 = vmatprep.subr.bf16.mxu0 0
    %304 = vmatpush1.bf16.msra.mxu0 %v243
    %305 = vmatprep.subr.bf16.mxu0 0
    %306 = vmatpush1.bf16.msra.mxu0 %v242
    %307 = vmatprep.subr.bf16.mxu0 0
    %308 = vmatpush2.bf16.msra.mxu0 0
    %309 = vmatprep.subr.bf16.mxu0 0
    %310 = vmatpush2.bf16.msra.mxu0 0
    %311 = vmatprep.subr.bf16.mxu0 0
    %312 = vmatpush2.bf16.msra.mxu0 0
    %313 = vmatprep.subr.bf16.mxu0 0
    %314 = vmatpush2.bf16.msra.mxu0 0
    %315 = vmatprep.subr.bf16.mxu0 0
    %316 = vmatpush2.bf16.msra.mxu0 0
    %317 = vmatprep.subr.bf16.mxu0 0
    %318 = vmatpush2.bf16.msra.mxu0 0
    %319 = vmatprep.subr.bf16.mxu0 0
    %320 = vmatpush2.bf16.msra.mxu0 0
    %321 = vmatprep.subr.bf16.mxu0 0
    %322 = vmatpush2.bf16.msra.mxu0 0
    %323 = vmatprep.mubr.bf16.mxu0 0
    %324 = vmatmul.mubr.bf16.gmra.mxu0 %v249
    %v325 = vpop.f32.mrf.mxu0
    %v326 = vadd.f32 0.0, %v325
    %v327 = vpop.f32.mrf.mxu0
    %v328 = vpop.f32.mrf.mxu0
    %v329 = vadd.f32 0.0, %v328
    %v330 = vpop.f32.mrf.mxu0
    %331 = vmatprep.mubr.bf16.mxu0 0
    %332 = vmatmul.mubr.bf16.gmra.mxu0 %v252
    %v333 = vpop.f32.mrf.mxu0
    %v334 = vadd.f32 0.0, %v333
    %v335 = vpop.f32.mrf.mxu0
    %v336 = vpop.f32.mrf.mxu0
    %v337 = vadd.f32 0.0, %v336
    %v338 = vpop.f32.mrf.mxu0
    %339 = vmatprep.mubr.bf16.mxu0 0
    %340 = vmatmul.mubr.bf16.gmra.mxu0 %v255
    %v341 = vpop.f32.mrf.mxu0
    %v342 = vadd.f32 0.0, %v341
    %v343 = vpop.f32.mrf.mxu0
    %v344 = vpop.f32.mrf.mxu0
    %v345 = vadd.f32 0.0, %v344
    %v346 = vpop.f32.mrf.mxu0
    %347 = vmatprep.mubr.bf16.mxu0 0
    %348 = vmatmul.mubr.bf16.gmra.mxu0 %v258
    %v349 = vpop.f32.mrf.mxu0
    %v350 = vadd.f32 0.0, %v349
    %v351 = vpop.f32.mrf.mxu0
    %v352 = vpop.f32.mrf.mxu0
    %v353 = vadd.f32 0.0, %v352
    %v354 = vpop.f32.mrf.mxu0
    %355 = vmatprep.mubr.bf16.mxu0 0
    %356 = vmatmul.mubr.bf16.gmra.mxu0 %v261
    %v357 = vpop.f32.mrf.mxu0
    %v358 = vadd.f32 0.0, %v357
    %v359 = vpop.f32.mrf.mxu0
    %v360 = vpop.f32.mrf.mxu0
    %v361 = vadd.f32 0.0, %v360
    %v362 = vpop.f32.mrf.mxu0
    %363 = vmatprep.mubr.bf16.mxu0 0
    %364 = vmatmul.mubr.bf16.gmra.mxu0 %v264
    %v365 = vpop.f32.mrf.mxu0
    %v366 = vadd.f32 0.0, %v365
    %v367 = vpop.f32.mrf.mxu0
    %v368 = vpop.f32.mrf.mxu0
    %v369 = vadd.f32 0.0, %v368
    %v370 = vpop.f32.mrf.mxu0
    %371 = vmatprep.mubr.bf16.mxu0 0
    %372 = vmatmul.mubr.bf16.gmra.mxu0 %v267
    %v373 = vpop.f32.mrf.mxu0
    %v374 = vadd.f32 0.0, %v373
    %v375 = vpop.f32.mrf.mxu0
    %v376 = vpop.f32.mrf.mxu0
    %v377 = vadd.f32 0.0, %v376
    %v378 = vpop.f32.mrf.mxu0
    %379 = vmatprep.mubr.bf16.mxu0 0
    %380 = vmatmul.mubr.bf16.gmra.mxu0 %v270
    %v381 = vpop.f32.mrf.mxu0
    %v382 = vadd.f32 0.0, %v381
    %v383 = vpop.f32.mrf.mxu0
    %v384 = vpop.f32.mrf.mxu0
    %v385 = vadd.f32 0.0, %v384
    %v386 = vpop.f32.mrf.mxu0
    %387 = vmatprep.mubr.bf16.mxu0 0
    %388 = vmatmul.mubr.bf16.gmra.mxu0 %v273
    %v389 = vpop.f32.mrf.mxu0
    %v390 = vadd.f32 0.0, %v389
    %v391 = vpop.f32.mrf.mxu0
    %v392 = vpop.f32.mrf.mxu0
    %v393 = vadd.f32 0.0, %v392
    %v394 = vpop.f32.mrf.mxu0
    %395 = vmatprep.mubr.bf16.mxu0 0
    %396 = vmatmul.mubr.bf16.gmra.mxu0 %v276
    %v397 = vpop.f32.mrf.mxu0
    %v398 = vadd.f32 0.0, %v397
    %v399 = vpop.f32.mrf.mxu0
    %v400 = vpop.f32.mrf.mxu0
    %v401 = vadd.f32 0.0, %v400
    %v402 = vpop.f32.mrf.mxu0
    %403 = vmatprep.mubr.bf16.mxu0 0
    %404 = vmatmul.mubr.bf16.gmra.mxu0 %v279
    %v405 = vpop.f32.mrf.mxu0
    %v406 = vadd.f32 0.0, %v405
    %v407 = vpop.f32.mrf.mxu0
    %v408 = vpop.f32.mrf.mxu0
    %v409 = vadd.f32 0.0, %v408
    %v410 = vpop.f32.mrf.mxu0
    %411 = vmatprep.mubr.bf16.mxu0 0
    %412 = vmatmul.mubr.bf16.gmra.mxu0 %v282
    %v413 = vpop.f32.mrf.mxu0
    %v414 = vadd.f32 0.0, %v413
    %v415 = vpop.f32.mrf.mxu0
    %v416 = vpop.f32.mrf.mxu0
    %v417 = vadd.f32 0.0, %v416
    %v418 = vpop.f32.mrf.mxu0
    %419 = vmatprep.mubr.bf16.mxu0 0
    %420 = vmatmul.mubr.bf16.gmra.mxu0 %v285
    %v421 = vpop.f32.mrf.mxu0
    %v422 = vadd.f32 0.0, %v421
    %v423 = vpop.f32.mrf.mxu0
    %v424 = vpop.f32.mrf.mxu0
    %v425 = vpop.f32.mrf.mxu0
    %426 = vdwg.mxu0
    %v427 = vld [vmem:[%s4] sm:$0x1]
    %v429 = vlaneseq
    %v430 = vshrl.u32 %v429, 7
    %v431 = vsub.s32 0, %v430
    %v432 = vrot.slane %v427, %v431
    %v434 = vmul.f32 %v326, %v432
    %v435 = vmul.f32 %v329, %v432
    %v436 = vmul.f32 %v334, %v432
    %v437 = vmul.f32 %v337, %v432
    %v438 = vmul.f32 %v342, %v432
    %v439 = vmul.f32 %v345, %v432
    %v440 = vmul.f32 %v350, %v432
    %v441 = vmul.f32 %v353, %v432
    %v442 = vmul.f32 %v358, %v432
    %v443 = vmul.f32 %v361, %v432
    %v444 = vmul.f32 %v366, %v432
    %v445 = vmul.f32 %v369, %v432
    %v446 = vmul.f32 %v374, %v432
    %v447 = vmul.f32 %v377, %v432
    %v448 = vmul.f32 %v382, %v432
    %v449 = vmul.f32 %v385, %v432
    %v450 = vmul.f32 %v390, %v432
    %v451 = vmul.f32 %v393, %v432
    %v452 = vmul.f32 %v398, %v432
    %v453 = vmul.f32 %v401, %v432
    %v454 = vmul.f32 %v406, %v432
    %v455 = vmul.f32 %v409, %v432
    %v456 = vmul.f32 %v414, %v432
    %v457 = vmul.f32 %v417, %v432
    %v458 = vmul.f32 %v422, %v432
    %v459 = vld [vmem:[%s5] sm:$0x1]
    %v461 = vlaneseq
    %v462 = vshrl.u32 %v461, 7
    %v463 = vsub.s32 0, %v462
    %v464 = vrot.slane %v459, %v463
    %v466 = vadd.f32 %v434, %v464
    %v467 = vadd.f32 %v435, %v464
    %v468 = vadd.f32 %v436, %v464
    %v469 = vadd.f32 %v437, %v464
    %v470 = vadd.f32 %v438, %v464
    %v471 = vadd.f32 %v439, %v464
    %v472 = vadd.f32 %v440, %v464
    %v473 = vadd.f32 %v441, %v464
    %v474 = vadd.f32 %v442, %v464
    %v475 = vadd.f32 %v443, %v464
    %v476 = vadd.f32 %v444, %v464
    %v477 = vadd.f32 %v445, %v464
    %v478 = vadd.f32 %v446, %v464
    %v479 = vadd.f32 %v447, %v464
    %v480 = vadd.f32 %v448, %v464
    %v481 = vadd.f32 %v449, %v464
    %v482 = vadd.f32 %v450, %v464
    %v483 = vadd.f32 %v451, %v464
    %v484 = vadd.f32 %v452, %v464
    %v485 = vadd.f32 %v453, %v464
    %v486 = vadd.f32 %v454, %v464
    %v487 = vadd.f32 %v455, %v464
    %v488 = vadd.f32 %v456, %v464
    %v489 = vadd.f32 %v457, %v464
    %v490 = vadd.f32 %v458, %v464
    %v491 = vmax.f32 %v466, 0.0
    %v492 = vmax.f32 %v467, 0.0
    %v493 = vmax.f32 %v468, 0.0
    %v494 = vmax.f32 %v469, 0.0
    %v495 = vmax.f32 %v470, 0.0
    %v496 = vmax.f32 %v471, 0.0
    %v497 = vmax.f32 %v472, 0.0
    %v498 = vmax.f32 %v473, 0.0
    %v499 = vmax.f32 %v474, 0.0
    %v500 = vmax.f32 %v475, 0.0
    %v501 = vmax.f32 %v476, 0.0
    %v502 = vmax.f32 %v477, 0.0
    %v503 = vmax.f32 %v478, 0.0
    %v504 = vmax.f32 %v479, 0.0
    %v505 = vmax.f32 %v480, 0.0
    %v506 = vmax.f32 %v481, 0.0
    %v507 = vmax.f32 %v482, 0.0
    %v508 = vmax.f32 %v483, 0.0
    %v509 = vmax.f32 %v484, 0.0
    %v510 = vmax.f32 %v485, 0.0
    %v511 = vmax.f32 %v486, 0.0
    %v512 = vmax.f32 %v487, 0.0
    %v513 = vmax.f32 %v488, 0.0
    %v514 = vmax.f32 %v489, 0.0
    %v515 = vmax.f32 %v490, 0.0
    %517 = vset.pattern.permute.xlu0 0
    %518 = vperm.xlu0 %517, %v84
    %v519 = vpop.permute.xlu0 %518
    %522 = vset.pattern.permute.xlu0 0
    %523 = vperm.xlu0 %522, %v85
    %v524 = vpop.permute.xlu0 %523
    %527 = vset.pattern.permute.xlu0 0
    %528 = vperm.xlu0 %527, %v86
    %v529 = vpop.permute.xlu0 %528
    %532 = vset.pattern.permute.xlu0 0
    %533 = vperm.xlu0 %532, %v87
    %v534 = vpop.permute.xlu0 %533
    %537 = vset.pattern.permute.xlu0 0
    %538 = vperm.xlu0 %537, %v88
    %v539 = vpop.permute.xlu0 %538
    %542 = vset.pattern.permute.xlu0 0
    %543 = vperm.xlu0 %542, %v89
    %v544 = vpop.permute.xlu0 %543
    %547 = vset.pattern.permute.xlu0 0
    %548 = vperm.xlu0 %547, %v90
    %v549 = vpop.permute.xlu0 %548
    %552 = vset.pattern.permute.xlu0 0
    %553 = vperm.xlu0 %552, %v91
    %v554 = vpop.permute.xlu0 %553
    %557 = vset.pattern.permute.xlu0 0
    %558 = vperm.xlu0 %557, %v92
    %v559 = vpop.permute.xlu0 %558
    %562 = vset.pattern.permute.xlu0 0
    %563 = vperm.xlu0 %562, %v93
    %v564 = vpop.permute.xlu0 %563
    %567 = vset.pattern.permute.xlu0 0
    %568 = vperm.xlu0 %567, %v94
    %v569 = vpop.permute.xlu0 %568
    %572 = vset.pattern.permute.xlu0 0
    %573 = vperm.xlu0 %572, %v95
    %v574 = vpop.permute.xlu0 %573
    %577 = vset.pattern.permute.xlu0 0
    %578 = vperm.xlu0 %577, %v96
    %v579 = vpop.permute.xlu0 %578
    %582 = vset.pattern.permute.xlu0 0
    %583 = vperm.xlu0 %582, %v97
    %v584 = vpop.permute.xlu0 %583
    %587 = vset.pattern.permute.xlu0 0
    %588 = vperm.xlu0 %587, %v98
    %v589 = vpop.permute.xlu0 %588
    %592 = vset.pattern.permute.xlu0 0
    %593 = vperm.xlu0 %592, %v99
    %v594 = vpop.permute.xlu0 %593
    %597 = vset.pattern.permute.xlu0 0
    %598 = vperm.xlu0 %597, %v100
    %v599 = vpop.permute.xlu0 %598
    %602 = vset.pattern.permute.xlu0 0
    %603 = vperm.xlu0 %602, %v101
    %v604 = vpop.permute.xlu0 %603
    %607 = vset.pattern.permute.xlu0 0
    %608 = vperm.xlu0 %607, %v102
    %v609 = vpop.permute.xlu0 %608
    %612 = vset.pattern.permute.xlu0 0
    %613 = vperm.xlu0 %612, %v103
    %v614 = vpop.permute.xlu0 %613
    %617 = vset.pattern.permute.xlu0 0
    %618 = vperm.xlu0 %617, %v104
    %v619 = vpop.permute.xlu0 %618
    %622 = vset.pattern.permute.xlu0 0
    %623 = vperm.xlu0 %622, %v105
    %v624 = vpop.permute.xlu0 %623
    %627 = vset.pattern.permute.xlu0 0
    %628 = vperm.xlu0 %627, %v106
    %v629 = vpop.permute.xlu0 %628
    %632 = vset.pattern.permute.xlu0 0
    %633 = vperm.xlu0 %632, %v107
    %v634 = vpop.permute.xlu0 %633
    %637 = vset.pattern.permute.xlu0 0
    %638 = vperm.xlu0 %637, %v108
    %v639 = vpop.permute.xlu0 %638
    %v641 = vmul.f32 %v491, %v519
    %v642 = vmul.f32 %v492, %v524
    %v643 = vmul.f32 %v493, %v529
    %v644 = vmul.f32 %v494, %v534
    %v645 = vmul.f32 %v495, %v539
    %v646 = vmul.f32 %v496, %v544
    %v647 = vmul.f32 %v497, %v549
    %v648 = vmul.f32 %v498, %v554
    %v649 = vmul.f32 %v499, %v559
    %v650 = vmul.f32 %v500, %v564
    %v651 = vmul.f32 %v501, %v569
    %v652 = vmul.f32 %v502, %v574
    %v653 = vmul.f32 %v503, %v579
    %v654 = vmul.f32 %v504, %v584
    %v655 = vmul.f32 %v505, %v589
    %v656 = vmul.f32 %v506, %v594
    %v657 = vmul.f32 %v507, %v599
    %v658 = vmul.f32 %v508, %v604
    %v659 = vmul.f32 %v509, %v609
    %v660 = vmul.f32 %v510, %v614
    %v661 = vmul.f32 %v511, %v619
    %v662 = vmul.f32 %v512, %v624
    %v663 = vmul.f32 %v513, %v629
    %v664 = vmul.f32 %v514, %v634
    %v665 = vmul.f32 %v515, %v639
    %666 = vst.msk [vmem:[%s24] sm:$0xff] %vm109, %v641
    %667 = vst.msk [vmem:[%s24 + $0x8] sm:$0xff] %vm109, %v642
    %668 = vst.msk [vmem:[%s24 + $0x10] sm:$0xff] %vm109, %v643
    %669 = vst.msk [vmem:[%s24 + $0x18] sm:$0xff] %vm109, %v644
    %670 = vst.msk [vmem:[%s24 + $0x20] sm:$0xff] %vm109, %v645
    %671 = vst.msk [vmem:[%s24 + $0x28] sm:$0xff] %vm109, %v646
    %672 = vst.msk [vmem:[%s24 + $0x30] sm:$0xff] %vm109, %v647
    %673 = vst.msk [vmem:[%s24 + $0x38] sm:$0xff] %vm109, %v648
    %674 = vst.msk [vmem:[%s24 + $0x40] sm:$0xff] %vm109, %v649
    %675 = vst.msk [vmem:[%s24 + $0x48] sm:$0xff] %vm109, %v650
    %676 = vst.msk [vmem:[%s24 + $0x50] sm:$0xff] %vm109, %v651
    %677 = vst.msk [vmem:[%s24 + $0x58] sm:$0xff] %vm109, %v652
    %678 = vst.msk [vmem:[%s24 + $0x60] sm:$0xff] %vm109, %v653
    %679 = vst.msk [vmem:[%s24 + $0x68] sm:$0xff] %vm109, %v654
    %680 = vst.msk [vmem:[%s24 + $0x70] sm:$0xff] %vm109, %v655
    %681 = vst.msk [vmem:[%s24 + $0x78] sm:$0xff] %vm109, %v656
    %682 = vst.msk [vmem:[%s24 + $0x80] sm:$0xff] %vm109, %v657
    %683 = vst.msk [vmem:[%s24 + $0x88] sm:$0xff] %vm109, %v658
    %684 = vst.msk [vmem:[%s24 + $0x90] sm:$0xff] %vm109, %v659
    %685 = vst.msk [vmem:[%s24 + $0x98] sm:$0xff] %vm109, %v660
    %686 = vst.msk [vmem:[%s24 + $0xa0] sm:$0xff] %vm109, %v661
    %687 = vst.msk [vmem:[%s24 + $0xa8] sm:$0xff] %vm109, %v662
    %688 = vst.msk [vmem:[%s24 + $0xb0] sm:$0xff] %vm109, %v663
    %689 = vst.msk [vmem:[%s24 + $0xb8] sm:$0xff] %vm109, %v664
    %690 = vst.msk [vmem:[%s24 + $0xc0] sm:$0xff] %vm109, %v665
    %v691 = vld [vmem:[%s24] sm:$0xff]
    %v692 = vld [vmem:[%s24 + $0x8] sm:$0xff]
    %v693 = vld [vmem:[%s24 + $0x10] sm:$0xff]
    %v694 = vld [vmem:[%s24 + $0x18] sm:$0xff]
    %v695 = vld [vmem:[%s24 + $0x20] sm:$0xff]
    %v696 = vld [vmem:[%s24 + $0x28] sm:$0xff]
    %v697 = vld [vmem:[%s24 + $0x30] sm:$0xff]
    %v698 = vld [vmem:[%s24 + $0x38] sm:$0xff]
    %v699 = vld [vmem:[%s24 + $0x40] sm:$0xff]
    %v700 = vld [vmem:[%s24 + $0x48] sm:$0xff]
    %v701 = vld [vmem:[%s24 + $0x50] sm:$0xff]
    %v702 = vld [vmem:[%s24 + $0x58] sm:$0xff]
    %v703 = vld [vmem:[%s24 + $0x60] sm:$0xff]
    %v704 = vld [vmem:[%s24 + $0x68] sm:$0xff]
    %v705 = vld [vmem:[%s24 + $0x70] sm:$0xff]
    %v706 = vld [vmem:[%s24 + $0x78] sm:$0xff]
    %v707 = vld [vmem:[%s24 + $0x80] sm:$0xff]
    %v708 = vld [vmem:[%s24 + $0x88] sm:$0xff]
    %v709 = vld [vmem:[%s24 + $0x90] sm:$0xff]
    %v710 = vld [vmem:[%s24 + $0x98] sm:$0xff]
    %v711 = vld [vmem:[%s24 + $0xa0] sm:$0xff]
    %v712 = vld [vmem:[%s24 + $0xa8] sm:$0xff]
    %v713 = vld [vmem:[%s24 + $0xb0] sm:$0xff]
    %v714 = vld [vmem:[%s24 + $0xb8] sm:$0xff]
    %v715 = vld [vmem:[%s24 + $0xc0] sm:$0xff]
    %v716 = vld [vmem:[%s6] sm:$0xf]
    %v717 = vld [vmem:[%s6 + $0x4] sm:$0xf]
    %v718 = vld [vmem:[%s6 + $0x8] sm:$0xf]
    %v719 = vld [vmem:[%s6 + $0xc] sm:$0xf]
    %v720 = vld [vmem:[%s6 + $0x10] sm:$0xf]
    %v721 = vld [vmem:[%s6 + $0x14] sm:$0xf]
    %v722 = vld [vmem:[%s6 + $0x18] sm:$0xf]
    %v723 = vld [vmem:[%s6 + $0x1c] sm:$0xf]
    %v724 = vld [vmem:[%s6 + $0x20] sm:$0xf]
    %v725 = vld [vmem:[%s6 + $0x24] sm:$0xf]
    %v726 = vld [vmem:[%s6 + $0x28] sm:$0xf]
    %v727 = vld [vmem:[%s6 + $0x2c] sm:$0xf]
    %v728 = vld [vmem:[%s6 + $0x30] sm:$0xf]
    %v729 = vld [vmem:[%s6 + $0x34] sm:$0xf]
    %v730 = vld [vmem:[%s6 + $0x38] sm:$0xf]
    %v731 = vld [vmem:[%s6 + $0x3c] sm:$0xf]
    %v732 = vld [vmem:[%s6 + $0x40] sm:$0xf]
    %v733 = vld [vmem:[%s6 + $0x44] sm:$0xf]
    %v734 = vld [vmem:[%s6 + $0x48] sm:$0xf]
    %v735 = vld [vmem:[%s6 + $0x4c] sm:$0xf]
    %v736 = vld [vmem:[%s6 + $0x50] sm:$0xf]
    %v737 = vld [vmem:[%s6 + $0x54] sm:$0xf]
    %v738 = vld [vmem:[%s6 + $0x58] sm:$0xf]
    %v739 = vld [vmem:[%s6 + $0x5c] sm:$0xf]
    %v740 = vld [vmem:[%s6 + $0x60] sm:$0xf]
    %v741 = vld [vmem:[%s6 + $0x64] sm:$0xf]
    %v742 = vld [vmem:[%s6 + $0x68] sm:$0xf]
    %v743 = vld [vmem:[%s6 + $0x6c] sm:$0xf]
    %v744 = vld [vmem:[%s6 + $0x70] sm:$0xf]
    %v745 = vld [vmem:[%s6 + $0x74] sm:$0xf]
    %v746 = vld [vmem:[%s6 + $0x78] sm:$0xf]
    %v747 = vld [vmem:[%s6 + $0x7c] sm:$0xf]
    %v748 = vld [vmem:[%s6 + $0x80] sm:$0xf]
    %v749 = vld [vmem:[%s6 + $0x84] sm:$0xf]
    %v750 = vld [vmem:[%s6 + $0x88] sm:$0xf]
    %v751 = vld [vmem:[%s6 + $0x8c] sm:$0xf]
    %v752 = vld [vmem:[%s7] sm:$0x1]
    %v753 = vld [vmem:[%s8] sm:$0x1]
    %754 = vst.msk [vmem:[#allocation2 + $0x10] sm:$0xff] %vm109, %v691
    %755 = vst.msk [vmem:[#allocation2 + $0x18] sm:$0xff] %vm109, %v692
    %756 = vst.msk [vmem:[#allocation2 + $0x20] sm:$0xff] %vm109, %v693
    %757 = vst.msk [vmem:[#allocation2 + $0x28] sm:$0xff] %vm109, %v694
    %758 = vst.msk [vmem:[#allocation2 + $0x30] sm:$0xff] %vm109, %v695
    %759 = vst.msk [vmem:[#allocation2 + $0x38] sm:$0xff] %vm109, %v696
    %760 = vst.msk [vmem:[#allocation2 + $0x40] sm:$0xff] %vm109, %v697
    %761 = vst.msk [vmem:[#allocation2 + $0x48] sm:$0xff] %vm109, %v698
    %762 = vst.msk [vmem:[#allocation2 + $0x50] sm:$0xff] %vm109, %v699
    %763 = vst.msk [vmem:[#allocation2 + $0x58] sm:$0xff] %vm109, %v700
    %764 = vst.msk [vmem:[#allocation2 + $0x60] sm:$0xff] %vm109, %v701
    %765 = vst.msk [vmem:[#allocation2 + $0x68] sm:$0xff] %vm109, %v702
    %766 = vst.msk [vmem:[#allocation2 + $0x70] sm:$0xff] %vm109, %v703
    %767 = vst.msk [vmem:[#allocation2 + $0x78] sm:$0xff] %vm109, %v704
    %768 = vst.msk [vmem:[#allocation2 + $0x80] sm:$0xff] %vm109, %v705
    %769 = vst.msk [vmem:[#allocation2 + $0x88] sm:$0xff] %vm109, %v706
    %770 = vst.msk [vmem:[#allocation2 + $0x90] sm:$0xff] %vm109, %v707
    %771 = vst.msk [vmem:[#allocation2 + $0x98] sm:$0xff] %vm109, %v708
    %772 = vst.msk [vmem:[#allocation2 + $0xa0] sm:$0xff] %vm109, %v709
    %773 = vst.msk [vmem:[#allocation2 + $0xa8] sm:$0xff] %vm109, %v710
    %774 = vst.msk [vmem:[#allocation2 + $0xb0] sm:$0xff] %vm109, %v711
    %775 = vst.msk [vmem:[#allocation2 + $0xb8] sm:$0xff] %vm109, %v712
    %776 = vst.msk [vmem:[#allocation2 + $0xc0] sm:$0xff] %vm109, %v713
    %777 = vst.msk [vmem:[#allocation2 + $0xc8] sm:$0xff] %vm109, %v714
    %778 = vst.msk [vmem:[#allocation2 + $0xd0] sm:$0xff] %vm109, %v715
    %v779 = vld [vmem:[#allocation2 + $0x5] sm:$0xff]
    %v780 = vld [vmem:[#allocation2 + $0xd] sm:$0xff]
    %v781 = vld [vmem:[#allocation2 + $0x15] sm:$0xff]
    %v782 = vld [vmem:[#allocation2 + $0x1d] sm:$0xff]
    %v783 = vld [vmem:[#allocation2 + $0x25] sm:$0xff]
    %v784 = vld [vmem:[#allocation2 + $0x2d] sm:$0xff]
    %v785 = vld [vmem:[#allocation2 + $0x35] sm:$0xff]
    %v786 = vld [vmem:[#allocation2 + $0x3d] sm:$0xff]
    %v787 = vld [vmem:[#allocation2 + $0x45] sm:$0xff]
    %v788 = vld [vmem:[#allocation2 + $0x4d] sm:$0xff]
    %v789 = vld [vmem:[#allocation2 + $0x55] sm:$0xff]
    %v790 = vld [vmem:[#allocation2 + $0x5d] sm:$0xff]
    %v791 = vld [vmem:[#allocation2 + $0x65] sm:$0xff]
    %v792 = vld [vmem:[#allocation2 + $0x6d] sm:$0xff]
    %v793 = vld [vmem:[#allocation2 + $0x75] sm:$0xff]
    %v794 = vld [vmem:[#allocation2 + $0x7d] sm:$0xff]
    %v795 = vld [vmem:[#allocation2 + $0x85] sm:$0xff]
    %v796 = vld [vmem:[#allocation2 + $0x8d] sm:$0xff]
    %v797 = vld [vmem:[#allocation2 + $0x95] sm:$0xff]
    %v798 = vld [vmem:[#allocation2 + $0x9d] sm:$0xff]
    %v799 = vld [vmem:[#allocation2 + $0xa5] sm:$0xff]
    %v800 = vld [vmem:[#allocation2 + $0xad] sm:$0xff]
    %v801 = vld [vmem:[#allocation2 + $0xb5] sm:$0xff]
    %v802 = vld [vmem:[#allocation2 + $0xbd] sm:$0xff]
    %v803 = vld [vmem:[#allocation2 + $0xc5] sm:$0xff]
    %v804 = vld [vmem:[#allocation2 + $0x6] sm:$0xff]
    %v805 = vld [vmem:[#allocation2 + $0xe] sm:$0xff]
    %v806 = vld [vmem:[#allocation2 + $0x16] sm:$0xff]
    %v807 = vld [vmem:[#allocation2 + $0x1e] sm:$0xff]
    %v808 = vld [vmem:[#allocation2 + $0x26] sm:$0xff]
    %v809 = vld [vmem:[#allocation2 + $0x2e] sm:$0xff]
    %v810 = vld [vmem:[#allocation2 + $0x36] sm:$0xff]
    %v811 = vld [vmem:[#allocation2 + $0x3e] sm:$0xff]
    %v812 = vld [vmem:[#allocation2 + $0x46] sm:$0xff]
    %v813 = vld [vmem:[#allocation2 + $0x4e] sm:$0xff]
    %v814 = vld [vmem:[#allocation2 + $0x56] sm:$0xff]
    %v815 = vld [vmem:[#allocation2 + $0x5e] sm:$0xff]
    %v816 = vld [vmem:[#allocation2 + $0x66] sm:$0xff]
    %v817 = vld [vmem:[#allocation2 + $0x6e] sm:$0xff]
    %v818 = vld [vmem:[#allocation2 + $0x76] sm:$0xff]
    %v819 = vld [vmem:[#allocation2 + $0x7e] sm:$0xff]
    %v820 = vld [vmem:[#allocation2 + $0x86] sm:$0xff]
    %v821 = vld [vmem:[#allocation2 + $0x8e] sm:$0xff]
    %v822 = vld [vmem:[#allocation2 + $0x96] sm:$0xff]
    %v823 = vld [vmem:[#allocation2 + $0x9e] sm:$0xff]
    %v824 = vld [vmem:[#allocation2 + $0xa6] sm:$0xff]
    %v825 = vld [vmem:[#allocation2 + $0xae] sm:$0xff]
    %v826 = vld [vmem:[#allocation2 + $0xb6] sm:$0xff]
    %v827 = vld [vmem:[#allocation2 + $0xbe] sm:$0xff]
    %v828 = vld [vmem:[#allocation2 + $0xc6] sm:$0xff]
    %v829 = vld [vmem:[#allocation2 + $0x7] sm:$0xff]
    %v830 = vld [vmem:[#allocation2 + $0xf] sm:$0xff]
    %v831 = vld [vmem:[#allocation2 + $0x17] sm:$0xff]
    %v832 = vld [vmem:[#allocation2 + $0x1f] sm:$0xff]
    %v833 = vld [vmem:[#allocation2 + $0x27] sm:$0xff]
    %v834 = vld [vmem:[#allocation2 + $0x2f] sm:$0xff]
    %v835 = vld [vmem:[#allocation2 + $0x37] sm:$0xff]
    %v836 = vld [vmem:[#allocation2 + $0x3f] sm:$0xff]
    %v837 = vld [vmem:[#allocation2 + $0x47] sm:$0xff]
    %v838 = vld [vmem:[#allocation2 + $0x4f] sm:$0xff]
    %v839 = vld [vmem:[#allocation2 + $0x57] sm:$0xff]
    %v840 = vld [vmem:[#allocation2 + $0x5f] sm:$0xff]
    %v841 = vld [vmem:[#allocation2 + $0x67] sm:$0xff]
    %v842 = vld [vmem:[#allocation2 + $0x6f] sm:$0xff]
    %v843 = vld [vmem:[#allocation2 + $0x77] sm:$0xff]
    %v844 = vld [vmem:[#allocation2 + $0x7f] sm:$0xff]
    %v845 = vld [vmem:[#allocation2 + $0x87] sm:$0xff]
    %v846 = vld [vmem:[#allocation2 + $0x8f] sm:$0xff]
    %v847 = vld [vmem:[#allocation2 + $0x97] sm:$0xff]
    %v848 = vld [vmem:[#allocation2 + $0x9f] sm:$0xff]
    %v849 = vld [vmem:[#allocation2 + $0xa7] sm:$0xff]
    %v850 = vld [vmem:[#allocation2 + $0xaf] sm:$0xff]
    %v851 = vld [vmem:[#allocation2 + $0xb7] sm:$0xff]
    %v852 = vld [vmem:[#allocation2 + $0xbf] sm:$0xff]
    %v853 = vld [vmem:[#allocation2 + $0xc7] sm:$0xff]
    %v854 = vld [vmem:[#allocation2 + $0xcf] sm:$0xff]
    %880 = vrot.lane.b32.xlu0 %v804, 32
    %v881 = vpop.permute.xlu0 %880
    %882 = vrot.lane.b32.xlu0 %v805, 32
    %v883 = vpop.permute.xlu0 %882
    %884 = vrot.lane.b32.xlu0 %v806, 32
    %v885 = vpop.permute.xlu0 %884
    %886 = vrot.lane.b32.xlu0 %v807, 32
    %v887 = vpop.permute.xlu0 %886
    %888 = vrot.lane.b32.xlu0 %v808, 32
    %v889 = vpop.permute.xlu0 %888
    %890 = vrot.lane.b32.xlu0 %v809, 32
    %v891 = vpop.permute.xlu0 %890
    %892 = vrot.lane.b32.xlu0 %v810, 32
    %v893 = vpop.permute.xlu0 %892
    %894 = vrot.lane.b32.xlu0 %v811, 32
    %v895 = vpop.permute.xlu0 %894
    %896 = vrot.lane.b32.xlu0 %v812, 32
    %v897 = vpop.permute.xlu0 %896
    %898 = vrot.lane.b32.xlu0 %v813, 32
    %v899 = vpop.permute.xlu0 %898
    %900 = vrot.lane.b32.xlu0 %v814, 32
    %v901 = vpop.permute.xlu0 %900
    %902 = vrot.lane.b32.xlu0 %v815, 32
    %v903 = vpop.permute.xlu0 %902
    %904 = vrot.lane.b32.xlu0 %v816, 32
    %v905 = vpop.permute.xlu0 %904
    %906 = vrot.lane.b32.xlu0 %v817, 32
    %v907 = vpop.permute.xlu0 %906
    %908 = vrot.lane.b32.xlu0 %v818, 32
    %v909 = vpop.permute.xlu0 %908
    %910 = vrot.lane.b32.xlu0 %v819, 32
    %v911 = vpop.permute.xlu0 %910
    %912 = vrot.lane.b32.xlu0 %v820, 32
    %v913 = vpop.permute.xlu0 %912
    %914 = vrot.lane.b32.xlu0 %v821, 32
    %v915 = vpop.permute.xlu0 %914
    %916 = vrot.lane.b32.xlu0 %v822, 32
    %v917 = vpop.permute.xlu0 %916
    %918 = vrot.lane.b32.xlu0 %v823, 32
    %v919 = vpop.permute.xlu0 %918
    %920 = vrot.lane.b32.xlu0 %v824, 32
    %v921 = vpop.permute.xlu0 %920
    %922 = vrot.lane.b32.xlu0 %v825, 32
    %v923 = vpop.permute.xlu0 %922
    %924 = vrot.lane.b32.xlu0 %v826, 32
    %v925 = vpop.permute.xlu0 %924
    %926 = vrot.lane.b32.xlu0 %v827, 32
    %v927 = vpop.permute.xlu0 %926
    %928 = vrot.lane.b32.xlu0 %v828, 32
    %v929 = vpop.permute.xlu0 %928
    %980 = vrot.lane.b32.xlu0 %v829, 64
    %v981 = vpop.permute.xlu0 %980
    %982 = vrot.lane.b32.xlu0 %v830, 64
    %v983 = vpop.permute.xlu0 %982
    %984 = vrot.lane.b32.xlu0 %v831, 64
    %v985 = vpop.permute.xlu0 %984
    %986 = vrot.lane.b32.xlu0 %v832, 64
    %v987 = vpop.permute.xlu0 %986
    %988 = vrot.lane.b32.xlu0 %v833, 64
    %v989 = vpop.permute.xlu0 %988
    %990 = vrot.lane.b32.xlu0 %v834, 64
    %v991 = vpop.permute.xlu0 %990
    %992 = vrot.lane.b32.xlu0 %v835, 64
    %v993 = vpop.permute.xlu0 %992
    %994 = vrot.lane.b32.xlu0 %v836, 64
    %v995 = vpop.permute.xlu0 %994
    %996 = vrot.lane.b32.xlu0 %v837, 64
    %v997 = vpop.permute.xlu0 %996
    %998 = vrot.lane.b32.xlu0 %v838, 64
    %v999 = vpop.permute.xlu0 %998
    %1000 = vrot.lane.b32.xlu0 %v839, 64
    %v1001 = vpop.permute.xlu0 %1000
    %1002 = vrot.lane.b32.xlu0 %v840, 64
    %v1003 = vpop.permute.xlu0 %1002
    %1004 = vrot.lane.b32.xlu0 %v841, 64
    %v1005 = vpop.permute.xlu0 %1004
    %1006 = vrot.lane.b32.xlu0 %v842, 64
    %v1007 = vpop.permute.xlu0 %1006
    %1008 = vrot.lane.b32.xlu0 %v843, 64
    %v1009 = vpop.permute.xlu0 %1008
    %1010 = vrot.lane.b32.xlu0 %v844, 64
    %v1011 = vpop.permute.xlu0 %1010
    %1012 = vrot.lane.b32.xlu0 %v845, 64
    %v1013 = vpop.permute.xlu0 %1012
    %1014 = vrot.lane.b32.xlu0 %v846, 64
    %v1015 = vpop.permute.xlu0 %1014
    %1016 = vrot.lane.b32.xlu0 %v847, 64
    %v1017 = vpop.permute.xlu0 %1016
    %1018 = vrot.lane.b32.xlu0 %v848, 64
    %v1019 = vpop.permute.xlu0 %1018
    %1020 = vrot.lane.b32.xlu0 %v849, 64
    %v1021 = vpop.permute.xlu0 %1020
    %1022 = vrot.lane.b32.xlu0 %v850, 64
    %v1023 = vpop.permute.xlu0 %1022
    %1024 = vrot.lane.b32.xlu0 %v851, 64
    %v1025 = vpop.permute.xlu0 %1024
    %1026 = vrot.lane.b32.xlu0 %v852, 64
    %v1027 = vpop.permute.xlu0 %1026
    %1028 = vrot.lane.b32.xlu0 %v853, 64
    %v1029 = vpop.permute.xlu0 %1028
    %1056 = vrot.lane.b32.xlu0 %v830, 96
    %v1057 = vpop.permute.xlu0 %1056
    %1058 = vrot.lane.b32.xlu0 %v831, 96
    %v1059 = vpop.permute.xlu0 %1058
    %1060 = vrot.lane.b32.xlu0 %v832, 96
    %v1061 = vpop.permute.xlu0 %1060
    %1062 = vrot.lane.b32.xlu0 %v833, 96
    %v1063 = vpop.permute.xlu0 %1062
    %1064 = vrot.lane.b32.xlu0 %v834, 96
    %v1065 = vpop.permute.xlu0 %1064
    %1066 = vrot.lane.b32.xlu0 %v835, 96
    %v1067 = vpop.permute.xlu0 %1066
    %1068 = vrot.lane.b32.xlu0 %v836, 96
    %v1069 = vpop.permute.xlu0 %1068
    %1070 = vrot.lane.b32.xlu0 %v837, 96
    %v1071 = vpop.permute.xlu0 %1070
    %1072 = vrot.lane.b32.xlu0 %v838, 96
    %v1073 = vpop.permute.xlu0 %1072
    %1074 = vrot.lane.b32.xlu0 %v839, 96
    %v1075 = vpop.permute.xlu0 %1074
    %1076 = vrot.lane.b32.xlu0 %v840, 96
    %v1077 = vpop.permute.xlu0 %1076
    %1078 = vrot.lane.b32.xlu0 %v841, 96
    %v1079 = vpop.permute.xlu0 %1078
    %1080 = vrot.lane.b32.xlu0 %v842, 96
    %v1081 = vpop.permute.xlu0 %1080
    %1082 = vrot.lane.b32.xlu0 %v843, 96
    %v1083 = vpop.permute.xlu0 %1082
    %1084 = vrot.lane.b32.xlu0 %v844, 96
    %v1085 = vpop.permute.xlu0 %1084
    %1086 = vrot.lane.b32.xlu0 %v845, 96
    %v1087 = vpop.permute.xlu0 %1086
    %1088 = vrot.lane.b32.xlu0 %v846, 96
    %v1089 = vpop.permute.xlu0 %1088
    %1090 = vrot.lane.b32.xlu0 %v847, 96
    %v1091 = vpop.permute.xlu0 %1090
    %1092 = vrot.lane.b32.xlu0 %v848, 96
    %v1093 = vpop.permute.xlu0 %1092
    %1094 = vrot.lane.b32.xlu0 %v849, 96
    %v1095 = vpop.permute.xlu0 %1094
    %1096 = vrot.lane.b32.xlu0 %v850, 96
    %v1097 = vpop.permute.xlu0 %1096
    %1098 = vrot.lane.b32.xlu0 %v851, 96
    %v1099 = vpop.permute.xlu0 %1098
    %1100 = vrot.lane.b32.xlu0 %v852, 96
    %v1101 = vpop.permute.xlu0 %1100
    %1102 = vrot.lane.b32.xlu0 %v853, 96
    %v1103 = vpop.permute.xlu0 %1102
    %1104 = vrot.lane.b32.xlu0 %v854, 96
    %v1105 = vpop.permute.xlu0 %1104
    %v1131 = vsel %vm109, %v779, %v881
    %v1132 = vsel %vm109, %v780, %v883
    %v1133 = vsel %vm109, %v781, %v885
    %v1134 = vsel %vm109, %v782, %v887
    %v1135 = vsel %vm109, %v783, %v889
    %v1136 = vsel %vm109, %v784, %v891
    %v1137 = vsel %vm109, %v785, %v893
    %v1138 = vsel %vm109, %v786, %v895
    %v1139 = vsel %vm109, %v787, %v897
    %v1140 = vsel %vm109, %v788, %v899
    %v1141 = vsel %vm109, %v789, %v901
    %v1142 = vsel %vm109, %v790, %v903
    %v1143 = vsel %vm109, %v791, %v905
    %v1144 = vsel %vm109, %v792, %v907
    %v1145 = vsel %vm109, %v793, %v909
    %v1146 = vsel %vm109, %v794, %v911
    %v1147 = vsel %vm109, %v795, %v913
    %v1148 = vsel %vm109, %v796, %v915
    %v1149 = vsel %vm109, %v797, %v917
    %v1150 = vsel %vm109, %v798, %v919
    %v1151 = vsel %vm109, %v799, %v921
    %v1152 = vsel %vm109, %v800, %v923
    %v1153 = vsel %vm109, %v801, %v925
    %v1154 = vsel %vm109, %v802, %v927
    %v1155 = vsel %vm109, %v803, %v929
    %vm1156 = vcmask 523264
    %v1157 = vsel %vm1156, %v1131, %v981
    %v1158 = vsel %vm1156, %v1132, %v983
    %v1159 = vsel %vm1156, %v1133, %v985
    %v1160 = vsel %vm1156, %v1134, %v987
    %v1161 = vsel %vm1156, %v1135, %v989
    %v1162 = vsel %vm1156, %v1136, %v991
    %v1163 = vsel %vm1156, %v1137, %v993
    %v1164 = vsel %vm1156, %v1138, %v995
    %v1165 = vsel %vm1156, %v1139, %v997
    %v1166 = vsel %vm1156, %v1140, %v999
    %v1167 = vsel %vm1156, %v1141, %v1001
    %v1168 = vsel %vm1156, %v1142, %v1003
    %v1169 = vsel %vm1156, %v1143, %v1005
    %v1170 = vsel %vm1156, %v1144, %v1007
    %v1171 = vsel %vm1156, %v1145, %v1009
    %v1172 = vsel %vm1156, %v1146, %v1011
    %v1173 = vsel %vm1156, %v1147, %v1013
    %v1174 = vsel %vm1156, %v1148, %v1015
    %v1175 = vsel %vm1156, %v1149, %v1017
    %v1176 = vsel %vm1156, %v1150, %v1019
    %v1177 = vsel %vm1156, %v1151, %v1021
    %v1178 = vsel %vm1156, %v1152, %v1023
    %v1179 = vsel %vm1156, %v1153, %v1025
    %v1180 = vsel %vm1156, %v1154, %v1027
    %v1181 = vsel %vm1156, %v1155, %v1029
    %vm1182 = vcmask 785408
    %v1183 = vsel %vm1182, %v1157, %v1057
    %v1184 = vsel %vm1182, %v1158, %v1059
    %v1185 = vsel %vm1182, %v1159, %v1061
    %v1186 = vsel %vm1182, %v1160, %v1063
    %v1187 = vsel %vm1182, %v1161, %v1065
    %v1188 = vsel %vm1182, %v1162, %v1067
    %v1189 = vsel %vm1182, %v1163, %v1069
    %v1190 = vsel %vm1182, %v1164, %v1071
    %v1191 = vsel %vm1182, %v1165, %v1073
    %v1192 = vsel %vm1182, %v1166, %v1075
    %v1193 = vsel %vm1182, %v1167, %v1077
    %v1194 = vsel %vm1182, %v1168, %v1079
    %v1195 = vsel %vm1182, %v1169, %v1081
    %v1196 = vsel %vm1182, %v1170, %v1083
    %v1197 = vsel %vm1182, %v1171, %v1085
    %v1198 = vsel %vm1182, %v1172, %v1087
    %v1199 = vsel %vm1182, %v1173, %v1089
    %v1200 = vsel %vm1182, %v1174, %v1091
    %v1201 = vsel %vm1182, %v1175, %v1093
    %v1202 = vsel %vm1182, %v1176, %v1095
    %v1203 = vsel %vm1182, %v1177, %v1097
    %v1204 = vsel %vm1182, %v1178, %v1099
    %v1205 = vsel %vm1182, %v1179, %v1101
    %v1206 = vsel %vm1182, %v1180, %v1103
    %v1207 = vsel %vm1182, %v1181, %v1105
    %v1208 = vpack.c.bf16 %v1184, %v1183
    %v1209 = vpack.c.bf16 %v1186, %v1185
    %v1210 = vpack.c.bf16 %v1188, %v1187
    %v1211 = vpack.c.bf16 %v1190, %v1189
    %v1212 = vpack.c.bf16 %v1192, %v1191
    %v1213 = vpack.c.bf16 %v1194, %v1193
    %v1214 = vpack.c.bf16 %v1196, %v1195
    %v1215 = vpack.c.bf16 %v1198, %v1197
    %v1216 = vpack.c.bf16 %v1200, %v1199
    %v1217 = vpack.c.bf16 %v1202, %v1201
    %v1218 = vpack.c.bf16 %v1204, %v1203
    %v1219 = vpack.c.bf16 %v1206, %v1205
    %v1220 = vpack.c.bf16 %v1207, %v1207
    %v1234 = vunpack.c.l.b16 %v1208
    %v1235 = vunpack.c.h.b16 %v1208
    %v1236 = vunpack.c.l.b16 %v1209
    %v1237 = vunpack.c.h.b16 %v1209
    %v1238 = vunpack.c.l.b16 %v1210
    %v1239 = vunpack.c.h.b16 %v1210
    %v1240 = vunpack.c.l.b16 %v1211
    %v1241 = vunpack.c.h.b16 %v1211
    %v1242 = vunpack.c.l.b16 %v1212
    %v1243 = vunpack.c.h.b16 %v1212
    %v1244 = vunpack.c.l.b16 %v1213
    %v1245 = vunpack.c.h.b16 %v1213
    %v1246 = vunpack.c.l.b16 %v1214
    %v1247 = vunpack.c.h.b16 %v1214
    %v1248 = vunpack.c.l.b16 %v1215
    %v1249 = vunpack.c.h.b16 %v1215
    %v1250 = vunpack.c.l.b16 %v1216
    %v1251 = vunpack.c.h.b16 %v1216
    %v1252 = vunpack.c.l.b16 %v1217
    %v1253 = vunpack.c.h.b16 %v1217
    %v1254 = vunpack.c.l.b16 %v1218
    %v1255 = vunpack.c.h.b16 %v1218
    %v1256 = vunpack.c.l.b16 %v1219
    %v1257 = vunpack.c.h.b16 %v1219
    %v1258 = vunpack.c.l.b16 %v1220
    %v1259 = vpack.c.b16 %v1234, %v1234
    %v1260 = vpack.c.b16 %v1235, %v1235
    %v1261 = vpack.c.b16 %v1236, %v1236
    %v1262 = vpack.c.b16 %v1237, %v1237
    %v1263 = vpack.c.b16 %v1238, %v1238
    %v1264 = vpack.c.b16 %v1239, %v1239
    %v1265 = vpack.c.b16 %v1240, %v1240
    %v1266 = vpack.c.b16 %v1241, %v1241
    %v1267 = vpack.c.b16 %v1242, %v1242
    %v1268 = vpack.c.b16 %v1243, %v1243
    %v1269 = vpack.c.b16 %v1244, %v1244
    %v1270 = vpack.c.b16 %v1245, %v1245
    %v1271 = vpack.c.b16 %v1246, %v1246
    %v1272 = vpack.c.b16 %v1247, %v1247
    %v1273 = vpack.c.b16 %v1248, %v1248
    %v1274 = vpack.c.b16 %v1249, %v1249
    %v1275 = vpack.c.b16 %v1250, %v1250
    %v1276 = vpack.c.b16 %v1251, %v1251
    %v1277 = vpack.c.b16 %v1252, %v1252
    %v1278 = vpack.c.b16 %v1253, %v1253
    %v1279 = vpack.c.b16 %v1254, %v1254
    %v1280 = vpack.c.b16 %v1255, %v1255
    %v1281 = vpack.c.b16 %v1256, %v1256
    %v1282 = vpack.c.b16 %v1257, %v1257
    %v1283 = vpack.c.b16 %v1258, %v1258
    %1309 = vst [vmem:[#allocation3] sm:$0xf] %v1259
    %1310 = vst [vmem:[#allocation3 + $0xc] sm:$0xf] %v1260
    %1311 = vst [vmem:[#allocation3 + $0x18] sm:$0xf] %v1261
    %1312 = vst [vmem:[#allocation3 + $0x24] sm:$0xf] %v1262
    %1313 = vst [vmem:[#allocation3 + $0x30] sm:$0xf] %v1263
    %1314 = vst [vmem:[#allocation3 + $0x3c] sm:$0xf] %v1264
    %1315 = vst [vmem:[#allocation3 + $0x48] sm:$0xf] %v1265
    %1316 = vst [vmem:[#allocation3 + $0x54] sm:$0xf] %v1266
    %1317 = vst [vmem:[#allocation3 + $0x60] sm:$0xf] %v1267
    %1318 = vst [vmem:[#allocation3 + $0x6c] sm:$0xf] %v1268
    %1319 = vst [vmem:[#allocation3 + $0x78] sm:$0xf] %v1269
    %1320 = vst [vmem:[#allocation3 + $0x84] sm:$0xf] %v1270
    %1321 = vst [vmem:[#allocation3 + $0x90] sm:$0xf] %v1271
    %1322 = vst [vmem:[#allocation3 + $0x9c] sm:$0xf] %v1272
    %1323 = vst [vmem:[#allocation3 + $0xa8] sm:$0xf] %v1273
    %1324 = vst [vmem:[#allocation3 + $0xb4] sm:$0xf] %v1274
    %1325 = vst [vmem:[#allocation3 + $0xc0] sm:$0xf] %v1275
    %1326 = vst [vmem:[#allocation3 + $0xcc] sm:$0xf] %v1276
    %1327 = vst [vmem:[#allocation3 + $0xd8] sm:$0xf] %v1277
    %1328 = vst [vmem:[#allocation3 + $0xe4] sm:$0xf] %v1278
    %1329 = vst [vmem:[#allocation3 + $0xf0] sm:$0xf] %v1279
    %1330 = vst [vmem:[#allocation3 + $0xfc] sm:$0xf] %v1280
    %1331 = vst [vmem:[#allocation3 + $0x108] sm:$0xf] %v1281
    %1332 = vst [vmem:[#allocation3 + $0x114] sm:$0xf] %v1282
    %1333 = vst [vmem:[#allocation3 + $0x120] sm:$0xf] %v1283
    %v1334 = vld [vmem:[#allocation2 + $0x10] sm:$0xff]
    %v1335 = vld [vmem:[#allocation2 + $0x18] sm:$0xff]
    %v1336 = vld [vmem:[#allocation2 + $0x20] sm:$0xff]
    %v1337 = vld [vmem:[#allocation2 + $0x28] sm:$0xff]
    %v1338 = vld [vmem:[#allocation2 + $0x30] sm:$0xff]
    %v1339 = vld [vmem:[#allocation2 + $0x38] sm:$0xff]
    %v1340 = vld [vmem:[#allocation2 + $0x40] sm:$0xff]
    %v1341 = vld [vmem:[#allocation2 + $0x48] sm:$0xff]
    %v1342 = vld [vmem:[#allocation2 + $0x50] sm:$0xff]
    %v1343 = vld [vmem:[#allocation2 + $0x58] sm:$0xff]
    %v1344 = vld [vmem:[#allocation2 + $0x60] sm:$0xff]
    %v1345 = vld [vmem:[#allocation2 + $0x68] sm:$0xff]
    %v1346 = vld [vmem:[#allocation2 + $0x70] sm:$0xff]
    %v1347 = vld [vmem:[#allocation2 + $0x78] sm:$0xff]
    %v1348 = vld [vmem:[#allocation2 + $0x80] sm:$0xff]
    %v1349 = vld [vmem:[#allocation2 + $0x88] sm:$0xff]
    %v1350 = vld [vmem:[#allocation2 + $0x90] sm:$0xff]
    %v1351 = vld [vmem:[#allocation2 + $0x98] sm:$0xff]
    %v1352 = vld [vmem:[#allocation2 + $0xa0] sm:$0xff]
    %v1353 = vld [vmem:[#allocation2 + $0xa8] sm:$0xff]
    %v1354 = vld [vmem:[#allocation2 + $0xb0] sm:$0xff]
    %v1355 = vld [vmem:[#allocation2 + $0xb8] sm:$0xff]
    %v1356 = vld [vmem:[#allocation2 + $0xc0] sm:$0xff]
    %v1357 = vld [vmem:[#allocation2 + $0xc8] sm:$0xff]
    %v1358 = vld [vmem:[#allocation2 + $0xd0] sm:$0xff]
    %v1359 = vld [vmem:[#allocation2 + $0x11] sm:$0xff]
    %v1360 = vld [vmem:[#allocation2 + $0x19] sm:$0xff]
    %v1361 = vld [vmem:[#allocation2 + $0x21] sm:$0xff]
    %v1362 = vld [vmem:[#allocation2 + $0x29] sm:$0xff]
    %v1363 = vld [vmem:[#allocation2 + $0x31] sm:$0xff]
    %v1364 = vld [vmem:[#allocation2 + $0x39] sm:$0xff]
    %v1365 = vld [vmem:[#allocation2 + $0x41] sm:$0xff]
    %v1366 = vld [vmem:[#allocation2 + $0x49] sm:$0xff]
    %v1367 = vld [vmem:[#allocation2 + $0x51] sm:$0xff]
    %v1368 = vld [vmem:[#allocation2 + $0x59] sm:$0xff]
    %v1369 = vld [vmem:[#allocation2 + $0x61] sm:$0xff]
    %v1370 = vld [vmem:[#allocation2 + $0x69] sm:$0xff]
    %v1371 = vld [vmem:[#allocation2 + $0x71] sm:$0xff]
    %v1372 = vld [vmem:[#allocation2 + $0x79] sm:$0xff]
    %v1373 = vld [vmem:[#allocation2 + $0x81] sm:$0xff]
    %v1374 = vld [vmem:[#allocation2 + $0x89] sm:$0xff]
    %v1375 = vld [vmem:[#allocation2 + $0x91] sm:$0xff]
    %v1376 = vld [vmem:[#allocation2 + $0x99] sm:$0xff]
    %v1377 = vld [vmem:[#allocation2 + $0xa1] sm:$0xff]
    %v1378 = vld [vmem:[#allocation2 + $0xa9] sm:$0xff]
    %v1379 = vld [vmem:[#allocation2 + $0xb1] sm:$0xff]
    %v1380 = vld [vmem:[#allocation2 + $0xb9] sm:$0xff]
    %v1381 = vld [vmem:[#allocation2 + $0xc1] sm:$0xff]
    %v1382 = vld [vmem:[#allocation2 + $0xc9] sm:$0xff]
    %v1383 = vld [vmem:[#allocation2 + $0xd1] sm:$0xff]
    %v1384 = vld [vmem:[#allocation2 + $0xd9] sm:$0xff]
    %v1385 = vld [vmem:[#allocation2 + $0x1a] sm:$0xff]
    %v1386 = vld [vmem:[#allocation2 + $0x22] sm:$0xff]
    %v1387 = vld [vmem:[#allocation2 + $0x2a] sm:$0xff]
    %v1388 = vld [vmem:[#allocation2 + $0x32] sm:$0xff]
    %v1389 = vld [vmem:[#allocation2 + $0x3a] sm:$0xff]
    %v1390 = vld [vmem:[#allocation2 + $0x42] sm:$0xff]
    %v1391 = vld [vmem:[#allocation2 + $0x4a] sm:$0xff]
    %v1392 = vld [vmem:[#allocation2 + $0x52] sm:$0xff]
    %v1393 = vld [vmem:[#allocation2 + $0x5a] sm:$0xff]
    %v1394 = vld [vmem:[#allocation2 + $0x62] sm:$0xff]
    %v1395 = vld [vmem:[#allocation2 + $0x6a] sm:$0xff]
    %v1396 = vld [vmem:[#allocation2 + $0x72] sm:$0xff]
    %v1397 = vld [vmem:[#allocation2 + $0x7a] sm:$0xff]
    %v1398 = vld [vmem:[#allocation2 + $0x82] sm:$0xff]
    %v1399 = vld [vmem:[#allocation2 + $0x8a] sm:$0xff]
    %v1400 = vld [vmem:[#allocation2 + $0x92] sm:$0xff]
    %v1401 = vld [vmem:[#allocation2 + $0x9a] sm:$0xff]
    %v1402 = vld [vmem:[#allocation2 + $0xa2] sm:$0xff]
    %v1403 = vld [vmem:[#allocation2 + $0xaa] sm:$0xff]
    %v1404 = vld [vmem:[#allocation2 + $0xb2] sm:$0xff]
    %v1405 = vld [vmem:[#allocation2 + $0xba] sm:$0xff]
    %v1406 = vld [vmem:[#allocation2 + $0xc2] sm:$0xff]
    %v1407 = vld [vmem:[#allocation2 + $0xca] sm:$0xff]
    %v1408 = vld [vmem:[#allocation2 + $0xd2] sm:$0xff]
    %v1409 = vld [vmem:[#allocation2 + $0xda] sm:$0xff]
    %1435 = vrot.lane.b32.xlu0 %v1359, 32
    %v1436 = vpop.permute.xlu0 %1435
    %1437 = vrot.lane.b32.xlu0 %v1360, 32
    %v1438 = vpop.permute.xlu0 %1437
    %1439 = vrot.lane.b32.xlu0 %v1361, 32
    %v1440 = vpop.permute.xlu0 %1439
    %1441 = vrot.lane.b32.xlu0 %v1362, 32
    %v1442 = vpop.permute.xlu0 %1441
    %1443 = vrot.lane.b32.xlu0 %v1363, 32
    %v1444 = vpop.permute.xlu0 %1443
    %1445 = vrot.lane.b32.xlu0 %v1364, 32
    %v1446 = vpop.permute.xlu0 %1445
    %1447 = vrot.lane.b32.xlu0 %v1365, 32
    %v1448 = vpop.permute.xlu0 %1447
    %1449 = vrot.lane.b32.xlu0 %v1366, 32
    %v1450 = vpop.permute.xlu0 %1449
    %1451 = vrot.lane.b32.xlu0 %v1367, 32
    %v1452 = vpop.permute.xlu0 %1451
    %1453 = vrot.lane.b32.xlu0 %v1368, 32
    %v1454 = vpop.permute.xlu0 %1453
    %1455 = vrot.lane.b32.xlu0 %v1369, 32
    %v1456 = vpop.permute.xlu0 %1455
    %1457 = vrot.lane.b32.xlu0 %v1370, 32
    %v1458 = vpop.permute.xlu0 %1457
    %1459 = vrot.lane.b32.xlu0 %v1371, 32
    %v1460 = vpop.permute.xlu0 %1459
    %1461 = vrot.lane.b32.xlu0 %v1372, 32
    %v1462 = vpop.permute.xlu0 %1461
    %1463 = vrot.lane.b32.xlu0 %v1373, 32
    %v1464 = vpop.permute.xlu0 %1463
    %1465 = vrot.lane.b32.xlu0 %v1374, 32
    %v1466 = vpop.permute.xlu0 %1465
    %1467 = vrot.lane.b32.xlu0 %v1375, 32
    %v1468 = vpop.permute.xlu0 %1467
    %1469 = vrot.lane.b32.xlu0 %v1376, 32
    %v1470 = vpop.permute.xlu0 %1469
    %1471 = vrot.lane.b32.xlu0 %v1377, 32
    %v1472 = vpop.permute.xlu0 %1471
    %1473 = vrot.lane.b32.xlu0 %v1378, 32
    %v1474 = vpop.permute.xlu0 %1473
    %1475 = vrot.lane.b32.xlu0 %v1379, 32
    %v1476 = vpop.permute.xlu0 %1475
    %1477 = vrot.lane.b32.xlu0 %v1380, 32
    %v1478 = vpop.permute.xlu0 %1477
    %1479 = vrot.lane.b32.xlu0 %v1381, 32
    %v1480 = vpop.permute.xlu0 %1479
    %1481 = vrot.lane.b32.xlu0 %v1382, 32
    %v1482 = vpop.permute.xlu0 %1481
    %1483 = vrot.lane.b32.xlu0 %v1383, 32
    %v1484 = vpop.permute.xlu0 %1483
    %1511 = vrot.lane.b32.xlu0 %v1360, 64
    %v1512 = vpop.permute.xlu0 %1511
    %1513 = vrot.lane.b32.xlu0 %v1361, 64
    %v1514 = vpop.permute.xlu0 %1513
    %1515 = vrot.lane.b32.xlu0 %v1362, 64
    %v1516 = vpop.permute.xlu0 %1515
    %1517 = vrot.lane.b32.xlu0 %v1363, 64
    %v1518 = vpop.permute.xlu0 %1517
    %1519 = vrot.lane.b32.xlu0 %v1364, 64
    %v1520 = vpop.permute.xlu0 %1519
    %1521 = vrot.lane.b32.xlu0 %v1365, 64
    %v1522 = vpop.permute.xlu0 %1521
    %1523 = vrot.lane.b32.xlu0 %v1366, 64
    %v1524 = vpop.permute.xlu0 %1523
    %1525 = vrot.lane.b32.xlu0 %v1367, 64
    %v1526 = vpop.permute.xlu0 %1525
    %1527 = vrot.lane.b32.xlu0 %v1368, 64
    %v1528 = vpop.permute.xlu0 %1527
    %1529 = vrot.lane.b32.xlu0 %v1369, 64
    %v1530 = vpop.permute.xlu0 %1529
    %1531 = vrot.lane.b32.xlu0 %v1370, 64
    %v1532 = vpop.permute.xlu0 %1531
    %1533 = vrot.lane.b32.xlu0 %v1371, 64
    %v1534 = vpop.permute.xlu0 %1533
    %1535 = vrot.lane.b32.xlu0 %v1372, 64
    %v1536 = vpop.permute.xlu0 %1535
    %1537 = vrot.lane.b32.xlu0 %v1373, 64
    %v1538 = vpop.permute.xlu0 %1537
    %1539 = vrot.lane.b32.xlu0 %v1374, 64
    %v1540 = vpop.permute.xlu0 %1539
    %1541 = vrot.lane.b32.xlu0 %v1375, 64
    %v1542 = vpop.permute.xlu0 %1541
    %1543 = vrot.lane.b32.xlu0 %v1376, 64
    %v1544 = vpop.permute.xlu0 %1543
    %1545 = vrot.lane.b32.xlu0 %v1377, 64
    %v1546 = vpop.permute.xlu0 %1545
    %1547 = vrot.lane.b32.xlu0 %v1378, 64
    %v1548 = vpop.permute.xlu0 %1547
    %1549 = vrot.lane.b32.xlu0 %v1379, 64
    %v1550 = vpop.permute.xlu0 %1549
    %1551 = vrot.lane.b32.xlu0 %v1380, 64
    %v1552 = vpop.permute.xlu0 %1551
    %1553 = vrot.lane.b32.xlu0 %v1381, 64
    %v1554 = vpop.permute.xlu0 %1553
    %1555 = vrot.lane.b32.xlu0 %v1382, 64
    %v1556 = vpop.permute.xlu0 %1555
    %1557 = vrot.lane.b32.xlu0 %v1383, 64
    %v1558 = vpop.permute.xlu0 %1557
    %1559 = vrot.lane.b32.xlu0 %v1384, 64
    %v1560 = vpop.permute.xlu0 %1559
    %1611 = vrot.lane.b32.xlu0 %v1385, 96
    %v1612 = vpop.permute.xlu0 %1611
    %1613 = vrot.lane.b32.xlu0 %v1386, 96
    %v1614 = vpop.permute.xlu0 %1613
    %1615 = vrot.lane.b32.xlu0 %v1387, 96
    %v1616 = vpop.permute.xlu0 %1615
    %1617 = vrot.lane.b32.xlu0 %v1388, 96
    %v1618 = vpop.permute.xlu0 %1617
    %1619 = vrot.lane.b32.xlu0 %v1389, 96
    %v1620 = vpop.permute.xlu0 %1619
    %1621 = vrot.lane.b32.xlu0 %v1390, 96
    %v1622 = vpop.permute.xlu0 %1621
    %1623 = vrot.lane.b32.xlu0 %v1391, 96
    %v1624 = vpop.permute.xlu0 %1623
    %1625 = vrot.lane.b32.xlu0 %v1392, 96
    %v1626 = vpop.permute.xlu0 %1625
    %1627 = vrot.lane.b32.xlu0 %v1393, 96
    %v1628 = vpop.permute.xlu0 %1627
    %1629 = vrot.lane.b32.xlu0 %v1394, 96
    %v1630 = vpop.permute.xlu0 %1629
    %1631 = vrot.lane.b32.xlu0 %v1395, 96
    %v1632 = vpop.permute.xlu0 %1631
    %1633 = vrot.lane.b32.xlu0 %v1396, 96
    %v1634 = vpop.permute.xlu0 %1633
    %1635 = vrot.lane.b32.xlu0 %v1397, 96
    %v1636 = vpop.permute.xlu0 %1635
    %1637 = vrot.lane.b32.xlu0 %v1398, 96
    %v1638 = vpop.permute.xlu0 %1637
    %1639 = vrot.lane.b32.xlu0 %v1399, 96
    %v1640 = vpop.permute.xlu0 %1639
    %1641 = vrot.lane.b32.xlu0 %v1400, 96
    %v1642 = vpop.permute.xlu0 %1641
    %1643 = vrot.lane.b32.xlu0 %v1401, 96
    %v1644 = vpop.permute.xlu0 %1643
    %1645 = vrot.lane.b32.xlu0 %v1402, 96
    %v1646 = vpop.permute.xlu0 %1645
    %1647 = vrot.lane.b32.xlu0 %v1403, 96
    %v1648 = vpop.permute.xlu0 %1647
    %1649 = vrot.lane.b32.xlu0 %v1404, 96
    %v1650 = vpop.permute.xlu0 %1649
    %1651 = vrot.lane.b32.xlu0 %v1405, 96
    %v1652 = vpop.permute.xlu0 %1651
    %1653 = vrot.lane.b32.xlu0 %v1406, 96
    %v1654 = vpop.permute.xlu0 %1653
    %1655 = vrot.lane.b32.xlu0 %v1407, 96
    %v1656 = vpop.permute.xlu0 %1655
    %1657 = vrot.lane.b32.xlu0 %v1408, 96
    %v1658 = vpop.permute.xlu0 %1657
    %1659 = vrot.lane.b32.xlu0 %v1409, 96
    %v1660 = vpop.permute.xlu0 %1659
    %v1686 = vsel %vm109, %v1334, %v1436
    %v1687 = vsel %vm109, %v1335, %v1438
    %v1688 = vsel %vm109, %v1336, %v1440
    %v1689 = vsel %vm109, %v1337, %v1442
    %v1690 = vsel %vm109, %v1338, %v1444
    %v1691 = vsel %vm109, %v1339, %v1446
    %v1692 = vsel %vm109, %v1340, %v1448
    %v1693 = vsel %vm109, %v1341, %v1450
    %v1694 = vsel %vm109, %v1342, %v1452
    %v1695 = vsel %vm109, %v1343, %v1454
    %v1696 = vsel %vm109, %v1344, %v1456
    %v1697 = vsel %vm109, %v1345, %v1458
    %v1698 = vsel %vm109, %v1346, %v1460
    %v1699 = vsel %vm109, %v1347, %v1462
    %v1700 = vsel %vm109, %v1348, %v1464
    %v1701 = vsel %vm109, %v1349, %v1466
    %v1702 = vsel %vm109, %v1350, %v1468
    %v1703 = vsel %vm109, %v1351, %v1470
    %v1704 = vsel %vm109, %v1352, %v1472
    %v1705 = vsel %vm109, %v1353, %v1474
    %v1706 = vsel %vm109, %v1354, %v1476
    %v1707 = vsel %vm109, %v1355, %v1478
    %v1708 = vsel %vm109, %v1356, %v1480
    %v1709 = vsel %vm109, %v1357, %v1482
    %v1710 = vsel %vm109, %v1358, %v1484
    %v1711 = vsel %vm1156, %v1686, %v1512
    %v1712 = vsel %vm1156, %v1687, %v1514
    %v1713 = vsel %vm1156, %v1688, %v1516
    %v1714 = vsel %vm1156, %v1689, %v1518
    %v1715 = vsel %vm1156, %v1690, %v1520
    %v1716 = vsel %vm1156, %v1691, %v1522
    %v1717 = vsel %vm1156, %v1692, %v1524
    %v1718 = vsel %vm1156, %v1693, %v1526
    %v1719 = vsel %vm1156, %v1694, %v1528
    %v1720 = vsel %vm1156, %v1695, %v1530
    %v1721 = vsel %vm1156, %v1696, %v1532
    %v1722 = vsel %vm1156, %v1697, %v1534
    %v1723 = vsel %vm1156, %v1698, %v1536
    %v1724 = vsel %vm1156, %v1699, %v1538
    %v1725 = vsel %vm1156, %v1700, %v1540
    %v1726 = vsel %vm1156, %v1701, %v1542
    %v1727 = vsel %vm1156, %v1702, %v1544
    %v1728 = vsel %vm1156, %v1703, %v1546
    %v1729 = vsel %vm1156, %v1704, %v1548
    %v1730 = vsel %vm1156, %v1705, %v1550
    %v1731 = vsel %vm1156, %v1706, %v1552
    %v1732 = vsel %vm1156, %v1707, %v1554
    %v1733 = vsel %vm1156, %v1708, %v1556
    %v1734 = vsel %vm1156, %v1709, %v1558
    %v1735 = vsel %vm1156, %v1710, %v1560
    %v1736 = vsel %vm1182, %v1711, %v1612
    %v1737 = vsel %vm1182, %v1712, %v1614
    %v1738 = vsel %vm1182, %v1713, %v1616
    %v1739 = vsel %vm1182, %v1714, %v1618
    %v1740 = vsel %vm1182, %v1715, %v1620
    %v1741 = vsel %vm1182, %v1716, %v1622
    %v1742 = vsel %vm1182, %v1717, %v1624
    %v1743 = vsel %vm1182, %v1718, %v1626
    %v1744 = vsel %vm1182, %v1719, %v1628
    %v1745 = vsel %vm1182, %v1720, %v1630
    %v1746 = vsel %vm1182, %v1721, %v1632
    %v1747 = vsel %vm1182, %v1722, %v1634
    %v1748 = vsel %vm1182, %v1723, %v1636
    %v1749 = vsel %vm1182, %v1724, %v1638
    %v1750 = vsel %vm1182, %v1725, %v1640
    %v1751 = vsel %vm1182, %v1726, %v1642
    %v1752 = vsel %vm1182, %v1727, %v1644
    %v1753 = vsel %vm1182, %v1728, %v1646
    %v1754 = vsel %vm1182, %v1729, %v1648
    %v1755 = vsel %vm1182, %v1730, %v1650
    %v1756 = vsel %vm1182, %v1731, %v1652
    %v1757 = vsel %vm1182, %v1732, %v1654
    %v1758 = vsel %vm1182, %v1733, %v1656
    %v1759 = vsel %vm1182, %v1734, %v1658
    %v1760 = vsel %vm1182, %v1735, %v1660
    %v1761 = vpack.c.bf16 %v1737, %v1736
    %v1762 = vpack.c.bf16 %v1739, %v1738
    %v1763 = vpack.c.bf16 %v1741, %v1740
    %v1764 = vpack.c.bf16 %v1743, %v1742
    %v1765 = vpack.c.bf16 %v1745, %v1744
    %v1766 = vpack.c.bf16 %v1747, %v1746
    %v1767 = vpack.c.bf16 %v1749, %v1748
    %v1768 = vpack.c.bf16 %v1751, %v1750
    %v1769 = vpack.c.bf16 %v1753, %v1752
    %v1770 = vpack.c.bf16 %v1755, %v1754
    %v1771 = vpack.c.bf16 %v1757, %v1756
    %v1772 = vpack.c.bf16 %v1759, %v1758
    %v1773 = vpack.c.bf16 %v1760, %v1760
    %v1787 = vunpack.c.l.b16 %v1761
    %v1788 = vunpack.c.h.b16 %v1761
    %v1789 = vunpack.c.l.b16 %v1762
    %v1790 = vunpack.c.h.b16 %v1762
    %v1791 = vunpack.c.l.b16 %v1763
    %v1792 = vunpack.c.h.b16 %v1763
    %v1793 = vunpack.c.l.b16 %v1764
    %v1794 = vunpack.c.h.b16 %v1764
    %v1795 = vunpack.c.l.b16 %v1765
    %v1796 = vunpack.c.h.b16 %v1765
    %v1797 = vunpack.c.l.b16 %v1766
    %v1798 = vunpack.c.h.b16 %v1766
    %v1799 = vunpack.c.l.b16 %v1767
    %v1800 = vunpack.c.h.b16 %v1767
    %v1801 = vunpack.c.l.b16 %v1768
    %v1802 = vunpack.c.h.b16 %v1768
    %v1803 = vunpack.c.l.b16 %v1769
    %v1804 = vunpack.c.h.b16 %v1769
    %v1805 = vunpack.c.l.b16 %v1770
    %v1806 = vunpack.c.h.b16 %v1770
    %v1807 = vunpack.c.l.b16 %v1771
    %v1808 = vunpack.c.h.b16 %v1771
    %v1809 = vunpack.c.l.b16 %v1772
    %v1810 = vunpack.c.h.b16 %v1772
    %v1811 = vunpack.c.l.b16 %v1773
    %v1812 = vpack.c.b16 %v1787, %v1787
    %v1813 = vpack.c.b16 %v1788, %v1788
    %v1814 = vpack.c.b16 %v1789, %v1789
    %v1815 = vpack.c.b16 %v1790, %v1790
    %v1816 = vpack.c.b16 %v1791, %v1791
    %v1817 = vpack.c.b16 %v1792, %v1792
    %v1818 = vpack.c.b16 %v1793, %v1793
    %v1819 = vpack.c.b16 %v1794, %v1794
    %v1820 = vpack.c.b16 %v1795, %v1795
    %v1821 = vpack.c.b16 %v1796, %v1796
    %v1822 = vpack.c.b16 %v1797, %v1797
    %v1823 = vpack.c.b16 %v1798, %v1798
    %v1824 = vpack.c.b16 %v1799, %v1799
    %v1825 = vpack.c.b16 %v1800, %v1800
    %v1826 = vpack.c.b16 %v1801, %v1801
    %v1827 = vpack.c.b16 %v1802, %v1802
    %v1828 = vpack.c.b16 %v1803, %v1803
    %v1829 = vpack.c.b16 %v1804, %v1804
    %v1830 = vpack.c.b16 %v1805, %v1805
    %v1831 = vpack.c.b16 %v1806, %v1806
    %v1832 = vpack.c.b16 %v1807, %v1807
    %v1833 = vpack.c.b16 %v1808, %v1808
    %v1834 = vpack.c.b16 %v1809, %v1809
    %v1835 = vpack.c.b16 %v1810, %v1810
    %v1836 = vpack.c.b16 %v1811, %v1811
    %1862 = vst [vmem:[#allocation3 + $0x4] sm:$0xf] %v1812
    %1863 = vst [vmem:[#allocation3 + $0x10] sm:$0xf] %v1813
    %1864 = vst [vmem:[#allocation3 + $0x1c] sm:$0xf] %v1814
    %1865 = vst [vmem:[#allocation3 + $0x28] sm:$0xf] %v1815
    %1866 = vst [vmem:[#allocation3 + $0x34] sm:$0xf] %v1816
    %1867 = vst [vmem:[#allocation3 + $0x40] sm:$0xf] %v1817
    %1868 = vst [vmem:[#allocation3 + $0x4c] sm:$0xf] %v1818
    %1869 = vst [vmem:[#allocation3 + $0x58] sm:$0xf] %v1819
    %1870 = vst [vmem:[#allocation3 + $0x64] sm:$0xf] %v1820
    %1871 = vst [vmem:[#allocation3 + $0x70] sm:$0xf] %v1821
    %1872 = vst [vmem:[#allocation3 + $0x7c] sm:$0xf] %v1822
    %1873 = vst [vmem:[#allocation3 + $0x88] sm:$0xf] %v1823
    %1874 = vst [vmem:[#allocation3 + $0x94] sm:$0xf] %v1824
    %1875 = vst [vmem:[#allocation3 + $0xa0] sm:$0xf] %v1825
    %1876 = vst [vmem:[#allocation3 + $0xac] sm:$0xf] %v1826
    %1877 = vst [vmem:[#allocation3 + $0xb8] sm:$0xf] %v1827
    %1878 = vst [vmem:[#allocation3 + $0xc4] sm:$0xf] %v1828
    %1879 = vst [vmem:[#allocation3 + $0xd0] sm:$0xf] %v1829
    %1880 = vst [vmem:[#allocation3 + $0xdc] sm:$0xf] %v1830
    %1881 = vst [vmem:[#allocation3 + $0xe8] sm:$0xf] %v1831
    %1882 = vst [vmem:[#allocation3 + $0xf4] sm:$0xf] %v1832
    %1883 = vst [vmem:[#allocation3 + $0x100] sm:$0xf] %v1833
    %1884 = vst [vmem:[#allocation3 + $0x10c] sm:$0xf] %v1834
    %1885 = vst [vmem:[#allocation3 + $0x118] sm:$0xf] %v1835
    %1886 = vst [vmem:[#allocation3 + $0x124] sm:$0xf] %v1836
    %v1887 = vld [vmem:[#allocation2 + $0x1b] sm:$0xff]
    %v1888 = vld [vmem:[#allocation2 + $0x23] sm:$0xff]
    %v1889 = vld [vmem:[#allocation2 + $0x2b] sm:$0xff]
    %v1890 = vld [vmem:[#allocation2 + $0x33] sm:$0xff]
    %v1891 = vld [vmem:[#allocation2 + $0x3b] sm:$0xff]
    %v1892 = vld [vmem:[#allocation2 + $0x43] sm:$0xff]
    %v1893 = vld [vmem:[#allocation2 + $0x4b] sm:$0xff]
    %v1894 = vld [vmem:[#allocation2 + $0x53] sm:$0xff]
    %v1895 = vld [vmem:[#allocation2 + $0x5b] sm:$0xff]
    %v1896 = vld [vmem:[#allocation2 + $0x63] sm:$0xff]
    %v1897 = vld [vmem:[#allocation2 + $0x6b] sm:$0xff]
    %v1898 = vld [vmem:[#allocation2 + $0x73] sm:$0xff]
    %v1899 = vld [vmem:[#allocation2 + $0x7b] sm:$0xff]
    %v1900 = vld [vmem:[#allocation2 + $0x83] sm:$0xff]
    %v1901 = vld [vmem:[#allocation2 + $0x8b] sm:$0xff]
    %v1902 = vld [vmem:[#allocation2 + $0x93] sm:$0xff]
    %v1903 = vld [vmem:[#allocation2 + $0x9b] sm:$0xff]
    %v1904 = vld [vmem:[#allocation2 + $0xa3] sm:$0xff]
    %v1905 = vld [vmem:[#allocation2 + $0xab] sm:$0xff]
    %v1906 = vld [vmem:[#allocation2 + $0xb3] sm:$0xff]
    %v1907 = vld [vmem:[#allocation2 + $0xbb] sm:$0xff]
    %v1908 = vld [vmem:[#allocation2 + $0xc3] sm:$0xff]
    %v1909 = vld [vmem:[#allocation2 + $0xcb] sm:$0xff]
    %v1910 = vld [vmem:[#allocation2 + $0xd3] sm:$0xff]
    %v1911 = vld [vmem:[#allocation2 + $0xdb] sm:$0xff]
    %v1912 = vpack.c.bf16 %v1888, %v1887
    %v1913 = vpack.c.bf16 %v1890, %v1889
    %v1914 = vpack.c.bf16 %v1892, %v1891
    %v1915 = vpack.c.bf16 %v1894, %v1893
    %v1916 = vpack.c.bf16 %v1896, %v1895
    %v1917 = vpack.c.bf16 %v1898, %v1897
    %v1918 = vpack.c.bf16 %v1900, %v1899
    %v1919 = vpack.c.bf16 %v1902, %v1901
    %v1920 = vpack.c.bf16 %v1904, %v1903
    %v1921 = vpack.c.bf16 %v1906, %v1905
    %v1922 = vpack.c.bf16 %v1908, %v1907
    %v1923 = vpack.c.bf16 %v1910, %v1909
    %v1924 = vpack.c.bf16 %v1911, %v1911
    %v1938 = vunpack.c.l.b16 %v1912
    %v1939 = vunpack.c.h.b16 %v1912
    %v1940 = vunpack.c.l.b16 %v1913
    %v1941 = vunpack.c.h.b16 %v1913
    %v1942 = vunpack.c.l.b16 %v1914
    %v1943 = vunpack.c.h.b16 %v1914
    %v1944 = vunpack.c.l.b16 %v1915
    %v1945 = vunpack.c.h.b16 %v1915
    %v1946 = vunpack.c.l.b16 %v1916
    %v1947 = vunpack.c.h.b16 %v1916
    %v1948 = vunpack.c.l.b16 %v1917
    %v1949 = vunpack.c.h.b16 %v1917
    %v1950 = vunpack.c.l.b16 %v1918
    %v1951 = vunpack.c.h.b16 %v1918
    %v1952 = vunpack.c.l.b16 %v1919
    %v1953 = vunpack.c.h.b16 %v1919
    %v1954 = vunpack.c.l.b16 %v1920
    %v1955 = vunpack.c.h.b16 %v1920
    %v1956 = vunpack.c.l.b16 %v1921
    %v1957 = vunpack.c.h.b16 %v1921
    %v1958 = vunpack.c.l.b16 %v1922
    %v1959 = vunpack.c.h.b16 %v1922
    %v1960 = vunpack.c.l.b16 %v1923
    %v1961 = vunpack.c.h.b16 %v1923
    %v1962 = vunpack.c.l.b16 %v1924
    %v1963 = vpack.c.b16 %v1938, %v1938
    %v1964 = vpack.c.b16 %v1939, %v1939
    %v1965 = vpack.c.b16 %v1940, %v1940
    %v1966 = vpack.c.b16 %v1941, %v1941
    %v1967 = vpack.c.b16 %v1942, %v1942
    %v1968 = vpack.c.b16 %v1943, %v1943
    %v1969 = vpack.c.b16 %v1944, %v1944
    %v1970 = vpack.c.b16 %v1945, %v1945
    %v1971 = vpack.c.b16 %v1946, %v1946
    %v1972 = vpack.c.b16 %v1947, %v1947
    %v1973 = vpack.c.b16 %v1948, %v1948
    %v1974 = vpack.c.b16 %v1949, %v1949
    %v1975 = vpack.c.b16 %v1950, %v1950
    %v1976 = vpack.c.b16 %v1951, %v1951
    %v1977 = vpack.c.b16 %v1952, %v1952
    %v1978 = vpack.c.b16 %v1953, %v1953
    %v1979 = vpack.c.b16 %v1954, %v1954
    %v1980 = vpack.c.b16 %v1955, %v1955
    %v1981 = vpack.c.b16 %v1956, %v1956
    %v1982 = vpack.c.b16 %v1957, %v1957
    %v1983 = vpack.c.b16 %v1958, %v1958
    %v1984 = vpack.c.b16 %v1959, %v1959
    %v1985 = vpack.c.b16 %v1960, %v1960
    %v1986 = vpack.c.b16 %v1961, %v1961
    %v1987 = vpack.c.b16 %v1962, %v1962
    %vm2013 = vcmask 257024
    %2014 = vst.msk [vmem:[#allocation3 + $0x8] sm:$0xf] %vm2013, %v1963
    %2015 = vst.msk [vmem:[#allocation3 + $0x14] sm:$0xf] %vm2013, %v1964
    %2016 = vst.msk [vmem:[#allocation3 + $0x20] sm:$0xf] %vm2013, %v1965
    %2017 = vst.msk [vmem:[#allocation3 + $0x2c] sm:$0xf] %vm2013, %v1966
    %2018 = vst.msk [vmem:[#allocation3 + $0x38] sm:$0xf] %vm2013, %v1967
    %2019 = vst.msk [vmem:[#allocation3 + $0x44] sm:$0xf] %vm2013, %v1968
    %2020 = vst.msk [vmem:[#allocation3 + $0x50] sm:$0xf] %vm2013, %v1969
    %2021 = vst.msk [vmem:[#allocation3 + $0x5c] sm:$0xf] %vm2013, %v1970
    %2022 = vst.msk [vmem:[#allocation3 + $0x68] sm:$0xf] %vm2013, %v1971
    %2023 = vst.msk [vmem:[#allocation3 + $0x74] sm:$0xf] %vm2013, %v1972
    %2024 = vst.msk [vmem:[#allocation3 + $0x80] sm:$0xf] %vm2013, %v1973
    %2025 = vst.msk [vmem:[#allocation3 + $0x8c] sm:$0xf] %vm2013, %v1974
    %2026 = vst.msk [vmem:[#allocation3 + $0x98] sm:$0xf] %vm2013, %v1975
    %2027 = vst.msk [vmem:[#allocation3 + $0xa4] sm:$0xf] %vm2013, %v1976
    %2028 = vst.msk [vmem:[#allocation3 + $0xb0] sm:$0xf] %vm2013, %v1977
    %2029 = vst.msk [vmem:[#allocation3 + $0xbc] sm:$0xf] %vm2013, %v1978
    %2030 = vst.msk [vmem:[#allocation3 + $0xc8] sm:$0xf] %vm2013, %v1979
    %2031 = vst.msk [vmem:[#allocation3 + $0xd4] sm:$0xf] %vm2013, %v1980
    %2032 = vst.msk [vmem:[#allocation3 + $0xe0] sm:$0xf] %vm2013, %v1981
    %2033 = vst.msk [vmem:[#allocation3 + $0xec] sm:$0xf] %vm2013, %v1982
    %2034 = vst.msk [vmem:[#allocation3 + $0xf8] sm:$0xf] %vm2013, %v1983
    %2035 = vst.msk [vmem:[#allocation3 + $0x104] sm:$0xf] %vm2013, %v1984
    %2036 = vst.msk [vmem:[#allocation3 + $0x110] sm:$0xf] %vm2013, %v1985
    %2037 = vst.msk [vmem:[#allocation3 + $0x11c] sm:$0xf] %vm2013, %v1986
    %2038 = vst.msk [vmem:[#allocation3 + $0x128] sm:$0xf] %vm2013, %v1987
    %v2039 = vld [vmem:[#allocation3] sm:$0xff]
    %v2040 = vld [vmem:[#allocation3 + $0x8] sm:$0xf]
    %v2041 = vld [vmem:[#allocation3 + $0xc] sm:$0xff]
    %v2042 = vld [vmem:[#allocation3 + $0x14] sm:$0xf]
    %v2043 = vld [vmem:[#allocation3 + $0x18] sm:$0xff]
    %v2044 = vld [vmem:[#allocation3 + $0x20] sm:$0xf]
    %v2045 = vld [vmem:[#allocation3 + $0x24] sm:$0xff]
    %v2046 = vld [vmem:[#allocation3 + $0x2c] sm:$0xf]
    %v2047 = vld [vmem:[#allocation3 + $0x30] sm:$0xff]
    %v2048 = vld [vmem:[#allocation3 + $0x38] sm:$0xf]
    %v2049 = vld [vmem:[#allocation3 + $0x3c] sm:$0xff]
    %v2050 = vld [vmem:[#allocation3 + $0x44] sm:$0xf]
    %v2051 = vld [vmem:[#allocation3 + $0x48] sm:$0xff]
    %v2052 = vld [vmem:[#allocation3 + $0x50] sm:$0xf]
    %v2053 = vld [vmem:[#allocation3 + $0x54] sm:$0xff]
    %v2054 = vld [vmem:[#allocation3 + $0x5c] sm:$0xf]
    %v2055 = vld [vmem:[#allocation3 + $0x60] sm:$0xff]
    %v2056 = vld [vmem:[#allocation3 + $0x68] sm:$0xf]
    %v2057 = vld [vmem:[#allocation3 + $0x6c] sm:$0xff]
    %v2058 = vld [vmem:[#allocation3 + $0x74] sm:$0xf]
    %v2059 = vld [vmem:[#allocation3 + $0x78] sm:$0xff]
    %v2060 = vld [vmem:[#allocation3 + $0x80] sm:$0xf]
    %v2061 = vld [vmem:[#allocation3 + $0x84] sm:$0xff]
    %v2062 = vld [vmem:[#allocation3 + $0x8c] sm:$0xf]
    %v2063 = vld [vmem:[#allocation3 + $0x90] sm:$0xff]
    %v2064 = vld [vmem:[#allocation3 + $0x98] sm:$0xf]
    %v2065 = vld [vmem:[#allocation3 + $0x9c] sm:$0xff]
    %v2066 = vld [vmem:[#allocation3 + $0xa4] sm:$0xf]
    %v2067 = vld [vmem:[#allocation3 + $0xa8] sm:$0xff]
    %v2068 = vld [vmem:[#allocation3 + $0xb0] sm:$0xf]
    %v2069 = vld [vmem:[#allocation3 + $0xb4] sm:$0xff]
    %v2070 = vld [vmem:[#allocation3 + $0xbc] sm:$0xf]
    %v2071 = vld [vmem:[#allocation3 + $0xc0] sm:$0xff]
    %v2072 = vld [vmem:[#allocation3 + $0xc8] sm:$0xf]
    %v2073 = vld [vmem:[#allocation3 + $0xcc] sm:$0xff]
    %v2074 = vld [vmem:[#allocation3 + $0xd4] sm:$0xf]
    %v2075 = vld [vmem:[#allocation3 + $0xd8] sm:$0xff]
    %v2076 = vld [vmem:[#allocation3 + $0xe0] sm:$0xf]
    %v2077 = vld [vmem:[#allocation3 + $0xe4] sm:$0xff]
    %v2078 = vld [vmem:[#allocation3 + $0xec] sm:$0xf]
    %v2079 = vld [vmem:[#allocation3 + $0xf0] sm:$0xff]
    %v2080 = vld [vmem:[#allocation3 + $0xf8] sm:$0xf]
    %v2081 = vld [vmem:[#allocation3 + $0xfc] sm:$0xff]
    %v2082 = vld [vmem:[#allocation3 + $0x104] sm:$0xf]
    %v2083 = vld [vmem:[#allocation3 + $0x108] sm:$0xff]
    %v2084 = vld [vmem:[#allocation3 + $0x110] sm:$0xf]
    %v2085 = vld [vmem:[#allocation3 + $0x114] sm:$0xff]
    %v2086 = vld [vmem:[#allocation3 + $0x11c] sm:$0xf]
    %v2087 = vld [vmem:[#allocation3 + $0x120] sm:$0xff]
    %v2088 = vld [vmem:[#allocation3 + $0x128] sm:$0xf]
    %v2139 = vunpack.c.l.b16 %v2039
    %v2140 = vunpack.c.h.b16 %v2039
    %v2141 = vunpack.c.l.b16 %v2040
    %v2142 = vunpack.c.l.b16 %v2041
    %v2143 = vunpack.c.h.b16 %v2041
    %v2144 = vunpack.c.l.b16 %v2042
    %v2145 = vunpack.c.l.b16 %v2043
    %v2146 = vunpack.c.h.b16 %v2043
    %v2147 = vunpack.c.l.b16 %v2044
    %v2148 = vunpack.c.l.b16 %v2045
    %v2149 = vunpack.c.h.b16 %v2045
    %v2150 = vunpack.c.l.b16 %v2046
    %v2151 = vunpack.c.l.b16 %v2047
    %v2152 = vunpack.c.h.b16 %v2047
    %v2153 = vunpack.c.l.b16 %v2048
    %v2154 = vunpack.c.l.b16 %v2049
    %v2155 = vunpack.c.h.b16 %v2049
    %v2156 = vunpack.c.l.b16 %v2050
    %v2157 = vunpack.c.l.b16 %v2051
    %v2158 = vunpack.c.h.b16 %v2051
    %v2159 = vunpack.c.l.b16 %v2052
    %v2160 = vunpack.c.l.b16 %v2053
    %v2161 = vunpack.c.h.b16 %v2053
    %v2162 = vunpack.c.l.b16 %v2054
    %v2163 = vunpack.c.l.b16 %v2055
    %v2164 = vunpack.c.h.b16 %v2055
    %v2165 = vunpack.c.l.b16 %v2056
    %v2166 = vunpack.c.l.b16 %v2057
    %v2167 = vunpack.c.h.b16 %v2057
    %v2168 = vunpack.c.l.b16 %v2058
    %v2169 = vunpack.c.l.b16 %v2059
    %v2170 = vunpack.c.h.b16 %v2059
    %v2171 = vunpack.c.l.b16 %v2060
    %v2172 = vunpack.c.l.b16 %v2061
    %v2173 = vunpack.c.h.b16 %v2061
    %v2174 = vunpack.c.l.b16 %v2062
    %v2175 = vunpack.c.l.b16 %v2063
    %v2176 = vunpack.c.h.b16 %v2063
    %v2177 = vunpack.c.l.b16 %v2064
    %v2178 = vunpack.c.l.b16 %v2065
    %v2179 = vunpack.c.h.b16 %v2065
    %v2180 = vunpack.c.l.b16 %v2066
    %v2181 = vunpack.c.l.b16 %v2067
    %v2182 = vunpack.c.h.b16 %v2067
    %v2183 = vunpack.c.l.b16 %v2068
    %v2184 = vunpack.c.l.b16 %v2069
    %v2185 = vunpack.c.h.b16 %v2069
    %v2186 = vunpack.c.l.b16 %v2070
    %v2187 = vunpack.c.l.b16 %v2071
    %v2188 = vunpack.c.h.b16 %v2071
    %v2189 = vunpack.c.l.b16 %v2072
    %v2190 = vunpack.c.l.b16 %v2073
    %v2191 = vunpack.c.h.b16 %v2073
    %v2192 = vunpack.c.l.b16 %v2074
    %v2193 = vunpack.c.l.b16 %v2075
    %v2194 = vunpack.c.h.b16 %v2075
    %v2195 = vunpack.c.l.b16 %v2076
    %v2196 = vunpack.c.l.b16 %v2077
    %v2197 = vunpack.c.h.b16 %v2077
    %v2198 = vunpack.c.l.b16 %v2078
    %v2199 = vunpack.c.l.b16 %v2079
    %v2200 = vunpack.c.h.b16 %v2079
    %v2201 = vunpack.c.l.b16 %v2080
    %v2202 = vunpack.c.l.b16 %v2081
    %v2203 = vunpack.c.h.b16 %v2081
    %v2204 = vunpack.c.l.b16 %v2082
    %v2205 = vunpack.c.l.b16 %v2083
    %v2206 = vunpack.c.h.b16 %v2083
    %v2207 = vunpack.c.l.b16 %v2084
    %v2208 = vunpack.c.l.b16 %v2085
    %v2209 = vunpack.c.h.b16 %v2085
    %v2210 = vunpack.c.l.b16 %v2086
    %v2211 = vunpack.c.l.b16 %v2087
    %v2212 = vunpack.c.h.b16 %v2087
    %v2213 = vunpack.c.l.b16 %v2088
    %v2214 = vpack.c.b16 %v2142, %v2139
    %v2215 = vpack.c.b16 %v2143, %v2140
    %v2216 = vpack.c.b16 %v2144, %v2141
    %v2217 = vpack.c.b16 %v2148, %v2145
    %v2218 = vpack.c.b16 %v2149, %v2146
    %v2219 = vpack.c.b16 %v2150, %v2147
    %v2220 = vpack.c.b16 %v2154, %v2151
    %v2221 = vpack.c.b16 %v2155, %v2152
    %v2222 = vpack.c.b16 %v2156, %v2153
    %v2223 = vpack.c.b16 %v2160, %v2157
    %v2224 = vpack.c.b16 %v2161, %v2158
    %v2225 = vpack.c.b16 %v2162, %v2159
    %v2226 = vpack.c.b16 %v2166, %v2163
    %v2227 = vpack.c.b16 %v2167, %v2164
    %v2228 = vpack.c.b16 %v2168, %v2165
    %v2229 = vpack.c.b16 %v2172, %v2169
    %v2230 = vpack.c.b16 %v2173, %v2170
    %v2231 = vpack.c.b16 %v2174, %v2171
    %v2232 = vpack.c.b16 %v2178, %v2175
    %v2233 = vpack.c.b16 %v2179, %v2176
    %v2234 = vpack.c.b16 %v2180, %v2177
    %v2235 = vpack.c.b16 %v2184, %v2181
    %v2236 = vpack.c.b16 %v2185, %v2182
    %v2237 = vpack.c.b16 %v2186, %v2183
    %v2238 = vpack.c.b16 %v2190, %v2187
    %v2239 = vpack.c.b16 %v2191, %v2188
    %v2240 = vpack.c.b16 %v2192, %v2189
    %v2241 = vpack.c.b16 %v2196, %v2193
    %v2242 = vpack.c.b16 %v2197, %v2194
    %v2243 = vpack.c.b16 %v2198, %v2195
    %v2244 = vpack.c.b16 %v2202, %v2199
    %v2245 = vpack.c.b16 %v2203, %v2200
    %v2246 = vpack.c.b16 %v2204, %v2201
    %v2247 = vpack.c.b16 %v2208, %v2205
    %v2248 = vpack.c.b16 %v2209, %v2206
    %v2249 = vpack.c.b16 %v2210, %v2207
    %v2250 = vpack.c.b16 %v2211, %v2211
    %v2251 = vpack.c.b16 %v2212, %v2212
    %v2252 = vpack.c.b16 %v2213, %v2213
    %v2315 = vunpack.c.l.b16 %v716
    %v2316 = vunpack.c.l.b16 %v717
    %v2317 = vunpack.c.l.b16 %v718
    %v2318 = vunpack.c.l.b16 %v719
    %v2319 = vunpack.c.l.b16 %v720
    %v2320 = vunpack.c.l.b16 %v721
    %v2321 = vunpack.c.l.b16 %v722
    %v2322 = vunpack.c.l.b16 %v723
    %v2323 = vunpack.c.l.b16 %v724
    %v2324 = vunpack.c.l.b16 %v725
    %v2325 = vunpack.c.l.b16 %v726
    %v2326 = vunpack.c.l.b16 %v727
    %v2327 = vunpack.c.l.b16 %v728
    %v2328 = vunpack.c.l.b16 %v729
    %v2329 = vunpack.c.l.b16 %v730
    %v2330 = vunpack.c.l.b16 %v731
    %v2331 = vunpack.c.l.b16 %v732
    %v2332 = vunpack.c.l.b16 %v733
    %v2333 = vunpack.c.l.b16 %v734
    %v2334 = vunpack.c.l.b16 %v735
    %v2335 = vunpack.c.l.b16 %v736
    %v2336 = vunpack.c.l.b16 %v737
    %v2337 = vunpack.c.l.b16 %v738
    %v2338 = vunpack.c.l.b16 %v739
    %v2339 = vunpack.c.l.b16 %v740
    %v2340 = vunpack.c.l.b16 %v741
    %v2341 = vunpack.c.l.b16 %v742
    %v2342 = vunpack.c.l.b16 %v743
    %v2343 = vunpack.c.l.b16 %v744
    %v2344 = vunpack.c.l.b16 %v745
    %v2345 = vunpack.c.l.b16 %v746
    %v2346 = vunpack.c.l.b16 %v747
    %v2347 = vunpack.c.l.b16 %v748
    %v2348 = vunpack.c.l.b16 %v749
    %v2349 = vunpack.c.l.b16 %v750
    %v2350 = vunpack.c.l.b16 %v751
    %v2351 = vpack.c.b16 %v2316, %v2315
    %v2352 = vpack.c.b16 %v2318, %v2317
    %v2353 = vpack.c.b16 %v2320, %v2319
    %v2354 = vpack.c.b16 %v2322, %v2321
    %v2355 = vpack.c.b16 %v2324, %v2323
    %v2356 = vpack.c.b16 %v2326, %v2325
    %v2357 = vpack.c.b16 %v2328, %v2327
    %v2358 = vpack.c.b16 %v2330, %v2329
    %v2359 = vpack.c.b16 %v2332, %v2331
    %v2360 = vpack.c.b16 %v2334, %v2333
    %v2361 = vpack.c.b16 %v2336, %v2335
    %v2362 = vpack.c.b16 %v2338, %v2337
    %v2363 = vpack.c.b16 %v2340, %v2339
    %v2364 = vpack.c.b16 %v2342, %v2341
    %v2365 = vpack.c.b16 %v2344, %v2343
    %v2366 = vpack.c.b16 %v2346, %v2345
    %v2367 = vpack.c.b16 %v2348, %v2347
    %v2368 = vpack.c.b16 %v2350, %v2349
    %v2388 = vsel %vm109, %v2216, 0
    %v2391 = vsel %vm109, %v2219, 0
    %v2394 = vsel %vm109, %v2222, 0
    %v2397 = vsel %vm109, %v2225, 0
    %v2400 = vsel %vm109, %v2228, 0
    %v2403 = vsel %vm109, %v2231, 0
    %v2406 = vsel %vm109, %v2234, 0
    %v2409 = vsel %vm109, %v2237, 0
    %v2412 = vsel %vm109, %v2240, 0
    %v2415 = vsel %vm109, %v2243, 0
    %v2418 = vsel %vm109, %v2246, 0
    %v2421 = vsel %vm109, %v2249, 0
    %v2424 = vsel %vm109, %v2252, 0
    %2426 = vmatprep.subr.bf16.mxu0 0
    %2427 = vmatpush1.bf16.msra.mxu0 %v2358
    %2428 = vmatprep.subr.bf16.mxu0 0
    %2429 = vmatpush1.bf16.msra.mxu0 %v2357
    %2430 = vmatprep.subr.bf16.mxu0 0
    %2431 = vmatpush1.bf16.msra.mxu0 %v2356
    %2432 = vmatprep.subr.bf16.mxu0 0
    %2433 = vmatpush1.bf16.msra.mxu0 %v2355
    %2434 = vmatprep.subr.bf16.mxu0 0
    %2435 = vmatpush1.bf16.msra.mxu0 %v2354
    %2436 = vmatprep.subr.bf16.mxu0 0
    %2437 = vmatpush1.bf16.msra.mxu0 %v2353
    %2438 = vmatprep.subr.bf16.mxu0 0
    %2439 = vmatpush1.bf16.msra.mxu0 %v2352
    %2440 = vmatprep.subr.bf16.mxu0 0
    %2441 = vmatpush1.bf16.msra.mxu0 %v2351
    %2442 = vmatprep.subr.bf16.mxu0 0
    %2443 = vmatpush2.bf16.msra.mxu0 %v2366
    %2444 = vmatprep.subr.bf16.mxu0 0
    %2445 = vmatpush2.bf16.msra.mxu0 %v2365
    %2446 = vmatprep.subr.bf16.mxu0 0
    %2447 = vmatpush2.bf16.msra.mxu0 %v2364
    %2448 = vmatprep.subr.bf16.mxu0 0
    %2449 = vmatpush2.bf16.msra.mxu0 %v2363
    %2450 = vmatprep.subr.bf16.mxu0 0
    %2451 = vmatpush2.bf16.msra.mxu0 %v2362
    %2452 = vmatprep.subr.bf16.mxu0 0
    %2453 = vmatpush2.bf16.msra.mxu0 %v2361
    %2454 = vmatprep.subr.bf16.mxu0 0
    %2455 = vmatpush2.bf16.msra.mxu0 %v2360
    %2456 = vmatprep.subr.bf16.mxu0 0
    %2457 = vmatpush2.bf16.msra.mxu0 %v2359
    %2458 = vmatprep.mubr.bf16.mxu0 %v2215
    %2459 = vmatmul.mubr.bf16.gmra.mxu0 %v2214
    %v2460 = vpop.f32.mrf.mxu0
    %v2461 = vadd.f32 0.0, %v2460
    %v2462 = vpop.f32.mrf.mxu0
    %v2463 = vpop.f32.mrf.mxu0
    %v2464 = vadd.f32 0.0, %v2463
    %v2465 = vpop.f32.mrf.mxu0
    %2466 = vmatprep.mubr.bf16.mxu0 %v2218
    %2467 = vmatmul.mubr.bf16.gmra.mxu0 %v2217
    %v2468 = vpop.f32.mrf.mxu0
    %v2469 = vadd.f32 0.0, %v2468
    %v2470 = vpop.f32.mrf.mxu0
    %v2471 = vpop.f32.mrf.mxu0
    %v2472 = vadd.f32 0.0, %v2471
    %v2473 = vpop.f32.mrf.mxu0
    %2474 = vmatprep.mubr.bf16.mxu0 %v2221
    %2475 = vmatmul.mubr.bf16.gmra.mxu0 %v2220
    %v2476 = vpop.f32.mrf.mxu0
    %v2477 = vadd.f32 0.0, %v2476
    %v2478 = vpop.f32.mrf.mxu0
    %v2479 = vpop.f32.mrf.mxu0
    %v2480 = vadd.f32 0.0, %v2479
    %v2481 = vpop.f32.mrf.mxu0
    %2482 = vmatprep.mubr.bf16.mxu0 %v2224
    %2483 = vmatmul.mubr.bf16.gmra.mxu0 %v2223
    %v2484 = vpop.f32.mrf.mxu0
    %v2485 = vadd.f32 0.0, %v2484
    %v2486 = vpop.f32.mrf.mxu0
    %v2487 = vpop.f32.mrf.mxu0
    %v2488 = vadd.f32 0.0, %v2487
    %v2489 = vpop.f32.mrf.mxu0
    %2490 = vmatprep.mubr.bf16.mxu0 %v2227
    %2491 = vmatmul.mubr.bf16.gmra.mxu0 %v2226
    %v2492 = vpop.f32.mrf.mxu0
    %v2493 = vadd.f32 0.0, %v2492
    %v2494 = vpop.f32.mrf.mxu0
    %v2495 = vpop.f32.mrf.mxu0
    %v2496 = vadd.f32 0.0, %v2495
    %v2497 = vpop.f32.mrf.mxu0
    %2498 = vmatprep.mubr.bf16.mxu0 %v2230
    %2499 = vmatmul.mubr.bf16.gmra.mxu0 %v2229
    %v2500 = vpop.f32.mrf.mxu0
    %v2501 = vadd.f32 0.0, %v2500
    %v2502 = vpop.f32.mrf.mxu0
    %v2503 = vpop.f32.mrf.mxu0
    %v2504 = vadd.f32 0.0, %v2503
    %v2505 = vpop.f32.mrf.mxu0
    %2506 = vmatprep.mubr.bf16.mxu0 %v2233
    %2507 = vmatmul.mubr.bf16.gmra.mxu0 %v2232
    %v2508 = vpop.f32.mrf.mxu0
    %v2509 = vadd.f32 0.0, %v2508
    %v2510 = vpop.f32.mrf.mxu0
    %v2511 = vpop.f32.mrf.mxu0
    %v2512 = vadd.f32 0.0, %v2511
    %v2513 = vpop.f32.mrf.mxu0
    %2514 = vmatprep.mubr.bf16.mxu0 %v2236
    %2515 = vmatmul.mubr.bf16.gmra.mxu0 %v2235
    %v2516 = vpop.f32.mrf.mxu0
    %v2517 = vadd.f32 0.0, %v2516
    %v2518 = vpop.f32.mrf.mxu0
    %v2519 = vpop.f32.mrf.mxu0
    %v2520 = vadd.f32 0.0, %v2519
    %v2521 = vpop.f32.mrf.mxu0
    %2522 = vmatprep.mubr.bf16.mxu0 %v2239
    %2523 = vmatmul.mubr.bf16.gmra.mxu0 %v2238
    %v2524 = vpop.f32.mrf.mxu0
    %v2525 = vadd.f32 0.0, %v2524
    %v2526 = vpop.f32.mrf.mxu0
    %v2527 = vpop.f32.mrf.mxu0
    %v2528 = vadd.f32 0.0, %v2527
    %v2529 = vpop.f32.mrf.mxu0
    %2530 = vmatprep.mubr.bf16.mxu0 %v2242
    %2531 = vmatmul.mubr.bf16.gmra.mxu0 %v2241
    %v2532 = vpop.f32.mrf.mxu0
    %v2533 = vadd.f32 0.0, %v2532
    %v2534 = vpop.f32.mrf.mxu0
    %v2535 = vpop.f32.mrf.mxu0
    %v2536 = vadd.f32 0.0, %v2535
    %v2537 = vpop.f32.mrf.mxu0
    %2538 = vmatprep.mubr.bf16.mxu0 %v2245
    %2539 = vmatmul.mubr.bf16.gmra.mxu0 %v2244
    %v2540 = vpop.f32.mrf.mxu0
    %v2541 = vadd.f32 0.0, %v2540
    %v2542 = vpop.f32.mrf.mxu0
    %v2543 = vpop.f32.mrf.mxu0
    %v2544 = vadd.f32 0.0, %v2543
    %v2545 = vpop.f32.mrf.mxu0
    %2546 = vmatprep.mubr.bf16.mxu0 %v2248
    %2547 = vmatmul.mubr.bf16.gmra.mxu0 %v2247
    %v2548 = vpop.f32.mrf.mxu0
    %v2549 = vadd.f32 0.0, %v2548
    %v2550 = vpop.f32.mrf.mxu0
    %v2551 = vpop.f32.mrf.mxu0
    %v2552 = vadd.f32 0.0, %v2551
    %v2553 = vpop.f32.mrf.mxu0
    %2554 = vmatprep.mubr.bf16.mxu0 %v2251
    %2555 = vmatmul.mubr.bf16.gmra.mxu0 %v2250
    %v2556 = vpop.f32.mrf.mxu0
    %v2557 = vadd.f32 0.0, %v2556
    %v2558 = vpop.f32.mrf.mxu0
    %v2559 = vpop.f32.mrf.mxu0
    %v2560 = vpop.f32.mrf.mxu0
    %2561 = vdwg.mxu0
    %2562 = vmatprep.subr.bf16.mxu0 0
    %2563 = vmatpush1.bf16.msra.mxu0 0
    %2564 = vmatprep.subr.bf16.mxu0 0
    %2565 = vmatpush1.bf16.msra.mxu0 0
    %2566 = vmatprep.subr.bf16.mxu0 0
    %2567 = vmatpush1.bf16.msra.mxu0 0
    %2568 = vmatprep.subr.bf16.mxu0 0
    %2569 = vmatpush1.bf16.msra.mxu0 0
    %2570 = vmatprep.subr.bf16.mxu0 0
    %2571 = vmatpush1.bf16.msra.mxu0 0
    %2572 = vmatprep.subr.bf16.mxu0 0
    %2573 = vmatpush1.bf16.msra.mxu0 0
    %2574 = vmatprep.subr.bf16.mxu0 0
    %2575 = vmatpush1.bf16.msra.mxu0 %v2368
    %2576 = vmatprep.subr.bf16.mxu0 0
    %2577 = vmatpush1.bf16.msra.mxu0 %v2367
    %2578 = vmatprep.subr.bf16.mxu0 0
    %2579 = vmatpush2.bf16.msra.mxu0 0
    %2580 = vmatprep.subr.bf16.mxu0 0
    %2581 = vmatpush2.bf16.msra.mxu0 0
    %2582 = vmatprep.subr.bf16.mxu0 0
    %2583 = vmatpush2.bf16.msra.mxu0 0
    %2584 = vmatprep.subr.bf16.mxu0 0
    %2585 = vmatpush2.bf16.msra.mxu0 0
    %2586 = vmatprep.subr.bf16.mxu0 0
    %2587 = vmatpush2.bf16.msra.mxu0 0
    %2588 = vmatprep.subr.bf16.mxu0 0
    %2589 = vmatpush2.bf16.msra.mxu0 0
    %2590 = vmatprep.subr.bf16.mxu0 0
    %2591 = vmatpush2.bf16.msra.mxu0 0
    %2592 = vmatprep.subr.bf16.mxu0 0
    %2593 = vmatpush2.bf16.msra.mxu0 0
    %2594 = vmatprep.mubr.bf16.mxu0 0
    %2595 = vmatmul.mubr.bf16.gmra.mxu0 %v2388
    %v2596 = vpop.f32.mrf.mxu0
    %v2597 = vadd.f32 %v2461, %v2596
    %v2598 = vpop.f32.mrf.mxu0
    %v2599 = vpop.f32.mrf.mxu0
    %v2600 = vadd.f32 %v2464, %v2599
    %v2601 = vpop.f32.mrf.mxu0
    %2602 = vmatprep.mubr.bf16.mxu0 0
    %2603 = vmatmul.mubr.bf16.gmra.mxu0 %v2391
    %v2604 = vpop.f32.mrf.mxu0
    %v2605 = vadd.f32 %v2469, %v2604
    %v2606 = vpop.f32.mrf.mxu0
    %v2607 = vpop.f32.mrf.mxu0
    %v2608 = vadd.f32 %v2472, %v2607
    %v2609 = vpop.f32.mrf.mxu0
    %2610 = vmatprep.mubr.bf16.mxu0 0
    %2611 = vmatmul.mubr.bf16.gmra.mxu0 %v2394
    %v2612 = vpop.f32.mrf.mxu0
    %v2613 = vadd.f32 %v2477, %v2612
    %v2614 = vpop.f32.mrf.mxu0
    %v2615 = vpop.f32.mrf.mxu0
    %v2616 = vadd.f32 %v2480, %v2615
    %v2617 = vpop.f32.mrf.mxu0
    %2618 = vmatprep.mubr.bf16.mxu0 0
    %2619 = vmatmul.mubr.bf16.gmra.mxu0 %v2397
    %v2620 = vpop.f32.mrf.mxu0
    %v2621 = vadd.f32 %v2485, %v2620
    %v2622 = vpop.f32.mrf.mxu0
    %v2623 = vpop.f32.mrf.mxu0
    %v2624 = vadd.f32 %v2488, %v2623
    %v2625 = vpop.f32.mrf.mxu0
    %2626 = vmatprep.mubr.bf16.mxu0 0
    %2627 = vmatmul.mubr.bf16.gmra.mxu0 %v2400
    %v2628 = vpop.f32.mrf.mxu0
    %v2629 = vadd.f32 %v2493, %v2628
    %v2630 = vpop.f32.mrf.mxu0
    %v2631 = vpop.f32.mrf.mxu0
    %v2632 = vadd.f32 %v2496, %v2631
    %v2633 = vpop.f32.mrf.mxu0
    %2634 = vmatprep.mubr.bf16.mxu0 0
    %2635 = vmatmul.mubr.bf16.gmra.mxu0 %v2403
    %v2636 = vpop.f32.mrf.mxu0
    %v2637 = vadd.f32 %v2501, %v2636
    %v2638 = vpop.f32.mrf.mxu0
    %v2639 = vpop.f32.mrf.mxu0
    %v2640 = vadd.f32 %v2504, %v2639
    %v2641 = vpop.f32.mrf.mxu0
    %2642 = vmatprep.mubr.bf16.mxu0 0
    %2643 = vmatmul.mubr.bf16.gmra.mxu0 %v2406
    %v2644 = vpop.f32.mrf.mxu0
    %v2645 = vadd.f32 %v2509, %v2644
    %v2646 = vpop.f32.mrf.mxu0
    %v2647 = vpop.f32.mrf.mxu0
    %v2648 = vadd.f32 %v2512, %v2647
    %v2649 = vpop.f32.mrf.mxu0
    %2650 = vmatprep.mubr.bf16.mxu0 0
    %2651 = vmatmul.mubr.bf16.gmra.mxu0 %v2409
    %v2652 = vpop.f32.mrf.mxu0
    %v2653 = vadd.f32 %v2517, %v2652
    %v2654 = vpop.f32.mrf.mxu0
    %v2655 = vpop.f32.mrf.mxu0
    %v2656 = vadd.f32 %v2520, %v2655
    %v2657 = vpop.f32.mrf.mxu0
    %2658 = vmatprep.mubr.bf16.mxu0 0
    %2659 = vmatmul.mubr.bf16.gmra.mxu0 %v2412
    %v2660 = vpop.f32.mrf.mxu0
    %v2661 = vadd.f32 %v2525, %v2660
    %v2662 = vpop.f32.mrf.mxu0
    %v2663 = vpop.f32.mrf.mxu0
    %v2664 = vadd.f32 %v2528, %v2663
    %v2665 = vpop.f32.mrf.mxu0
    %2666 = vmatprep.mubr.bf16.mxu0 0
    %2667 = vmatmul.mubr.bf16.gmra.mxu0 %v2415
    %v2668 = vpop.f32.mrf.mxu0
    %v2669 = vadd.f32 %v2533, %v2668
    %v2670 = vpop.f32.mrf.mxu0
    %v2671 = vpop.f32.mrf.mxu0
    %v2672 = vadd.f32 %v2536, %v2671
    %v2673 = vpop.f32.mrf.mxu0
    %2674 = vmatprep.mubr.bf16.mxu0 0
    %2675 = vmatmul.mubr.bf16.gmra.mxu0 %v2418
    %v2676 = vpop.f32.mrf.mxu0
    %v2677 = vadd.f32 %v2541, %v2676
    %v2678 = vpop.f32.mrf.mxu0
    %v2679 = vpop.f32.mrf.mxu0
    %v2680 = vadd.f32 %v2544, %v2679
    %v2681 = vpop.f32.mrf.mxu0
    %2682 = vmatprep.mubr.bf16.mxu0 0
    %2683 = vmatmul.mubr.bf16.gmra.mxu0 %v2421
    %v2684 = vpop.f32.mrf.mxu0
    %v2685 = vadd.f32 %v2549, %v2684
    %v2686 = vpop.f32.mrf.mxu0
    %v2687 = vpop.f32.mrf.mxu0
    %v2688 = vadd.f32 %v2552, %v2687
    %v2689 = vpop.f32.mrf.mxu0
    %2690 = vmatprep.mubr.bf16.mxu0 0
    %2691 = vmatmul.mubr.bf16.gmra.mxu0 %v2424
    %v2692 = vpop.f32.mrf.mxu0
    %v2693 = vadd.f32 %v2557, %v2692
    %v2694 = vpop.f32.mrf.mxu0
    %v2695 = vpop.f32.mrf.mxu0
    %v2696 = vpop.f32.mrf.mxu0
    %2697 = vdwg.mxu0
    %v2699 = vlaneseq
    %v2700 = vshrl.u32 %v2699, 7
    %v2701 = vsub.s32 0, %v2700
    %v2702 = vrot.slane %v752, %v2701
    %v2704 = vmul.f32 %v2597, %v2702
    %v2705 = vmul.f32 %v2600, %v2702
    %v2706 = vmul.f32 %v2605, %v2702
    %v2707 = vmul.f32 %v2608, %v2702
    %v2708 = vmul.f32 %v2613, %v2702
    %v2709 = vmul.f32 %v2616, %v2702
    %v2710 = vmul.f32 %v2621, %v2702
    %v2711 = vmul.f32 %v2624, %v2702
    %v2712 = vmul.f32 %v2629, %v2702
    %v2713 = vmul.f32 %v2632, %v2702
    %v2714 = vmul.f32 %v2637, %v2702
    %v2715 = vmul.f32 %v2640, %v2702
    %v2716 = vmul.f32 %v2645, %v2702
    %v2717 = vmul.f32 %v2648, %v2702
    %v2718 = vmul.f32 %v2653, %v2702
    %v2719 = vmul.f32 %v2656, %v2702
    %v2720 = vmul.f32 %v2661, %v2702
    %v2721 = vmul.f32 %v2664, %v2702
    %v2722 = vmul.f32 %v2669, %v2702
    %v2723 = vmul.f32 %v2672, %v2702
    %v2724 = vmul.f32 %v2677, %v2702
    %v2725 = vmul.f32 %v2680, %v2702
    %v2726 = vmul.f32 %v2685, %v2702
    %v2727 = vmul.f32 %v2688, %v2702
    %v2728 = vmul.f32 %v2693, %v2702
    %v2730 = vlaneseq
    %v2731 = vshrl.u32 %v2730, 7
    %v2732 = vsub.s32 0, %v2731
    %v2733 = vrot.slane %v753, %v2732
    %v2735 = vadd.f32 %v2704, %v2733
    %v2736 = vadd.f32 %v2705, %v2733
    %v2737 = vadd.f32 %v2706, %v2733
    %v2738 = vadd.f32 %v2707, %v2733
    %v2739 = vadd.f32 %v2708, %v2733
    %v2740 = vadd.f32 %v2709, %v2733
    %v2741 = vadd.f32 %v2710, %v2733
    %v2742 = vadd.f32 %v2711, %v2733
    %v2743 = vadd.f32 %v2712, %v2733
    %v2744 = vadd.f32 %v2713, %v2733
    %v2745 = vadd.f32 %v2714, %v2733
    %v2746 = vadd.f32 %v2715, %v2733
    %v2747 = vadd.f32 %v2716, %v2733
    %v2748 = vadd.f32 %v2717, %v2733
    %v2749 = vadd.f32 %v2718, %v2733
    %v2750 = vadd.f32 %v2719, %v2733
    %v2751 = vadd.f32 %v2720, %v2733
    %v2752 = vadd.f32 %v2721, %v2733
    %v2753 = vadd.f32 %v2722, %v2733
    %v2754 = vadd.f32 %v2723, %v2733
    %v2755 = vadd.f32 %v2724, %v2733
    %v2756 = vadd.f32 %v2725, %v2733
    %v2757 = vadd.f32 %v2726, %v2733
    %v2758 = vadd.f32 %v2727, %v2733
    %v2759 = vadd.f32 %v2728, %v2733
    %v2760 = vmax.f32 %v2735, 0.0
    %v2761 = vmax.f32 %v2736, 0.0
    %v2762 = vmax.f32 %v2737, 0.0
    %v2763 = vmax.f32 %v2738, 0.0
    %v2764 = vmax.f32 %v2739, 0.0
    %v2765 = vmax.f32 %v2740, 0.0
    %v2766 = vmax.f32 %v2741, 0.0
    %v2767 = vmax.f32 %v2742, 0.0
    %v2768 = vmax.f32 %v2743, 0.0
    %v2769 = vmax.f32 %v2744, 0.0
    %v2770 = vmax.f32 %v2745, 0.0
    %v2771 = vmax.f32 %v2746, 0.0
    %v2772 = vmax.f32 %v2747, 0.0
    %v2773 = vmax.f32 %v2748, 0.0
    %v2774 = vmax.f32 %v2749, 0.0
    %v2775 = vmax.f32 %v2750, 0.0
    %v2776 = vmax.f32 %v2751, 0.0
    %v2777 = vmax.f32 %v2752, 0.0
    %v2778 = vmax.f32 %v2753, 0.0
    %v2779 = vmax.f32 %v2754, 0.0
    %v2780 = vmax.f32 %v2755, 0.0
    %v2781 = vmax.f32 %v2756, 0.0
    %v2782 = vmax.f32 %v2757, 0.0
    %v2783 = vmax.f32 %v2758, 0.0
    %v2784 = vmax.f32 %v2759, 0.0
    %v2785 = vmul.f32 %v2760, %v519
    %v2786 = vmul.f32 %v2761, %v524
    %v2787 = vmul.f32 %v2762, %v529
    %v2788 = vmul.f32 %v2763, %v534
    %v2789 = vmul.f32 %v2764, %v539
    %v2790 = vmul.f32 %v2765, %v544
    %v2791 = vmul.f32 %v2766, %v549
    %v2792 = vmul.f32 %v2767, %v554
    %v2793 = vmul.f32 %v2768, %v559
    %v2794 = vmul.f32 %v2769, %v564
    %v2795 = vmul.f32 %v2770, %v569
    %v2796 = vmul.f32 %v2771, %v574
    %v2797 = vmul.f32 %v2772, %v579
    %v2798 = vmul.f32 %v2773, %v584
    %v2799 = vmul.f32 %v2774, %v589
    %v2800 = vmul.f32 %v2775, %v594
    %v2801 = vmul.f32 %v2776, %v599
    %v2802 = vmul.f32 %v2777, %v604
    %v2803 = vmul.f32 %v2778, %v609
    %v2804 = vmul.f32 %v2779, %v614
    %v2805 = vmul.f32 %v2780, %v619
    %v2806 = vmul.f32 %v2781, %v624
    %v2807 = vmul.f32 %v2782, %v629
    %v2808 = vmul.f32 %v2783, %v634
    %v2809 = vmul.f32 %v2784, %v639
    %s2810 = scalar_lea.vmem %s6, 144
    %v2811 = vld [vmem:[%s2810] sm:$0xf]
    %v2812 = vld [vmem:[%s2810 + $0x4] sm:$0xf]
    %v2813 = vld [vmem:[%s2810 + $0x8] sm:$0xf]
    %v2814 = vld [vmem:[%s2810 + $0xc] sm:$0xf]
    %v2815 = vld [vmem:[%s2810 + $0x10] sm:$0xf]
    %v2816 = vld [vmem:[%s2810 + $0x14] sm:$0xf]
    %v2817 = vld [vmem:[%s2810 + $0x18] sm:$0xf]
    %v2818 = vld [vmem:[%s2810 + $0x1c] sm:$0xf]
    %v2819 = vld [vmem:[%s2810 + $0x20] sm:$0xf]
    %v2820 = vld [vmem:[%s2810 + $0x24] sm:$0xf]
    %v2821 = vld [vmem:[%s2810 + $0x28] sm:$0xf]
    %v2822 = vld [vmem:[%s2810 + $0x2c] sm:$0xf]
    %v2823 = vld [vmem:[%s2810 + $0x30] sm:$0xf]
    %v2824 = vld [vmem:[%s2810 + $0x34] sm:$0xf]
    %v2825 = vld [vmem:[%s2810 + $0x38] sm:$0xf]
    %v2826 = vld [vmem:[%s2810 + $0x3c] sm:$0xf]
    %v2827 = vld [vmem:[%s2810 + $0x40] sm:$0xf]
    %v2828 = vld [vmem:[%s2810 + $0x44] sm:$0xf]
    %v2829 = vld [vmem:[%s2810 + $0x48] sm:$0xf]
    %v2830 = vld [vmem:[%s2810 + $0x4c] sm:$0xf]
    %v2831 = vld [vmem:[%s2810 + $0x50] sm:$0xf]
    %v2832 = vld [vmem:[%s2810 + $0x54] sm:$0xf]
    %v2833 = vld [vmem:[%s2810 + $0x58] sm:$0xf]
    %v2834 = vld [vmem:[%s2810 + $0x5c] sm:$0xf]
    %v2835 = vld [vmem:[%s2810 + $0x60] sm:$0xf]
    %v2836 = vld [vmem:[%s2810 + $0x64] sm:$0xf]
    %v2837 = vld [vmem:[%s2810 + $0x68] sm:$0xf]
    %v2838 = vld [vmem:[%s2810 + $0x6c] sm:$0xf]
    %v2839 = vld [vmem:[%s2810 + $0x70] sm:$0xf]
    %v2840 = vld [vmem:[%s2810 + $0x74] sm:$0xf]
    %v2841 = vld [vmem:[%s2810 + $0x78] sm:$0xf]
    %v2842 = vld [vmem:[%s2810 + $0x7c] sm:$0xf]
    %v2843 = vld [vmem:[%s2810 + $0x80] sm:$0xf]
    %v2844 = vld [vmem:[%s2810 + $0x84] sm:$0xf]
    %v2845 = vld [vmem:[%s2810 + $0x88] sm:$0xf]
    %v2846 = vld [vmem:[%s2810 + $0x8c] sm:$0xf]
    %s2847 = scalar_lea.vmem %s7, 1
    %v2848 = vld [vmem:[%s2847] sm:$0x1]
    %s2849 = scalar_lea.vmem %s8, 1
    %v2850 = vld [vmem:[%s2849] sm:$0x1]
    %2851 = vst.msk [vmem:[#allocation2 + $0x10] sm:$0xff] %vm109, %v2785
    %2852 = vst.msk [vmem:[#allocation2 + $0x18] sm:$0xff] %vm109, %v2786
    %2853 = vst.msk [vmem:[#allocation2 + $0x20] sm:$0xff] %vm109, %v2787
    %2854 = vst.msk [vmem:[#allocation2 + $0x28] sm:$0xff] %vm109, %v2788
    %2855 = vst.msk [vmem:[#allocation2 + $0x30] sm:$0xff] %vm109, %v2789
    %2856 = vst.msk [vmem:[#allocation2 + $0x38] sm:$0xff] %vm109, %v2790
    %2857 = vst.msk [vmem:[#allocation2 + $0x40] sm:$0xff] %vm109, %v2791
    %2858 = vst.msk [vmem:[#allocation2 + $0x48] sm:$0xff] %vm109, %v2792
    %2859 = vst.msk [vmem:[#allocation2 + $0x50] sm:$0xff] %vm109, %v2793
    %2860 = vst.msk [vmem:[#allocation2 + $0x58] sm:$0xff] %vm109, %v2794
    %2861 = vst.msk [vmem:[#allocation2 + $0x60] sm:$0xff] %vm109, %v2795
    %2862 = vst.msk [vmem:[#allocation2 + $0x68] sm:$0xff] %vm109, %v2796
    %2863 = vst.msk [vmem:[#allocation2 + $0x70] sm:$0xff] %vm109, %v2797
    %2864 = vst.msk [vmem:[#allocation2 + $0x78] sm:$0xff] %vm109, %v2798
    %2865 = vst.msk [vmem:[#allocation2 + $0x80] sm:$0xff] %vm109, %v2799
    %2866 = vst.msk [vmem:[#allocation2 + $0x88] sm:$0xff] %vm109, %v2800
    %2867 = vst.msk [vmem:[#allocation2 + $0x90] sm:$0xff] %vm109, %v2801
    %2868 = vst.msk [vmem:[#allocation2 + $0x98] sm:$0xff] %vm109, %v2802
    %2869 = vst.msk [vmem:[#allocation2 + $0xa0] sm:$0xff] %vm109, %v2803
    %2870 = vst.msk [vmem:[#allocation2 + $0xa8] sm:$0xff] %vm109, %v2804
    %2871 = vst.msk [vmem:[#allocation2 + $0xb0] sm:$0xff] %vm109, %v2805
    %2872 = vst.msk [vmem:[#allocation2 + $0xb8] sm:$0xff] %vm109, %v2806
    %2873 = vst.msk [vmem:[#allocation2 + $0xc0] sm:$0xff] %vm109, %v2807
    %2874 = vst.msk [vmem:[#allocation2 + $0xc8] sm:$0xff] %vm109, %v2808
    %2875 = vst.msk [vmem:[#allocation2 + $0xd0] sm:$0xff] %vm109, %v2809
    %v2876 = vld [vmem:[#allocation2 + $0x5] sm:$0xff]
    %v2877 = vld [vmem:[#allocation2 + $0xd] sm:$0xff]
    %v2878 = vld [vmem:[#allocation2 + $0x15] sm:$0xff]
    %v2879 = vld [vmem:[#allocation2 + $0x1d] sm:$0xff]
    %v2880 = vld [vmem:[#allocation2 + $0x25] sm:$0xff]
    %v2881 = vld [vmem:[#allocation2 + $0x2d] sm:$0xff]
    %v2882 = vld [vmem:[#allocation2 + $0x35] sm:$0xff]
    %v2883 = vld [vmem:[#allocation2 + $0x3d] sm:$0xff]
    %v2884 = vld [vmem:[#allocation2 + $0x45] sm:$0xff]
    %v2885 = vld [vmem:[#allocation2 + $0x4d] sm:$0xff]
    %v2886 = vld [vmem:[#allocation2 + $0x55] sm:$0xff]
    %v2887 = vld [vmem:[#allocation2 + $0x5d] sm:$0xff]
    %v2888 = vld [vmem:[#allocation2 + $0x65] sm:$0xff]
    %v2889 = vld [vmem:[#allocation2 + $0x6d] sm:$0xff]
    %v2890 = vld [vmem:[#allocation2 + $0x75] sm:$0xff]
    %v2891 = vld [vmem:[#allocation2 + $0x7d] sm:$0xff]
    %v2892 = vld [vmem:[#allocation2 + $0x85] sm:$0xff]
    %v2893 = vld [vmem:[#allocation2 + $0x8d] sm:$0xff]
    %v2894 = vld [vmem:[#allocation2 + $0x95] sm:$0xff]
    %v2895 = vld [vmem:[#allocation2 + $0x9d] sm:$0xff]
    %v2896 = vld [vmem:[#allocation2 + $0xa5] sm:$0xff]
    %v2897 = vld [vmem:[#allocation2 + $0xad] sm:$0xff]
    %v2898 = vld [vmem:[#allocation2 + $0xb5] sm:$0xff]
    %v2899 = vld [vmem:[#allocation2 + $0xbd] sm:$0xff]
    %v2900 = vld [vmem:[#allocation2 + $0xc5] sm:$0xff]
    %v2901 = vld [vmem:[#allocation2 + $0x6] sm:$0xff]
    %v2902 = vld [vmem:[#allocation2 + $0xe] sm:$0xff]
    %v2903 = vld [vmem:[#allocation2 + $0x16] sm:$0xff]
    %v2904 = vld [vmem:[#allocation2 + $0x1e] sm:$0xff]
    %v2905 = vld [vmem:[#allocation2 + $0x26] sm:$0xff]
    %v2906 = vld [vmem:[#allocation2 + $0x2e] sm:$0xff]
    %v2907 = vld [vmem:[#allocation2 + $0x36] sm:$0xff]
    %v2908 = vld [vmem:[#allocation2 + $0x3e] sm:$0xff]
    %v2909 = vld [vmem:[#allocation2 + $0x46] sm:$0xff]
    %v2910 = vld [vmem:[#allocation2 + $0x4e] sm:$0xff]
    %v2911 = vld [vmem:[#allocation2 + $0x56] sm:$0xff]
    %v2912 = vld [vmem:[#allocation2 + $0x5e] sm:$0xff]
    %v2913 = vld [vmem:[#allocation2 + $0x66] sm:$0xff]
    %v2914 = vld [vmem:[#allocation2 + $0x6e] sm:$0xff]
    %v2915 = vld [vmem:[#allocation2 + $0x76] sm:$0xff]
    %v2916 = vld [vmem:[#allocation2 + $0x7e] sm:$0xff]
    %v2917 = vld [vmem:[#allocation2 + $0x86] sm:$0xff]
    %v2918 = vld [vmem:[#allocation2 + $0x8e] sm:$0xff]
    %v2919 = vld [vmem:[#allocation2 + $0x96] sm:$0xff]
    %v2920 = vld [vmem:[#allocation2 + $0x9e] sm:$0xff]
    %v2921 = vld [vmem:[#allocation2 + $0xa6] sm:$0xff]
    %v2922 = vld [vmem:[#allocation2 + $0xae] sm:$0xff]
    %v2923 = vld [vmem:[#allocation2 + $0xb6] sm:$0xff]
    %v2924 = vld [vmem:[#allocation2 + $0xbe] sm:$0xff]
    %v2925 = vld [vmem:[#allocation2 + $0xc6] sm:$0xff]
    %v2926 = vld [vmem:[#allocation2 + $0x7] sm:$0xff]
    %v2927 = vld [vmem:[#allocation2 + $0xf] sm:$0xff]
    %v2928 = vld [vmem:[#allocation2 + $0x17] sm:$0xff]
    %v2929 = vld [vmem:[#allocation2 + $0x1f] sm:$0xff]
    %v2930 = vld [vmem:[#allocation2 + $0x27] sm:$0xff]
    %v2931 = vld [vmem:[#allocation2 + $0x2f] sm:$0xff]
    %v2932 = vld [vmem:[#allocation2 + $0x37] sm:$0xff]
    %v2933 = vld [vmem:[#allocation2 + $0x3f] sm:$0xff]
    %v2934 = vld [vmem:[#allocation2 + $0x47] sm:$0xff]
    %v2935 = vld [vmem:[#allocation2 + $0x4f] sm:$0xff]
    %v2936 = vld [vmem:[#allocation2 + $0x57] sm:$0xff]
    %v2937 = vld [vmem:[#allocation2 + $0x5f] sm:$0xff]
    %v2938 = vld [vmem:[#allocation2 + $0x67] sm:$0xff]
    %v2939 = vld [vmem:[#allocation2 + $0x6f] sm:$0xff]
    %v2940 = vld [vmem:[#allocation2 + $0x77] sm:$0xff]
    %v2941 = vld [vmem:[#allocation2 + $0x7f] sm:$0xff]
    %v2942 = vld [vmem:[#allocation2 + $0x87] sm:$0xff]
    %v2943 = vld [vmem:[#allocation2 + $0x8f] sm:$0xff]
    %v2944 = vld [vmem:[#allocation2 + $0x97] sm:$0xff]
    %v2945 = vld [vmem:[#allocation2 + $0x9f] sm:$0xff]
    %v2946 = vld [vmem:[#allocation2 + $0xa7] sm:$0xff]
    %v2947 = vld [vmem:[#allocation2 + $0xaf] sm:$0xff]
    %v2948 = vld [vmem:[#allocation2 + $0xb7] sm:$0xff]
    %v2949 = vld [vmem:[#allocation2 + $0xbf] sm:$0xff]
    %v2950 = vld [vmem:[#allocation2 + $0xc7] sm:$0xff]
    %v2951 = vld [vmem:[#allocation2 + $0xcf] sm:$0xff]
    %2977 = vrot.lane.b32.xlu0 %v2901, 32
    %v2978 = vpop.permute.xlu0 %2977
    %2979 = vrot.lane.b32.xlu0 %v2902, 32
    %v2980 = vpop.permute.xlu0 %2979
    %2981 = vrot.lane.b32.xlu0 %v2903, 32
    %v2982 = vpop.permute.xlu0 %2981
    %2983 = vrot.lane.b32.xlu0 %v2904, 32
    %v2984 = vpop.permute.xlu0 %2983
    %2985 = vrot.lane.b32.xlu0 %v2905, 32
    %v2986 = vpop.permute.xlu0 %2985
    %2987 = vrot.lane.b32.xlu0 %v2906, 32
    %v2988 = vpop.permute.xlu0 %2987
    %2989 = vrot.lane.b32.xlu0 %v2907, 32
    %v2990 = vpop.permute.xlu0 %2989
    %2991 = vrot.lane.b32.xlu0 %v2908, 32
    %v2992 = vpop.permute.xlu0 %2991
    %2993 = vrot.lane.b32.xlu0 %v2909, 32
    %v2994 = vpop.permute.xlu0 %2993
    %2995 = vrot.lane.b32.xlu0 %v2910, 32
    %v2996 = vpop.permute.xlu0 %2995
    %2997 = vrot.lane.b32.xlu0 %v2911, 32
    %v2998 = vpop.permute.xlu0 %2997
    %2999 = vrot.lane.b32.xlu0 %v2912, 32
    %v3000 = vpop.permute.xlu0 %2999
    %3001 = vrot.lane.b32.xlu0 %v2913, 32
    %v3002 = vpop.permute.xlu0 %3001
    %3003 = vrot.lane.b32.xlu0 %v2914, 32
    %v3004 = vpop.permute.xlu0 %3003
    %3005 = vrot.lane.b32.xlu0 %v2915, 32
    %v3006 = vpop.permute.xlu0 %3005
    %3007 = vrot.lane.b32.xlu0 %v2916, 32
    %v3008 = vpop.permute.xlu0 %3007
    %3009 = vrot.lane.b32.xlu0 %v2917, 32
    %v3010 = vpop.permute.xlu0 %3009
    %3011 = vrot.lane.b32.xlu0 %v2918, 32
    %v3012 = vpop.permute.xlu0 %3011
    %3013 = vrot.lane.b32.xlu0 %v2919, 32
    %v3014 = vpop.permute.xlu0 %3013
    %3015 = vrot.lane.b32.xlu0 %v2920, 32
    %v3016 = vpop.permute.xlu0 %3015
    %3017 = vrot.lane.b32.xlu0 %v2921, 32
    %v3018 = vpop.permute.xlu0 %3017
    %3019 = vrot.lane.b32.xlu0 %v2922, 32
    %v3020 = vpop.permute.xlu0 %3019
    %3021 = vrot.lane.b32.xlu0 %v2923, 32
    %v3022 = vpop.permute.xlu0 %3021
    %3023 = vrot.lane.b32.xlu0 %v2924, 32
    %v3024 = vpop.permute.xlu0 %3023
    %3025 = vrot.lane.b32.xlu0 %v2925, 32
    %v3026 = vpop.permute.xlu0 %3025
    %3077 = vrot.lane.b32.xlu0 %v2926, 64
    %v3078 = vpop.permute.xlu0 %3077
    %3079 = vrot.lane.b32.xlu0 %v2927, 64
    %v3080 = vpop.permute.xlu0 %3079
    %3081 = vrot.lane.b32.xlu0 %v2928, 64
    %v3082 = vpop.permute.xlu0 %3081
    %3083 = vrot.lane.b32.xlu0 %v2929, 64
    %v3084 = vpop.permute.xlu0 %3083
    %3085 = vrot.lane.b32.xlu0 %v2930, 64
    %v3086 = vpop.permute.xlu0 %3085
    %3087 = vrot.lane.b32.xlu0 %v2931, 64
    %v3088 = vpop.permute.xlu0 %3087
    %3089 = vrot.lane.b32.xlu0 %v2932, 64
    %v3090 = vpop.permute.xlu0 %3089
    %3091 = vrot.lane.b32.xlu0 %v2933, 64
    %v3092 = vpop.permute.xlu0 %3091
    %3093 = vrot.lane.b32.xlu0 %v2934, 64
    %v3094 = vpop.permute.xlu0 %3093
    %3095 = vrot.lane.b32.xlu0 %v2935, 64
    %v3096 = vpop.permute.xlu0 %3095
    %3097 = vrot.lane.b32.xlu0 %v2936, 64
    %v3098 = vpop.permute.xlu0 %3097
    %3099 = vrot.lane.b32.xlu0 %v2937, 64
    %v3100 = vpop.permute.xlu0 %3099
    %3101 = vrot.lane.b32.xlu0 %v2938, 64
    %v3102 = vpop.permute.xlu0 %3101
    %3103 = vrot.lane.b32.xlu0 %v2939, 64
    %v3104 = vpop.permute.xlu0 %3103
    %3105 = vrot.lane.b32.xlu0 %v2940, 64
    %v3106 = vpop.permute.xlu0 %3105
    %3107 = vrot.lane.b32.xlu0 %v2941, 64
    %v3108 = vpop.permute.xlu0 %3107
    %3109 = vrot.lane.b32.xlu0 %v2942, 64
    %v3110 = vpop.permute.xlu0 %3109
    %3111 = vrot.lane.b32.xlu0 %v2943, 64
    %v3112 = vpop.permute.xlu0 %3111
    %3113 = vrot.lane.b32.xlu0 %v2944, 64
    %v3114 = vpop.permute.xlu0 %3113
    %3115 = vrot.lane.b32.xlu0 %v2945, 64
    %v3116 = vpop.permute.xlu0 %3115
    %3117 = vrot.lane.b32.xlu0 %v2946, 64
    %v3118 = vpop.permute.xlu0 %3117
    %3119 = vrot.lane.b32.xlu0 %v2947, 64
    %v3120 = vpop.permute.xlu0 %3119
    %3121 = vrot.lane.b32.xlu0 %v2948, 64
    %v3122 = vpop.permute.xlu0 %3121
    %3123 = vrot.lane.b32.xlu0 %v2949, 64
    %v3124 = vpop.permute.xlu0 %3123
    %3125 = vrot.lane.b32.xlu0 %v2950, 64
    %v3126 = vpop.permute.xlu0 %3125
    %3153 = vrot.lane.b32.xlu0 %v2927, 96
    %v3154 = vpop.permute.xlu0 %3153
    %3155 = vrot.lane.b32.xlu0 %v2928, 96
    %v3156 = vpop.permute.xlu0 %3155
    %3157 = vrot.lane.b32.xlu0 %v2929, 96
    %v3158 = vpop.permute.xlu0 %3157
    %3159 = vrot.lane.b32.xlu0 %v2930, 96
    %v3160 = vpop.permute.xlu0 %3159
    %3161 = vrot.lane.b32.xlu0 %v2931, 96
    %v3162 = vpop.permute.xlu0 %3161
    %3163 = vrot.lane.b32.xlu0 %v2932, 96
    %v3164 = vpop.permute.xlu0 %3163
    %3165 = vrot.lane.b32.xlu0 %v2933, 96
    %v3166 = vpop.permute.xlu0 %3165
    %3167 = vrot.lane.b32.xlu0 %v2934, 96
    %v3168 = vpop.permute.xlu0 %3167
    %3169 = vrot.lane.b32.xlu0 %v2935, 96
    %v3170 = vpop.permute.xlu0 %3169
    %3171 = vrot.lane.b32.xlu0 %v2936, 96
    %v3172 = vpop.permute.xlu0 %3171
    %3173 = vrot.lane.b32.xlu0 %v2937, 96
    %v3174 = vpop.permute.xlu0 %3173
    %3175 = vrot.lane.b32.xlu0 %v2938, 96
    %v3176 = vpop.permute.xlu0 %3175
    %3177 = vrot.lane.b32.xlu0 %v2939, 96
    %v3178 = vpop.permute.xlu0 %3177
    %3179 = vrot.lane.b32.xlu0 %v2940, 96
    %v3180 = vpop.permute.xlu0 %3179
    %3181 = vrot.lane.b32.xlu0 %v2941, 96
    %v3182 = vpop.permute.xlu0 %3181
    %3183 = vrot.lane.b32.xlu0 %v2942, 96
    %v3184 = vpop.permute.xlu0 %3183
    %3185 = vrot.lane.b32.xlu0 %v2943, 96
    %v3186 = vpop.permute.xlu0 %3185
    %3187 = vrot.lane.b32.xlu0 %v2944, 96
    %v3188 = vpop.permute.xlu0 %3187
    %3189 = vrot.lane.b32.xlu0 %v2945, 96
    %v3190 = vpop.permute.xlu0 %3189
    %3191 = vrot.lane.b32.xlu0 %v2946, 96
    %v3192 = vpop.permute.xlu0 %3191
    %3193 = vrot.lane.b32.xlu0 %v2947, 96
    %v3194 = vpop.permute.xlu0 %3193
    %3195 = vrot.lane.b32.xlu0 %v2948, 96
    %v3196 = vpop.permute.xlu0 %3195
    %3197 = vrot.lane.b32.xlu0 %v2949, 96
    %v3198 = vpop.permute.xlu0 %3197
    %3199 = vrot.lane.b32.xlu0 %v2950, 96
    %v3200 = vpop.permute.xlu0 %3199
    %3201 = vrot.lane.b32.xlu0 %v2951, 96
    %v3202 = vpop.permute.xlu0 %3201
    %v3228 = vsel %vm109, %v2876, %v2978
    %v3229 = vsel %vm109, %v2877, %v2980
    %v3230 = vsel %vm109, %v2878, %v2982
    %v3231 = vsel %vm109, %v2879, %v2984
    %v3232 = vsel %vm109, %v2880, %v2986
    %v3233 = vsel %vm109, %v2881, %v2988
    %v3234 = vsel %vm109, %v2882, %v2990
    %v3235 = vsel %vm109, %v2883, %v2992
    %v3236 = vsel %vm109, %v2884, %v2994
    %v3237 = vsel %vm109, %v2885, %v2996
    %v3238 = vsel %vm109, %v2886, %v2998
    %v3239 = vsel %vm109, %v2887, %v3000
    %v3240 = vsel %vm109, %v2888, %v3002
    %v3241 = vsel %vm109, %v2889, %v3004
    %v3242 = vsel %vm109, %v2890, %v3006
    %v3243 = vsel %vm109, %v2891, %v3008
    %v3244 = vsel %vm109, %v2892, %v3010
    %v3245 = vsel %vm109, %v2893, %v3012
    %v3246 = vsel %vm109, %v2894, %v3014
    %v3247 = vsel %vm109, %v2895, %v3016
    %v3248 = vsel %vm109, %v2896, %v3018
    %v3249 = vsel %vm109, %v2897, %v3020
    %v3250 = vsel %vm109, %v2898, %v3022
    %v3251 = vsel %vm109, %v2899, %v3024
    %v3252 = vsel %vm109, %v2900, %v3026
    %v3253 = vsel %vm1156, %v3228, %v3078
    %v3254 = vsel %vm1156, %v3229, %v3080
    %v3255 = vsel %vm1156, %v3230, %v3082
    %v3256 = vsel %vm1156, %v3231, %v3084
    %v3257 = vsel %vm1156, %v3232, %v3086
    %v3258 = vsel %vm1156, %v3233, %v3088
    %v3259 = vsel %vm1156, %v3234, %v3090
    %v3260 = vsel %vm1156, %v3235, %v3092
    %v3261 = vsel %vm1156, %v3236, %v3094
    %v3262 = vsel %vm1156, %v3237, %v3096
    %v3263 = vsel %vm1156, %v3238, %v3098
    %v3264 = vsel %vm1156, %v3239, %v3100
    %v3265 = vsel %vm1156, %v3240, %v3102
    %v3266 = vsel %vm1156, %v3241, %v3104
    %v3267 = vsel %vm1156, %v3242, %v3106
    %v3268 = vsel %vm1156, %v3243, %v3108
    %v3269 = vsel %vm1156, %v3244, %v3110
    %v3270 = vsel %vm1156, %v3245, %v3112
    %v3271 = vsel %vm1156, %v3246, %v3114
    %v3272 = vsel %vm1156, %v3247, %v3116
    %v3273 = vsel %vm1156, %v3248, %v3118
    %v3274 = vsel %vm1156, %v3249, %v3120
    %v3275 = vsel %vm1156, %v3250, %v3122
    %v3276 = vsel %vm1156, %v3251, %v3124
    %v3277 = vsel %vm1156, %v3252, %v3126
    %v3278 = vsel %vm1182, %v3253, %v3154
    %v3279 = vsel %vm1182, %v3254, %v3156
    %v3280 = vsel %vm1182, %v3255, %v3158
    %v3281 = vsel %vm1182, %v3256, %v3160
    %v3282 = vsel %vm1182, %v3257, %v3162
    %v3283 = vsel %vm1182, %v3258, %v3164
    %v3284 = vsel %vm1182, %v3259, %v3166
    %v3285 = vsel %vm1182, %v3260, %v3168
    %v3286 = vsel %vm1182, %v3261, %v3170
    %v3287 = vsel %vm1182, %v3262, %v3172
    %v3288 = vsel %vm1182, %v3263, %v3174
    %v3289 = vsel %vm1182, %v3264, %v3176
    %v3290 = vsel %vm1182, %v3265, %v3178
    %v3291 = vsel %vm1182, %v3266, %v3180
    %v3292 = vsel %vm1182, %v3267, %v3182
    %v3293 = vsel %vm1182, %v3268, %v3184
    %v3294 = vsel %vm1182, %v3269, %v3186
    %v3295 = vsel %vm1182, %v3270, %v3188
    %v3296 = vsel %vm1182, %v3271, %v3190
    %v3297 = vsel %vm1182, %v3272, %v3192
    %v3298 = vsel %vm1182, %v3273, %v3194
    %v3299 = vsel %vm1182, %v3274, %v3196
    %v3300 = vsel %vm1182, %v3275, %v3198
    %v3301 = vsel %vm1182, %v3276, %v3200
    %v3302 = vsel %vm1182, %v3277, %v3202
    %v3303 = vpack.c.bf16 %v3279, %v3278
    %v3304 = vpack.c.bf16 %v3281, %v3280
    %v3305 = vpack.c.bf16 %v3283, %v3282
    %v3306 = vpack.c.bf16 %v3285, %v3284
    %v3307 = vpack.c.bf16 %v3287, %v3286
    %v3308 = vpack.c.bf16 %v3289, %v3288
    %v3309 = vpack.c.bf16 %v3291, %v3290
    %v3310 = vpack.c.bf16 %v3293, %v3292
    %v3311 = vpack.c.bf16 %v3295, %v3294
    %v3312 = vpack.c.bf16 %v3297, %v3296
    %v3313 = vpack.c.bf16 %v3299, %v3298
    %v3314 = vpack.c.bf16 %v3301, %v3300
    %v3315 = vpack.c.bf16 %v3302, %v3302
    %v3329 = vunpack.c.l.b16 %v3303
    %v3330 = vunpack.c.h.b16 %v3303
    %v3331 = vunpack.c.l.b16 %v3304
    %v3332 = vunpack.c.h.b16 %v3304
    %v3333 = vunpack.c.l.b16 %v3305
    %v3334 = vunpack.c.h.b16 %v3305
    %v3335 = vunpack.c.l.b16 %v3306
    %v3336 = vunpack.c.h.b16 %v3306
    %v3337 = vunpack.c.l.b16 %v3307
    %v3338 = vunpack.c.h.b16 %v3307
    %v3339 = vunpack.c.l.b16 %v3308
    %v3340 = vunpack.c.h.b16 %v3308
    %v3341 = vunpack.c.l.b16 %v3309
    %v3342 = vunpack.c.h.b16 %v3309
    %v3343 = vunpack.c.l.b16 %v3310
    %v3344 = vunpack.c.h.b16 %v3310
    %v3345 = vunpack.c.l.b16 %v3311
    %v3346 = vunpack.c.h.b16 %v3311
    %v3347 = vunpack.c.l.b16 %v3312
    %v3348 = vunpack.c.h.b16 %v3312
    %v3349 = vunpack.c.l.b16 %v3313
    %v3350 = vunpack.c.h.b16 %v3313
    %v3351 = vunpack.c.l.b16 %v3314
    %v3352 = vunpack.c.h.b16 %v3314
    %v3353 = vunpack.c.l.b16 %v3315
    %v3354 = vpack.c.b16 %v3329, %v3329
    %v3355 = vpack.c.b16 %v3330, %v3330
    %v3356 = vpack.c.b16 %v3331, %v3331
    %v3357 = vpack.c.b16 %v3332, %v3332
    %v3358 = vpack.c.b16 %v3333, %v3333
    %v3359 = vpack.c.b16 %v3334, %v3334
    %v3360 = vpack.c.b16 %v3335, %v3335
    %v3361 = vpack.c.b16 %v3336, %v3336
    %v3362 = vpack.c.b16 %v3337, %v3337
    %v3363 = vpack.c.b16 %v3338, %v3338
    %v3364 = vpack.c.b16 %v3339, %v3339
    %v3365 = vpack.c.b16 %v3340, %v3340
    %v3366 = vpack.c.b16 %v3341, %v3341
    %v3367 = vpack.c.b16 %v3342, %v3342
    %v3368 = vpack.c.b16 %v3343, %v3343
    %v3369 = vpack.c.b16 %v3344, %v3344
    %v3370 = vpack.c.b16 %v3345, %v3345
    %v3371 = vpack.c.b16 %v3346, %v3346
    %v3372 = vpack.c.b16 %v3347, %v3347
    %v3373 = vpack.c.b16 %v3348, %v3348
    %v3374 = vpack.c.b16 %v3349, %v3349
    %v3375 = vpack.c.b16 %v3350, %v3350
    %v3376 = vpack.c.b16 %v3351, %v3351
    %v3377 = vpack.c.b16 %v3352, %v3352
    %v3378 = vpack.c.b16 %v3353, %v3353
    %3404 = vst [vmem:[#allocation3] sm:$0xf] %v3354
    %3405 = vst [vmem:[#allocation3 + $0xc] sm:$0xf] %v3355
    %3406 = vst [vmem:[#allocation3 + $0x18] sm:$0xf] %v3356
    %3407 = vst [vmem:[#allocation3 + $0x24] sm:$0xf] %v3357
    %3408 = vst [vmem:[#allocation3 + $0x30] sm:$0xf] %v3358
    %3409 = vst [vmem:[#allocation3 + $0x3c] sm:$0xf] %v3359
    %3410 = vst [vmem:[#allocation3 + $0x48] sm:$0xf] %v3360
    %3411 = vst [vmem:[#allocation3 + $0x54] sm:$0xf] %v3361
    %3412 = vst [vmem:[#allocation3 + $0x60] sm:$0xf] %v3362
    %3413 = vst [vmem:[#allocation3 + $0x6c] sm:$0xf] %v3363
    %3414 = vst [vmem:[#allocation3 + $0x78] sm:$0xf] %v3364
    %3415 = vst [vmem:[#allocation3 + $0x84] sm:$0xf] %v3365
    %3416 = vst [vmem:[#allocation3 + $0x90] sm:$0xf] %v3366
    %3417 = vst [vmem:[#allocation3 + $0x9c] sm:$0xf] %v3367
    %3418 = vst [vmem:[#allocation3 + $0xa8] sm:$0xf] %v3368
    %3419 = vst [vmem:[#allocation3 + $0xb4] sm:$0xf] %v3369
    %3420 = vst [vmem:[#allocation3 + $0xc0] sm:$0xf] %v3370
    %3421 = vst [vmem:[#allocation3 + $0xcc] sm:$0xf] %v3371
    %3422 = vst [vmem:[#allocation3 + $0xd8] sm:$0xf] %v3372
    %3423 = vst [vmem:[#allocation3 + $0xe4] sm:$0xf] %v3373
    %3424 = vst [vmem:[#allocation3 + $0xf0] sm:$0xf] %v3374
    %3425 = vst [vmem:[#allocation3 + $0xfc] sm:$0xf] %v3375
    %3426 = vst [vmem:[#allocation3 + $0x108] sm:$0xf] %v3376
    %3427 = vst [vmem:[#allocation3 + $0x114] sm:$0xf] %v3377
    %3428 = vst [vmem:[#allocation3 + $0x120] sm:$0xf] %v3378
    %v3429 = vld [vmem:[#allocation2 + $0x10] sm:$0xff]
    %v3430 = vld [vmem:[#allocation2 + $0x18] sm:$0xff]
    %v3431 = vld [vmem:[#allocation2 + $0x20] sm:$0xff]
    %v3432 = vld [vmem:[#allocation2 + $0x28] sm:$0xff]
    %v3433 = vld [vmem:[#allocation2 + $0x30] sm:$0xff]
    %v3434 = vld [vmem:[#allocation2 + $0x38] sm:$0xff]
    %v3435 = vld [vmem:[#allocation2 + $0x40] sm:$0xff]
    %v3436 = vld [vmem:[#allocation2 + $0x48] sm:$0xff]
    %v3437 = vld [vmem:[#allocation2 + $0x50] sm:$0xff]
    %v3438 = vld [vmem:[#allocation2 + $0x58] sm:$0xff]
    %v3439 = vld [vmem:[#allocation2 + $0x60] sm:$0xff]
    %v3440 = vld [vmem:[#allocation2 + $0x68] sm:$0xff]
    %v3441 = vld [vmem:[#allocation2 + $0x70] sm:$0xff]
    %v3442 = vld [vmem:[#allocation2 + $0x78] sm:$0xff]
    %v3443 = vld [vmem:[#allocation2 + $0x80] sm:$0xff]
    %v3444 = vld [vmem:[#allocation2 + $0x88] sm:$0xff]
    %v3445 = vld [vmem:[#allocation2 + $0x90] sm:$0xff]
    %v3446 = vld [vmem:[#allocation2 + $0x98] sm:$0xff]
    %v3447 = vld [vmem:[#allocation2 + $0xa0] sm:$0xff]
    %v3448 = vld [vmem:[#allocation2 + $0xa8] sm:$0xff]
    %v3449 = vld [vmem:[#allocation2 + $0xb0] sm:$0xff]
    %v3450 = vld [vmem:[#allocation2 + $0xb8] sm:$0xff]
    %v3451 = vld [vmem:[#allocation2 + $0xc0] sm:$0xff]
    %v3452 = vld [vmem:[#allocation2 + $0xc8] sm:$0xff]
    %v3453 = vld [vmem:[#allocation2 + $0xd0] sm:$0xff]
    %v3454 = vld [vmem:[#allocation2 + $0x11] sm:$0xff]
    %v3455 = vld [vmem:[#allocation2 + $0x19] sm:$0xff]
    %v3456 = vld [vmem:[#allocation2 + $0x21] sm:$0xff]
    %v3457 = vld [vmem:[#allocation2 + $0x29] sm:$0xff]
    %v3458 = vld [vmem:[#allocation2 + $0x31] sm:$0xff]
    %v3459 = vld [vmem:[#allocation2 + $0x39] sm:$0xff]
    %v3460 = vld [vmem:[#allocation2 + $0x41] sm:$0xff]
    %v3461 = vld [vmem:[#allocation2 + $0x49] sm:$0xff]
    %v3462 = vld [vmem:[#allocation2 + $0x51] sm:$0xff]
    %v3463 = vld [vmem:[#allocation2 + $0x59] sm:$0xff]
    %v3464 = vld [vmem:[#allocation2 + $0x61] sm:$0xff]
    %v3465 = vld [vmem:[#allocation2 + $0x69] sm:$0xff]
    %v3466 = vld [vmem:[#allocation2 + $0x71] sm:$0xff]
    %v3467 = vld [vmem:[#allocation2 + $0x79] sm:$0xff]
    %v3468 = vld [vmem:[#allocation2 + $0x81] sm:$0xff]
    %v3469 = vld [vmem:[#allocation2 + $0x89] sm:$0xff]
    %v3470 = vld [vmem:[#allocation2 + $0x91] sm:$0xff]
    %v3471 = vld [vmem:[#allocation2 + $0x99] sm:$0xff]
    %v3472 = vld [vmem:[#allocation2 + $0xa1] sm:$0xff]
    %v3473 = vld [vmem:[#allocation2 + $0xa9] sm:$0xff]
    %v3474 = vld [vmem:[#allocation2 + $0xb1] sm:$0xff]
    %v3475 = vld [vmem:[#allocation2 + $0xb9] sm:$0xff]
    %v3476 = vld [vmem:[#allocation2 + $0xc1] sm:$0xff]
    %v3477 = vld [vmem:[#allocation2 + $0xc9] sm:$0xff]
    %v3478 = vld [vmem:[#allocation2 + $0xd1] sm:$0xff]
    %v3479 = vld [vmem:[#allocation2 + $0xd9] sm:$0xff]
    %v3480 = vld [vmem:[#allocation2 + $0x1a] sm:$0xff]
    %v3481 = vld [vmem:[#allocation2 + $0x22] sm:$0xff]
    %v3482 = vld [vmem:[#allocation2 + $0x2a] sm:$0xff]
    %v3483 = vld [vmem:[#allocation2 + $0x32] sm:$0xff]
    %v3484 = vld [vmem:[#allocation2 + $0x3a] sm:$0xff]
    %v3485 = vld [vmem:[#allocation2 + $0x42] sm:$0xff]
    %v3486 = vld [vmem:[#allocation2 + $0x4a] sm:$0xff]
    %v3487 = vld [vmem:[#allocation2 + $0x52] sm:$0xff]
    %v3488 = vld [vmem:[#allocation2 + $0x5a] sm:$0xff]
    %v3489 = vld [vmem:[#allocation2 + $0x62] sm:$0xff]
    %v3490 = vld [vmem:[#allocation2 + $0x6a] sm:$0xff]
    %v3491 = vld [vmem:[#allocation2 + $0x72] sm:$0xff]
    %v3492 = vld [vmem:[#allocation2 + $0x7a] sm:$0xff]
    %v3493 = vld [vmem:[#allocation2 + $0x82] sm:$0xff]
    %v3494 = vld [vmem:[#allocation2 + $0x8a] sm:$0xff]
    %v3495 = vld [vmem:[#allocation2 + $0x92] sm:$0xff]
    %v3496 = vld [vmem:[#allocation2 + $0x9a] sm:$0xff]
    %v3497 = vld [vmem:[#allocation2 + $0xa2] sm:$0xff]
    %v3498 = vld [vmem:[#allocation2 + $0xaa] sm:$0xff]
    %v3499 = vld [vmem:[#allocation2 + $0xb2] sm:$0xff]
    %v3500 = vld [vmem:[#allocation2 + $0xba] sm:$0xff]
    %v3501 = vld [vmem:[#allocation2 + $0xc2] sm:$0xff]
    %v3502 = vld [vmem:[#allocation2 + $0xca] sm:$0xff]
    %v3503 = vld [vmem:[#allocation2 + $0xd2] sm:$0xff]
    %v3504 = vld [vmem:[#allocation2 + $0xda] sm:$0xff]
    %3530 = vrot.lane.b32.xlu0 %v3454, 32
    %v3531 = vpop.permute.xlu0 %3530
    %3532 = vrot.lane.b32.xlu0 %v3455, 32
    %v3533 = vpop.permute.xlu0 %3532
    %3534 = vrot.lane.b32.xlu0 %v3456, 32
    %v3535 = vpop.permute.xlu0 %3534
    %3536 = vrot.lane.b32.xlu0 %v3457, 32
    %v3537 = vpop.permute.xlu0 %3536
    %3538 = vrot.lane.b32.xlu0 %v3458, 32
    %v3539 = vpop.permute.xlu0 %3538
    %3540 = vrot.lane.b32.xlu0 %v3459, 32
    %v3541 = vpop.permute.xlu0 %3540
    %3542 = vrot.lane.b32.xlu0 %v3460, 32
    %v3543 = vpop.permute.xlu0 %3542
    %3544 = vrot.lane.b32.xlu0 %v3461, 32
    %v3545 = vpop.permute.xlu0 %3544
    %3546 = vrot.lane.b32.xlu0 %v3462, 32
    %v3547 = vpop.permute.xlu0 %3546
    %3548 = vrot.lane.b32.xlu0 %v3463, 32
    %v3549 = vpop.permute.xlu0 %3548
    %3550 = vrot.lane.b32.xlu0 %v3464, 32
    %v3551 = vpop.permute.xlu0 %3550
    %3552 = vrot.lane.b32.xlu0 %v3465, 32
    %v3553 = vpop.permute.xlu0 %3552
    %3554 = vrot.lane.b32.xlu0 %v3466, 32
    %v3555 = vpop.permute.xlu0 %3554
    %3556 = vrot.lane.b32.xlu0 %v3467, 32
    %v3557 = vpop.permute.xlu0 %3556
    %3558 = vrot.lane.b32.xlu0 %v3468, 32
    %v3559 = vpop.permute.xlu0 %3558
    %3560 = vrot.lane.b32.xlu0 %v3469, 32
    %v3561 = vpop.permute.xlu0 %3560
    %3562 = vrot.lane.b32.xlu0 %v3470, 32
    %v3563 = vpop.permute.xlu0 %3562
    %3564 = vrot.lane.b32.xlu0 %v3471, 32
    %v3565 = vpop.permute.xlu0 %3564
    %3566 = vrot.lane.b32.xlu0 %v3472, 32
    %v3567 = vpop.permute.xlu0 %3566
    %3568 = vrot.lane.b32.xlu0 %v3473, 32
    %v3569 = vpop.permute.xlu0 %3568
    %3570 = vrot.lane.b32.xlu0 %v3474, 32
    %v3571 = vpop.permute.xlu0 %3570
    %3572 = vrot.lane.b32.xlu0 %v3475, 32
    %v3573 = vpop.permute.xlu0 %3572
    %3574 = vrot.lane.b32.xlu0 %v3476, 32
    %v3575 = vpop.permute.xlu0 %3574
    %3576 = vrot.lane.b32.xlu0 %v3477, 32
    %v3577 = vpop.permute.xlu0 %3576
    %3578 = vrot.lane.b32.xlu0 %v3478, 32
    %v3579 = vpop.permute.xlu0 %3578
    %3606 = vrot.lane.b32.xlu0 %v3455, 64
    %v3607 = vpop.permute.xlu0 %3606
    %3608 = vrot.lane.b32.xlu0 %v3456, 64
    %v3609 = vpop.permute.xlu0 %3608
    %3610 = vrot.lane.b32.xlu0 %v3457, 64
    %v3611 = vpop.permute.xlu0 %3610
    %3612 = vrot.lane.b32.xlu0 %v3458, 64
    %v3613 = vpop.permute.xlu0 %3612
    %3614 = vrot.lane.b32.xlu0 %v3459, 64
    %v3615 = vpop.permute.xlu0 %3614
    %3616 = vrot.lane.b32.xlu0 %v3460, 64
    %v3617 = vpop.permute.xlu0 %3616
    %3618 = vrot.lane.b32.xlu0 %v3461, 64
    %v3619 = vpop.permute.xlu0 %3618
    %3620 = vrot.lane.b32.xlu0 %v3462, 64
    %v3621 = vpop.permute.xlu0 %3620
    %3622 = vrot.lane.b32.xlu0 %v3463, 64
    %v3623 = vpop.permute.xlu0 %3622
    %3624 = vrot.lane.b32.xlu0 %v3464, 64
    %v3625 = vpop.permute.xlu0 %3624
    %3626 = vrot.lane.b32.xlu0 %v3465, 64
    %v3627 = vpop.permute.xlu0 %3626
    %3628 = vrot.lane.b32.xlu0 %v3466, 64
    %v3629 = vpop.permute.xlu0 %3628
    %3630 = vrot.lane.b32.xlu0 %v3467, 64
    %v3631 = vpop.permute.xlu0 %3630
    %3632 = vrot.lane.b32.xlu0 %v3468, 64
    %v3633 = vpop.permute.xlu0 %3632
    %3634 = vrot.lane.b32.xlu0 %v3469, 64
    %v3635 = vpop.permute.xlu0 %3634
    %3636 = vrot.lane.b32.xlu0 %v3470, 64
    %v3637 = vpop.permute.xlu0 %3636
    %3638 = vrot.lane.b32.xlu0 %v3471, 64
    %v3639 = vpop.permute.xlu0 %3638
    %3640 = vrot.lane.b32.xlu0 %v3472, 64
    %v3641 = vpop.permute.xlu0 %3640
    %3642 = vrot.lane.b32.xlu0 %v3473, 64
    %v3643 = vpop.permute.xlu0 %3642
    %3644 = vrot.lane.b32.xlu0 %v3474, 64
    %v3645 = vpop.permute.xlu0 %3644
    %3646 = vrot.lane.b32.xlu0 %v3475, 64
    %v3647 = vpop.permute.xlu0 %3646
    %3648 = vrot.lane.b32.xlu0 %v3476, 64
    %v3649 = vpop.permute.xlu0 %3648
    %3650 = vrot.lane.b32.xlu0 %v3477, 64
    %v3651 = vpop.permute.xlu0 %3650
    %3652 = vrot.lane.b32.xlu0 %v3478, 64
    %v3653 = vpop.permute.xlu0 %3652
    %3654 = vrot.lane.b32.xlu0 %v3479, 64
    %v3655 = vpop.permute.xlu0 %3654
    %3706 = vrot.lane.b32.xlu0 %v3480, 96
    %v3707 = vpop.permute.xlu0 %3706
    %3708 = vrot.lane.b32.xlu0 %v3481, 96
    %v3709 = vpop.permute.xlu0 %3708
    %3710 = vrot.lane.b32.xlu0 %v3482, 96
    %v3711 = vpop.permute.xlu0 %3710
    %3712 = vrot.lane.b32.xlu0 %v3483, 96
    %v3713 = vpop.permute.xlu0 %3712
    %3714 = vrot.lane.b32.xlu0 %v3484, 96
    %v3715 = vpop.permute.xlu0 %3714
    %3716 = vrot.lane.b32.xlu0 %v3485, 96
    %v3717 = vpop.permute.xlu0 %3716
    %3718 = vrot.lane.b32.xlu0 %v3486, 96
    %v3719 = vpop.permute.xlu0 %3718
    %3720 = vrot.lane.b32.xlu0 %v3487, 96
    %v3721 = vpop.permute.xlu0 %3720
    %3722 = vrot.lane.b32.xlu0 %v3488, 96
    %v3723 = vpop.permute.xlu0 %3722
    %3724 = vrot.lane.b32.xlu0 %v3489, 96
    %v3725 = vpop.permute.xlu0 %3724
    %3726 = vrot.lane.b32.xlu0 %v3490, 96
    %v3727 = vpop.permute.xlu0 %3726
    %3728 = vrot.lane.b32.xlu0 %v3491, 96
    %v3729 = vpop.permute.xlu0 %3728
    %3730 = vrot.lane.b32.xlu0 %v3492, 96
    %v3731 = vpop.permute.xlu0 %3730
    %3732 = vrot.lane.b32.xlu0 %v3493, 96
    %v3733 = vpop.permute.xlu0 %3732
    %3734 = vrot.lane.b32.xlu0 %v3494, 96
    %v3735 = vpop.permute.xlu0 %3734
    %3736 = vrot.lane.b32.xlu0 %v3495, 96
    %v3737 = vpop.permute.xlu0 %3736
    %3738 = vrot.lane.b32.xlu0 %v3496, 96
    %v3739 = vpop.permute.xlu0 %3738
    %3740 = vrot.lane.b32.xlu0 %v3497, 96
    %v3741 = vpop.permute.xlu0 %3740
    %3742 = vrot.lane.b32.xlu0 %v3498, 96
    %v3743 = vpop.permute.xlu0 %3742
    %3744 = vrot.lane.b32.xlu0 %v3499, 96
    %v3745 = vpop.permute.xlu0 %3744
    %3746 = vrot.lane.b32.xlu0 %v3500, 96
    %v3747 = vpop.permute.xlu0 %3746
    %3748 = vrot.lane.b32.xlu0 %v3501, 96
    %v3749 = vpop.permute.xlu0 %3748
    %3750 = vrot.lane.b32.xlu0 %v3502, 96
    %v3751 = vpop.permute.xlu0 %3750
    %3752 = vrot.lane.b32.xlu0 %v3503, 96
    %v3753 = vpop.permute.xlu0 %3752
    %3754 = vrot.lane.b32.xlu0 %v3504, 96
    %v3755 = vpop.permute.xlu0 %3754
    %v3781 = vsel %vm109, %v3429, %v3531
    %v3782 = vsel %vm109, %v3430, %v3533
    %v3783 = vsel %vm109, %v3431, %v3535
    %v3784 = vsel %vm109, %v3432, %v3537
    %v3785 = vsel %vm109, %v3433, %v3539
    %v3786 = vsel %vm109, %v3434, %v3541
    %v3787 = vsel %vm109, %v3435, %v3543
    %v3788 = vsel %vm109, %v3436, %v3545
    %v3789 = vsel %vm109, %v3437, %v3547
    %v3790 = vsel %vm109, %v3438, %v3549
    %v3791 = vsel %vm109, %v3439, %v3551
    %v3792 = vsel %vm109, %v3440, %v3553
    %v3793 = vsel %vm109, %v3441, %v3555
    %v3794 = vsel %vm109, %v3442, %v3557
    %v3795 = vsel %vm109, %v3443, %v3559
    %v3796 = vsel %vm109, %v3444, %v3561
    %v3797 = vsel %vm109, %v3445, %v3563
    %v3798 = vsel %vm109, %v3446, %v3565
    %v3799 = vsel %vm109, %v3447, %v3567
    %v3800 = vsel %vm109, %v3448, %v3569
    %v3801 = vsel %vm109, %v3449, %v3571
    %v3802 = vsel %vm109, %v3450, %v3573
    %v3803 = vsel %vm109, %v3451, %v3575
    %v3804 = vsel %vm109, %v3452, %v3577
    %v3805 = vsel %vm109, %v3453, %v3579
    %v3806 = vsel %vm1156, %v3781, %v3607
    %v3807 = vsel %vm1156, %v3782, %v3609
    %v3808 = vsel %vm1156, %v3783, %v3611
    %v3809 = vsel %vm1156, %v3784, %v3613
    %v3810 = vsel %vm1156, %v3785, %v3615
    %v3811 = vsel %vm1156, %v3786, %v3617
    %v3812 = vsel %vm1156, %v3787, %v3619
    %v3813 = vsel %vm1156, %v3788, %v3621
    %v3814 = vsel %vm1156, %v3789, %v3623
    %v3815 = vsel %vm1156, %v3790, %v3625
    %v3816 = vsel %vm1156, %v3791, %v3627
    %v3817 = vsel %vm1156, %v3792, %v3629
    %v3818 = vsel %vm1156, %v3793, %v3631
    %v3819 = vsel %vm1156, %v3794, %v3633
    %v3820 = vsel %vm1156, %v3795, %v3635
    %v3821 = vsel %vm1156, %v3796, %v3637
    %v3822 = vsel %vm1156, %v3797, %v3639
    %v3823 = vsel %vm1156, %v3798, %v3641
    %v3824 = vsel %vm1156, %v3799, %v3643
    %v3825 = vsel %vm1156, %v3800, %v3645
    %v3826 = vsel %vm1156, %v3801, %v3647
    %v3827 = vsel %vm1156, %v3802, %v3649
    %v3828 = vsel %vm1156, %v3803, %v3651
    %v3829 = vsel %vm1156, %v3804, %v3653
    %v3830 = vsel %vm1156, %v3805, %v3655
    %v3831 = vsel %vm1182, %v3806, %v3707
    %v3832 = vsel %vm1182, %v3807, %v3709
    %v3833 = vsel %vm1182, %v3808, %v3711
    %v3834 = vsel %vm1182, %v3809, %v3713
    %v3835 = vsel %vm1182, %v3810, %v3715
    %v3836 = vsel %vm1182, %v3811, %v3717
    %v3837 = vsel %vm1182, %v3812, %v3719
    %v3838 = vsel %vm1182, %v3813, %v3721
    %v3839 = vsel %vm1182, %v3814, %v3723
    %v3840 = vsel %vm1182, %v3815, %v3725
    %v3841 = vsel %vm1182, %v3816, %v3727
    %v3842 = vsel %vm1182, %v3817, %v3729
    %v3843 = vsel %vm1182, %v3818, %v3731
    %v3844 = vsel %vm1182, %v3819, %v3733
    %v3845 = vsel %vm1182, %v3820, %v3735
    %v3846 = vsel %vm1182, %v3821, %v3737
    %v3847 = vsel %vm1182, %v3822, %v3739
    %v3848 = vsel %vm1182, %v3823, %v3741
    %v3849 = vsel %vm1182, %v3824, %v3743
    %v3850 = vsel %vm1182, %v3825, %v3745
    %v3851 = vsel %vm1182, %v3826, %v3747
    %v3852 = vsel %vm1182, %v3827, %v3749
    %v3853 = vsel %vm1182, %v3828, %v3751
    %v3854 = vsel %vm1182, %v3829, %v3753
    %v3855 = vsel %vm1182, %v3830, %v3755
    %v3856 = vpack.c.bf16 %v3832, %v3831
    %v3857 = vpack.c.bf16 %v3834, %v3833
    %v3858 = vpack.c.bf16 %v3836, %v3835
    %v3859 = vpack.c.bf16 %v3838, %v3837
    %v3860 = vpack.c.bf16 %v3840, %v3839
    %v3861 = vpack.c.bf16 %v3842, %v3841
    %v3862 = vpack.c.bf16 %v3844, %v3843
    %v3863 = vpack.c.bf16 %v3846, %v3845
    %v3864 = vpack.c.bf16 %v3848, %v3847
    %v3865 = vpack.c.bf16 %v3850, %v3849
    %v3866 = vpack.c.bf16 %v3852, %v3851
    %v3867 = vpack.c.bf16 %v3854, %v3853
    %v3868 = vpack.c.bf16 %v3855, %v3855
    %v3882 = vunpack.c.l.b16 %v3856
    %v3883 = vunpack.c.h.b16 %v3856
    %v3884 = vunpack.c.l.b16 %v3857
    %v3885 = vunpack.c.h.b16 %v3857
    %v3886 = vunpack.c.l.b16 %v3858
    %v3887 = vunpack.c.h.b16 %v3858
    %v3888 = vunpack.c.l.b16 %v3859
    %v3889 = vunpack.c.h.b16 %v3859
    %v3890 = vunpack.c.l.b16 %v3860
    %v3891 = vunpack.c.h.b16 %v3860
    %v3892 = vunpack.c.l.b16 %v3861
    %v3893 = vunpack.c.h.b16 %v3861
    %v3894 = vunpack.c.l.b16 %v3862
    %v3895 = vunpack.c.h.b16 %v3862
    %v3896 = vunpack.c.l.b16 %v3863
    %v3897 = vunpack.c.h.b16 %v3863
    %v3898 = vunpack.c.l.b16 %v3864
    %v3899 = vunpack.c.h.b16 %v3864
    %v3900 = vunpack.c.l.b16 %v3865
    %v3901 = vunpack.c.h.b16 %v3865
    %v3902 = vunpack.c.l.b16 %v3866
    %v3903 = vunpack.c.h.b16 %v3866
    %v3904 = vunpack.c.l.b16 %v3867
    %v3905 = vunpack.c.h.b16 %v3867
    %v3906 = vunpack.c.l.b16 %v3868
    %v3907 = vpack.c.b16 %v3882, %v3882
    %v3908 = vpack.c.b16 %v3883, %v3883
    %v3909 = vpack.c.b16 %v3884, %v3884
    %v3910 = vpack.c.b16 %v3885, %v3885
    %v3911 = vpack.c.b16 %v3886, %v3886
    %v3912 = vpack.c.b16 %v3887, %v3887
    %v3913 = vpack.c.b16 %v3888, %v3888
    %v3914 = vpack.c.b16 %v3889, %v3889
    %v3915 = vpack.c.b16 %v3890, %v3890
    %v3916 = vpack.c.b16 %v3891, %v3891
    %v3917 = vpack.c.b16 %v3892, %v3892
    %v3918 = vpack.c.b16 %v3893, %v3893
    %v3919 = vpack.c.b16 %v3894, %v3894
    %v3920 = vpack.c.b16 %v3895, %v3895
    %v3921 = vpack.c.b16 %v3896, %v3896
    %v3922 = vpack.c.b16 %v3897, %v3897
    %v3923 = vpack.c.b16 %v3898, %v3898
    %v3924 = vpack.c.b16 %v3899, %v3899
    %v3925 = vpack.c.b16 %v3900, %v3900
    %v3926 = vpack.c.b16 %v3901, %v3901
    %v3927 = vpack.c.b16 %v3902, %v3902
    %v3928 = vpack.c.b16 %v3903, %v3903
    %v3929 = vpack.c.b16 %v3904, %v3904
    %v3930 = vpack.c.b16 %v3905, %v3905
    %v3931 = vpack.c.b16 %v3906, %v3906
    %3957 = vst [vmem:[#allocation3 + $0x4] sm:$0xf] %v3907
    %3958 = vst [vmem:[#allocation3 + $0x10] sm:$0xf] %v3908
    %3959 = vst [vmem:[#allocation3 + $0x1c] sm:$0xf] %v3909
    %3960 = vst [vmem:[#allocation3 + $0x28] sm:$0xf] %v3910
    %3961 = vst [vmem:[#allocation3 + $0x34] sm:$0xf] %v3911
    %3962 = vst [vmem:[#allocation3 + $0x40] sm:$0xf] %v3912
    %3963 = vst [vmem:[#allocation3 + $0x4c] sm:$0xf] %v3913
    %3964 = vst [vmem:[#allocation3 + $0x58] sm:$0xf] %v3914
    %3965 = vst [vmem:[#allocation3 + $0x64] sm:$0xf] %v3915
    %3966 = vst [vmem:[#allocation3 + $0x70] sm:$0xf] %v3916
    %3967 = vst [vmem:[#allocation3 + $0x7c] sm:$0xf] %v3917
    %3968 = vst [vmem:[#allocation3 + $0x88] sm:$0xf] %v3918
    %3969 = vst [vmem:[#allocation3 + $0x94] sm:$0xf] %v3919
    %3970 = vst [vmem:[#allocation3 + $0xa0] sm:$0xf] %v3920
    %3971 = vst [vmem:[#allocation3 + $0xac] sm:$0xf] %v3921
    %3972 = vst [vmem:[#allocation3 + $0xb8] sm:$0xf] %v3922
    %3973 = vst [vmem:[#allocation3 + $0xc4] sm:$0xf] %v3923
    %3974 = vst [vmem:[#allocation3 + $0xd0] sm:$0xf] %v3924
    %3975 = vst [vmem:[#allocation3 + $0xdc] sm:$0xf] %v3925
    %3976 = vst [vmem:[#allocation3 + $0xe8] sm:$0xf] %v3926
    %3977 = vst [vmem:[#allocation3 + $0xf4] sm:$0xf] %v3927
    %3978 = vst [vmem:[#allocation3 + $0x100] sm:$0xf] %v3928
    %3979 = vst [vmem:[#allocation3 + $0x10c] sm:$0xf] %v3929
    %3980 = vst [vmem:[#allocation3 + $0x118] sm:$0xf] %v3930
    %3981 = vst [vmem:[#allocation3 + $0x124] sm:$0xf] %v3931
    %v3982 = vld [vmem:[#allocation2 + $0x1b] sm:$0xff]
    %v3983 = vld [vmem:[#allocation2 + $0x23] sm:$0xff]
    %v3984 = vld [vmem:[#allocation2 + $0x2b] sm:$0xff]
    %v3985 = vld [vmem:[#allocation2 + $0x33] sm:$0xff]
    %v3986 = vld [vmem:[#allocation2 + $0x3b] sm:$0xff]
    %v3987 = vld [vmem:[#allocation2 + $0x43] sm:$0xff]
    %v3988 = vld [vmem:[#allocation2 + $0x4b] sm:$0xff]
    %v3989 = vld [vmem:[#allocation2 + $0x53] sm:$0xff]
    %v3990 = vld [vmem:[#allocation2 + $0x5b] sm:$0xff]
    %v3991 = vld [vmem:[#allocation2 + $0x63] sm:$0xff]
    %v3992 = vld [vmem:[#allocation2 + $0x6b] sm:$0xff]
    %v3993 = vld [vmem:[#allocation2 + $0x73] sm:$0xff]
    %v3994 = vld [vmem:[#allocation2 + $0x7b] sm:$0xff]
    %v3995 = vld [vmem:[#allocation2 + $0x83] sm:$0xff]
    %v3996 = vld [vmem:[#allocation2 + $0x8b] sm:$0xff]
    %v3997 = vld [vmem:[#allocation2 + $0x93] sm:$0xff]
    %v3998 = vld [vmem:[#allocation2 + $0x9b] sm:$0xff]
    %v3999 = vld [vmem:[#allocation2 + $0xa3] sm:$0xff]
    %v4000 = vld [vmem:[#allocation2 + $0xab] sm:$0xff]
    %v4001 = vld [vmem:[#allocation2 + $0xb3] sm:$0xff]
    %v4002 = vld [vmem:[#allocation2 + $0xbb] sm:$0xff]
    %v4003 = vld [vmem:[#allocation2 + $0xc3] sm:$0xff]
    %v4004 = vld [vmem:[#allocation2 + $0xcb] sm:$0xff]
    %v4005 = vld [vmem:[#allocation2 + $0xd3] sm:$0xff]
    %v4006 = vld [vmem:[#allocation2 + $0xdb] sm:$0xff]
    %v4007 = vpack.c.bf16 %v3983, %v3982
    %v4008 = vpack.c.bf16 %v3985, %v3984
    %v4009 = vpack.c.bf16 %v3987, %v3986
    %v4010 = vpack.c.bf16 %v3989, %v3988
    %v4011 = vpack.c.bf16 %v3991, %v3990
    %v4012 = vpack.c.bf16 %v3993, %v3992
    %v4013 = vpack.c.bf16 %v3995, %v3994
    %v4014 = vpack.c.bf16 %v3997, %v3996
    %v4015 = vpack.c.bf16 %v3999, %v3998
    %v4016 = vpack.c.bf16 %v4001, %v4000
    %v4017 = vpack.c.bf16 %v4003, %v4002
    %v4018 = vpack.c.bf16 %v4005, %v4004
    %v4019 = vpack.c.bf16 %v4006, %v4006
    %v4033 = vunpack.c.l.b16 %v4007
    %v4034 = vunpack.c.h.b16 %v4007
    %v4035 = vunpack.c.l.b16 %v4008
    %v4036 = vunpack.c.h.b16 %v4008
    %v4037 = vunpack.c.l.b16 %v4009
    %v4038 = vunpack.c.h.b16 %v4009
    %v4039 = vunpack.c.l.b16 %v4010
    %v4040 = vunpack.c.h.b16 %v4010
    %v4041 = vunpack.c.l.b16 %v4011
    %v4042 = vunpack.c.h.b16 %v4011
    %v4043 = vunpack.c.l.b16 %v4012
    %v4044 = vunpack.c.h.b16 %v4012
    %v4045 = vunpack.c.l.b16 %v4013
    %v4046 = vunpack.c.h.b16 %v4013
    %v4047 = vunpack.c.l.b16 %v4014
    %v4048 = vunpack.c.h.b16 %v4014
    %v4049 = vunpack.c.l.b16 %v4015
    %v4050 = vunpack.c.h.b16 %v4015
    %v4051 = vunpack.c.l.b16 %v4016
    %v4052 = vunpack.c.h.b16 %v4016
    %v4053 = vunpack.c.l.b16 %v4017
    %v4054 = vunpack.c.h.b16 %v4017
    %v4055 = vunpack.c.l.b16 %v4018
    %v4056 = vunpack.c.h.b16 %v4018
    %v4057 = vunpack.c.l.b16 %v4019
    %v4058 = vpack.c.b16 %v4033, %v4033
    %v4059 = vpack.c.b16 %v4034, %v4034
    %v4060 = vpack.c.b16 %v4035, %v4035
    %v4061 = vpack.c.b16 %v4036, %v4036
    %v4062 = vpack.c.b16 %v4037, %v4037
    %v4063 = vpack.c.b16 %v4038, %v4038
    %v4064 = vpack.c.b16 %v4039, %v4039
    %v4065 = vpack.c.b16 %v4040, %v4040
    %v4066 = vpack.c.b16 %v4041, %v4041
    %v4067 = vpack.c.b16 %v4042, %v4042
    %v4068 = vpack.c.b16 %v4043, %v4043
    %v4069 = vpack.c.b16 %v4044, %v4044
    %v4070 = vpack.c.b16 %v4045, %v4045
    %v4071 = vpack.c.b16 %v4046, %v4046
    %v4072 = vpack.c.b16 %v4047, %v4047
    %v4073 = vpack.c.b16 %v4048, %v4048
    %v4074 = vpack.c.b16 %v4049, %v4049
    %v4075 = vpack.c.b16 %v4050, %v4050
    %v4076 = vpack.c.b16 %v4051, %v4051
    %v4077 = vpack.c.b16 %v4052, %v4052
    %v4078 = vpack.c.b16 %v4053, %v4053
    %v4079 = vpack.c.b16 %v4054, %v4054
    %v4080 = vpack.c.b16 %v4055, %v4055
    %v4081 = vpack.c.b16 %v4056, %v4056
    %v4082 = vpack.c.b16 %v4057, %v4057
    %4108 = vst.msk [vmem:[#allocation3 + $0x8] sm:$0xf] %vm2013, %v4058
    %4109 = vst.msk [vmem:[#allocation3 + $0x14] sm:$0xf] %vm2013, %v4059
    %4110 = vst.msk [vmem:[#allocation3 + $0x20] sm:$0xf] %vm2013, %v4060
    %4111 = vst.msk [vmem:[#allocation3 + $0x2c] sm:$0xf] %vm2013, %v4061
    %4112 = vst.msk [vmem:[#allocation3 + $0x38] sm:$0xf] %vm2013, %v4062
    %4113 = vst.msk [vmem:[#allocation3 + $0x44] sm:$0xf] %vm2013, %v4063
    %4114 = vst.msk [vmem:[#allocation3 + $0x50] sm:$0xf] %vm2013, %v4064
    %4115 = vst.msk [vmem:[#allocation3 + $0x5c] sm:$0xf] %vm2013, %v4065
    %4116 = vst.msk [vmem:[#allocation3 + $0x68] sm:$0xf] %vm2013, %v4066
    %4117 = vst.msk [vmem:[#allocation3 + $0x74] sm:$0xf] %vm2013, %v4067
    %4118 = vst.msk [vmem:[#allocation3 + $0x80] sm:$0xf] %vm2013, %v4068
    %4119 = vst.msk [vmem:[#allocation3 + $0x8c] sm:$0xf] %vm2013, %v4069
    %4120 = vst.msk [vmem:[#allocation3 + $0x98] sm:$0xf] %vm2013, %v4070
    %4121 = vst.msk [vmem:[#allocation3 + $0xa4] sm:$0xf] %vm2013, %v4071
    %4122 = vst.msk [vmem:[#allocation3 + $0xb0] sm:$0xf] %vm2013, %v4072
    %4123 = vst.msk [vmem:[#allocation3 + $0xbc] sm:$0xf] %vm2013, %v4073
    %4124 = vst.msk [vmem:[#allocation3 + $0xc8] sm:$0xf] %vm2013, %v4074
    %4125 = vst.msk [vmem:[#allocation3 + $0xd4] sm:$0xf] %vm2013, %v4075
    %4126 = vst.msk [vmem:[#allocation3 + $0xe0] sm:$0xf] %vm2013, %v4076
    %4127 = vst.msk [vmem:[#allocation3 + $0xec] sm:$0xf] %vm2013, %v4077
    %4128 = vst.msk [vmem:[#allocation3 + $0xf8] sm:$0xf] %vm2013, %v4078
    %4129 = vst.msk [vmem:[#allocation3 + $0x104] sm:$0xf] %vm2013, %v4079
    %4130 = vst.msk [vmem:[#allocation3 + $0x110] sm:$0xf] %vm2013, %v4080
    %4131 = vst.msk [vmem:[#allocation3 + $0x11c] sm:$0xf] %vm2013, %v4081
    %4132 = vst.msk [vmem:[#allocation3 + $0x128] sm:$0xf] %vm2013, %v4082
    %v4133 = vld [vmem:[#allocation3] sm:$0xff]
    %v4134 = vld [vmem:[#allocation3 + $0x8] sm:$0xf]
    %v4135 = vld [vmem:[#allocation3 + $0xc] sm:$0xff]
    %v4136 = vld [vmem:[#allocation3 + $0x14] sm:$0xf]
    %v4137 = vld [vmem:[#allocation3 + $0x18] sm:$0xff]
    %v4138 = vld [vmem:[#allocation3 + $0x20] sm:$0xf]
    %v4139 = vld [vmem:[#allocation3 + $0x24] sm:$0xff]
    %v4140 = vld [vmem:[#allocation3 + $0x2c] sm:$0xf]
    %v4141 = vld [vmem:[#allocation3 + $0x30] sm:$0xff]
    %v4142 = vld [vmem:[#allocation3 + $0x38] sm:$0xf]
    %v4143 = vld [vmem:[#allocation3 + $0x3c] sm:$0xff]
    %v4144 = vld [vmem:[#allocation3 + $0x44] sm:$0xf]
    %v4145 = vld [vmem:[#allocation3 + $0x48] sm:$0xff]
    %v4146 = vld [vmem:[#allocation3 + $0x50] sm:$0xf]
    %v4147 = vld [vmem:[#allocation3 + $0x54] sm:$0xff]
    %v4148 = vld [vmem:[#allocation3 + $0x5c] sm:$0xf]
    %v4149 = vld [vmem:[#allocation3 + $0x60] sm:$0xff]
    %v4150 = vld [vmem:[#allocation3 + $0x68] sm:$0xf]
    %v4151 = vld [vmem:[#allocation3 + $0x6c] sm:$0xff]
    %v4152 = vld [vmem:[#allocation3 + $0x74] sm:$0xf]
    %v4153 = vld [vmem:[#allocation3 + $0x78] sm:$0xff]
    %v4154 = vld [vmem:[#allocation3 + $0x80] sm:$0xf]
    %v4155 = vld [vmem:[#allocation3 + $0x84] sm:$0xff]
    %v4156 = vld [vmem:[#allocation3 + $0x8c] sm:$0xf]
    %v4157 = vld [vmem:[#allocation3 + $0x90] sm:$0xff]
    %v4158 = vld [vmem:[#allocation3 + $0x98] sm:$0xf]
    %v4159 = vld [vmem:[#allocation3 + $0x9c] sm:$0xff]
    %v4160 = vld [vmem:[#allocation3 + $0xa4] sm:$0xf]
    %v4161 = vld [vmem:[#allocation3 + $0xa8] sm:$0xff]
    %v4162 = vld [vmem:[#allocation3 + $0xb0] sm:$0xf]
    %v4163 = vld [vmem:[#allocation3 + $0xb4] sm:$0xff]
    %v4164 = vld [vmem:[#allocation3 + $0xbc] sm:$0xf]
    %v4165 = vld [vmem:[#allocation3 + $0xc0] sm:$0xff]
    %v4166 = vld [vmem:[#allocation3 + $0xc8] sm:$0xf]
    %v4167 = vld [vmem:[#allocation3 + $0xcc] sm:$0xff]
    %v4168 = vld [vmem:[#allocation3 + $0xd4] sm:$0xf]
    %v4169 = vld [vmem:[#allocation3 + $0xd8] sm:$0xff]
    %v4170 = vld [vmem:[#allocation3 + $0xe0] sm:$0xf]
    %v4171 = vld [vmem:[#allocation3 + $0xe4] sm:$0xff]
    %v4172 = vld [vmem:[#allocation3 + $0xec] sm:$0xf]
    %v4173 = vld [vmem:[#allocation3 + $0xf0] sm:$0xff]
    %v4174 = vld [vmem:[#allocation3 + $0xf8] sm:$0xf]
    %v4175 = vld [vmem:[#allocation3 + $0xfc] sm:$0xff]
    %v4176 = vld [vmem:[#allocation3 + $0x104] sm:$0xf]
    %v4177 = vld [vmem:[#allocation3 + $0x108] sm:$0xff]
    %v4178 = vld [vmem:[#allocation3 + $0x110] sm:$0xf]
    %v4179 = vld [vmem:[#allocation3 + $0x114] sm:$0xff]
    %v4180 = vld [vmem:[#allocation3 + $0x11c] sm:$0xf]
    %v4181 = vld [vmem:[#allocation3 + $0x120] sm:$0xff]
    %v4182 = vld [vmem:[#allocation3 + $0x128] sm:$0xf]
    %v4233 = vunpack.c.l.b16 %v4133
    %v4234 = vunpack.c.h.b16 %v4133
    %v4235 = vunpack.c.l.b16 %v4134
    %v4236 = vunpack.c.l.b16 %v4135
    %v4237 = vunpack.c.h.b16 %v4135
    %v4238 = vunpack.c.l.b16 %v4136
    %v4239 = vunpack.c.l.b16 %v4137
    %v4240 = vunpack.c.h.b16 %v4137
    %v4241 = vunpack.c.l.b16 %v4138
    %v4242 = vunpack.c.l.b16 %v4139
    %v4243 = vunpack.c.h.b16 %v4139
    %v4244 = vunpack.c.l.b16 %v4140
    %v4245 = vunpack.c.l.b16 %v4141
    %v4246 = vunpack.c.h.b16 %v4141
    %v4247 = vunpack.c.l.b16 %v4142
    %v4248 = vunpack.c.l.b16 %v4143
    %v4249 = vunpack.c.h.b16 %v4143
    %v4250 = vunpack.c.l.b16 %v4144
    %v4251 = vunpack.c.l.b16 %v4145
    %v4252 = vunpack.c.h.b16 %v4145
    %v4253 = vunpack.c.l.b16 %v4146
    %v4254 = vunpack.c.l.b16 %v4147
    %v4255 = vunpack.c.h.b16 %v4147
    %v4256 = vunpack.c.l.b16 %v4148
    %v4257 = vunpack.c.l.b16 %v4149
    %v4258 = vunpack.c.h.b16 %v4149
    %v4259 = vunpack.c.l.b16 %v4150
    %v4260 = vunpack.c.l.b16 %v4151
    %v4261 = vunpack.c.h.b16 %v4151
    %v4262 = vunpack.c.l.b16 %v4152
    %v4263 = vunpack.c.l.b16 %v4153
    %v4264 = vunpack.c.h.b16 %v4153
    %v4265 = vunpack.c.l.b16 %v4154
    %v4266 = vunpack.c.l.b16 %v4155
    %v4267 = vunpack.c.h.b16 %v4155
    %v4268 = vunpack.c.l.b16 %v4156
    %v4269 = vunpack.c.l.b16 %v4157
    %v4270 = vunpack.c.h.b16 %v4157
    %v4271 = vunpack.c.l.b16 %v4158
    %v4272 = vunpack.c.l.b16 %v4159
    %v4273 = vunpack.c.h.b16 %v4159
    %v4274 = vunpack.c.l.b16 %v4160
    %v4275 = vunpack.c.l.b16 %v4161
    %v4276 = vunpack.c.h.b16 %v4161
    %v4277 = vunpack.c.l.b16 %v4162
    %v4278 = vunpack.c.l.b16 %v4163
    %v4279 = vunpack.c.h.b16 %v4163
    %v4280 = vunpack.c.l.b16 %v4164
    %v4281 = vunpack.c.l.b16 %v4165
    %v4282 = vunpack.c.h.b16 %v4165
    %v4283 = vunpack.c.l.b16 %v4166
    %v4284 = vunpack.c.l.b16 %v4167
    %v4285 = vunpack.c.h.b16 %v4167
    %v4286 = vunpack.c.l.b16 %v4168
    %v4287 = vunpack.c.l.b16 %v4169
    %v4288 = vunpack.c.h.b16 %v4169
    %v4289 = vunpack.c.l.b16 %v4170
    %v4290 = vunpack.c.l.b16 %v4171
    %v4291 = vunpack.c.h.b16 %v4171
    %v4292 = vunpack.c.l.b16 %v4172
    %v4293 = vunpack.c.l.b16 %v4173
    %v4294 = vunpack.c.h.b16 %v4173
    %v4295 = vunpack.c.l.b16 %v4174
    %v4296 = vunpack.c.l.b16 %v4175
    %v4297 = vunpack.c.h.b16 %v4175
    %v4298 = vunpack.c.l.b16 %v4176
    %v4299 = vunpack.c.l.b16 %v4177
    %v4300 = vunpack.c.h.b16 %v4177
    %v4301 = vunpack.c.l.b16 %v4178
    %v4302 = vunpack.c.l.b16 %v4179
    %v4303 = vunpack.c.h.b16 %v4179
    %v4304 = vunpack.c.l.b16 %v4180
    %v4305 = vunpack.c.l.b16 %v4181
    %v4306 = vunpack.c.h.b16 %v4181
    %v4307 = vunpack.c.l.b16 %v4182
    %v4308 = vpack.c.b16 %v4236, %v4233
    %v4309 = vpack.c.b16 %v4237, %v4234
    %v4310 = vpack.c.b16 %v4238, %v4235
    %v4311 = vpack.c.b16 %v4242, %v4239
    %v4312 = vpack.c.b16 %v4243, %v4240
    %v4313 = vpack.c.b16 %v4244, %v4241
    %v4314 = vpack.c.b16 %v4248, %v4245
    %v4315 = vpack.c.b16 %v4249, %v4246
    %v4316 = vpack.c.b16 %v4250, %v4247
    %v4317 = vpack.c.b16 %v4254, %v4251
    %v4318 = vpack.c.b16 %v4255, %v4252
    %v4319 = vpack.c.b16 %v4256, %v4253
    %v4320 = vpack.c.b16 %v4260, %v4257
    %v4321 = vpack.c.b16 %v4261, %v4258
    %v4322 = vpack.c.b16 %v4262, %v4259
    %v4323 = vpack.c.b16 %v4266, %v4263
    %v4324 = vpack.c.b16 %v4267, %v4264
    %v4325 = vpack.c.b16 %v4268, %v4265
    %v4326 = vpack.c.b16 %v4272, %v4269
    %v4327 = vpack.c.b16 %v4273, %v4270
    %v4328 = vpack.c.b16 %v4274, %v4271
    %v4329 = vpack.c.b16 %v4278, %v4275
    %v4330 = vpack.c.b16 %v4279, %v4276
    %v4331 = vpack.c.b16 %v4280, %v4277
    %v4332 = vpack.c.b16 %v4284, %v4281
    %v4333 = vpack.c.b16 %v4285, %v4282
    %v4334 = vpack.c.b16 %v4286, %v4283
    %v4335 = vpack.c.b16 %v4290, %v4287
    %v4336 = vpack.c.b16 %v4291, %v4288
    %v4337 = vpack.c.b16 %v4292, %v4289
    %v4338 = vpack.c.b16 %v4296, %v4293
    %v4339 = vpack.c.b16 %v4297, %v4294
    %v4340 = vpack.c.b16 %v4298, %v4295
    %v4341 = vpack.c.b16 %v4302, %v4299
    %v4342 = vpack.c.b16 %v4303, %v4300
    %v4343 = vpack.c.b16 %v4304, %v4301
    %v4344 = vpack.c.b16 %v4305, %v4305
    %v4345 = vpack.c.b16 %v4306, %v4306
    %v4346 = vpack.c.b16 %v4307, %v4307
    %v4409 = vunpack.c.l.b16 %v2811
    %v4410 = vunpack.c.l.b16 %v2812
    %v4411 = vunpack.c.l.b16 %v2813
    %v4412 = vunpack.c.l.b16 %v2814
    %v4413 = vunpack.c.l.b16 %v2815
    %v4414 = vunpack.c.l.b16 %v2816
    %v4415 = vunpack.c.l.b16 %v2817
    %v4416 = vunpack.c.l.b16 %v2818
    %v4417 = vunpack.c.l.b16 %v2819
    %v4418 = vunpack.c.l.b16 %v2820
    %v4419 = vunpack.c.l.b16 %v2821
    %v4420 = vunpack.c.l.b16 %v2822
    %v4421 = vunpack.c.l.b16 %v2823
    %v4422 = vunpack.c.l.b16 %v2824
    %v4423 = vunpack.c.l.b16 %v2825
    %v4424 = vunpack.c.l.b16 %v2826
    %v4425 = vunpack.c.l.b16 %v2827
    %v4426 = vunpack.c.l.b16 %v2828
    %v4427 = vunpack.c.l.b16 %v2829
    %v4428 = vunpack.c.l.b16 %v2830
    %v4429 = vunpack.c.l.b16 %v2831
    %v4430 = vunpack.c.l.b16 %v2832
    %v4431 = vunpack.c.l.b16 %v2833
    %v4432 = vunpack.c.l.b16 %v2834
    %v4433 = vunpack.c.l.b16 %v2835
    %v4434 = vunpack.c.l.b16 %v2836
    %v4435 = vunpack.c.l.b16 %v2837
    %v4436 = vunpack.c.l.b16 %v2838
    %v4437 = vunpack.c.l.b16 %v2839
    %v4438 = vunpack.c.l.b16 %v2840
    %v4439 = vunpack.c.l.b16 %v2841
    %v4440 = vunpack.c.l.b16 %v2842
    %v4441 = vunpack.c.l.b16 %v2843
    %v4442 = vunpack.c.l.b16 %v2844
    %v4443 = vunpack.c.l.b16 %v2845
    %v4444 = vunpack.c.l.b16 %v2846
    %v4445 = vpack.c.b16 %v4410, %v4409
    %v4446 = vpack.c.b16 %v4412, %v4411
    %v4447 = vpack.c.b16 %v4414, %v4413
    %v4448 = vpack.c.b16 %v4416, %v4415
    %v4449 = vpack.c.b16 %v4418, %v4417
    %v4450 = vpack.c.b16 %v4420, %v4419
    %v4451 = vpack.c.b16 %v4422, %v4421
    %v4452 = vpack.c.b16 %v4424, %v4423
    %v4453 = vpack.c.b16 %v4426, %v4425
    %v4454 = vpack.c.b16 %v4428, %v4427
    %v4455 = vpack.c.b16 %v4430, %v4429
    %v4456 = vpack.c.b16 %v4432, %v4431
    %v4457 = vpack.c.b16 %v4434, %v4433
    %v4458 = vpack.c.b16 %v4436, %v4435
    %v4459 = vpack.c.b16 %v4438, %v4437
    %v4460 = vpack.c.b16 %v4440, %v4439
    %v4461 = vpack.c.b16 %v4442, %v4441
    %v4462 = vpack.c.b16 %v4444, %v4443
    %v4482 = vsel %vm109, %v4310, 0
    %v4485 = vsel %vm109, %v4313, 0
    %v4488 = vsel %vm109, %v4316, 0
    %v4491 = vsel %vm109, %v4319, 0
    %v4494 = vsel %vm109, %v4322, 0
    %v4497 = vsel %vm109, %v4325, 0
    %v4500 = vsel %vm109, %v4328, 0
    %v4503 = vsel %vm109, %v4331, 0
    %v4506 = vsel %vm109, %v4334, 0
    %v4509 = vsel %vm109, %v4337, 0
    %v4512 = vsel %vm109, %v4340, 0
    %v4515 = vsel %vm109, %v4343, 0
    %v4518 = vsel %vm109, %v4346, 0
    %4520 = vmatprep.subr.bf16.mxu0 0
    %4521 = vmatpush1.bf16.msra.mxu0 %v4452
    %4522 = vmatprep.subr.bf16.mxu0 0
    %4523 = vmatpush1.bf16.msra.mxu0 %v4451
    %4524 = vmatprep.subr.bf16.mxu0 0
    %4525 = vmatpush1.bf16.msra.mxu0 %v4450
    %4526 = vmatprep.subr.bf16.mxu0 0
    %4527 = vmatpush1.bf16.msra.mxu0 %v4449
    %4528 = vmatprep.subr.bf16.mxu0 0
    %4529 = vmatpush1.bf16.msra.mxu0 %v4448
    %4530 = vmatprep.subr.bf16.mxu0 0
    %4531 = vmatpush1.bf16.msra.mxu0 %v4447
    %4532 = vmatprep.subr.bf16.mxu0 0
    %4533 = vmatpush1.bf16.msra.mxu0 %v4446
    %4534 = vmatprep.subr.bf16.mxu0 0
    %4535 = vmatpush1.bf16.msra.mxu0 %v4445
    %4536 = vmatprep.subr.bf16.mxu0 0
    %4537 = vmatpush2.bf16.msra.mxu0 %v4460
    %4538 = vmatprep.subr.bf16.mxu0 0
    %4539 = vmatpush2.bf16.msra.mxu0 %v4459
    %4540 = vmatprep.subr.bf16.mxu0 0
    %4541 = vmatpush2.bf16.msra.mxu0 %v4458
    %4542 = vmatprep.subr.bf16.mxu0 0
    %4543 = vmatpush2.bf16.msra.mxu0 %v4457
    %4544 = vmatprep.subr.bf16.mxu0 0
    %4545 = vmatpush2.bf16.msra.mxu0 %v4456
    %4546 = vmatprep.subr.bf16.mxu0 0
    %4547 = vmatpush2.bf16.msra.mxu0 %v4455
    %4548 = vmatprep.subr.bf16.mxu0 0
    %4549 = vmatpush2.bf16.msra.mxu0 %v4454
    %4550 = vmatprep.subr.bf16.mxu0 0
    %4551 = vmatpush2.bf16.msra.mxu0 %v4453
    %4552 = vmatprep.mubr.bf16.mxu0 %v4309
    %4553 = vmatmul.mubr.bf16.gmra.mxu0 %v4308
    %v4554 = vpop.f32.mrf.mxu0
    %v4555 = vadd.f32 0.0, %v4554
    %v4556 = vpop.f32.mrf.mxu0
    %v4557 = vpop.f32.mrf.mxu0
    %v4558 = vadd.f32 0.0, %v4557
    %v4559 = vpop.f32.mrf.mxu0
    %4560 = vmatprep.mubr.bf16.mxu0 %v4312
    %4561 = vmatmul.mubr.bf16.gmra.mxu0 %v4311
    %v4562 = vpop.f32.mrf.mxu0
    %v4563 = vadd.f32 0.0, %v4562
    %v4564 = vpop.f32.mrf.mxu0
    %v4565 = vpop.f32.mrf.mxu0
    %v4566 = vadd.f32 0.0, %v4565
    %v4567 = vpop.f32.mrf.mxu0
    %4568 = vmatprep.mubr.bf16.mxu0 %v4315
    %4569 = vmatmul.mubr.bf16.gmra.mxu0 %v4314
    %v4570 = vpop.f32.mrf.mxu0
    %v4571 = vadd.f32 0.0, %v4570
    %v4572 = vpop.f32.mrf.mxu0
    %v4573 = vpop.f32.mrf.mxu0
    %v4574 = vadd.f32 0.0, %v4573
    %v4575 = vpop.f32.mrf.mxu0
    %4576 = vmatprep.mubr.bf16.mxu0 %v4318
    %4577 = vmatmul.mubr.bf16.gmra.mxu0 %v4317
    %v4578 = vpop.f32.mrf.mxu0
    %v4579 = vadd.f32 0.0, %v4578
    %v4580 = vpop.f32.mrf.mxu0
    %v4581 = vpop.f32.mrf.mxu0
    %v4582 = vadd.f32 0.0, %v4581
    %v4583 = vpop.f32.mrf.mxu0
    %4584 = vmatprep.mubr.bf16.mxu0 %v4321
    %4585 = vmatmul.mubr.bf16.gmra.mxu0 %v4320
    %v4586 = vpop.f32.mrf.mxu0
    %v4587 = vadd.f32 0.0, %v4586
    %v4588 = vpop.f32.mrf.mxu0
    %v4589 = vpop.f32.mrf.mxu0
    %v4590 = vadd.f32 0.0, %v4589
    %v4591 = vpop.f32.mrf.mxu0
    %4592 = vmatprep.mubr.bf16.mxu0 %v4324
    %4593 = vmatmul.mubr.bf16.gmra.mxu0 %v4323
    %v4594 = vpop.f32.mrf.mxu0
    %v4595 = vadd.f32 0.0, %v4594
    %v4596 = vpop.f32.mrf.mxu0
    %v4597 = vpop.f32.mrf.mxu0
    %v4598 = vadd.f32 0.0, %v4597
    %v4599 = vpop.f32.mrf.mxu0
    %4600 = vmatprep.mubr.bf16.mxu0 %v4327
    %4601 = vmatmul.mubr.bf16.gmra.mxu0 %v4326
    %v4602 = vpop.f32.mrf.mxu0
    %v4603 = vadd.f32 0.0, %v4602
    %v4604 = vpop.f32.mrf.mxu0
    %v4605 = vpop.f32.mrf.mxu0
    %v4606 = vadd.f32 0.0, %v4605
    %v4607 = vpop.f32.mrf.mxu0
    %4608 = vmatprep.mubr.bf16.mxu0 %v4330
    %4609 = vmatmul.mubr.bf16.gmra.mxu0 %v4329
    %v4610 = vpop.f32.mrf.mxu0
    %v4611 = vadd.f32 0.0, %v4610
    %v4612 = vpop.f32.mrf.mxu0
    %v4613 = vpop.f32.mrf.mxu0
    %v4614 = vadd.f32 0.0, %v4613
    %v4615 = vpop.f32.mrf.mxu0
    %4616 = vmatprep.mubr.bf16.mxu0 %v4333
    %4617 = vmatmul.mubr.bf16.gmra.mxu0 %v4332
    %v4618 = vpop.f32.mrf.mxu0
    %v4619 = vadd.f32 0.0, %v4618
    %v4620 = vpop.f32.mrf.mxu0
    %v4621 = vpop.f32.mrf.mxu0
    %v4622 = vadd.f32 0.0, %v4621
    %v4623 = vpop.f32.mrf.mxu0
    %4624 = vmatprep.mubr.bf16.mxu0 %v4336
    %4625 = vmatmul.mubr.bf16.gmra.mxu0 %v4335
    %v4626 = vpop.f32.mrf.mxu0
    %v4627 = vadd.f32 0.0, %v4626
    %v4628 = vpop.f32.mrf.mxu0
    %v4629 = vpop.f32.mrf.mxu0
    %v4630 = vadd.f32 0.0, %v4629
    %v4631 = vpop.f32.mrf.mxu0
    %4632 = vmatprep.mubr.bf16.mxu0 %v4339
    %4633 = vmatmul.mubr.bf16.gmra.mxu0 %v4338
    %v4634 = vpop.f32.mrf.mxu0
    %v4635 = vadd.f32 0.0, %v4634
    %v4636 = vpop.f32.mrf.mxu0
    %v4637 = vpop.f32.mrf.mxu0
    %v4638 = vadd.f32 0.0, %v4637
    %v4639 = vpop.f32.mrf.mxu0
    %4640 = vmatprep.mubr.bf16.mxu0 %v4342
    %4641 = vmatmul.mubr.bf16.gmra.mxu0 %v4341
    %v4642 = vpop.f32.mrf.mxu0
    %v4643 = vadd.f32 0.0, %v4642
    %v4644 = vpop.f32.mrf.mxu0
    %v4645 = vpop.f32.mrf.mxu0
    %v4646 = vadd.f32 0.0, %v4645
    %v4647 = vpop.f32.mrf.mxu0
    %4648 = vmatprep.mubr.bf16.mxu0 %v4345
    %4649 = vmatmul.mubr.bf16.gmra.mxu0 %v4344
    %v4650 = vpop.f32.mrf.mxu0
    %v4651 = vadd.f32 0.0, %v4650
    %v4652 = vpop.f32.mrf.mxu0
    %v4653 = vpop.f32.mrf.mxu0
    %v4654 = vpop.f32.mrf.mxu0
    %4655 = vdwg.mxu0
    %4656 = vmatprep.subr.bf16.mxu0 0
    %4657 = vmatpush1.bf16.msra.mxu0 0
    %4658 = vmatprep.subr.bf16.mxu0 0
    %4659 = vmatpush1.bf16.msra.mxu0 0
    %4660 = vmatprep.subr.bf16.mxu0 0
    %4661 = vmatpush1.bf16.msra.mxu0 0
    %4662 = vmatprep.subr.bf16.mxu0 0
    %4663 = vmatpush1.bf16.msra.mxu0 0
    %4664 = vmatprep.subr.bf16.mxu0 0
    %4665 = vmatpush1.bf16.msra.mxu0 0
    %4666 = vmatprep.subr.bf16.mxu0 0
    %4667 = vmatpush1.bf16.msra.mxu0 0
    %4668 = vmatprep.subr.bf16.mxu0 0
    %4669 = vmatpush1.bf16.msra.mxu0 %v4462
    %4670 = vmatprep.subr.bf16.mxu0 0
    %4671 = vmatpush1.bf16.msra.mxu0 %v4461
    %4672 = vmatprep.subr.bf16.mxu0 0
    %4673 = vmatpush2.bf16.msra.mxu0 0
    %4674 = vmatprep.subr.bf16.mxu0 0
    %4675 = vmatpush2.bf16.msra.mxu0 0
    %4676 = vmatprep.subr.bf16.mxu0 0
    %4677 = vmatpush2.bf16.msra.mxu0 0
    %4678 = vmatprep.subr.bf16.mxu0 0
    %4679 = vmatpush2.bf16.msra.mxu0 0
    %4680 = vmatprep.subr.bf16.mxu0 0
    %4681 = vmatpush2.bf16.msra.mxu0 0
    %4682 = vmatprep.subr.bf16.mxu0 0
    %4683 = vmatpush2.bf16.msra.mxu0 0
    %4684 = vmatprep.subr.bf16.mxu0 0
    %4685 = vmatpush2.bf16.msra.mxu0 0
    %4686 = vmatprep.subr.bf16.mxu0 0
    %4687 = vmatpush2.bf16.msra.mxu0 0
    %4688 = vmatprep.mubr.bf16.mxu0 0
    %4689 = vmatmul.mubr.bf16.gmra.mxu0 %v4482
    %v4690 = vpop.f32.mrf.mxu0
    %v4691 = vadd.f32 %v4555, %v4690
    %v4692 = vpop.f32.mrf.mxu0
    %v4693 = vpop.f32.mrf.mxu0
    %v4694 = vadd.f32 %v4558, %v4693
    %v4695 = vpop.f32.mrf.mxu0
    %4696 = vmatprep.mubr.bf16.mxu0 0
    %4697 = vmatmul.mubr.bf16.gmra.mxu0 %v4485
    %v4698 = vpop.f32.mrf.mxu0
    %v4699 = vadd.f32 %v4563, %v4698
    %v4700 = vpop.f32.mrf.mxu0
    %v4701 = vpop.f32.mrf.mxu0
    %v4702 = vadd.f32 %v4566, %v4701
    %v4703 = vpop.f32.mrf.mxu0
    %4704 = vmatprep.mubr.bf16.mxu0 0
    %4705 = vmatmul.mubr.bf16.gmra.mxu0 %v4488
    %v4706 = vpop.f32.mrf.mxu0
    %v4707 = vadd.f32 %v4571, %v4706
    %v4708 = vpop.f32.mrf.mxu0
    %v4709 = vpop.f32.mrf.mxu0
    %v4710 = vadd.f32 %v4574, %v4709
    %v4711 = vpop.f32.mrf.mxu0
    %4712 = vmatprep.mubr.bf16.mxu0 0
    %4713 = vmatmul.mubr.bf16.gmra.mxu0 %v4491
    %v4714 = vpop.f32.mrf.mxu0
    %v4715 = vadd.f32 %v4579, %v4714
    %v4716 = vpop.f32.mrf.mxu0
    %v4717 = vpop.f32.mrf.mxu0
    %v4718 = vadd.f32 %v4582, %v4717
    %v4719 = vpop.f32.mrf.mxu0
    %4720 = vmatprep.mubr.bf16.mxu0 0
    %4721 = vmatmul.mubr.bf16.gmra.mxu0 %v4494
    %v4722 = vpop.f32.mrf.mxu0
    %v4723 = vadd.f32 %v4587, %v4722
    %v4724 = vpop.f32.mrf.mxu0
    %v4725 = vpop.f32.mrf.mxu0
    %v4726 = vadd.f32 %v4590, %v4725
    %v4727 = vpop.f32.mrf.mxu0
    %4728 = vmatprep.mubr.bf16.mxu0 0
    %4729 = vmatmul.mubr.bf16.gmra.mxu0 %v4497
    %v4730 = vpop.f32.mrf.mxu0
    %v4731 = vadd.f32 %v4595, %v4730
    %v4732 = vpop.f32.mrf.mxu0
    %v4733 = vpop.f32.mrf.mxu0
    %v4734 = vadd.f32 %v4598, %v4733
    %v4735 = vpop.f32.mrf.mxu0
    %4736 = vmatprep.mubr.bf16.mxu0 0
    %4737 = vmatmul.mubr.bf16.gmra.mxu0 %v4500
    %v4738 = vpop.f32.mrf.mxu0
    %v4739 = vadd.f32 %v4603, %v4738
    %v4740 = vpop.f32.mrf.mxu0
    %v4741 = vpop.f32.mrf.mxu0
    %v4742 = vadd.f32 %v4606, %v4741
    %v4743 = vpop.f32.mrf.mxu0
    %4744 = vmatprep.mubr.bf16.mxu0 0
    %4745 = vmatmul.mubr.bf16.gmra.mxu0 %v4503
    %v4746 = vpop.f32.mrf.mxu0
    %v4747 = vadd.f32 %v4611, %v4746
    %v4748 = vpop.f32.mrf.mxu0
    %v4749 = vpop.f32.mrf.mxu0
    %v4750 = vadd.f32 %v4614, %v4749
    %v4751 = vpop.f32.mrf.mxu0
    %4752 = vmatprep.mubr.bf16.mxu0 0
    %4753 = vmatmul.mubr.bf16.gmra.mxu0 %v4506
    %v4754 = vpop.f32.mrf.mxu0
    %v4755 = vadd.f32 %v4619, %v4754
    %v4756 = vpop.f32.mrf.mxu0
    %v4757 = vpop.f32.mrf.mxu0
    %v4758 = vadd.f32 %v4622, %v4757
    %v4759 = vpop.f32.mrf.mxu0
    %4760 = vmatprep.mubr.bf16.mxu0 0
    %4761 = vmatmul.mubr.bf16.gmra.mxu0 %v4509
    %v4762 = vpop.f32.mrf.mxu0
    %v4763 = vadd.f32 %v4627, %v4762
    %v4764 = vpop.f32.mrf.mxu0
    %v4765 = vpop.f32.mrf.mxu0
    %v4766 = vadd.f32 %v4630, %v4765
    %v4767 = vpop.f32.mrf.mxu0
    %4768 = vmatprep.mubr.bf16.mxu0 0
    %4769 = vmatmul.mubr.bf16.gmra.mxu0 %v4512
    %v4770 = vpop.f32.mrf.mxu0
    %v4771 = vadd.f32 %v4635, %v4770
    %v4772 = vpop.f32.mrf.mxu0
    %v4773 = vpop.f32.mrf.mxu0
    %v4774 = vadd.f32 %v4638, %v4773
    %v4775 = vpop.f32.mrf.mxu0
    %4776 = vmatprep.mubr.bf16.mxu0 0
    %4777 = vmatmul.mubr.bf16.gmra.mxu0 %v4515
    %v4778 = vpop.f32.mrf.mxu0
    %v4779 = vadd.f32 %v4643, %v4778
    %v4780 = vpop.f32.mrf.mxu0
    %v4781 = vpop.f32.mrf.mxu0
    %v4782 = vadd.f32 %v4646, %v4781
    %v4783 = vpop.f32.mrf.mxu0
    %4784 = vmatprep.mubr.bf16.mxu0 0
    %4785 = vmatmul.mubr.bf16.gmra.mxu0 %v4518
    %v4786 = vpop.f32.mrf.mxu0
    %v4787 = vadd.f32 %v4651, %v4786
    %v4788 = vpop.f32.mrf.mxu0
    %v4789 = vpop.f32.mrf.mxu0
    %v4790 = vpop.f32.mrf.mxu0
    %4791 = vdwg.mxu0
    %v4793 = vlaneseq
    %v4794 = vshrl.u32 %v4793, 7
    %v4795 = vsub.s32 0, %v4794
    %v4796 = vrot.slane %v2848, %v4795
    %v4798 = vmul.f32 %v4691, %v4796
    %v4799 = vmul.f32 %v4694, %v4796
    %v4800 = vmul.f32 %v4699, %v4796
    %v4801 = vmul.f32 %v4702, %v4796
    %v4802 = vmul.f32 %v4707, %v4796
    %v4803 = vmul.f32 %v4710, %v4796
    %v4804 = vmul.f32 %v4715, %v4796
    %v4805 = vmul.f32 %v4718, %v4796
    %v4806 = vmul.f32 %v4723, %v4796
    %v4807 = vmul.f32 %v4726, %v4796
    %v4808 = vmul.f32 %v4731, %v4796
    %v4809 = vmul.f32 %v4734, %v4796
    %v4810 = vmul.f32 %v4739, %v4796
    %v4811 = vmul.f32 %v4742, %v4796
    %v4812 = vmul.f32 %v4747, %v4796
    %v4813 = vmul.f32 %v4750, %v4796
    %v4814 = vmul.f32 %v4755, %v4796
    %v4815 = vmul.f32 %v4758, %v4796
    %v4816 = vmul.f32 %v4763, %v4796
    %v4817 = vmul.f32 %v4766, %v4796
    %v4818 = vmul.f32 %v4771, %v4796
    %v4819 = vmul.f32 %v4774, %v4796
    %v4820 = vmul.f32 %v4779, %v4796
    %v4821 = vmul.f32 %v4782, %v4796
    %v4822 = vmul.f32 %v4787, %v4796
    %v4824 = vlaneseq
    %v4825 = vshrl.u32 %v4824, 7
    %v4826 = vsub.s32 0, %v4825
    %v4827 = vrot.slane %v2850, %v4826
    %v4829 = vadd.f32 %v4798, %v4827
    %v4830 = vadd.f32 %v4799, %v4827
    %v4831 = vadd.f32 %v4800, %v4827
    %v4832 = vadd.f32 %v4801, %v4827
    %v4833 = vadd.f32 %v4802, %v4827
    %v4834 = vadd.f32 %v4803, %v4827
    %v4835 = vadd.f32 %v4804, %v4827
    %v4836 = vadd.f32 %v4805, %v4827
    %v4837 = vadd.f32 %v4806, %v4827
    %v4838 = vadd.f32 %v4807, %v4827
    %v4839 = vadd.f32 %v4808, %v4827
    %v4840 = vadd.f32 %v4809, %v4827
    %v4841 = vadd.f32 %v4810, %v4827
    %v4842 = vadd.f32 %v4811, %v4827
    %v4843 = vadd.f32 %v4812, %v4827
    %v4844 = vadd.f32 %v4813, %v4827
    %v4845 = vadd.f32 %v4814, %v4827
    %v4846 = vadd.f32 %v4815, %v4827
    %v4847 = vadd.f32 %v4816, %v4827
    %v4848 = vadd.f32 %v4817, %v4827
    %v4849 = vadd.f32 %v4818, %v4827
    %v4850 = vadd.f32 %v4819, %v4827
    %v4851 = vadd.f32 %v4820, %v4827
    %v4852 = vadd.f32 %v4821, %v4827
    %v4853 = vadd.f32 %v4822, %v4827
    %v4854 = vmul.f32 %v4829, %v519
    %v4855 = vmul.f32 %v4830, %v524
    %v4856 = vmul.f32 %v4831, %v529
    %v4857 = vmul.f32 %v4832, %v534
    %v4858 = vmul.f32 %v4833, %v539
    %v4859 = vmul.f32 %v4834, %v544
    %v4860 = vmul.f32 %v4835, %v549
    %v4861 = vmul.f32 %v4836, %v554
    %v4862 = vmul.f32 %v4837, %v559
    %v4863 = vmul.f32 %v4838, %v564
    %v4864 = vmul.f32 %v4839, %v569
    %v4865 = vmul.f32 %v4840, %v574
    %v4866 = vmul.f32 %v4841, %v579
    %v4867 = vmul.f32 %v4842, %v584
    %v4868 = vmul.f32 %v4843, %v589
    %v4869 = vmul.f32 %v4844, %v594
    %v4870 = vmul.f32 %v4845, %v599
    %v4871 = vmul.f32 %v4846, %v604
    %v4872 = vmul.f32 %v4847, %v609
    %v4873 = vmul.f32 %v4848, %v614
    %v4874 = vmul.f32 %v4849, %v619
    %v4875 = vmul.f32 %v4850, %v624
    %v4876 = vmul.f32 %v4851, %v629
    %v4877 = vmul.f32 %v4852, %v634
    %v4878 = vmul.f32 %v4853, %v639
    %v4879 = vadd.f32 %v691, %v4854
    %v4880 = vadd.f32 %v692, %v4855
    %v4881 = vadd.f32 %v693, %v4856
    %v4882 = vadd.f32 %v694, %v4857
    %v4883 = vadd.f32 %v695, %v4858
    %v4884 = vadd.f32 %v696, %v4859
    %v4885 = vadd.f32 %v697, %v4860
    %v4886 = vadd.f32 %v698, %v4861
    %v4887 = vadd.f32 %v699, %v4862
    %v4888 = vadd.f32 %v700, %v4863
    %v4889 = vadd.f32 %v701, %v4864
    %v4890 = vadd.f32 %v702, %v4865
    %v4891 = vadd.f32 %v703, %v4866
    %v4892 = vadd.f32 %v704, %v4867
    %v4893 = vadd.f32 %v705, %v4868
    %v4894 = vadd.f32 %v706, %v4869
    %v4895 = vadd.f32 %v707, %v4870
    %v4896 = vadd.f32 %v708, %v4871
    %v4897 = vadd.f32 %v709, %v4872
    %v4898 = vadd.f32 %v710, %v4873
    %v4899 = vadd.f32 %v711, %v4874
    %v4900 = vadd.f32 %v712, %v4875
    %v4901 = vadd.f32 %v713, %v4876
    %v4902 = vadd.f32 %v714, %v4877
    %v4903 = vadd.f32 %v715, %v4878
    %v4904 = vmax.f32 %v4879, 0.0
    %v4905 = vmax.f32 %v4880, 0.0
    %v4906 = vmax.f32 %v4881, 0.0
    %v4907 = vmax.f32 %v4882, 0.0
    %v4908 = vmax.f32 %v4883, 0.0
    %v4909 = vmax.f32 %v4884, 0.0
    %v4910 = vmax.f32 %v4885, 0.0
    %v4911 = vmax.f32 %v4886, 0.0
    %v4912 = vmax.f32 %v4887, 0.0
    %v4913 = vmax.f32 %v4888, 0.0
    %v4914 = vmax.f32 %v4889, 0.0
    %v4915 = vmax.f32 %v4890, 0.0
    %v4916 = vmax.f32 %v4891, 0.0
    %v4917 = vmax.f32 %v4892, 0.0
    %v4918 = vmax.f32 %v4893, 0.0
    %v4919 = vmax.f32 %v4894, 0.0
    %v4920 = vmax.f32 %v4895, 0.0
    %v4921 = vmax.f32 %v4896, 0.0
    %v4922 = vmax.f32 %v4897, 0.0
    %v4923 = vmax.f32 %v4898, 0.0
    %v4924 = vmax.f32 %v4899, 0.0
    %v4925 = vmax.f32 %v4900, 0.0
    %v4926 = vmax.f32 %v4901, 0.0
    %v4927 = vmax.f32 %v4902, 0.0
    %v4928 = vmax.f32 %v4903, 0.0
    %v4929 = vsub.f32 %v4904, %v691
    %v4930 = vsub.f32 %v4905, %v692
    %v4931 = vsub.f32 %v4906, %v693
    %v4932 = vsub.f32 %v4907, %v694
    %v4933 = vsub.f32 %v4908, %v695
    %v4934 = vsub.f32 %v4909, %v696
    %v4935 = vsub.f32 %v4910, %v697
    %v4936 = vsub.f32 %v4911, %v698
    %v4937 = vsub.f32 %v4912, %v699
    %v4938 = vsub.f32 %v4913, %v700
    %v4939 = vsub.f32 %v4914, %v701
    %v4940 = vsub.f32 %v4915, %v702
    %v4941 = vsub.f32 %v4916, %v703
    %v4942 = vsub.f32 %v4917, %v704
    %v4943 = vsub.f32 %v4918, %v705
    %v4944 = vsub.f32 %v4919, %v706
    %v4945 = vsub.f32 %v4920, %v707
    %v4946 = vsub.f32 %v4921, %v708
    %v4947 = vsub.f32 %v4922, %v709
    %v4948 = vsub.f32 %v4923, %v710
    %v4949 = vsub.f32 %v4924, %v711
    %v4950 = vsub.f32 %v4925, %v712
    %v4951 = vsub.f32 %v4926, %v713
    %v4952 = vsub.f32 %v4927, %v714
    %v4953 = vsub.f32 %v4928, %v715
    %4954 = vst.msk [vmem:[%s25] sm:$0xff] %vm109, %v4929
    %4955 = vst.msk [vmem:[%s25 + $0x8] sm:$0xff] %vm109, %v4930
    %4956 = vst.msk [vmem:[%s25 + $0x10] sm:$0xff] %vm109, %v4931
    %4957 = vst.msk [vmem:[%s25 + $0x18] sm:$0xff] %vm109, %v4932
    %4958 = vst.msk [vmem:[%s25 + $0x20] sm:$0xff] %vm109, %v4933
    %4959 = vst.msk [vmem:[%s25 + $0x28] sm:$0xff] %vm109, %v4934
    %4960 = vst.msk [vmem:[%s25 + $0x30] sm:$0xff] %vm109, %v4935
    %4961 = vst.msk [vmem:[%s25 + $0x38] sm:$0xff] %vm109, %v4936
    %4962 = vst.msk [vmem:[%s25 + $0x40] sm:$0xff] %vm109, %v4937
    %4963 = vst.msk [vmem:[%s25 + $0x48] sm:$0xff] %vm109, %v4938
    %4964 = vst.msk [vmem:[%s25 + $0x50] sm:$0xff] %vm109, %v4939
    %4965 = vst.msk [vmem:[%s25 + $0x58] sm:$0xff] %vm109, %v4940
    %4966 = vst.msk [vmem:[%s25 + $0x60] sm:$0xff] %vm109, %v4941
    %4967 = vst.msk [vmem:[%s25 + $0x68] sm:$0xff] %vm109, %v4942
    %4968 = vst.msk [vmem:[%s25 + $0x70] sm:$0xff] %vm109, %v4943
    %4969 = vst.msk [vmem:[%s25 + $0x78] sm:$0xff] %vm109, %v4944
    %4970 = vst.msk [vmem:[%s25 + $0x80] sm:$0xff] %vm109, %v4945
    %4971 = vst.msk [vmem:[%s25 + $0x88] sm:$0xff] %vm109, %v4946
    %4972 = vst.msk [vmem:[%s25 + $0x90] sm:$0xff] %vm109, %v4947
    %4973 = vst.msk [vmem:[%s25 + $0x98] sm:$0xff] %vm109, %v4948
    %4974 = vst.msk [vmem:[%s25 + $0xa0] sm:$0xff] %vm109, %v4949
    %4975 = vst.msk [vmem:[%s25 + $0xa8] sm:$0xff] %vm109, %v4950
    %4976 = vst.msk [vmem:[%s25 + $0xb0] sm:$0xff] %vm109, %v4951
    %4977 = vst.msk [vmem:[%s25 + $0xb8] sm:$0xff] %vm109, %v4952
    %4978 = vst.msk [vmem:[%s25 + $0xc0] sm:$0xff] %vm109, %v4953
    %4979 = vst.msk [vmem:[%s26] sm:$0xff] %vm109, %v2785
    %4980 = vst.msk [vmem:[%s26 + $0x8] sm:$0xff] %vm109, %v2786
    %4981 = vst.msk [vmem:[%s26 + $0x10] sm:$0xff] %vm109, %v2787
    %4982 = vst.msk [vmem:[%s26 + $0x18] sm:$0xff] %vm109, %v2788
    %4983 = vst.msk [vmem:[%s26 + $0x20] sm:$0xff] %vm109, %v2789
    %4984 = vst.msk [vmem:[%s26 + $0x28] sm:$0xff] %vm109, %v2790
    %4985 = vst.msk [vmem:[%s26 + $0x30] sm:$0xff] %vm109, %v2791
    %4986 = vst.msk [vmem:[%s26 + $0x38] sm:$0xff] %vm109, %v2792
    %4987 = vst.msk [vmem:[%s26 + $0x40] sm:$0xff] %vm109, %v2793
    %4988 = vst.msk [vmem:[%s26 + $0x48] sm:$0xff] %vm109, %v2794
    %4989 = vst.msk [vmem:[%s26 + $0x50] sm:$0xff] %vm109, %v2795
    %4990 = vst.msk [vmem:[%s26 + $0x58] sm:$0xff] %vm109, %v2796
    %4991 = vst.msk [vmem:[%s26 + $0x60] sm:$0xff] %vm109, %v2797
    %4992 = vst.msk [vmem:[%s26 + $0x68] sm:$0xff] %vm109, %v2798
    %4993 = vst.msk [vmem:[%s26 + $0x70] sm:$0xff] %vm109, %v2799
    %4994 = vst.msk [vmem:[%s26 + $0x78] sm:$0xff] %vm109, %v2800
    %4995 = vst.msk [vmem:[%s26 + $0x80] sm:$0xff] %vm109, %v2801
    %4996 = vst.msk [vmem:[%s26 + $0x88] sm:$0xff] %vm109, %v2802
    %4997 = vst.msk [vmem:[%s26 + $0x90] sm:$0xff] %vm109, %v2803
    %4998 = vst.msk [vmem:[%s26 + $0x98] sm:$0xff] %vm109, %v2804
    %4999 = vst.msk [vmem:[%s26 + $0xa0] sm:$0xff] %vm109, %v2805
    %5000 = vst.msk [vmem:[%s26 + $0xa8] sm:$0xff] %vm109, %v2806
    %5001 = vst.msk [vmem:[%s26 + $0xb0] sm:$0xff] %vm109, %v2807
    %5002 = vst.msk [vmem:[%s26 + $0xb8] sm:$0xff] %vm109, %v2808
    %5003 = vst.msk [vmem:[%s26 + $0xc0] sm:$0xff] %vm109, %v2809
    %s5004 = scalar_lea.vmem %s24, 200
    %5005 = vst.msk [vmem:[%s5004] sm:$0xff] %vm109, %v4904
    %5006 = vst.msk [vmem:[%s5004 + $0x8] sm:$0xff] %vm109, %v4905
    %5007 = vst.msk [vmem:[%s5004 + $0x10] sm:$0xff] %vm109, %v4906
    %5008 = vst.msk [vmem:[%s5004 + $0x18] sm:$0xff] %vm109, %v4907
    %5009 = vst.msk [vmem:[%s5004 + $0x20] sm:$0xff] %vm109, %v4908
    %5010 = vst.msk [vmem:[%s5004 + $0x28] sm:$0xff] %vm109, %v4909
    %5011 = vst.msk [vmem:[%s5004 + $0x30] sm:$0xff] %vm109, %v4910
    %5012 = vst.msk [vmem:[%s5004 + $0x38] sm:$0xff] %vm109, %v4911
    %5013 = vst.msk [vmem:[%s5004 + $0x40] sm:$0xff] %vm109, %v4912
    %5014 = vst.msk [vmem:[%s5004 + $0x48] sm:$0xff] %vm109, %v4913
    %5015 = vst.msk [vmem:[%s5004 + $0x50] sm:$0xff] %vm109, %v4914
    %5016 = vst.msk [vmem:[%s5004 + $0x58] sm:$0xff] %vm109, %v4915
    %5017 = vst.msk [vmem:[%s5004 + $0x60] sm:$0xff] %vm109, %v4916
    %5018 = vst.msk [vmem:[%s5004 + $0x68] sm:$0xff] %vm109, %v4917
    %5019 = vst.msk [vmem:[%s5004 + $0x70] sm:$0xff] %vm109, %v4918
    %5020 = vst.msk [vmem:[%s5004 + $0x78] sm:$0xff] %vm109, %v4919
    %5021 = vst.msk [vmem:[%s5004 + $0x80] sm:$0xff] %vm109, %v4920
    %5022 = vst.msk [vmem:[%s5004 + $0x88] sm:$0xff] %vm109, %v4921
    %5023 = vst.msk [vmem:[%s5004 + $0x90] sm:$0xff] %vm109, %v4922
    %5024 = vst.msk [vmem:[%s5004 + $0x98] sm:$0xff] %vm109, %v4923
    %5025 = vst.msk [vmem:[%s5004 + $0xa0] sm:$0xff] %vm109, %v4924
    %5026 = vst.msk [vmem:[%s5004 + $0xa8] sm:$0xff] %vm109, %v4925
    %5027 = vst.msk [vmem:[%s5004 + $0xb0] sm:$0xff] %vm109, %v4926
    %5028 = vst.msk [vmem:[%s5004 + $0xb8] sm:$0xff] %vm109, %v4927
    %5029 = vst.msk [vmem:[%s5004 + $0xc0] sm:$0xff] %vm109, %v4928
    %v5030 = vld [vmem:[%s5004] sm:$0xff]
    %v5031 = vld [vmem:[%s5004 + $0x8] sm:$0xff]
    %v5032 = vld [vmem:[%s5004 + $0x10] sm:$0xff]
    %v5033 = vld [vmem:[%s5004 + $0x18] sm:$0xff]
    %v5034 = vld [vmem:[%s5004 + $0x20] sm:$0xff]
    %v5035 = vld [vmem:[%s5004 + $0x28] sm:$0xff]
    %v5036 = vld [vmem:[%s5004 + $0x30] sm:$0xff]
    %v5037 = vld [vmem:[%s5004 + $0x38] sm:$0xff]
    %v5038 = vld [vmem:[%s5004 + $0x40] sm:$0xff]
    %v5039 = vld [vmem:[%s5004 + $0x48] sm:$0xff]
    %v5040 = vld [vmem:[%s5004 + $0x50] sm:$0xff]
    %v5041 = vld [vmem:[%s5004 + $0x58] sm:$0xff]
    %v5042 = vld [vmem:[%s5004 + $0x60] sm:$0xff]
    %v5043 = vld [vmem:[%s5004 + $0x68] sm:$0xff]
    %v5044 = vld [vmem:[%s5004 + $0x70] sm:$0xff]
    %v5045 = vld [vmem:[%s5004 + $0x78] sm:$0xff]
    %v5046 = vld [vmem:[%s5004 + $0x80] sm:$0xff]
    %v5047 = vld [vmem:[%s5004 + $0x88] sm:$0xff]
    %v5048 = vld [vmem:[%s5004 + $0x90] sm:$0xff]
    %v5049 = vld [vmem:[%s5004 + $0x98] sm:$0xff]
    %v5050 = vld [vmem:[%s5004 + $0xa0] sm:$0xff]
    %v5051 = vld [vmem:[%s5004 + $0xa8] sm:$0xff]
    %v5052 = vld [vmem:[%s5004 + $0xb0] sm:$0xff]
    %v5053 = vld [vmem:[%s5004 + $0xb8] sm:$0xff]
    %v5054 = vld [vmem:[%s5004 + $0xc0] sm:$0xff]
    %s5055 = scalar_lea.vmem %s6, 288
    %v5056 = vld [vmem:[%s5055] sm:$0xf]
    %v5057 = vld [vmem:[%s5055 + $0x4] sm:$0xf]
    %v5058 = vld [vmem:[%s5055 + $0x8] sm:$0xf]
    %v5059 = vld [vmem:[%s5055 + $0xc] sm:$0xf]
    %v5060 = vld [vmem:[%s5055 + $0x10] sm:$0xf]
    %v5061 = vld [vmem:[%s5055 + $0x14] sm:$0xf]
    %v5062 = vld [vmem:[%s5055 + $0x18] sm:$0xf]
    %v5063 = vld [vmem:[%s5055 + $0x1c] sm:$0xf]
    %v5064 = vld [vmem:[%s5055 + $0x20] sm:$0xf]
    %v5065 = vld [vmem:[%s5055 + $0x24] sm:$0xf]
    %v5066 = vld [vmem:[%s5055 + $0x28] sm:$0xf]
    %v5067 = vld [vmem:[%s5055 + $0x2c] sm:$0xf]
    %v5068 = vld [vmem:[%s5055 + $0x30] sm:$0xf]
    %v5069 = vld [vmem:[%s5055 + $0x34] sm:$0xf]
    %v5070 = vld [vmem:[%s5055 + $0x38] sm:$0xf]
    %v5071 = vld [vmem:[%s5055 + $0x3c] sm:$0xf]
    %v5072 = vld [vmem:[%s5055 + $0x40] sm:$0xf]
    %v5073 = vld [vmem:[%s5055 + $0x44] sm:$0xf]
    %v5074 = vld [vmem:[%s5055 + $0x48] sm:$0xf]
    %v5075 = vld [vmem:[%s5055 + $0x4c] sm:$0xf]
    %v5076 = vld [vmem:[%s5055 + $0x50] sm:$0xf]
    %v5077 = vld [vmem:[%s5055 + $0x54] sm:$0xf]
    %v5078 = vld [vmem:[%s5055 + $0x58] sm:$0xf]
    %v5079 = vld [vmem:[%s5055 + $0x5c] sm:$0xf]
    %v5080 = vld [vmem:[%s5055 + $0x60] sm:$0xf]
    %v5081 = vld [vmem:[%s5055 + $0x64] sm:$0xf]
    %v5082 = vld [vmem:[%s5055 + $0x68] sm:$0xf]
    %v5083 = vld [vmem:[%s5055 + $0x6c] sm:$0xf]
    %v5084 = vld [vmem:[%s5055 + $0x70] sm:$0xf]
    %v5085 = vld [vmem:[%s5055 + $0x74] sm:$0xf]
    %v5086 = vld [vmem:[%s5055 + $0x78] sm:$0xf]
    %v5087 = vld [vmem:[%s5055 + $0x7c] sm:$0xf]
    %v5088 = vld [vmem:[%s5055 + $0x80] sm:$0xf]
    %v5089 = vld [vmem:[%s5055 + $0x84] sm:$0xf]
    %v5090 = vld [vmem:[%s5055 + $0x88] sm:$0xf]
    %v5091 = vld [vmem:[%s5055 + $0x8c] sm:$0xf]
    %s5092 = scalar_lea.vmem %s7, 2
    %v5093 = vld [vmem:[%s5092] sm:$0x1]
    %s5094 = scalar_lea.vmem %s8, 2
    %v5095 = vld [vmem:[%s5094] sm:$0x1]
    %5096 = vst.msk [vmem:[#allocation2 + $0x10] sm:$0xff] %vm109, %v5030
    %5097 = vst.msk [vmem:[#allocation2 + $0x18] sm:$0xff] %vm109, %v5031
    %5098 = vst.msk [vmem:[#allocation2 + $0x20] sm:$0xff] %vm109, %v5032
    %5099 = vst.msk [vmem:[#allocation2 + $0x28] sm:$0xff] %vm109, %v5033
    %5100 = vst.msk [vmem:[#allocation2 + $0x30] sm:$0xff] %vm109, %v5034
    %5101 = vst.msk [vmem:[#allocation2 + $0x38] sm:$0xff] %vm109, %v5035
    %5102 = vst.msk [vmem:[#allocation2 + $0x40] sm:$0xff] %vm109, %v5036
    %5103 = vst.msk [vmem:[#allocation2 + $0x48] sm:$0xff] %vm109, %v5037
    %5104 = vst.msk [vmem:[#allocation2 + $0x50] sm:$0xff] %vm109, %v5038
    %5105 = vst.msk [vmem:[#allocation2 + $0x58] sm:$0xff] %vm109, %v5039
    %5106 = vst.msk [vmem:[#allocation2 + $0x60] sm:$0xff] %vm109, %v5040
    %5107 = vst.msk [vmem:[#allocation2 + $0x68] sm:$0xff] %vm109, %v5041
    %5108 = vst.msk [vmem:[#allocation2 + $0x70] sm:$0xff] %vm109, %v5042
    %5109 = vst.msk [vmem:[#allocation2 + $0x78] sm:$0xff] %vm109, %v5043
    %5110 = vst.msk [vmem:[#allocation2 + $0x80] sm:$0xff] %vm109, %v5044
    %5111 = vst.msk [vmem:[#allocation2 + $0x88] sm:$0xff] %vm109, %v5045
    %5112 = vst.msk [vmem:[#allocation2 + $0x90] sm:$0xff] %vm109, %v5046
    %5113 = vst.msk [vmem:[#allocation2 + $0x98] sm:$0xff] %vm109, %v5047
    %5114 = vst.msk [vmem:[#allocation2 + $0xa0] sm:$0xff] %vm109, %v5048
    %5115 = vst.msk [vmem:[#allocation2 + $0xa8] sm:$0xff] %vm109, %v5049
    %5116 = vst.msk [vmem:[#allocation2 + $0xb0] sm:$0xff] %vm109, %v5050
    %5117 = vst.msk [vmem:[#allocation2 + $0xb8] sm:$0xff] %vm109, %v5051
    %5118 = vst.msk [vmem:[#allocation2 + $0xc0] sm:$0xff] %vm109, %v5052
    %5119 = vst.msk [vmem:[#allocation2 + $0xc8] sm:$0xff] %vm109, %v5053
    %5120 = vst.msk [vmem:[#allocation2 + $0xd0] sm:$0xff] %vm109, %v5054
    %v5121 = vld [vmem:[#allocation2 + $0x5] sm:$0xff]
    %v5122 = vld [vmem:[#allocation2 + $0xd] sm:$0xff]
    %v5123 = vld [vmem:[#allocation2 + $0x15] sm:$0xff]
    %v5124 = vld [vmem:[#allocation2 + $0x1d] sm:$0xff]
    %v5125 = vld [vmem:[#allocation2 + $0x25] sm:$0xff]
    %v5126 = vld [vmem:[#allocation2 + $0x2d] sm:$0xff]
    %v5127 = vld [vmem:[#allocation2 + $0x35] sm:$0xff]
    %v5128 = vld [vmem:[#allocation2 + $0x3d] sm:$0xff]
    %v5129 = vld [vmem:[#allocation2 + $0x45] sm:$0xff]
    %v5130 = vld [vmem:[#allocation2 + $0x4d] sm:$0xff]
    %v5131 = vld [vmem:[#allocation2 + $0x55] sm:$0xff]
    %v5132 = vld [vmem:[#allocation2 + $0x5d] sm:$0xff]
    %v5133 = vld [vmem:[#allocation2 + $0x65] sm:$0xff]
    %v5134 = vld [vmem:[#allocation2 + $0x6d] sm:$0xff]
    %v5135 = vld [vmem:[#allocation2 + $0x75] sm:$0xff]
    %v5136 = vld [vmem:[#allocation2 + $0x7d] sm:$0xff]
    %v5137 = vld [vmem:[#allocation2 + $0x85] sm:$0xff]
    %v5138 = vld [vmem:[#allocation2 + $0x8d] sm:$0xff]
    %v5139 = vld [vmem:[#allocation2 + $0x95] sm:$0xff]
    %v5140 = vld [vmem:[#allocation2 + $0x9d] sm:$0xff]
    %v5141 = vld [vmem:[#allocation2 + $0xa5] sm:$0xff]
    %v5142 = vld [vmem:[#allocation2 + $0xad] sm:$0xff]
    %v5143 = vld [vmem:[#allocation2 + $0xb5] sm:$0xff]
    %v5144 = vld [vmem:[#allocation2 + $0xbd] sm:$0xff]
    %v5145 = vld [vmem:[#allocation2 + $0xc5] sm:$0xff]
    %v5146 = vld [vmem:[#allocation2 + $0x6] sm:$0xff]
    %v5147 = vld [vmem:[#allocation2 + $0xe] sm:$0xff]
    %v5148 = vld [vmem:[#allocation2 + $0x16] sm:$0xff]
    %v5149 = vld [vmem:[#allocation2 + $0x1e] sm:$0xff]
    %v5150 = vld [vmem:[#allocation2 + $0x26] sm:$0xff]
    %v5151 = vld [vmem:[#allocation2 + $0x2e] sm:$0xff]
    %v5152 = vld [vmem:[#allocation2 + $0x36] sm:$0xff]
    %v5153 = vld [vmem:[#allocation2 + $0x3e] sm:$0xff]
    %v5154 = vld [vmem:[#allocation2 + $0x46] sm:$0xff]
    %v5155 = vld [vmem:[#allocation2 + $0x4e] sm:$0xff]
    %v5156 = vld [vmem:[#allocation2 + $0x56] sm:$0xff]
    %v5157 = vld [vmem:[#allocation2 + $0x5e] sm:$0xff]
    %v5158 = vld [vmem:[#allocation2 + $0x66] sm:$0xff]
    %v5159 = vld [vmem:[#allocation2 + $0x6e] sm:$0xff]
    %v5160 = vld [vmem:[#allocation2 + $0x76] sm:$0xff]
    %v5161 = vld [vmem:[#allocation2 + $0x7e] sm:$0xff]
    %v5162 = vld [vmem:[#allocation2 + $0x86] sm:$0xff]
    %v5163 = vld [vmem:[#allocation2 + $0x8e] sm:$0xff]
    %v5164 = vld [vmem:[#allocation2 + $0x96] sm:$0xff]
    %v5165 = vld [vmem:[#allocation2 + $0x9e] sm:$0xff]
    %v5166 = vld [vmem:[#allocation2 + $0xa6] sm:$0xff]
    %v5167 = vld [vmem:[#allocation2 + $0xae] sm:$0xff]
    %v5168 = vld [vmem:[#allocation2 + $0xb6] sm:$0xff]
    %v5169 = vld [vmem:[#allocation2 + $0xbe] sm:$0xff]
    %v5170 = vld [vmem:[#allocation2 + $0xc6] sm:$0xff]
    %v5171 = vld [vmem:[#allocation2 + $0x7] sm:$0xff]
    %v5172 = vld [vmem:[#allocation2 + $0xf] sm:$0xff]
    %v5173 = vld [vmem:[#allocation2 + $0x17] sm:$0xff]
    %v5174 = vld [vmem:[#allocation2 + $0x1f] sm:$0xff]
    %v5175 = vld [vmem:[#allocation2 + $0x27] sm:$0xff]
    %v5176 = vld [vmem:[#allocation2 + $0x2f] sm:$0xff]
    %v5177 = vld [vmem:[#allocation2 + $0x37] sm:$0xff]
    %v5178 = vld [vmem:[#allocation2 + $0x3f] sm:$0xff]
    %v5179 = vld [vmem:[#allocation2 + $0x47] sm:$0xff]
    %v5180 = vld [vmem:[#allocation2 + $0x4f] sm:$0xff]
    %v5181 = vld [vmem:[#allocation2 + $0x57] sm:$0xff]
    %v5182 = vld [vmem:[#allocation2 + $0x5f] sm:$0xff]
    %v5183 = vld [vmem:[#allocation2 + $0x67] sm:$0xff]
    %v5184 = vld [vmem:[#allocation2 + $0x6f] sm:$0xff]
    %v5185 = vld [vmem:[#allocation2 + $0x77] sm:$0xff]
    %v5186 = vld [vmem:[#allocation2 + $0x7f] sm:$0xff]
    %v5187 = vld [vmem:[#allocation2 + $0x87] sm:$0xff]
    %v5188 = vld [vmem:[#allocation2 + $0x8f] sm:$0xff]
    %v5189 = vld [vmem:[#allocation2 + $0x97] sm:$0xff]
    %v5190 = vld [vmem:[#allocation2 + $0x9f] sm:$0xff]
    %v5191 = vld [vmem:[#allocation2 + $0xa7] sm:$0xff]
    %v5192 = vld [vmem:[#allocation2 + $0xaf] sm:$0xff]
    %v5193 = vld [vmem:[#allocation2 + $0xb7] sm:$0xff]
    %v5194 = vld [vmem:[#allocation2 + $0xbf] sm:$0xff]
    %v5195 = vld [vmem:[#allocation2 + $0xc7] sm:$0xff]
    %v5196 = vld [vmem:[#allocation2 + $0xcf] sm:$0xff]
    %5222 = vrot.lane.b32.xlu0 %v5146, 32
    %v5223 = vpop.permute.xlu0 %5222
    %5224 = vrot.lane.b32.xlu0 %v5147, 32
    %v5225 = vpop.permute.xlu0 %5224
    %5226 = vrot.lane.b32.xlu0 %v5148, 32
    %v5227 = vpop.permute.xlu0 %5226
    %5228 = vrot.lane.b32.xlu0 %v5149, 32
    %v5229 = vpop.permute.xlu0 %5228
    %5230 = vrot.lane.b32.xlu0 %v5150, 32
    %v5231 = vpop.permute.xlu0 %5230
    %5232 = vrot.lane.b32.xlu0 %v5151, 32
    %v5233 = vpop.permute.xlu0 %5232
    %5234 = vrot.lane.b32.xlu0 %v5152, 32
    %v5235 = vpop.permute.xlu0 %5234
    %5236 = vrot.lane.b32.xlu0 %v5153, 32
    %v5237 = vpop.permute.xlu0 %5236
    %5238 = vrot.lane.b32.xlu0 %v5154, 32
    %v5239 = vpop.permute.xlu0 %5238
    %5240 = vrot.lane.b32.xlu0 %v5155, 32
    %v5241 = vpop.permute.xlu0 %5240
    %5242 = vrot.lane.b32.xlu0 %v5156, 32
    %v5243 = vpop.permute.xlu0 %5242
    %5244 = vrot.lane.b32.xlu0 %v5157, 32
    %v5245 = vpop.permute.xlu0 %5244
    %5246 = vrot.lane.b32.xlu0 %v5158, 32
    %v5247 = vpop.permute.xlu0 %5246
    %5248 = vrot.lane.b32.xlu0 %v5159, 32
    %v5249 = vpop.permute.xlu0 %5248
    %5250 = vrot.lane.b32.xlu0 %v5160, 32
    %v5251 = vpop.permute.xlu0 %5250
    %5252 = vrot.lane.b32.xlu0 %v5161, 32
    %v5253 = vpop.permute.xlu0 %5252
    %5254 = vrot.lane.b32.xlu0 %v5162, 32
    %v5255 = vpop.permute.xlu0 %5254
    %5256 = vrot.lane.b32.xlu0 %v5163, 32
    %v5257 = vpop.permute.xlu0 %5256
    %5258 = vrot.lane.b32.xlu0 %v5164, 32
    %v5259 = vpop.permute.xlu0 %5258
    %5260 = vrot.lane.b32.xlu0 %v5165, 32
    %v5261 = vpop.permute.xlu0 %5260
    %5262 = vrot.lane.b32.xlu0 %v5166, 32
    %v5263 = vpop.permute.xlu0 %5262
    %5264 = vrot.lane.b32.xlu0 %v5167, 32
    %v5265 = vpop.permute.xlu0 %5264
    %5266 = vrot.lane.b32.xlu0 %v5168, 32
    %v5267 = vpop.permute.xlu0 %5266
    %5268 = vrot.lane.b32.xlu0 %v5169, 32
    %v5269 = vpop.permute.xlu0 %5268
    %5270 = vrot.lane.b32.xlu0 %v5170, 32
    %v5271 = vpop.permute.xlu0 %5270
    %5322 = vrot.lane.b32.xlu0 %v5171, 64
    %v5323 = vpop.permute.xlu0 %5322
    %5324 = vrot.lane.b32.xlu0 %v5172, 64
    %v5325 = vpop.permute.xlu0 %5324
    %5326 = vrot.lane.b32.xlu0 %v5173, 64
    %v5327 = vpop.permute.xlu0 %5326
    %5328 = vrot.lane.b32.xlu0 %v5174, 64
    %v5329 = vpop.permute.xlu0 %5328
    %5330 = vrot.lane.b32.xlu0 %v5175, 64
    %v5331 = vpop.permute.xlu0 %5330
    %5332 = vrot.lane.b32.xlu0 %v5176, 64
    %v5333 = vpop.permute.xlu0 %5332
    %5334 = vrot.lane.b32.xlu0 %v5177, 64
    %v5335 = vpop.permute.xlu0 %5334
    %5336 = vrot.lane.b32.xlu0 %v5178, 64
    %v5337 = vpop.permute.xlu0 %5336
    %5338 = vrot.lane.b32.xlu0 %v5179, 64
    %v5339 = vpop.permute.xlu0 %5338
    %5340 = vrot.lane.b32.xlu0 %v5180, 64
    %v5341 = vpop.permute.xlu0 %5340
    %5342 = vrot.lane.b32.xlu0 %v5181, 64
    %v5343 = vpop.permute.xlu0 %5342
    %5344 = vrot.lane.b32.xlu0 %v5182, 64
    %v5345 = vpop.permute.xlu0 %5344
    %5346 = vrot.lane.b32.xlu0 %v5183, 64
    %v5347 = vpop.permute.xlu0 %5346
    %5348 = vrot.lane.b32.xlu0 %v5184, 64
    %v5349 = vpop.permute.xlu0 %5348
    %5350 = vrot.lane.b32.xlu0 %v5185, 64
    %v5351 = vpop.permute.xlu0 %5350
    %5352 = vrot.lane.b32.xlu0 %v5186, 64
    %v5353 = vpop.permute.xlu0 %5352
    %5354 = vrot.lane.b32.xlu0 %v5187, 64
    %v5355 = vpop.permute.xlu0 %5354
    %5356 = vrot.lane.b32.xlu0 %v5188, 64
    %v5357 = vpop.permute.xlu0 %5356
    %5358 = vrot.lane.b32.xlu0 %v5189, 64
    %v5359 = vpop.permute.xlu0 %5358
    %5360 = vrot.lane.b32.xlu0 %v5190, 64
    %v5361 = vpop.permute.xlu0 %5360
    %5362 = vrot.lane.b32.xlu0 %v5191, 64
    %v5363 = vpop.permute.xlu0 %5362
    %5364 = vrot.lane.b32.xlu0 %v5192, 64
    %v5365 = vpop.permute.xlu0 %5364
    %5366 = vrot.lane.b32.xlu0 %v5193, 64
    %v5367 = vpop.permute.xlu0 %5366
    %5368 = vrot.lane.b32.xlu0 %v5194, 64
    %v5369 = vpop.permute.xlu0 %5368
    %5370 = vrot.lane.b32.xlu0 %v5195, 64
    %v5371 = vpop.permute.xlu0 %5370
    %5398 = vrot.lane.b32.xlu0 %v5172, 96
    %v5399 = vpop.permute.xlu0 %5398
    %5400 = vrot.lane.b32.xlu0 %v5173, 96
    %v5401 = vpop.permute.xlu0 %5400
    %5402 = vrot.lane.b32.xlu0 %v5174, 96
    %v5403 = vpop.permute.xlu0 %5402
    %5404 = vrot.lane.b32.xlu0 %v5175, 96
    %v5405 = vpop.permute.xlu0 %5404
    %5406 = vrot.lane.b32.xlu0 %v5176, 96
    %v5407 = vpop.permute.xlu0 %5406
    %5408 = vrot.lane.b32.xlu0 %v5177, 96
    %v5409 = vpop.permute.xlu0 %5408
    %5410 = vrot.lane.b32.xlu0 %v5178, 96
    %v5411 = vpop.permute.xlu0 %5410
    %5412 = vrot.lane.b32.xlu0 %v5179, 96
    %v5413 = vpop.permute.xlu0 %5412
    %5414 = vrot.lane.b32.xlu0 %v5180, 96
    %v5415 = vpop.permute.xlu0 %5414
    %5416 = vrot.lane.b32.xlu0 %v5181, 96
    %v5417 = vpop.permute.xlu0 %5416
    %5418 = vrot.lane.b32.xlu0 %v5182, 96
    %v5419 = vpop.permute.xlu0 %5418
    %5420 = vrot.lane.b32.xlu0 %v5183, 96
    %v5421 = vpop.permute.xlu0 %5420
    %5422 = vrot.lane.b32.xlu0 %v5184, 96
    %v5423 = vpop.permute.xlu0 %5422
    %5424 = vrot.lane.b32.xlu0 %v5185, 96
    %v5425 = vpop.permute.xlu0 %5424
    %5426 = vrot.lane.b32.xlu0 %v5186, 96
    %v5427 = vpop.permute.xlu0 %5426
    %5428 = vrot.lane.b32.xlu0 %v5187, 96
    %v5429 = vpop.permute.xlu0 %5428
    %5430 = vrot.lane.b32.xlu0 %v5188, 96
    %v5431 = vpop.permute.xlu0 %5430
    %5432 = vrot.lane.b32.xlu0 %v5189, 96
    %v5433 = vpop.permute.xlu0 %5432
    %5434 = vrot.lane.b32.xlu0 %v5190, 96
    %v5435 = vpop.permute.xlu0 %5434
    %5436 = vrot.lane.b32.xlu0 %v5191, 96
    %v5437 = vpop.permute.xlu0 %5436
    %5438 = vrot.lane.b32.xlu0 %v5192, 96
    %v5439 = vpop.permute.xlu0 %5438
    %5440 = vrot.lane.b32.xlu0 %v5193, 96
    %v5441 = vpop.permute.xlu0 %5440
    %5442 = vrot.lane.b32.xlu0 %v5194, 96
    %v5443 = vpop.permute.xlu0 %5442
    %5444 = vrot.lane.b32.xlu0 %v5195, 96
    %v5445 = vpop.permute.xlu0 %5444
    %5446 = vrot.lane.b32.xlu0 %v5196, 96
    %v5447 = vpop.permute.xlu0 %5446
    %v5473 = vsel %vm109, %v5121, %v5223
    %v5474 = vsel %vm109, %v5122, %v5225
    %v5475 = vsel %vm109, %v5123, %v5227
    %v5476 = vsel %vm109, %v5124, %v5229
    %v5477 = vsel %vm109, %v5125, %v5231
    %v5478 = vsel %vm109, %v5126, %v5233
    %v5479 = vsel %vm109, %v5127, %v5235
    %v5480 = vsel %vm109, %v5128, %v5237
    %v5481 = vsel %vm109, %v5129, %v5239
    %v5482 = vsel %vm109, %v5130, %v5241
    %v5483 = vsel %vm109, %v5131, %v5243
    %v5484 = vsel %vm109, %v5132, %v5245
    %v5485 = vsel %vm109, %v5133, %v5247
    %v5486 = vsel %vm109, %v5134, %v5249
    %v5487 = vsel %vm109, %v5135, %v5251
    %v5488 = vsel %vm109, %v5136, %v5253
    %v5489 = vsel %vm109, %v5137, %v5255
    %v5490 = vsel %vm109, %v5138, %v5257
    %v5491 = vsel %vm109, %v5139, %v5259
    %v5492 = vsel %vm109, %v5140, %v5261
    %v5493 = vsel %vm109, %v5141, %v5263
    %v5494 = vsel %vm109, %v5142, %v5265
    %v5495 = vsel %vm109, %v5143, %v5267
    %v5496 = vsel %vm109, %v5144, %v5269
    %v5497 = vsel %vm109, %v5145, %v5271
    %v5498 = vsel %vm1156, %v5473, %v5323
    %v5499 = vsel %vm1156, %v5474, %v5325
    %v5500 = vsel %vm1156, %v5475, %v5327
    %v5501 = vsel %vm1156, %v5476, %v5329
    %v5502 = vsel %vm1156, %v5477, %v5331
    %v5503 = vsel %vm1156, %v5478, %v5333
    %v5504 = vsel %vm1156, %v5479, %v5335
    %v5505 = vsel %vm1156, %v5480, %v5337
    %v5506 = vsel %vm1156, %v5481, %v5339
    %v5507 = vsel %vm1156, %v5482, %v5341
    %v5508 = vsel %vm1156, %v5483, %v5343
    %v5509 = vsel %vm1156, %v5484, %v5345
    %v5510 = vsel %vm1156, %v5485, %v5347
    %v5511 = vsel %vm1156, %v5486, %v5349
    %v5512 = vsel %vm1156, %v5487, %v5351
    %v5513 = vsel %vm1156, %v5488, %v5353
    %v5514 = vsel %vm1156, %v5489, %v5355
    %v5515 = vsel %vm1156, %v5490, %v5357
    %v5516 = vsel %vm1156, %v5491, %v5359
    %v5517 = vsel %vm1156, %v5492, %v5361
    %v5518 = vsel %vm1156, %v5493, %v5363
    %v5519 = vsel %vm1156, %v5494, %v5365
    %v5520 = vsel %vm1156, %v5495, %v5367
    %v5521 = vsel %vm1156, %v5496, %v5369
    %v5522 = vsel %vm1156, %v5497, %v5371
    %v5523 = vsel %vm1182, %v5498, %v5399
    %v5524 = vsel %vm1182, %v5499, %v5401
    %v5525 = vsel %vm1182, %v5500, %v5403
    %v5526 = vsel %vm1182, %v5501, %v5405
    %v5527 = vsel %vm1182, %v5502, %v5407
    %v5528 = vsel %vm1182, %v5503, %v5409
    %v5529 = vsel %vm1182, %v5504, %v5411
    %v5530 = vsel %vm1182, %v5505, %v5413
    %v5531 = vsel %vm1182, %v5506, %v5415
    %v5532 = vsel %vm1182, %v5507, %v5417
    %v5533 = vsel %vm1182, %v5508, %v5419
    %v5534 = vsel %vm1182, %v5509, %v5421
    %v5535 = vsel %vm1182, %v5510, %v5423
    %v5536 = vsel %vm1182, %v5511, %v5425
    %v5537 = vsel %vm1182, %v5512, %v5427
    %v5538 = vsel %vm1182, %v5513, %v5429
    %v5539 = vsel %vm1182, %v5514, %v5431
    %v5540 = vsel %vm1182, %v5515, %v5433
    %v5541 = vsel %vm1182, %v5516, %v5435
    %v5542 = vsel %vm1182, %v5517, %v5437
    %v5543 = vsel %vm1182, %v5518, %v5439
    %v5544 = vsel %vm1182, %v5519, %v5441
    %v5545 = vsel %vm1182, %v5520, %v5443
    %v5546 = vsel %vm1182, %v5521, %v5445
    %v5547 = vsel %vm1182, %v5522, %v5447
    %v5548 = vpack.c.bf16 %v5524, %v5523
    %v5549 = vpack.c.bf16 %v5526, %v5525
    %v5550 = vpack.c.bf16 %v5528, %v5527
    %v5551 = vpack.c.bf16 %v5530, %v5529
    %v5552 = vpack.c.bf16 %v5532, %v5531
    %v5553 = vpack.c.bf16 %v5534, %v5533
    %v5554 = vpack.c.bf16 %v5536, %v5535
    %v5555 = vpack.c.bf16 %v5538, %v5537
    %v5556 = vpack.c.bf16 %v5540, %v5539
    %v5557 = vpack.c.bf16 %v5542, %v5541
    %v5558 = vpack.c.bf16 %v5544, %v5543
    %v5559 = vpack.c.bf16 %v5546, %v5545
    %v5560 = vpack.c.bf16 %v5547, %v5547
    %v5574 = vunpack.c.l.b16 %v5548
    %v5575 = vunpack.c.h.b16 %v5548
    %v5576 = vunpack.c.l.b16 %v5549
    %v5577 = vunpack.c.h.b16 %v5549
    %v5578 = vunpack.c.l.b16 %v5550
    %v5579 = vunpack.c.h.b16 %v5550
    %v5580 = vunpack.c.l.b16 %v5551
    %v5581 = vunpack.c.h.b16 %v5551
    %v5582 = vunpack.c.l.b16 %v5552
    %v5583 = vunpack.c.h.b16 %v5552
    %v5584 = vunpack.c.l.b16 %v5553
    %v5585 = vunpack.c.h.b16 %v5553
    %v5586 = vunpack.c.l.b16 %v5554
    %v5587 = vunpack.c.h.b16 %v5554
    %v5588 = vunpack.c.l.b16 %v5555
    %v5589 = vunpack.c.h.b16 %v5555
    %v5590 = vunpack.c.l.b16 %v5556
    %v5591 = vunpack.c.h.b16 %v5556
    %v5592 = vunpack.c.l.b16 %v5557
    %v5593 = vunpack.c.h.b16 %v5557
    %v5594 = vunpack.c.l.b16 %v5558
    %v5595 = vunpack.c.h.b16 %v5558
    %v5596 = vunpack.c.l.b16 %v5559
    %v5597 = vunpack.c.h.b16 %v5559
    %v5598 = vunpack.c.l.b16 %v5560
    %v5599 = vpack.c.b16 %v5574, %v5574
    %v5600 = vpack.c.b16 %v5575, %v5575
    %v5601 = vpack.c.b16 %v5576, %v5576
    %v5602 = vpack.c.b16 %v5577, %v5577
    %v5603 = vpack.c.b16 %v5578, %v5578
    %v5604 = vpack.c.b16 %v5579, %v5579
    %v5605 = vpack.c.b16 %v5580, %v5580
    %v5606 = vpack.c.b16 %v5581, %v5581
    %v5607 = vpack.c.b16 %v5582, %v5582
    %v5608 = vpack.c.b16 %v5583, %v5583
    %v5609 = vpack.c.b16 %v5584, %v5584
    %v5610 = vpack.c.b16 %v5585, %v5585
    %v5611 = vpack.c.b16 %v5586, %v5586
    %v5612 = vpack.c.b16 %v5587, %v5587
    %v5613 = vpack.c.b16 %v5588, %v5588
    %v5614 = vpack.c.b16 %v5589, %v5589
    %v5615 = vpack.c.b16 %v5590, %v5590
    %v5616 = vpack.c.b16 %v5591, %v5591
    %v5617 = vpack.c.b16 %v5592, %v5592
    %v5618 = vpack.c.b16 %v5593, %v5593
    %v5619 = vpack.c.b16 %v5594, %v5594
    %v5620 = vpack.c.b16 %v5595, %v5595
    %v5621 = vpack.c.b16 %v5596, %v5596
    %v5622 = vpack.c.b16 %v5597, %v5597
    %v5623 = vpack.c.b16 %v5598, %v5598
    %5649 = vst [vmem:[#allocation3] sm:$0xf] %v5599
    %5650 = vst [vmem:[#allocation3 + $0xc] sm:$0xf] %v5600
    %5651 = vst [vmem:[#allocation3 + $0x18] sm:$0xf] %v5601
    %5652 = vst [vmem:[#allocation3 + $0x24] sm:$0xf] %v5602
    %5653 = vst [vmem:[#allocation3 + $0x30] sm:$0xf] %v5603
    %5654 = vst [vmem:[#allocation3 + $0x3c] sm:$0xf] %v5604
    %5655 = vst [vmem:[#allocation3 + $0x48] sm:$0xf] %v5605
    %5656 = vst [vmem:[#allocation3 + $0x54] sm:$0xf] %v5606
    %5657 = vst [vmem:[#allocation3 + $0x60] sm:$0xf] %v5607
    %5658 = vst [vmem:[#allocation3 + $0x6c] sm:$0xf] %v5608
    %5659 = vst [vmem:[#allocation3 + $0x78] sm:$0xf] %v5609
    %5660 = vst [vmem:[#allocation3 + $0x84] sm:$0xf] %v5610
    %5661 = vst [vmem:[#allocation3 + $0x90] sm:$0xf] %v5611
    %5662 = vst [vmem:[#allocation3 + $0x9c] sm:$0xf] %v5612
    %5663 = vst [vmem:[#allocation3 + $0xa8] sm:$0xf] %v5613
    %5664 = vst [vmem:[#allocation3 + $0xb4] sm:$0xf] %v5614
    %5665 = vst [vmem:[#allocation3 + $0xc0] sm:$0xf] %v5615
    %5666 = vst [vmem:[#allocation3 + $0xcc] sm:$0xf] %v5616
    %5667 = vst [vmem:[#allocation3 + $0xd8] sm:$0xf] %v5617
    %5668 = vst [vmem:[#allocation3 + $0xe4] sm:$0xf] %v5618
    %5669 = vst [vmem:[#allocation3 + $0xf0] sm:$0xf] %v5619
    %5670 = vst [vmem:[#allocation3 + $0xfc] sm:$0xf] %v5620
    %5671 = vst [vmem:[#allocation3 + $0x108] sm:$0xf] %v5621
    %5672 = vst [vmem:[#allocation3 + $0x114] sm:$0xf] %v5622
    %5673 = vst [vmem:[#allocation3 + $0x120] sm:$0xf] %v5623
    %v5674 = vld [vmem:[#allocation2 + $0x10] sm:$0xff]
    %v5675 = vld [vmem:[#allocation2 + $0x18] sm:$0xff]
    %v5676 = vld [vmem:[#allocation2 + $0x20] sm:$0xff]
    %v5677 = vld [vmem:[#allocation2 + $0x28] sm:$0xff]
    %v5678 = vld [vmem:[#allocation2 + $0x30] sm:$0xff]
    %v5679 = vld [vmem:[#allocation2 + $0x38] sm:$0xff]
    %v5680 = vld [vmem:[#allocation2 + $0x40] sm:$0xff]
    %v5681 = vld [vmem:[#allocation2 + $0x48] sm:$0xff]
    %v5682 = vld [vmem:[#allocation2 + $0x50] sm:$0xff]
    %v5683 = vld [vmem:[#allocation2 + $0x58] sm:$0xff]
    %v5684 = vld [vmem:[#allocation2 + $0x60] sm:$0xff]
    %v5685 = vld [vmem:[#allocation2 + $0x68] sm:$0xff]
    %v5686 = vld [vmem:[#allocation2 + $0x70] sm:$0xff]
    %v5687 = vld [vmem:[#allocation2 + $0x78] sm:$0xff]
    %v5688 = vld [vmem:[#allocation2 + $0x80] sm:$0xff]
    %v5689 = vld [vmem:[#allocation2 + $0x88] sm:$0xff]
    %v5690 = vld [vmem:[#allocation2 + $0x90] sm:$0xff]
    %v5691 = vld [vmem:[#allocation2 + $0x98] sm:$0xff]
    %v5692 = vld [vmem:[#allocation2 + $0xa0] sm:$0xff]
    %v5693 = vld [vmem:[#allocation2 + $0xa8] sm:$0xff]
    %v5694 = vld [vmem:[#allocation2 + $0xb0] sm:$0xff]
    %v5695 = vld [vmem:[#allocation2 + $0xb8] sm:$0xff]
    %v5696 = vld [vmem:[#allocation2 + $0xc0] sm:$0xff]
    %v5697 = vld [vmem:[#allocation2 + $0xc8] sm:$0xff]
    %v5698 = vld [vmem:[#allocation2 + $0xd0] sm:$0xff]
    %v5699 = vld [vmem:[#allocation2 + $0x11] sm:$0xff]
    %v5700 = vld [vmem:[#allocation2 + $0x19] sm:$0xff]
    %v5701 = vld [vmem:[#allocation2 + $0x21] sm:$0xff]
    %v5702 = vld [vmem:[#allocation2 + $0x29] sm:$0xff]
    %v5703 = vld [vmem:[#allocation2 + $0x31] sm:$0xff]
    %v5704 = vld [vmem:[#allocation2 + $0x39] sm:$0xff]
    %v5705 = vld [vmem:[#allocation2 + $0x41] sm:$0xff]
    %v5706 = vld [vmem:[#allocation2 + $0x49] sm:$0xff]
    %v5707 = vld [vmem:[#allocation2 + $0x51] sm:$0xff]
    %v5708 = vld [vmem:[#allocation2 + $0x59] sm:$0xff]
    %v5709 = vld [vmem:[#allocation2 + $0x61] sm:$0xff]
    %v5710 = vld [vmem:[#allocation2 + $0x69] sm:$0xff]
    %v5711 = vld [vmem:[#allocation2 + $0x71] sm:$0xff]
    %v5712 = vld [vmem:[#allocation2 + $0x79] sm:$0xff]
    %v5713 = vld [vmem:[#allocation2 + $0x81] sm:$0xff]
    %v5714 = vld [vmem:[#allocation2 + $0x89] sm:$0xff]
    %v5715 = vld [vmem:[#allocation2 + $0x91] sm:$0xff]
    %v5716 = vld [vmem:[#allocation2 + $0x99] sm:$0xff]
    %v5717 = vld [vmem:[#allocation2 + $0xa1] sm:$0xff]
    %v5718 = vld [vmem:[#allocation2 + $0xa9] sm:$0xff]
    %v5719 = vld [vmem:[#allocation2 + $0xb1] sm:$0xff]
    %v5720 = vld [vmem:[#allocation2 + $0xb9] sm:$0xff]
    %v5721 = vld [vmem:[#allocation2 + $0xc1] sm:$0xff]
    %v5722 = vld [vmem:[#allocation2 + $0xc9] sm:$0xff]
    %v5723 = vld [vmem:[#allocation2 + $0xd1] sm:$0xff]
    %v5724 = vld [vmem:[#allocation2 + $0xd9] sm:$0xff]
    %v5725 = vld [vmem:[#allocation2 + $0x1a] sm:$0xff]
    %v5726 = vld [vmem:[#allocation2 + $0x22] sm:$0xff]
    %v5727 = vld [vmem:[#allocation2 + $0x2a] sm:$0xff]
    %v5728 = vld [vmem:[#allocation2 + $0x32] sm:$0xff]
    %v5729 = vld [vmem:[#allocation2 + $0x3a] sm:$0xff]
    %v5730 = vld [vmem:[#allocation2 + $0x42] sm:$0xff]
    %v5731 = vld [vmem:[#allocation2 + $0x4a] sm:$0xff]
    %v5732 = vld [vmem:[#allocation2 + $0x52] sm:$0xff]
    %v5733 = vld [vmem:[#allocation2 + $0x5a] sm:$0xff]
    %v5734 = vld [vmem:[#allocation2 + $0x62] sm:$0xff]
    %v5735 = vld [vmem:[#allocation2 + $0x6a] sm:$0xff]
    %v5736 = vld [vmem:[#allocation2 + $0x72] sm:$0xff]
    %v5737 = vld [vmem:[#allocation2 + $0x7a] sm:$0xff]
    %v5738 = vld [vmem:[#allocation2 + $0x82] sm:$0xff]
    %v5739 = vld [vmem:[#allocation2 + $0x8a] sm:$0xff]
    %v5740 = vld [vmem:[#allocation2 + $0x92] sm:$0xff]
    %v5741 = vld [vmem:[#allocation2 + $0x9a] sm:$0xff]
    %v5742 = vld [vmem:[#allocation2 + $0xa2] sm:$0xff]
    %v5743 = vld [vmem:[#allocation2 + $0xaa] sm:$0xff]
    %v5744 = vld [vmem:[#allocation2 + $0xb2] sm:$0xff]
    %v5745 = vld [vmem:[#allocation2 + $0xba] sm:$0xff]
    %v5746 = vld [vmem:[#allocation2 + $0xc2] sm:$0xff]
    %v5747 = vld [vmem:[#allocation2 + $0xca] sm:$0xff]
    %v5748 = vld [vmem:[#allocation2 + $0xd2] sm:$0xff]
    %v5749 = vld [vmem:[#allocation2 + $0xda] sm:$0xff]
    %5775 = vrot.lane.b32.xlu0 %v5699, 32
    %v5776 = vpop.permute.xlu0 %5775
    %5777 = vrot.lane.b32.xlu0 %v5700, 32
    %v5778 = vpop.permute.xlu0 %5777
    %5779 = vrot.lane.b32.xlu0 %v5701, 32
    %v5780 = vpop.permute.xlu0 %5779
    %5781 = vrot.lane.b32.xlu0 %v5702, 32
    %v5782 = vpop.permute.xlu0 %5781
    %5783 = vrot.lane.b32.xlu0 %v5703, 32
    %v5784 = vpop.permute.xlu0 %5783
    %5785 = vrot.lane.b32.xlu0 %v5704, 32
    %v5786 = vpop.permute.xlu0 %5785
    %5787 = vrot.lane.b32.xlu0 %v5705, 32
    %v5788 = vpop.permute.xlu0 %5787
    %5789 = vrot.lane.b32.xlu0 %v5706, 32
    %v5790 = vpop.permute.xlu0 %5789
    %5791 = vrot.lane.b32.xlu0 %v5707, 32
    %v5792 = vpop.permute.xlu0 %5791
    %5793 = vrot.lane.b32.xlu0 %v5708, 32
    %v5794 = vpop.permute.xlu0 %5793
    %5795 = vrot.lane.b32.xlu0 %v5709, 32
    %v5796 = vpop.permute.xlu0 %5795
    %5797 = vrot.lane.b32.xlu0 %v5710, 32
    %v5798 = vpop.permute.xlu0 %5797
    %5799 = vrot.lane.b32.xlu0 %v5711, 32
    %v5800 = vpop.permute.xlu0 %5799
    %5801 = vrot.lane.b32.xlu0 %v5712, 32
    %v5802 = vpop.permute.xlu0 %5801
    %5803 = vrot.lane.b32.xlu0 %v5713, 32
    %v5804 = vpop.permute.xlu0 %5803
    %5805 = vrot.lane.b32.xlu0 %v5714, 32
    %v5806 = vpop.permute.xlu0 %5805
    %5807 = vrot.lane.b32.xlu0 %v5715, 32
    %v5808 = vpop.permute.xlu0 %5807
    %5809 = vrot.lane.b32.xlu0 %v5716, 32
    %v5810 = vpop.permute.xlu0 %5809
    %5811 = vrot.lane.b32.xlu0 %v5717, 32
    %v5812 = vpop.permute.xlu0 %5811
    %5813 = vrot.lane.b32.xlu0 %v5718, 32
    %v5814 = vpop.permute.xlu0 %5813
    %5815 = vrot.lane.b32.xlu0 %v5719, 32
    %v5816 = vpop.permute.xlu0 %5815
    %5817 = vrot.lane.b32.xlu0 %v5720, 32
    %v5818 = vpop.permute.xlu0 %5817
    %5819 = vrot.lane.b32.xlu0 %v5721, 32
    %v5820 = vpop.permute.xlu0 %5819
    %5821 = vrot.lane.b32.xlu0 %v5722, 32
    %v5822 = vpop.permute.xlu0 %5821
    %5823 = vrot.lane.b32.xlu0 %v5723, 32
    %v5824 = vpop.permute.xlu0 %5823
    %5851 = vrot.lane.b32.xlu0 %v5700, 64
    %v5852 = vpop.permute.xlu0 %5851
    %5853 = vrot.lane.b32.xlu0 %v5701, 64
    %v5854 = vpop.permute.xlu0 %5853
    %5855 = vrot.lane.b32.xlu0 %v5702, 64
    %v5856 = vpop.permute.xlu0 %5855
    %5857 = vrot.lane.b32.xlu0 %v5703, 64
    %v5858 = vpop.permute.xlu0 %5857
    %5859 = vrot.lane.b32.xlu0 %v5704, 64
    %v5860 = vpop.permute.xlu0 %5859
    %5861 = vrot.lane.b32.xlu0 %v5705, 64
    %v5862 = vpop.permute.xlu0 %5861
    %5863 = vrot.lane.b32.xlu0 %v5706, 64
    %v5864 = vpop.permute.xlu0 %5863
    %5865 = vrot.lane.b32.xlu0 %v5707, 64
    %v5866 = vpop.permute.xlu0 %5865
    %5867 = vrot.lane.b32.xlu0 %v5708, 64
    %v5868 = vpop.permute.xlu0 %5867
    %5869 = vrot.lane.b32.xlu0 %v5709, 64
    %v5870 = vpop.permute.xlu0 %5869
    %5871 = vrot.lane.b32.xlu0 %v5710, 64
    %v5872 = vpop.permute.xlu0 %5871
    %5873 = vrot.lane.b32.xlu0 %v5711, 64
    %v5874 = vpop.permute.xlu0 %5873
    %5875 = vrot.lane.b32.xlu0 %v5712, 64
    %v5876 = vpop.permute.xlu0 %5875
    %5877 = vrot.lane.b32.xlu0 %v5713, 64
    %v5878 = vpop.permute.xlu0 %5877
    %5879 = vrot.lane.b32.xlu0 %v5714, 64
    %v5880 = vpop.permute.xlu0 %5879
    %5881 = vrot.lane.b32.xlu0 %v5715, 64
    %v5882 = vpop.permute.xlu0 %5881
    %5883 = vrot.lane.b32.xlu0 %v5716, 64
    %v5884 = vpop.permute.xlu0 %5883
    %5885 = vrot.lane.b32.xlu0 %v5717, 64
    %v5886 = vpop.permute.xlu0 %5885
    %5887 = vrot.lane.b32.xlu0 %v5718, 64
    %v5888 = vpop.permute.xlu0 %5887
    %5889 = vrot.lane.b32.xlu0 %v5719, 64
    %v5890 = vpop.permute.xlu0 %5889
    %5891 = vrot.lane.b32.xlu0 %v5720, 64
    %v5892 = vpop.permute.xlu0 %5891
    %5893 = vrot.lane.b32.xlu0 %v5721, 64
    %v5894 = vpop.permute.xlu0 %5893
    %5895 = vrot.lane.b32.xlu0 %v5722, 64
    %v5896 = vpop.permute.xlu0 %5895
    %5897 = vrot.lane.b32.xlu0 %v5723, 64
    %v5898 = vpop.permute.xlu0 %5897
    %5899 = vrot.lane.b32.xlu0 %v5724, 64
    %v5900 = vpop.permute.xlu0 %5899
    %5951 = vrot.lane.b32.xlu0 %v5725, 96
    %v5952 = vpop.permute.xlu0 %5951
    %5953 = vrot.lane.b32.xlu0 %v5726, 96
    %v5954 = vpop.permute.xlu0 %5953
    %5955 = vrot.lane.b32.xlu0 %v5727, 96
    %v5956 = vpop.permute.xlu0 %5955
    %5957 = vrot.lane.b32.xlu0 %v5728, 96
    %v5958 = vpop.permute.xlu0 %5957
    %5959 = vrot.lane.b32.xlu0 %v5729, 96
    %v5960 = vpop.permute.xlu0 %5959
    %5961 = vrot.lane.b32.xlu0 %v5730, 96
    %v5962 = vpop.permute.xlu0 %5961
    %5963 = vrot.lane.b32.xlu0 %v5731, 96
    %v5964 = vpop.permute.xlu0 %5963
    %5965 = vrot.lane.b32.xlu0 %v5732, 96
    %v5966 = vpop.permute.xlu0 %5965
    %5967 = vrot.lane.b32.xlu0 %v5733, 96
    %v5968 = vpop.permute.xlu0 %5967
    %5969 = vrot.lane.b32.xlu0 %v5734, 96
    %v5970 = vpop.permute.xlu0 %5969
    %5971 = vrot.lane.b32.xlu0 %v5735, 96
    %v5972 = vpop.permute.xlu0 %5971
    %5973 = vrot.lane.b32.xlu0 %v5736, 96
    %v5974 = vpop.permute.xlu0 %5973
    %5975 = vrot.lane.b32.xlu0 %v5737, 96
    %v5976 = vpop.permute.xlu0 %5975
    %5977 = vrot.lane.b32.xlu0 %v5738, 96
    %v5978 = vpop.permute.xlu0 %5977
    %5979 = vrot.lane.b32.xlu0 %v5739, 96
    %v5980 = vpop.permute.xlu0 %5979
    %5981 = vrot.lane.b32.xlu0 %v5740, 96
    %v5982 = vpop.permute.xlu0 %5981
    %5983 = vrot.lane.b32.xlu0 %v5741, 96
    %v5984 = vpop.permute.xlu0 %5983
    %5985 = vrot.lane.b32.xlu0 %v5742, 96
    %v5986 = vpop.permute.xlu0 %5985
    %5987 = vrot.lane.b32.xlu0 %v5743, 96
    %v5988 = vpop.permute.xlu0 %5987
    %5989 = vrot.lane.b32.xlu0 %v5744, 96
    %v5990 = vpop.permute.xlu0 %5989
    %5991 = vrot.lane.b32.xlu0 %v5745, 96
    %v5992 = vpop.permute.xlu0 %5991
    %5993 = vrot.lane.b32.xlu0 %v5746, 96
    %v5994 = vpop.permute.xlu0 %5993
    %5995 = vrot.lane.b32.xlu0 %v5747, 96
    %v5996 = vpop.permute.xlu0 %5995
    %5997 = vrot.lane.b32.xlu0 %v5748, 96
    %v5998 = vpop.permute.xlu0 %5997
    %5999 = vrot.lane.b32.xlu0 %v5749, 96
    %v6000 = vpop.permute.xlu0 %5999
    %v6026 = vsel %vm109, %v5674, %v5776
    %v6027 = vsel %vm109, %v5675, %v5778
    %v6028 = vsel %vm109, %v5676, %v5780
    %v6029 = vsel %vm109, %v5677, %v5782
    %v6030 = vsel %vm109, %v5678, %v5784
    %v6031 = vsel %vm109, %v5679, %v5786
    %v6032 = vsel %vm109, %v5680, %v5788
    %v6033 = vsel %vm109, %v5681, %v5790
    %v6034 = vsel %vm109, %v5682, %v5792
    %v6035 = vsel %vm109, %v5683, %v5794
    %v6036 = vsel %vm109, %v5684, %v5796
    %v6037 = vsel %vm109, %v5685, %v5798
    %v6038 = vsel %vm109, %v5686, %v5800
    %v6039 = vsel %vm109, %v5687, %v5802
    %v6040 = vsel %vm109, %v5688, %v5804
    %v6041 = vsel %vm109, %v5689, %v5806
    %v6042 = vsel %vm109, %v5690, %v5808
    %v6043 = vsel %vm109, %v5691, %v5810
    %v6044 = vsel %vm109, %v5692, %v5812
    %v6045 = vsel %vm109, %v5693, %v5814
    %v6046 = vsel %vm109, %v5694, %v5816
    %v6047 = vsel %vm109, %v5695, %v5818
    %v6048 = vsel %vm109, %v5696, %v5820
    %v6049 = vsel %vm109, %v5697, %v5822
    %v6050 = vsel %vm109, %v5698, %v5824
    %v6051 = vsel %vm1156, %v6026, %v5852
    %v6052 = vsel %vm1156, %v6027, %v5854
    %v6053 = vsel %vm1156, %v6028, %v5856
    %v6054 = vsel %vm1156, %v6029, %v5858
    %v6055 = vsel %vm1156, %v6030, %v5860
    %v6056 = vsel %vm1156, %v6031, %v5862
    %v6057 = vsel %vm1156, %v6032, %v5864
    %v6058 = vsel %vm1156, %v6033, %v5866
    %v6059 = vsel %vm1156, %v6034, %v5868
    %v6060 = vsel %vm1156, %v6035, %v5870
    %v6061 = vsel %vm1156, %v6036, %v5872
    %v6062 = vsel %vm1156, %v6037, %v5874
    %v6063 = vsel %vm1156, %v6038, %v5876
    %v6064 = vsel %vm1156, %v6039, %v5878
    %v6065 = vsel %vm1156, %v6040, %v5880
    %v6066 = vsel %vm1156, %v6041, %v5882
    %v6067 = vsel %vm1156, %v6042, %v5884
    %v6068 = vsel %vm1156, %v6043, %v5886
    %v6069 = vsel %vm1156, %v6044, %v5888
    %v6070 = vsel %vm1156, %v6045, %v5890
    %v6071 = vsel %vm1156, %v6046, %v5892
    %v6072 = vsel %vm1156, %v6047, %v5894
    %v6073 = vsel %vm1156, %v6048, %v5896
    %v6074 = vsel %vm1156, %v6049, %v5898
    %v6075 = vsel %vm1156, %v6050, %v5900
    %v6076 = vsel %vm1182, %v6051, %v5952
    %v6077 = vsel %vm1182, %v6052, %v5954
    %v6078 = vsel %vm1182, %v6053, %v5956
    %v6079 = vsel %vm1182, %v6054, %v5958
    %v6080 = vsel %vm1182, %v6055, %v5960
    %v6081 = vsel %vm1182, %v6056, %v5962
    %v6082 = vsel %vm1182, %v6057, %v5964
    %v6083 = vsel %vm1182, %v6058, %v5966
    %v6084 = vsel %vm1182, %v6059, %v5968
    %v6085 = vsel %vm1182, %v6060, %v5970
    %v6086 = vsel %vm1182, %v6061, %v5972
    %v6087 = vsel %vm1182, %v6062, %v5974
    %v6088 = vsel %vm1182, %v6063, %v5976
    %v6089 = vsel %vm1182, %v6064, %v5978
    %v6090 = vsel %vm1182, %v6065, %v5980
    %v6091 = vsel %vm1182, %v6066, %v5982
    %v6092 = vsel %vm1182, %v6067, %v5984
    %v6093 = vsel %vm1182, %v6068, %v5986
    %v6094 = vsel %vm1182, %v6069, %v5988
    %v6095 = vsel %vm1182, %v6070, %v5990
    %v6096 = vsel %vm1182, %v6071, %v5992
    %v6097 = vsel %vm1182, %v6072, %v5994
    %v6098 = vsel %vm1182, %v6073, %v5996
    %v6099 = vsel %vm1182, %v6074, %v5998
    %v6100 = vsel %vm1182, %v6075, %v6000
    %v6101 = vpack.c.bf16 %v6077, %v6076
    %v6102 = vpack.c.bf16 %v6079, %v6078
    %v6103 = vpack.c.bf16 %v6081, %v6080
    %v6104 = vpack.c.bf16 %v6083, %v6082
    %v6105 = vpack.c.bf16 %v6085, %v6084
    %v6106 = vpack.c.bf16 %v6087, %v6086
    %v6107 = vpack.c.bf16 %v6089, %v6088
    %v6108 = vpack.c.bf16 %v6091, %v6090
    %v6109 = vpack.c.bf16 %v6093, %v6092
    %v6110 = vpack.c.bf16 %v6095, %v6094
    %v6111 = vpack.c.bf16 %v6097, %v6096
    %v6112 = vpack.c.bf16 %v6099, %v6098
    %v6113 = vpack.c.bf16 %v6100, %v6100
    %v6127 = vunpack.c.l.b16 %v6101
    %v6128 = vunpack.c.h.b16 %v6101
    %v6129 = vunpack.c.l.b16 %v6102
    %v6130 = vunpack.c.h.b16 %v6102
    %v6131 = vunpack.c.l.b16 %v6103
    %v6132 = vunpack.c.h.b16 %v6103
    %v6133 = vunpack.c.l.b16 %v6104
    %v6134 = vunpack.c.h.b16 %v6104
    %v6135 = vunpack.c.l.b16 %v6105
    %v6136 = vunpack.c.h.b16 %v6105
    %v6137 = vunpack.c.l.b16 %v6106
    %v6138 = vunpack.c.h.b16 %v6106
    %v6139 = vunpack.c.l.b16 %v6107
    %v6140 = vunpack.c.h.b16 %v6107
    %v6141 = vunpack.c.l.b16 %v6108
    %v6142 = vunpack.c.h.b16 %v6108
    %v6143 = vunpack.c.l.b16 %v6109
    %v6144 = vunpack.c.h.b16 %v6109
    %v6145 = vunpack.c.l.b16 %v6110
    %v6146 = vunpack.c.h.b16 %v6110
    %v6147 = vunpack.c.l.b16 %v6111
    %v6148 = vunpack.c.h.b16 %v6111
    %v6149 = vunpack.c.l.b16 %v6112
    %v6150 = vunpack.c.h.b16 %v6112
    %v6151 = vunpack.c.l.b16 %v6113
    %v6152 = vpack.c.b16 %v6127, %v6127
    %v6153 = vpack.c.b16 %v6128, %v6128
    %v6154 = vpack.c.b16 %v6129, %v6129
    %v6155 = vpack.c.b16 %v6130, %v6130
    %v6156 = vpack.c.b16 %v6131, %v6131
    %v6157 = vpack.c.b16 %v6132, %v6132
    %v6158 = vpack.c.b16 %v6133, %v6133
    %v6159 = vpack.c.b16 %v6134, %v6134
    %v6160 = vpack.c.b16 %v6135, %v6135
    %v6161 = vpack.c.b16 %v6136, %v6136
    %v6162 = vpack.c.b16 %v6137, %v6137
    %v6163 = vpack.c.b16 %v6138, %v6138
    %v6164 = vpack.c.b16 %v6139, %v6139
    %v6165 = vpack.c.b16 %v6140, %v6140
    %v6166 = vpack.c.b16 %v6141, %v6141
    %v6167 = vpack.c.b16 %v6142, %v6142
    %v6168 = vpack.c.b16 %v6143, %v6143
    %v6169 = vpack.c.b16 %v6144, %v6144
    %v6170 = vpack.c.b16 %v6145, %v6145
    %v6171 = vpack.c.b16 %v6146, %v6146
    %v6172 = vpack.c.b16 %v6147, %v6147
    %v6173 = vpack.c.b16 %v6148, %v6148
    %v6174 = vpack.c.b16 %v6149, %v6149
    %v6175 = vpack.c.b16 %v6150, %v6150
    %v6176 = vpack.c.b16 %v6151, %v6151
    %6202 = vst [vmem:[#allocation3 + $0x4] sm:$0xf] %v6152
    %6203 = vst [vmem:[#allocation3 + $0x10] sm:$0xf] %v6153
    %6204 = vst [vmem:[#allocation3 + $0x1c] sm:$0xf] %v6154
    %6205 = vst [vmem:[#allocation3 + $0x28] sm:$0xf] %v6155
    %6206 = vst [vmem:[#allocation3 + $0x34] sm:$0xf] %v6156
    %6207 = vst [vmem:[#allocation3 + $0x40] sm:$0xf] %v6157
    %6208 = vst [vmem:[#allocation3 + $0x4c] sm:$0xf] %v6158
    %6209 = vst [vmem:[#allocation3 + $0x58] sm:$0xf] %v6159
    %6210 = vst [vmem:[#allocation3 + $0x64] sm:$0xf] %v6160
    %6211 = vst [vmem:[#allocation3 + $0x70] sm:$0xf] %v6161
    %6212 = vst [vmem:[#allocation3 + $0x7c] sm:$0xf] %v6162
    %6213 = vst [vmem:[#allocation3 + $0x88] sm:$0xf] %v6163
    %6214 = vst [vmem:[#allocation3 + $0x94] sm:$0xf] %v6164
    %6215 = vst [vmem:[#allocation3 + $0xa0] sm:$0xf] %v6165
    %6216 = vst [vmem:[#allocation3 + $0xac] sm:$0xf] %v6166
    %6217 = vst [vmem:[#allocation3 + $0xb8] sm:$0xf] %v6167
    %6218 = vst [vmem:[#allocation3 + $0xc4] sm:$0xf] %v6168
    %6219 = vst [vmem:[#allocation3 + $0xd0] sm:$0xf] %v6169
    %6220 = vst [vmem:[#allocation3 + $0xdc] sm:$0xf] %v6170
    %6221 = vst [vmem:[#allocation3 + $0xe8] sm:$0xf] %v6171
    %6222 = vst [vmem:[#allocation3 + $0xf4] sm:$0xf] %v6172
    %6223 = vst [vmem:[#allocation3 + $0x100] sm:$0xf] %v6173
    %6224 = vst [vmem:[#allocation3 + $0x10c] sm:$0xf] %v6174
    %6225 = vst [vmem:[#allocation3 + $0x118] sm:$0xf] %v6175
    %6226 = vst [vmem:[#allocation3 + $0x124] sm:$0xf] %v6176
    %v6227 = vld [vmem:[#allocation2 + $0x1b] sm:$0xff]
    %v6228 = vld [vmem:[#allocation2 + $0x23] sm:$0xff]
    %v6229 = vld [vmem:[#allocation2 + $0x2b] sm:$0xff]
    %v6230 = vld [vmem:[#allocation2 + $0x33] sm:$0xff]
    %v6231 = vld [vmem:[#allocation2 + $0x3b] sm:$0xff]
    %v6232 = vld [vmem:[#allocation2 + $0x43] sm:$0xff]
    %v6233 = vld [vmem:[#allocation2 + $0x4b] sm:$0xff]
    %v6234 = vld [vmem:[#allocation2 + $0x53] sm:$0xff]
    %v6235 = vld [vmem:[#allocation2 + $0x5b] sm:$0xff]
    %v6236 = vld [vmem:[#allocation2 + $0x63] sm:$0xff]
    %v6237 = vld [vmem:[#allocation2 + $0x6b] sm:$0xff]
    %v6238 = vld [vmem:[#allocation2 + $0x73] sm:$0xff]
    %v6239 = vld [vmem:[#allocation2 + $0x7b] sm:$0xff]
    %v6240 = vld [vmem:[#allocation2 + $0x83] sm:$0xff]
    %v6241 = vld [vmem:[#allocation2 + $0x8b] sm:$0xff]
    %v6242 = vld [vmem:[#allocation2 + $0x93] sm:$0xff]
    %v6243 = vld [vmem:[#allocation2 + $0x9b] sm:$0xff]
    %v6244 = vld [vmem:[#allocation2 + $0xa3] sm:$0xff]
    %v6245 = vld [vmem:[#allocation2 + $0xab] sm:$0xff]
    %v6246 = vld [vmem:[#allocation2 + $0xb3] sm:$0xff]
    %v6247 = vld [vmem:[#allocation2 + $0xbb] sm:$0xff]
    %v6248 = vld [vmem:[#allocation2 + $0xc3] sm:$0xff]
    %v6249 = vld [vmem:[#allocation2 + $0xcb] sm:$0xff]
    %v6250 = vld [vmem:[#allocation2 + $0xd3] sm:$0xff]
    %v6251 = vld [vmem:[#allocation2 + $0xdb] sm:$0xff]
    %v6252 = vpack.c.bf16 %v6228, %v6227
    %v6253 = vpack.c.bf16 %v6230, %v6229
    %v6254 = vpack.c.bf16 %v6232, %v6231
    %v6255 = vpack.c.bf16 %v6234, %v6233
    %v6256 = vpack.c.bf16 %v6236, %v6235
    %v6257 = vpack.c.bf16 %v6238, %v6237
    %v6258 = vpack.c.bf16 %v6240, %v6239
    %v6259 = vpack.c.bf16 %v6242, %v6241
    %v6260 = vpack.c.bf16 %v6244, %v6243
    %v6261 = vpack.c.bf16 %v6246, %v6245
    %v6262 = vpack.c.bf16 %v6248, %v6247
    %v6263 = vpack.c.bf16 %v6250, %v6249
    %v6264 = vpack.c.bf16 %v6251, %v6251
    %v6278 = vunpack.c.l.b16 %v6252
    %v6279 = vunpack.c.h.b16 %v6252
    %v6280 = vunpack.c.l.b16 %v6253
    %v6281 = vunpack.c.h.b16 %v6253
    %v6282 = vunpack.c.l.b16 %v6254
    %v6283 = vunpack.c.h.b16 %v6254
    %v6284 = vunpack.c.l.b16 %v6255
    %v6285 = vunpack.c.h.b16 %v6255
    %v6286 = vunpack.c.l.b16 %v6256
    %v6287 = vunpack.c.h.b16 %v6256
    %v6288 = vunpack.c.l.b16 %v6257
    %v6289 = vunpack.c.h.b16 %v6257
    %v6290 = vunpack.c.l.b16 %v6258
    %v6291 = vunpack.c.h.b16 %v6258
    %v6292 = vunpack.c.l.b16 %v6259
    %v6293 = vunpack.c.h.b16 %v6259
    %v6294 = vunpack.c.l.b16 %v6260
    %v6295 = vunpack.c.h.b16 %v6260
    %v6296 = vunpack.c.l.b16 %v6261
    %v6297 = vunpack.c.h.b16 %v6261
    %v6298 = vunpack.c.l.b16 %v6262
    %v6299 = vunpack.c.h.b16 %v6262
    %v6300 = vunpack.c.l.b16 %v6263
    %v6301 = vunpack.c.h.b16 %v6263
    %v6302 = vunpack.c.l.b16 %v6264
    %v6303 = vpack.c.b16 %v6278, %v6278
    %v6304 = vpack.c.b16 %v6279, %v6279
    %v6305 = vpack.c.b16 %v6280, %v6280
    %v6306 = vpack.c.b16 %v6281, %v6281
    %v6307 = vpack.c.b16 %v6282, %v6282
    %v6308 = vpack.c.b16 %v6283, %v6283
    %v6309 = vpack.c.b16 %v6284, %v6284
    %v6310 = vpack.c.b16 %v6285, %v6285
    %v6311 = vpack.c.b16 %v6286, %v6286
    %v6312 = vpack.c.b16 %v6287, %v6287
    %v6313 = vpack.c.b16 %v6288, %v6288
    %v6314 = vpack.c.b16 %v6289, %v6289
    %v6315 = vpack.c.b16 %v6290, %v6290
    %v6316 = vpack.c.b16 %v6291, %v6291
    %v6317 = vpack.c.b16 %v6292, %v6292
    %v6318 = vpack.c.b16 %v6293, %v6293
    %v6319 = vpack.c.b16 %v6294, %v6294
    %v6320 = vpack.c.b16 %v6295, %v6295
    %v6321 = vpack.c.b16 %v6296, %v6296
    %v6322 = vpack.c.b16 %v6297, %v6297
    %v6323 = vpack.c.b16 %v6298, %v6298
    %v6324 = vpack.c.b16 %v6299, %v6299
    %v6325 = vpack.c.b16 %v6300, %v6300
    %v6326 = vpack.c.b16 %v6301, %v6301
    %v6327 = vpack.c.b16 %v6302, %v6302
    %6353 = vst.msk [vmem:[#allocation3 + $0x8] sm:$0xf] %vm2013, %v6303
    %6354 = vst.msk [vmem:[#allocation3 + $0x14] sm:$0xf] %vm2013, %v6304
    %6355 = vst.msk [vmem:[#allocation3 + $0x20] sm:$0xf] %vm2013, %v6305
    %6356 = vst.msk [vmem:[#allocation3 + $0x2c] sm:$0xf] %vm2013, %v6306
    %6357 = vst.msk [vmem:[#allocation3 + $0x38] sm:$0xf] %vm2013, %v6307
    %6358 = vst.msk [vmem:[#allocation3 + $0x44] sm:$0xf] %vm2013, %v6308
    %6359 = vst.msk [vmem:[#allocation3 + $0x50] sm:$0xf] %vm2013, %v6309
    %6360 = vst.msk [vmem:[#allocation3 + $0x5c] sm:$0xf] %vm2013, %v6310
    %6361 = vst.msk [vmem:[#allocation3 + $0x68] sm:$0xf] %vm2013, %v6311
    %6362 = vst.msk [vmem:[#allocation3 + $0x74] sm:$0xf] %vm2013, %v6312
    %6363 = vst.msk [vmem:[#allocation3 + $0x80] sm:$0xf] %vm2013, %v6313
    %6364 = vst.msk [vmem:[#allocation3 + $0x8c] sm:$0xf] %vm2013, %v6314
    %6365 = vst.msk [vmem:[#allocation3 + $0x98] sm:$0xf] %vm2013, %v6315
    %6366 = vst.msk [vmem:[#allocation3 + $0xa4] sm:$0xf] %vm2013, %v6316
    %6367 = vst.msk [vmem:[#allocation3 + $0xb0] sm:$0xf] %vm2013, %v6317
    %6368 = vst.msk [vmem:[#allocation3 + $0xbc] sm:$0xf] %vm2013, %v6318
    %6369 = vst.msk [vmem:[#allocation3 + $0xc8] sm:$0xf] %vm2013, %v6319
    %6370 = vst.msk [vmem:[#allocation3 + $0xd4] sm:$0xf] %vm2013, %v6320
    %6371 = vst.msk [vmem:[#allocation3 + $0xe0] sm:$0xf] %vm2013, %v6321
    %6372 = vst.msk [vmem:[#allocation3 + $0xec] sm:$0xf] %vm2013, %v6322
    %6373 = vst.msk [vmem:[#allocation3 + $0xf8] sm:$0xf] %vm2013, %v6323
    %6374 = vst.msk [vmem:[#allocation3 + $0x104] sm:$0xf] %vm2013, %v6324
    %6375 = vst.msk [vmem:[#allocation3 + $0x110] sm:$0xf] %vm2013, %v6325
    %6376 = vst.msk [vmem:[#allocation3 + $0x11c] sm:$0xf] %vm2013, %v6326
    %6377 = vst.msk [vmem:[#allocation3 + $0x128] sm:$0xf] %vm2013, %v6327
    %v6378 = vld [vmem:[#allocation3] sm:$0xff]
    %v6379 = vld [vmem:[#allocation3 + $0x8] sm:$0xf]
    %v6380 = vld [vmem:[#allocation3 + $0xc] sm:$0xff]
    %v6381 = vld [vmem:[#allocation3 + $0x14] sm:$0xf]
    %v6382 = vld [vmem:[#allocation3 + $0x18] sm:$0xff]
    %v6383 = vld [vmem:[#allocation3 + $0x20] sm:$0xf]
    %v6384 = vld [vmem:[#allocation3 + $0x24] sm:$0xff]
    %v6385 = vld [vmem:[#allocation3 + $0x2c] sm:$0xf]
    %v6386 = vld [vmem:[#allocation3 + $0x30] sm:$0xff]
    %v6387 = vld [vmem:[#allocation3 + $0x38] sm:$0xf]
    %v6388 = vld [vmem:[#allocation3 + $0x3c] sm:$0xff]
    %v6389 = vld [vmem:[#allocation3 + $0x44] sm:$0xf]
    %v6390 = vld [vmem:[#allocation3 + $0x48] sm:$0xff]
    %v6391 = vld [vmem:[#allocation3 + $0x50] sm:$0xf]
    %v6392 = vld [vmem:[#allocation3 + $0x54] sm:$0xff]
    %v6393 = vld [vmem:[#allocation3 + $0x5c] sm:$0xf]
    %v6394 = vld [vmem:[#allocation3 + $0x60] sm:$0xff]
    %v6395 = vld [vmem:[#allocation3 + $0x68] sm:$0xf]
    %v6396 = vld [vmem:[#allocation3 + $0x6c] sm:$0xff]
    %v6397 = vld [vmem:[#allocation3 + $0x74] sm:$0xf]
    %v6398 = vld [vmem:[#allocation3 + $0x78] sm:$0xff]
    %v6399 = vld [vmem:[#allocation3 + $0x80] sm:$0xf]
    %v6400 = vld [vmem:[#allocation3 + $0x84] sm:$0xff]
    %v6401 = vld [vmem:[#allocation3 + $0x8c] sm:$0xf]
    %v6402 = vld [vmem:[#allocation3 + $0x90] sm:$0xff]
    %v6403 = vld [vmem:[#allocation3 + $0x98] sm:$0xf]
    %v6404 = vld [vmem:[#allocation3 + $0x9c] sm:$0xff]
    %v6405 = vld [vmem:[#allocation3 + $0xa4] sm:$0xf]
    %v6406 = vld [vmem:[#allocation3 + $0xa8] sm:$0xff]
    %v6407 = vld [vmem:[#allocation3 + $0xb0] sm:$0xf]
    %v6408 = vld [vmem:[#allocation3 + $0xb4] sm:$0xff]
    %v6409 = vld [vmem:[#allocation3 + $0xbc] sm:$0xf]
    %v6410 = vld [vmem:[#allocation3 + $0xc0] sm:$0xff]
    %v6411 = vld [vmem:[#allocation3 + $0xc8] sm:$0xf]
    %v6412 = vld [vmem:[#allocation3 + $0xcc] sm:$0xff]
    %v6413 = vld [vmem:[#allocation3 + $0xd4] sm:$0xf]
    %v6414 = vld [vmem:[#allocation3 + $0xd8] sm:$0xff]
    %v6415 = vld [vmem:[#allocation3 + $0xe0] sm:$0xf]
    %v6416 = vld [vmem:[#allocation3 + $0xe4] sm:$0xff]
    %v6417 = vld [vmem:[#allocation3 + $0xec] sm:$0xf]
    %v6418 = vld [vmem:[#allocation3 + $0xf0] sm:$0xff]
    %v6419 = vld [vmem:[#allocation3 + $0xf8] sm:$0xf]
    %v6420 = vld [vmem:[#allocation3 + $0xfc] sm:$0xff]
    %v6421 = vld [vmem:[#allocation3 + $0x104] sm:$0xf]
    %v6422 = vld [vmem:[#allocation3 + $0x108] sm:$0xff]
    %v6423 = vld [vmem:[#allocation3 + $0x110] sm:$0xf]
    %v6424 = vld [vmem:[#allocation3 + $0x114] sm:$0xff]
    %v6425 = vld [vmem:[#allocation3 + $0x11c] sm:$0xf]
    %v6426 = vld [vmem:[#allocation3 + $0x120] sm:$0xff]
    %v6427 = vld [vmem:[#allocation3 + $0x128] sm:$0xf]
    %v6478 = vunpack.c.l.b16 %v6378
    %v6479 = vunpack.c.h.b16 %v6378
    %v6480 = vunpack.c.l.b16 %v6379
    %v6481 = vunpack.c.l.b16 %v6380
    %v6482 = vunpack.c.h.b16 %v6380
    %v6483 = vunpack.c.l.b16 %v6381
    %v6484 = vunpack.c.l.b16 %v6382
    %v6485 = vunpack.c.h.b16 %v6382
    %v6486 = vunpack.c.l.b16 %v6383
    %v6487 = vunpack.c.l.b16 %v6384
    %v6488 = vunpack.c.h.b16 %v6384
    %v6489 = vunpack.c.l.b16 %v6385
    %v6490 = vunpack.c.l.b16 %v6386
    %v6491 = vunpack.c.h.b16 %v6386
    %v6492 = vunpack.c.l.b16 %v6387
    %v6493 = vunpack.c.l.b16 %v6388
    %v6494 = vunpack.c.h.b16 %v6388
    %v6495 = vunpack.c.l.b16 %v6389
    %v6496 = vunpack.c.l.b16 %v6390
    %v6497 = vunpack.c.h.b16 %v6390
    %v6498 = vunpack.c.l.b16 %v6391
    %v6499 = vunpack.c.l.b16 %v6392
    %v6500 = vunpack.c.h.b16 %v6392
    %v6501 = vunpack.c.l.b16 %v6393
    %v6502 = vunpack.c.l.b16 %v6394
    %v6503 = vunpack.c.h.b16 %v6394
    %v6504 = vunpack.c.l.b16 %v6395
    %v6505 = vunpack.c.l.b16 %v6396
    %v6506 = vunpack.c.h.b16 %v6396
    %v6507 = vunpack.c.l.b16 %v6397
    %v6508 = vunpack.c.l.b16 %v6398
    %v6509 = vunpack.c.h.b16 %v6398
    %v6510 = vunpack.c.l.b16 %v6399
    %v6511 = vunpack.c.l.b16 %v6400
    %v6512 = vunpack.c.h.b16 %v6400
    %v6513 = vunpack.c.l.b16 %v6401
    %v6514 = vunpack.c.l.b16 %v6402
    %v6515 = vunpack.c.h.b16 %v6402
    %v6516 = vunpack.c.l.b16 %v6403
    %v6517 = vunpack.c.l.b16 %v6404
    %v6518 = vunpack.c.h.b16 %v6404
    %v6519 = vunpack.c.l.b16 %v6405
    %v6520 = vunpack.c.l.b16 %v6406
    %v6521 = vunpack.c.h.b16 %v6406
    %v6522 = vunpack.c.l.b16 %v6407
    %v6523 = vunpack.c.l.b16 %v6408
    %v6524 = vunpack.c.h.b16 %v6408
    %v6525 = vunpack.c.l.b16 %v6409
    %v6526 = vunpack.c.l.b16 %v6410
    %v6527 = vunpack.c.h.b16 %v6410
    %v6528 = vunpack.c.l.b16 %v6411
    %v6529 = vunpack.c.l.b16 %v6412
    %v6530 = vunpack.c.h.b16 %v6412
    %v6531 = vunpack.c.l.b16 %v6413
    %v6532 = vunpack.c.l.b16 %v6414
    %v6533 = vunpack.c.h.b16 %v6414
    %v6534 = vunpack.c.l.b16 %v6415
    %v6535 = vunpack.c.l.b16 %v6416
    %v6536 = vunpack.c.h.b16 %v6416
    %v6537 = vunpack.c.l.b16 %v6417
    %v6538 = vunpack.c.l.b16 %v6418
    %v6539 = vunpack.c.h.b16 %v6418
    %v6540 = vunpack.c.l.b16 %v6419
    %v6541 = vunpack.c.l.b16 %v6420
    %v6542 = vunpack.c.h.b16 %v6420
    %v6543 = vunpack.c.l.b16 %v6421
    %v6544 = vunpack.c.l.b16 %v6422
    %v6545 = vunpack.c.h.b16 %v6422
    %v6546 = vunpack.c.l.b16 %v6423
    %v6547 = vunpack.c.l.b16 %v6424
    %v6548 = vunpack.c.h.b16 %v6424
    %v6549 = vunpack.c.l.b16 %v6425
    %v6550 = vunpack.c.l.b16 %v6426
    %v6551 = vunpack.c.h.b16 %v6426
    %v6552 = vunpack.c.l.b16 %v6427
    %v6553 = vpack.c.b16 %v6481, %v6478
    %v6554 = vpack.c.b16 %v6482, %v6479
    %v6555 = vpack.c.b16 %v6483, %v6480
    %v6556 = vpack.c.b16 %v6487, %v6484
    %v6557 = vpack.c.b16 %v6488, %v6485
    %v6558 = vpack.c.b16 %v6489, %v6486
    %v6559 = vpack.c.b16 %v6493, %v6490
    %v6560 = vpack.c.b16 %v6494, %v6491
    %v6561 = vpack.c.b16 %v6495, %v6492
    %v6562 = vpack.c.b16 %v6499, %v6496
    %v6563 = vpack.c.b16 %v6500, %v6497
    %v6564 = vpack.c.b16 %v6501, %v6498
    %v6565 = vpack.c.b16 %v6505, %v6502
    %v6566 = vpack.c.b16 %v6506, %v6503
    %v6567 = vpack.c.b16 %v6507, %v6504
    %v6568 = vpack.c.b16 %v6511, %v6508
    %v6569 = vpack.c.b16 %v6512, %v6509
    %v6570 = vpack.c.b16 %v6513, %v6510
    %v6571 = vpack.c.b16 %v6517, %v6514
    %v6572 = vpack.c.b16 %v6518, %v6515
    %v6573 = vpack.c.b16 %v6519, %v6516
    %v6574 = vpack.c.b16 %v6523, %v6520
    %v6575 = vpack.c.b16 %v6524, %v6521
    %v6576 = vpack.c.b16 %v6525, %v6522
    %v6577 = vpack.c.b16 %v6529, %v6526
    %v6578 = vpack.c.b16 %v6530, %v6527
    %v6579 = vpack.c.b16 %v6531, %v6528
    %v6580 = vpack.c.b16 %v6535, %v6532
    %v6581 = vpack.c.b16 %v6536, %v6533
    %v6582 = vpack.c.b16 %v6537, %v6534
    %v6583 = vpack.c.b16 %v6541, %v6538
    %v6584 = vpack.c.b16 %v6542, %v6539
    %v6585 = vpack.c.b16 %v6543, %v6540
    %v6586 = vpack.c.b16 %v6547, %v6544
    %v6587 = vpack.c.b16 %v6548, %v6545
    %v6588 = vpack.c.b16 %v6549, %v6546
    %v6589 = vpack.c.b16 %v6550, %v6550
    %v6590 = vpack.c.b16 %v6551, %v6551
    %v6591 = vpack.c.b16 %v6552, %v6552
    %v6654 = vunpack.c.l.b16 %v5056
    %v6655 = vunpack.c.l.b16 %v5057
    %v6656 = vunpack.c.l.b16 %v5058
    %v6657 = vunpack.c.l.b16 %v5059
    %v6658 = vunpack.c.l.b16 %v5060
    %v6659 = vunpack.c.l.b16 %v5061
    %v6660 = vunpack.c.l.b16 %v5062
    %v6661 = vunpack.c.l.b16 %v5063
    %v6662 = vunpack.c.l.b16 %v5064
    %v6663 = vunpack.c.l.b16 %v5065
    %v6664 = vunpack.c.l.b16 %v5066
    %v6665 = vunpack.c.l.b16 %v5067
    %v6666 = vunpack.c.l.b16 %v5068
    %v6667 = vunpack.c.l.b16 %v5069
    %v6668 = vunpack.c.l.b16 %v5070
    %v6669 = vunpack.c.l.b16 %v5071
    %v6670 = vunpack.c.l.b16 %v5072
    %v6671 = vunpack.c.l.b16 %v5073
    %v6672 = vunpack.c.l.b16 %v5074
    %v6673 = vunpack.c.l.b16 %v5075
    %v6674 = vunpack.c.l.b16 %v5076
    %v6675 = vunpack.c.l.b16 %v5077
    %v6676 = vunpack.c.l.b16 %v5078
    %v6677 = vunpack.c.l.b16 %v5079
    %v6678 = vunpack.c.l.b16 %v5080
    %v6679 = vunpack.c.l.b16 %v5081
    %v6680 = vunpack.c.l.b16 %v5082
    %v6681 = vunpack.c.l.b16 %v5083
    %v6682 = vunpack.c.l.b16 %v5084
    %v6683 = vunpack.c.l.b16 %v5085
    %v6684 = vunpack.c.l.b16 %v5086
    %v6685 = vunpack.c.l.b16 %v5087
    %v6686 = vunpack.c.l.b16 %v5088
    %v6687 = vunpack.c.l.b16 %v5089
    %v6688 = vunpack.c.l.b16 %v5090
    %v6689 = vunpack.c.l.b16 %v5091
    %v6690 = vpack.c.b16 %v6655, %v6654
    %v6691 = vpack.c.b16 %v6657, %v6656
    %v6692 = vpack.c.b16 %v6659, %v6658
    %v6693 = vpack.c.b16 %v6661, %v6660
    %v6694 = vpack.c.b16 %v6663, %v6662
    %v6695 = vpack.c.b16 %v6665, %v6664
    %v6696 = vpack.c.b16 %v6667, %v6666
    %v6697 = vpack.c.b16 %v6669, %v6668
    %v6698 = vpack.c.b16 %v6671, %v6670
    %v6699 = vpack.c.b16 %v6673, %v6672
    %v6700 = vpack.c.b16 %v6675, %v6674
    %v6701 = vpack.c.b16 %v6677, %v6676
    %v6702 = vpack.c.b16 %v6679, %v6678
    %v6703 = vpack.c.b16 %v6681, %v6680
    %v6704 = vpack.c.b16 %v6683, %v6682
    %v6705 = vpack.c.b16 %v6685, %v6684
    %v6706 = vpack.c.b16 %v6687, %v6686
    %v6707 = vpack.c.b16 %v6689, %v6688
    %v6727 = vsel %vm109, %v6555, 0
    %v6730 = vsel %vm109, %v6558, 0
    %v6733 = vsel %vm109, %v6561, 0
    %v6736 = vsel %vm109, %v6564, 0
    %v6739 = vsel %vm109, %v6567, 0
    %v6742 = vsel %vm109, %v6570, 0
    %v6745 = vsel %vm109, %v6573, 0
    %v6748 = vsel %vm109, %v6576, 0
    %v6751 = vsel %vm109, %v6579, 0
    %v6754 = vsel %vm109, %v6582, 0
    %v6757 = vsel %vm109, %v6585, 0
    %v6760 = vsel %vm109, %v6588, 0
    %v6763 = vsel %vm109, %v6591, 0
    %6765 = vmatprep.subr.bf16.mxu0 0
    %6766 = vmatpush1.bf16.msra.mxu0 %v6697
    %6767 = vmatprep.subr.bf16.mxu0 0
    %6768 = vmatpush1.bf16.msra.mxu0 %v6696
    %6769 = vmatprep.subr.bf16.mxu0 0
    %6770 = vmatpush1.bf16.msra.mxu0 %v6695
    %6771 = vmatprep.subr.bf16.mxu0 0
    %6772 = vmatpush1.bf16.msra.mxu0 %v6694
    %6773 = vmatprep.subr.bf16.mxu0 0
    %6774 = vmatpush1.bf16.msra.mxu0 %v6693
    %6775 = vmatprep.subr.bf16.mxu0 0
    %6776 = vmatpush1.bf16.msra.mxu0 %v6692
    %6777 = vmatprep.subr.bf16.mxu0 0
    %6778 = vmatpush1.bf16.msra.mxu0 %v6691
    %6779 = vmatprep.subr.bf16.mxu0 0
    %6780 = vmatpush1.bf16.msra.mxu0 %v6690
    %6781 = vmatprep.subr.bf16.mxu0 0
    %6782 = vmatpush2.bf16.msra.mxu0 %v6705
    %6783 = vmatprep.subr.bf16.mxu0 0
    %6784 = vmatpush2.bf16.msra.mxu0 %v6704
    %6785 = vmatprep.subr.bf16.mxu0 0
    %6786 = vmatpush2.bf16.msra.mxu0 %v6703
    %6787 = vmatprep.subr.bf16.mxu0 0
    %6788 = vmatpush2.bf16.msra.mxu0 %v6702
    %6789 = vmatprep.subr.bf16.mxu0 0
    %6790 = vmatpush2.bf16.msra.mxu0 %v6701
    %6791 = vmatprep.subr.bf16.mxu0 0
    %6792 = vmatpush2.bf16.msra.mxu0 %v6700
    %6793 = vmatprep.subr.bf16.mxu0 0
    %6794 = vmatpush2.bf16.msra.mxu0 %v6699
    %6795 = vmatprep.subr.bf16.mxu0 0
    %6796 = vmatpush2.bf16.msra.mxu0 %v6698
    %6797 = vmatprep.mubr.bf16.mxu0 %v6554
    %6798 = vmatmul.mubr.bf16.gmra.mxu0 %v6553
    %v6799 = vpop.f32.mrf.mxu0
    %v6800 = vadd.f32 0.0, %v6799
    %v6801 = vpop.f32.mrf.mxu0
    %v6802 = vpop.f32.mrf.mxu0
    %v6803 = vadd.f32 0.0, %v6802
    %v6804 = vpop.f32.mrf.mxu0
    %6805 = vmatprep.mubr.bf16.mxu0 %v6557
    %6806 = vmatmul.mubr.bf16.gmra.mxu0 %v6556
    %v6807 = vpop.f32.mrf.mxu0
    %v6808 = vadd.f32 0.0, %v6807
    %v6809 = vpop.f32.mrf.mxu0
    %v6810 = vpop.f32.mrf.mxu0
    %v6811 = vadd.f32 0.0, %v6810
    %v6812 = vpop.f32.mrf.mxu0
    %6813 = vmatprep.mubr.bf16.mxu0 %v6560
    %6814 = vmatmul.mubr.bf16.gmra.mxu0 %v6559
    %v6815 = vpop.f32.mrf.mxu0
    %v6816 = vadd.f32 0.0, %v6815
    %v6817 = vpop.f32.mrf.mxu0
    %v6818 = vpop.f32.mrf.mxu0
    %v6819 = vadd.f32 0.0, %v6818
    %v6820 = vpop.f32.mrf.mxu0
    %6821 = vmatprep.mubr.bf16.mxu0 %v6563
    %6822 = vmatmul.mubr.bf16.gmra.mxu0 %v6562
    %v6823 = vpop.f32.mrf.mxu0
    %v6824 = vadd.f32 0.0, %v6823
    %v6825 = vpop.f32.mrf.mxu0
    %v6826 = vpop.f32.mrf.mxu0
    %v6827 = vadd.f32 0.0, %v6826
    %v6828 = vpop.f32.mrf.mxu0
    %6829 = vmatprep.mubr.bf16.mxu0 %v6566
    %6830 = vmatmul.mubr.bf16.gmra.mxu0 %v6565
    %v6831 = vpop.f32.mrf.mxu0
    %v6832 = vadd.f32 0.0, %v6831
    %v6833 = vpop.f32.mrf.mxu0
    %v6834 = vpop.f32.mrf.mxu0
    %v6835 = vadd.f32 0.0, %v6834
    %v6836 = vpop.f32.mrf.mxu0
    %6837 = vmatprep.mubr.bf16.mxu0 %v6569
    %6838 = vmatmul.mubr.bf16.gmra.mxu0 %v6568
    %v6839 = vpop.f32.mrf.mxu0
    %v6840 = vadd.f32 0.0, %v6839
    %v6841 = vpop.f32.mrf.mxu0
    %v6842 = vpop.f32.mrf.mxu0
    %v6843 = vadd.f32 0.0, %v6842
    %v6844 = vpop.f32.mrf.mxu0
    %6845 = vmatprep.mubr.bf16.mxu0 %v6572
    %6846 = vmatmul.mubr.bf16.gmra.mxu0 %v6571
    %v6847 = vpop.f32.mrf.mxu0
    %v6848 = vadd.f32 0.0, %v6847
    %v6849 = vpop.f32.mrf.mxu0
    %v6850 = vpop.f32.mrf.mxu0
    %v6851 = vadd.f32 0.0, %v6850
    %v6852 = vpop.f32.mrf.mxu0
    %6853 = vmatprep.mubr.bf16.mxu0 %v6575
    %6854 = vmatmul.mubr.bf16.gmra.mxu0 %v6574
    %v6855 = vpop.f32.mrf.mxu0
    %v6856 = vadd.f32 0.0, %v6855
    %v6857 = vpop.f32.mrf.mxu0
    %v6858 = vpop.f32.mrf.mxu0
    %v6859 = vadd.f32 0.0, %v6858
    %v6860 = vpop.f32.mrf.mxu0
    %6861 = vmatprep.mubr.bf16.mxu0 %v6578
    %6862 = vmatmul.mubr.bf16.gmra.mxu0 %v6577
    %v6863 = vpop.f32.mrf.mxu0
    %v6864 = vadd.f32 0.0, %v6863
    %v6865 = vpop.f32.mrf.mxu0
    %v6866 = vpop.f32.mrf.mxu0
    %v6867 = vadd.f32 0.0, %v6866
    %v6868 = vpop.f32.mrf.mxu0
    %6869 = vmatprep.mubr.bf16.mxu0 %v6581
    %6870 = vmatmul.mubr.bf16.gmra.mxu0 %v6580
    %v6871 = vpop.f32.mrf.mxu0
    %v6872 = vadd.f32 0.0, %v6871
    %v6873 = vpop.f32.mrf.mxu0
    %v6874 = vpop.f32.mrf.mxu0
    %v6875 = vadd.f32 0.0, %v6874
    %v6876 = vpop.f32.mrf.mxu0
    %6877 = vmatprep.mubr.bf16.mxu0 %v6584
    %6878 = vmatmul.mubr.bf16.gmra.mxu0 %v6583
    %v6879 = vpop.f32.mrf.mxu0
    %v6880 = vadd.f32 0.0, %v6879
    %v6881 = vpop.f32.mrf.mxu0
    %v6882 = vpop.f32.mrf.mxu0
    %v6883 = vadd.f32 0.0, %v6882
    %v6884 = vpop.f32.mrf.mxu0
    %6885 = vmatprep.mubr.bf16.mxu0 %v6587
    %6886 = vmatmul.mubr.bf16.gmra.mxu0 %v6586
    %v6887 = vpop.f32.mrf.mxu0
    %v6888 = vadd.f32 0.0, %v6887
    %v6889 = vpop.f32.mrf.mxu0
    %v6890 = vpop.f32.mrf.mxu0
    %v6891 = vadd.f32 0.0, %v6890
    %v6892 = vpop.f32.mrf.mxu0
    %6893 = vmatprep.mubr.bf16.mxu0 %v6590
    %6894 = vmatmul.mubr.bf16.gmra.mxu0 %v6589
    %v6895 = vpop.f32.mrf.mxu0
    %v6896 = vadd.f32 0.0, %v6895
    %v6897 = vpop.f32.mrf.mxu0
    %v6898 = vpop.f32.mrf.mxu0
    %v6899 = vpop.f32.mrf.mxu0
    %6900 = vdwg.mxu0
    %6901 = vmatprep.subr.bf16.mxu0 0
    %6902 = vmatpush1.bf16.msra.mxu0 0
    %6903 = vmatprep.subr.bf16.mxu0 0
    %6904 = vmatpush1.bf16.msra.mxu0 0
    %6905 = vmatprep.subr.bf16.mxu0 0
    %6906 = vmatpush1.bf16.msra.mxu0 0
    %6907 = vmatprep.subr.bf16.mxu0 0
    %6908 = vmatpush1.bf16.msra.mxu0 0
    %6909 = vmatprep.subr.bf16.mxu0 0
    %6910 = vmatpush1.bf16.msra.mxu0 0
    %6911 = vmatprep.subr.bf16.mxu0 0
    %6912 = vmatpush1.bf16.msra.mxu0 0
    %6913 = vmatprep.subr.bf16.mxu0 0
    %6914 = vmatpush1.bf16.msra.mxu0 %v6707
    %6915 = vmatprep.subr.bf16.mxu0 0
    %6916 = vmatpush1.bf16.msra.mxu0 %v6706
    %6917 = vmatprep.subr.bf16.mxu0 0
    %6918 = vmatpush2.bf16.msra.mxu0 0
    %6919 = vmatprep.subr.bf16.mxu0 0
    %6920 = vmatpush2.bf16.msra.mxu0 0
    %6921 = vmatprep.subr.bf16.mxu0 0
    %6922 = vmatpush2.bf16.msra.mxu0 0
    %6923 = vmatprep.subr.bf16.mxu0 0
    %6924 = vmatpush2.bf16.msra.mxu0 0
    %6925 = vmatprep.subr.bf16.mxu0 0
    %6926 = vmatpush2.bf16.msra.mxu0 0
    %6927 = vmatprep.subr.bf16.mxu0 0
    %6928 = vmatpush2.bf16.msra.mxu0 0
    %6929 = vmatprep.subr.bf16.mxu0 0
    %6930 = vmatpush2.bf16.msra.mxu0 0
    %6931 = vmatprep.subr.bf16.mxu0 0
    %6932 = vmatpush2.bf16.msra.mxu0 0
    %6933 = vmatprep.mubr.bf16.mxu0 0
    %6934 = vmatmul.mubr.bf16.gmra.mxu0 %v6727
    %v6935 = vpop.f32.mrf.mxu0
    %v6936 = vadd.f32 %v6800, %v6935
    %v6937 = vpop.f32.mrf.mxu0
    %v6938 = vpop.f32.mrf.mxu0
    %v6939 = vadd.f32 %v6803, %v6938
    %v6940 = vpop.f32.mrf.mxu0
    %6941 = vmatprep.mubr.bf16.mxu0 0
    %6942 = vmatmul.mubr.bf16.gmra.mxu0 %v6730
    %v6943 = vpop.f32.mrf.mxu0
    %v6944 = vadd.f32 %v6808, %v6943
    %v6945 = vpop.f32.mrf.mxu0
    %v6946 = vpop.f32.mrf.mxu0
    %v6947 = vadd.f32 %v6811, %v6946
    %v6948 = vpop.f32.mrf.mxu0
    %6949 = vmatprep.mubr.bf16.mxu0 0
    %6950 = vmatmul.mubr.bf16.gmra.mxu0 %v6733
    %v6951 = vpop.f32.mrf.mxu0
    %v6952 = vadd.f32 %v6816, %v6951
    %v6953 = vpop.f32.mrf.mxu0
    %v6954 = vpop.f32.mrf.mxu0
    %v6955 = vadd.f32 %v6819, %v6954
    %v6956 = vpop.f32.mrf.mxu0
    %6957 = vmatprep.mubr.bf16.mxu0 0
    %6958 = vmatmul.mubr.bf16.gmra.mxu0 %v6736
    %v6959 = vpop.f32.mrf.mxu0
    %v6960 = vadd.f32 %v6824, %v6959
    %v6961 = vpop.f32.mrf.mxu0
    %v6962 = vpop.f32.mrf.mxu0
    %v6963 = vadd.f32 %v6827, %v6962
    %v6964 = vpop.f32.mrf.mxu0
    %6965 = vmatprep.mubr.bf16.mxu0 0
    %6966 = vmatmul.mubr.bf16.gmra.mxu0 %v6739
    %v6967 = vpop.f32.mrf.mxu0
    %v6968 = vadd.f32 %v6832, %v6967
    %v6969 = vpop.f32.mrf.mxu0
    %v6970 = vpop.f32.mrf.mxu0
    %v6971 = vadd.f32 %v6835, %v6970
    %v6972 = vpop.f32.mrf.mxu0
    %6973 = vmatprep.mubr.bf16.mxu0 0
    %6974 = vmatmul.mubr.bf16.gmra.mxu0 %v6742
    %v6975 = vpop.f32.mrf.mxu0
    %v6976 = vadd.f32 %v6840, %v6975
    %v6977 = vpop.f32.mrf.mxu0
    %v6978 = vpop.f32.mrf.mxu0
    %v6979 = vadd.f32 %v6843, %v6978
    %v6980 = vpop.f32.mrf.mxu0
    %6981 = vmatprep.mubr.bf16.mxu0 0
    %6982 = vmatmul.mubr.bf16.gmra.mxu0 %v6745
    %v6983 = vpop.f32.mrf.mxu0
    %v6984 = vadd.f32 %v6848, %v6983
    %v6985 = vpop.f32.mrf.mxu0
    %v6986 = vpop.f32.mrf.mxu0
    %v6987 = vadd.f32 %v6851, %v6986
    %v6988 = vpop.f32.mrf.mxu0
    %6989 = vmatprep.mubr.bf16.mxu0 0
    %6990 = vmatmul.mubr.bf16.gmra.mxu0 %v6748
    %v6991 = vpop.f32.mrf.mxu0
    %v6992 = vadd.f32 %v6856, %v6991
    %v6993 = vpop.f32.mrf.mxu0
    %v6994 = vpop.f32.mrf.mxu0
    %v6995 = vadd.f32 %v6859, %v6994
    %v6996 = vpop.f32.mrf.mxu0
    %6997 = vmatprep.mubr.bf16.mxu0 0
    %6998 = vmatmul.mubr.bf16.gmra.mxu0 %v6751
    %v6999 = vpop.f32.mrf.mxu0
    %v7000 = vadd.f32 %v6864, %v6999
    %v7001 = vpop.f32.mrf.mxu0
    %v7002 = vpop.f32.mrf.mxu0
    %v7003 = vadd.f32 %v6867, %v7002
    %v7004 = vpop.f32.mrf.mxu0
    %7005 = vmatprep.mubr.bf16.mxu0 0
    %7006 = vmatmul.mubr.bf16.gmra.mxu0 %v6754
    %v7007 = vpop.f32.mrf.mxu0
    %v7008 = vadd.f32 %v6872, %v7007
    %v7009 = vpop.f32.mrf.mxu0
    %v7010 = vpop.f32.mrf.mxu0
    %v7011 = vadd.f32 %v6875, %v7010
    %v7012 = vpop.f32.mrf.mxu0
    %7013 = vmatprep.mubr.bf16.mxu0 0
    %7014 = vmatmul.mubr.bf16.gmra.mxu0 %v6757
    %v7015 = vpop.f32.mrf.mxu0
    %v7016 = vadd.f32 %v6880, %v7015
    %v7017 = vpop.f32.mrf.mxu0
    %v7018 = vpop.f32.mrf.mxu0
    %v7019 = vadd.f32 %v6883, %v7018
    %v7020 = vpop.f32.mrf.mxu0
    %7021 = vmatprep.mubr.bf16.mxu0 0
    %7022 = vmatmul.mubr.bf16.gmra.mxu0 %v6760
    %v7023 = vpop.f32.mrf.mxu0
    %v7024 = vadd.f32 %v6888, %v7023
    %v7025 = vpop.f32.mrf.mxu0
    %v7026 = vpop.f32.mrf.mxu0
    %v7027 = vadd.f32 %v6891, %v7026
    %v7028 = vpop.f32.mrf.mxu0
    %7029 = vmatprep.mubr.bf16.mxu0 0
    %7030 = vmatmul.mubr.bf16.gmra.mxu0 %v6763
    %v7031 = vpop.f32.mrf.mxu0
    %v7032 = vadd.f32 %v6896, %v7031
    %v7033 = vpop.f32.mrf.mxu0
    %v7034 = vpop.f32.mrf.mxu0
    %v7035 = vpop.f32.mrf.mxu0
    %7036 = vdwg.mxu0
    %v7038 = vlaneseq
    %v7039 = vshrl.u32 %v7038, 7
    %v7040 = vsub.s32 0, %v7039
    %v7041 = vrot.slane %v5093, %v7040
    %v7043 = vmul.f32 %v6936, %v7041
    %v7044 = vmul.f32 %v6939, %v7041
    %v7045 = vmul.f32 %v6944, %v7041
    %v7046 = vmul.f32 %v6947, %v7041
    %v7047 = vmul.f32 %v6952, %v7041
    %v7048 = vmul.f32 %v6955, %v7041
    %v7049 = vmul.f32 %v6960, %v7041
    %v7050 = vmul.f32 %v6963, %v7041
    %v7051 = vmul.f32 %v6968, %v7041
    %v7052 = vmul.f32 %v6971, %v7041
    %v7053 = vmul.f32 %v6976, %v7041
    %v7054 = vmul.f32 %v6979, %v7041
    %v7055 = vmul.f32 %v6984, %v7041
    %v7056 = vmul.f32 %v6987, %v7041
    %v7057 = vmul.f32 %v6992, %v7041
    %v7058 = vmul.f32 %v6995, %v7041
    %v7059 = vmul.f32 %v7000, %v7041
    %v7060 = vmul.f32 %v7003, %v7041
    %v7061 = vmul.f32 %v7008, %v7041
    %v7062 = vmul.f32 %v7011, %v7041
    %v7063 = vmul.f32 %v7016, %v7041
    %v7064 = vmul.f32 %v7019, %v7041
    %v7065 = vmul.f32 %v7024, %v7041
    %v7066 = vmul.f32 %v7027, %v7041
    %v7067 = vmul.f32 %v7032, %v7041
    %v7069 = vlaneseq
    %v7070 = vshrl.u32 %v7069, 7
    %v7071 = vsub.s32 0, %v7070
    %v7072 = vrot.slane %v5095, %v7071
    %v7074 = vadd.f32 %v7043, %v7072
    %v7075 = vadd.f32 %v7044, %v7072
    %v7076 = vadd.f32 %v7045, %v7072
    %v7077 = vadd.f32 %v7046, %v7072
    %v7078 = vadd.f32 %v7047, %v7072
    %v7079 = vadd.f32 %v7048, %v7072
    %v7080 = vadd.f32 %v7049, %v7072
    %v7081 = vadd.f32 %v7050, %v7072
    %v7082 = vadd.f32 %v7051, %v7072
    %v7083 = vadd.f32 %v7052, %v7072
    %v7084 = vadd.f32 %v7053, %v7072
    %v7085 = vadd.f32 %v7054, %v7072
    %v7086 = vadd.f32 %v7055, %v7072
    %v7087 = vadd.f32 %v7056, %v7072
    %v7088 = vadd.f32 %v7057, %v7072
    %v7089 = vadd.f32 %v7058, %v7072
    %v7090 = vadd.f32 %v7059, %v7072
    %v7091 = vadd.f32 %v7060, %v7072
    %v7092 = vadd.f32 %v7061, %v7072
    %v7093 = vadd.f32 %v7062, %v7072
    %v7094 = vadd.f32 %v7063, %v7072
    %v7095 = vadd.f32 %v7064, %v7072
    %v7096 = vadd.f32 %v7065, %v7072
    %v7097 = vadd.f32 %v7066, %v7072
    %v7098 = vadd.f32 %v7067, %v7072
    %v7099 = vmax.f32 %v7074, 0.0
    %v7100 = vmax.f32 %v7075, 0.0
    %v7101 = vmax.f32 %v7076, 0.0
    %v7102 = vmax.f32 %v7077, 0.0
    %v7103 = vmax.f32 %v7078, 0.0
    %v7104 = vmax.f32 %v7079, 0.0
    %v7105 = vmax.f32 %v7080, 0.0
    %v7106 = vmax.f32 %v7081, 0.0
    %v7107 = vmax.f32 %v7082, 0.0
    %v7108 = vmax.f32 %v7083, 0.0
    %v7109 = vmax.f32 %v7084, 0.0
    %v7110 = vmax.f32 %v7085, 0.0
    %v7111 = vmax.f32 %v7086, 0.0
    %v7112 = vmax.f32 %v7087, 0.0
    %v7113 = vmax.f32 %v7088, 0.0
    %v7114 = vmax.f32 %v7089, 0.0
    %v7115 = vmax.f32 %v7090, 0.0
    %v7116 = vmax.f32 %v7091, 0.0
    %v7117 = vmax.f32 %v7092, 0.0
    %v7118 = vmax.f32 %v7093, 0.0
    %v7119 = vmax.f32 %v7094, 0.0
    %v7120 = vmax.f32 %v7095, 0.0
    %v7121 = vmax.f32 %v7096, 0.0
    %v7122 = vmax.f32 %v7097, 0.0
    %v7123 = vmax.f32 %v7098, 0.0
    %v7124 = vmul.f32 %v7099, %v519
    %v7125 = vmul.f32 %v7100, %v524
    %v7126 = vmul.f32 %v7101, %v529
    %v7127 = vmul.f32 %v7102, %v534
    %v7128 = vmul.f32 %v7103, %v539
    %v7129 = vmul.f32 %v7104, %v544
    %v7130 = vmul.f32 %v7105, %v549
    %v7131 = vmul.f32 %v7106, %v554
    %v7132 = vmul.f32 %v7107, %v559
    %v7133 = vmul.f32 %v7108, %v564
    %v7134 = vmul.f32 %v7109, %v569
    %v7135 = vmul.f32 %v7110, %v574
    %v7136 = vmul.f32 %v7111, %v579
    %v7137 = vmul.f32 %v7112, %v584
    %v7138 = vmul.f32 %v7113, %v589
    %v7139 = vmul.f32 %v7114, %v594
    %v7140 = vmul.f32 %v7115, %v599
    %v7141 = vmul.f32 %v7116, %v604
    %v7142 = vmul.f32 %v7117, %v609
    %v7143 = vmul.f32 %v7118, %v614
    %v7144 = vmul.f32 %v7119, %v619
    %v7145 = vmul.f32 %v7120, %v624
    %v7146 = vmul.f32 %v7121, %v629
    %v7147 = vmul.f32 %v7122, %v634
    %v7148 = vmul.f32 %v7123, %v639
    %s7149 = scalar_lea.vmem %s6, 432
    %v7150 = vld [vmem:[%s7149] sm:$0xf]
    %v7151 = vld [vmem:[%s7149 + $0x4] sm:$0xf]
    %v7152 = vld [vmem:[%s7149 + $0x8] sm:$0xf]
    %v7153 = vld [vmem:[%s7149 + $0xc] sm:$0xf]
    %v7154 = vld [vmem:[%s7149 + $0x10] sm:$0xf]
    %v7155 = vld [vmem:[%s7149 + $0x14] sm:$0xf]
    %v7156 = vld [vmem:[%s7149 + $0x18] sm:$0xf]
    %v7157 = vld [vmem:[%s7149 + $0x1c] sm:$0xf]
    %v7158 = vld [vmem:[%s7149 + $0x20] sm:$0xf]
    %v7159 = vld [vmem:[%s7149 + $0x24] sm:$0xf]
    %v7160 = vld [vmem:[%s7149 + $0x28] sm:$0xf]
    %v7161 = vld [vmem:[%s7149 + $0x2c] sm:$0xf]
    %v7162 = vld [vmem:[%s7149 + $0x30] sm:$0xf]
    %v7163 = vld [vmem:[%s7149 + $0x34] sm:$0xf]
    %v7164 = vld [vmem:[%s7149 + $0x38] sm:$0xf]
    %v7165 = vld [vmem:[%s7149 + $0x3c] sm:$0xf]
    %v7166 = vld [vmem:[%s7149 + $0x40] sm:$0xf]
    %v7167 = vld [vmem:[%s7149 + $0x44] sm:$0xf]
    %v7168 = vld [vmem:[%s7149 + $0x48] sm:$0xf]
    %v7169 = vld [vmem:[%s7149 + $0x4c] sm:$0xf]
    %v7170 = vld [vmem:[%s7149 + $0x50] sm:$0xf]
    %v7171 = vld [vmem:[%s7149 + $0x54] sm:$0xf]
    %v7172 = vld [vmem:[%s7149 + $0x58] sm:$0xf]
    %v7173 = vld [vmem:[%s7149 + $0x5c] sm:$0xf]
    %v7174 = vld [vmem:[%s7149 + $0x60] sm:$0xf]
    %v7175 = vld [vmem:[%s7149 + $0x64] sm:$0xf]
    %v7176 = vld [vmem:[%s7149 + $0x68] sm:$0xf]
    %v7177 = vld [vmem:[%s7149 + $0x6c] sm:$0xf]
    %v7178 = vld [vmem:[%s7149 + $0x70] sm:$0xf]
    %v7179 = vld [vmem:[%s7149 + $0x74] sm:$0xf]
    %v7180 = vld [vmem:[%s7149 + $0x78] sm:$0xf]
    %v7181 = vld [vmem:[%s7149 + $0x7c] sm:$0xf]
    %v7182 = vld [vmem:[%s7149 + $0x80] sm:$0xf]
    %v7183 = vld [vmem:[%s7149 + $0x84] sm:$0xf]
    %v7184 = vld [vmem:[%s7149 + $0x88] sm:$0xf]
    %v7185 = vld [vmem:[%s7149 + $0x8c] sm:$0xf]
    %s7186 = scalar_lea.vmem %s7, 3
    %v7187 = vld [vmem:[%s7186] sm:$0x1]
    %s7188 = scalar_lea.vmem %s8, 3
    %v7189 = vld [vmem:[%s7188] sm:$0x1]
    %7190 = vst.msk [vmem:[#allocation2 + $0x10] sm:$0xff] %vm109, %v7124
    %7191 = vst.msk [vmem:[#allocation2 + $0x18] sm:$0xff] %vm109, %v7125
    %7192 = vst.msk [vmem:[#allocation2 + $0x20] sm:$0xff] %vm109, %v7126
    %7193 = vst.msk [vmem:[#allocation2 + $0x28] sm:$0xff] %vm109, %v7127
    %7194 = vst.msk [vmem:[#allocation2 + $0x30] sm:$0xff] %vm109, %v7128
    %7195 = vst.msk [vmem:[#allocation2 + $0x38] sm:$0xff] %vm109, %v7129
    %7196 = vst.msk [vmem:[#allocation2 + $0x40] sm:$0xff] %vm109, %v7130
    %7197 = vst.msk [vmem:[#allocation2 + $0x48] sm:$0xff] %vm109, %v7131
    %7198 = vst.msk [vmem:[#allocation2 + $0x50] sm:$0xff] %vm109, %v7132
    %7199 = vst.msk [vmem:[#allocation2 + $0x58] sm:$0xff] %vm109, %v7133
    %7200 = vst.msk [vmem:[#allocation2 + $0x60] sm:$0xff] %vm109, %v7134
    %7201 = vst.msk [vmem:[#allocation2 + $0x68] sm:$0xff] %vm109, %v7135
    %7202 = vst.msk [vmem:[#allocation2 + $0x70] sm:$0xff] %vm109, %v7136
    %7203 = vst.msk [vmem:[#allocation2 + $0x78] sm:$0xff] %vm109, %v7137
    %7204 = vst.msk [vmem:[#allocation2 + $0x80] sm:$0xff] %vm109, %v7138
    %7205 = vst.msk [vmem:[#allocation2 + $0x88] sm:$0xff] %vm109, %v7139
    %7206 = vst.msk [vmem:[#allocation2 + $0x90] sm:$0xff] %vm109, %v7140
    %7207 = vst.msk [vmem:[#allocation2 + $0x98] sm:$0xff] %vm109, %v7141
    %7208 = vst.msk [vmem:[#allocation2 + $0xa0] sm:$0xff] %vm109, %v7142
    %7209 = vst.msk [vmem:[#allocation2 + $0xa8] sm:$0xff] %vm109, %v7143
    %7210 = vst.msk [vmem:[#allocation2 + $0xb0] sm:$0xff] %vm109, %v7144
    %7211 = vst.msk [vmem:[#allocation2 + $0xb8] sm:$0xff] %vm109, %v7145
    %7212 = vst.msk [vmem:[#allocation2 + $0xc0] sm:$0xff] %vm109, %v7146
    %7213 = vst.msk [vmem:[#allocation2 + $0xc8] sm:$0xff] %vm109, %v7147
    %7214 = vst.msk [vmem:[#allocation2 + $0xd0] sm:$0xff] %vm109, %v7148
    %v7215 = vld [vmem:[#allocation2 + $0x5] sm:$0xff]
    %v7216 = vld [vmem:[#allocation2 + $0xd] sm:$0xff]
    %v7217 = vld [vmem:[#allocation2 + $0x15] sm:$0xff]
    %v7218 = vld [vmem:[#allocation2 + $0x1d] sm:$0xff]
    %v7219 = vld [vmem:[#allocation2 + $0x25] sm:$0xff]
    %v7220 = vld [vmem:[#allocation2 + $0x2d] sm:$0xff]
    %v7221 = vld [vmem:[#allocation2 + $0x35] sm:$0xff]
    %v7222 = vld [vmem:[#allocation2 + $0x3d] sm:$0xff]
    %v7223 = vld [vmem:[#allocation2 + $0x45] sm:$0xff]
    %v7224 = vld [vmem:[#allocation2 + $0x4d] sm:$0xff]
    %v7225 = vld [vmem:[#allocation2 + $0x55] sm:$0xff]
    %v7226 = vld [vmem:[#allocation2 + $0x5d] sm:$0xff]
    %v7227 = vld [vmem:[#allocation2 + $0x65] sm:$0xff]
    %v7228 = vld [vmem:[#allocation2 + $0x6d] sm:$0xff]
    %v7229 = vld [vmem:[#allocation2 + $0x75] sm:$0xff]
    %v7230 = vld [vmem:[#allocation2 + $0x7d] sm:$0xff]
    %v7231 = vld [vmem:[#allocation2 + $0x85] sm:$0xff]
    %v7232 = vld [vmem:[#allocation2 + $0x8d] sm:$0xff]
    %v7233 = vld [vmem:[#allocation2 + $0x95] sm:$0xff]
    %v7234 = vld [vmem:[#allocation2 + $0x9d] sm:$0xff]
    %v7235 = vld [vmem:[#allocation2 + $0xa5] sm:$0xff]
    %v7236 = vld [vmem:[#allocation2 + $0xad] sm:$0xff]
    %v7237 = vld [vmem:[#allocation2 + $0xb5] sm:$0xff]
    %v7238 = vld [vmem:[#allocation2 + $0xbd] sm:$0xff]
    %v7239 = vld [vmem:[#allocation2 + $0xc5] sm:$0xff]
    %v7240 = vld [vmem:[#allocation2 + $0x6] sm:$0xff]
    %v7241 = vld [vmem:[#allocation2 + $0xe] sm:$0xff]
    %v7242 = vld [vmem:[#allocation2 + $0x16] sm:$0xff]
    %v7243 = vld [vmem:[#allocation2 + $0x1e] sm:$0xff]
    %v7244 = vld [vmem:[#allocation2 + $0x26] sm:$0xff]
    %v7245 = vld [vmem:[#allocation2 + $0x2e] sm:$0xff]
    %v7246 = vld [vmem:[#allocation2 + $0x36] sm:$0xff]
    %v7247 = vld [vmem:[#allocation2 + $0x3e] sm:$0xff]
    %v7248 = vld [vmem:[#allocation2 + $0x46] sm:$0xff]
    %v7249 = vld [vmem:[#allocation2 + $0x4e] sm:$0xff]
    %v7250 = vld [vmem:[#allocation2 + $0x56] sm:$0xff]
    %v7251 = vld [vmem:[#allocation2 + $0x5e] sm:$0xff]
    %v7252 = vld [vmem:[#allocation2 + $0x66] sm:$0xff]
    %v7253 = vld [vmem:[#allocation2 + $0x6e] sm:$0xff]
    %v7254 = vld [vmem:[#allocation2 + $0x76] sm:$0xff]
    %v7255 = vld [vmem:[#allocation2 + $0x7e] sm:$0xff]
    %v7256 = vld [vmem:[#allocation2 + $0x86] sm:$0xff]
    %v7257 = vld [vmem:[#allocation2 + $0x8e] sm:$0xff]
    %v7258 = vld [vmem:[#allocation2 + $0x96] sm:$0xff]
    %v7259 = vld [vmem:[#allocation2 + $0x9e] sm:$0xff]
    %v7260 = vld [vmem:[#allocation2 + $0xa6] sm:$0xff]
    %v7261 = vld [vmem:[#allocation2 + $0xae] sm:$0xff]
    %v7262 = vld [vmem:[#allocation2 + $0xb6] sm:$0xff]
    %v7263 = vld [vmem:[#allocation2 + $0xbe] sm:$0xff]
    %v7264 = vld [vmem:[#allocation2 + $0xc6] sm:$0xff]
    %v7265 = vld [vmem:[#allocation2 + $0x7] sm:$0xff]
    %v7266 = vld [vmem:[#allocation2 + $0xf] sm:$0xff]
    %v7267 = vld [vmem:[#allocation2 + $0x17] sm:$0xff]
    %v7268 = vld [vmem:[#allocation2 + $0x1f] sm:$0xff]
    %v7269 = vld [vmem:[#allocation2 + $0x27] sm:$0xff]
    %v7270 = vld [vmem:[#allocation2 + $0x2f] sm:$0xff]
    %v7271 = vld [vmem:[#allocation2 + $0x37] sm:$0xff]
    %v7272 = vld [vmem:[#allocation2 + $0x3f] sm:$0xff]
    %v7273 = vld [vmem:[#allocation2 + $0x47] sm:$0xff]
    %v7274 = vld [vmem:[#allocation2 + $0x4f] sm:$0xff]
    %v7275 = vld [vmem:[#allocation2 + $0x57] sm:$0xff]
    %v7276 = vld [vmem:[#allocation2 + $0x5f] sm:$0xff]
    %v7277 = vld [vmem:[#allocation2 + $0x67] sm:$0xff]
    %v7278 = vld [vmem:[#allocation2 + $0x6f] sm:$0xff]
    %v7279 = vld [vmem:[#allocation2 + $0x77] sm:$0xff]
    %v7280 = vld [vmem:[#allocation2 + $0x7f] sm:$0xff]
    %v7281 = vld [vmem:[#allocation2 + $0x87] sm:$0xff]
    %v7282 = vld [vmem:[#allocation2 + $0x8f] sm:$0xff]
    %v7283 = vld [vmem:[#allocation2 + $0x97] sm:$0xff]
    %v7284 = vld [vmem:[#allocation2 + $0x9f] sm:$0xff]
    %v7285 = vld [vmem:[#allocation2 + $0xa7] sm:$0xff]
    %v7286 = vld [vmem:[#allocation2 + $0xaf] sm:$0xff]
    %v7287 = vld [vmem:[#allocation2 + $0xb7] sm:$0xff]
    %v7288 = vld [vmem:[#allocation2 + $0xbf] sm:$0xff]
    %v7289 = vld [vmem:[#allocation2 + $0xc7] sm:$0xff]
    %v7290 = vld [vmem:[#allocation2 + $0xcf] sm:$0xff]
    %7316 = vrot.lane.b32.xlu0 %v7240, 32
    %v7317 = vpop.permute.xlu0 %7316
    %7318 = vrot.lane.b32.xlu0 %v7241, 32
    %v7319 = vpop.permute.xlu0 %7318
    %7320 = vrot.lane.b32.xlu0 %v7242, 32
    %v7321 = vpop.permute.xlu0 %7320
    %7322 = vrot.lane.b32.xlu0 %v7243, 32
    %v7323 = vpop.permute.xlu0 %7322
    %7324 = vrot.lane.b32.xlu0 %v7244, 32
    %v7325 = vpop.permute.xlu0 %7324
    %7326 = vrot.lane.b32.xlu0 %v7245, 32
    %v7327 = vpop.permute.xlu0 %7326
    %7328 = vrot.lane.b32.xlu0 %v7246, 32
    %v7329 = vpop.permute.xlu0 %7328
    %7330 = vrot.lane.b32.xlu0 %v7247, 32
    %v7331 = vpop.permute.xlu0 %7330
    %7332 = vrot.lane.b32.xlu0 %v7248, 32
    %v7333 = vpop.permute.xlu0 %7332
    %7334 = vrot.lane.b32.xlu0 %v7249, 32
    %v7335 = vpop.permute.xlu0 %7334
    %7336 = vrot.lane.b32.xlu0 %v7250, 32
    %v7337 = vpop.permute.xlu0 %7336
    %7338 = vrot.lane.b32.xlu0 %v7251, 32
    %v7339 = vpop.permute.xlu0 %7338
    %7340 = vrot.lane.b32.xlu0 %v7252, 32
    %v7341 = vpop.permute.xlu0 %7340
    %7342 = vrot.lane.b32.xlu0 %v7253, 32
    %v7343 = vpop.permute.xlu0 %7342
    %7344 = vrot.lane.b32.xlu0 %v7254, 32
    %v7345 = vpop.permute.xlu0 %7344
    %7346 = vrot.lane.b32.xlu0 %v7255, 32
    %v7347 = vpop.permute.xlu0 %7346
    %7348 = vrot.lane.b32.xlu0 %v7256, 32
    %v7349 = vpop.permute.xlu0 %7348
    %7350 = vrot.lane.b32.xlu0 %v7257, 32
    %v7351 = vpop.permute.xlu0 %7350
    %7352 = vrot.lane.b32.xlu0 %v7258, 32
    %v7353 = vpop.permute.xlu0 %7352
    %7354 = vrot.lane.b32.xlu0 %v7259, 32
    %v7355 = vpop.permute.xlu0 %7354
    %7356 = vrot.lane.b32.xlu0 %v7260, 32
    %v7357 = vpop.permute.xlu0 %7356
    %7358 = vrot.lane.b32.xlu0 %v7261, 32
    %v7359 = vpop.permute.xlu0 %7358
    %7360 = vrot.lane.b32.xlu0 %v7262, 32
    %v7361 = vpop.permute.xlu0 %7360
    %7362 = vrot.lane.b32.xlu0 %v7263, 32
    %v7363 = vpop.permute.xlu0 %7362
    %7364 = vrot.lane.b32.xlu0 %v7264, 32
    %v7365 = vpop.permute.xlu0 %7364
    %7416 = vrot.lane.b32.xlu0 %v7265, 64
    %v7417 = vpop.permute.xlu0 %7416
    %7418 = vrot.lane.b32.xlu0 %v7266, 64
    %v7419 = vpop.permute.xlu0 %7418
    %7420 = vrot.lane.b32.xlu0 %v7267, 64
    %v7421 = vpop.permute.xlu0 %7420
    %7422 = vrot.lane.b32.xlu0 %v7268, 64
    %v7423 = vpop.permute.xlu0 %7422
    %7424 = vrot.lane.b32.xlu0 %v7269, 64
    %v7425 = vpop.permute.xlu0 %7424
    %7426 = vrot.lane.b32.xlu0 %v7270, 64
    %v7427 = vpop.permute.xlu0 %7426
    %7428 = vrot.lane.b32.xlu0 %v7271, 64
    %v7429 = vpop.permute.xlu0 %7428
    %7430 = vrot.lane.b32.xlu0 %v7272, 64
    %v7431 = vpop.permute.xlu0 %7430
    %7432 = vrot.lane.b32.xlu0 %v7273, 64
    %v7433 = vpop.permute.xlu0 %7432
    %7434 = vrot.lane.b32.xlu0 %v7274, 64
    %v7435 = vpop.permute.xlu0 %7434
    %7436 = vrot.lane.b32.xlu0 %v7275, 64
    %v7437 = vpop.permute.xlu0 %7436
    %7438 = vrot.lane.b32.xlu0 %v7276, 64
    %v7439 = vpop.permute.xlu0 %7438
    %7440 = vrot.lane.b32.xlu0 %v7277, 64
    %v7441 = vpop.permute.xlu0 %7440
    %7442 = vrot.lane.b32.xlu0 %v7278, 64
    %v7443 = vpop.permute.xlu0 %7442
    %7444 = vrot.lane.b32.xlu0 %v7279, 64
    %v7445 = vpop.permute.xlu0 %7444
    %7446 = vrot.lane.b32.xlu0 %v7280, 64
    %v7447 = vpop.permute.xlu0 %7446
    %7448 = vrot.lane.b32.xlu0 %v7281, 64
    %v7449 = vpop.permute.xlu0 %7448
    %7450 = vrot.lane.b32.xlu0 %v7282, 64
    %v7451 = vpop.permute.xlu0 %7450
    %7452 = vrot.lane.b32.xlu0 %v7283, 64
    %v7453 = vpop.permute.xlu0 %7452
    %7454 = vrot.lane.b32.xlu0 %v7284, 64
    %v7455 = vpop.permute.xlu0 %7454
    %7456 = vrot.lane.b32.xlu0 %v7285, 64
    %v7457 = vpop.permute.xlu0 %7456
    %7458 = vrot.lane.b32.xlu0 %v7286, 64
    %v7459 = vpop.permute.xlu0 %7458
    %7460 = vrot.lane.b32.xlu0 %v7287, 64
    %v7461 = vpop.permute.xlu0 %7460
    %7462 = vrot.lane.b32.xlu0 %v7288, 64
    %v7463 = vpop.permute.xlu0 %7462
    %7464 = vrot.lane.b32.xlu0 %v7289, 64
    %v7465 = vpop.permute.xlu0 %7464
    %7492 = vrot.lane.b32.xlu0 %v7266, 96
    %v7493 = vpop.permute.xlu0 %7492
    %7494 = vrot.lane.b32.xlu0 %v7267, 96
    %v7495 = vpop.permute.xlu0 %7494
    %7496 = vrot.lane.b32.xlu0 %v7268, 96
    %v7497 = vpop.permute.xlu0 %7496
    %7498 = vrot.lane.b32.xlu0 %v7269, 96
    %v7499 = vpop.permute.xlu0 %7498
    %7500 = vrot.lane.b32.xlu0 %v7270, 96
    %v7501 = vpop.permute.xlu0 %7500
    %7502 = vrot.lane.b32.xlu0 %v7271, 96
    %v7503 = vpop.permute.xlu0 %7502
    %7504 = vrot.lane.b32.xlu0 %v7272, 96
    %v7505 = vpop.permute.xlu0 %7504
    %7506 = vrot.lane.b32.xlu0 %v7273, 96
    %v7507 = vpop.permute.xlu0 %7506
    %7508 = vrot.lane.b32.xlu0 %v7274, 96
    %v7509 = vpop.permute.xlu0 %7508
    %7510 = vrot.lane.b32.xlu0 %v7275, 96
    %v7511 = vpop.permute.xlu0 %7510
    %7512 = vrot.lane.b32.xlu0 %v7276, 96
    %v7513 = vpop.permute.xlu0 %7512
    %7514 = vrot.lane.b32.xlu0 %v7277, 96
    %v7515 = vpop.permute.xlu0 %7514
    %7516 = vrot.lane.b32.xlu0 %v7278, 96
    %v7517 = vpop.permute.xlu0 %7516
    %7518 = vrot.lane.b32.xlu0 %v7279, 96
    %v7519 = vpop.permute.xlu0 %7518
    %7520 = vrot.lane.b32.xlu0 %v7280, 96
    %v7521 = vpop.permute.xlu0 %7520
    %7522 = vrot.lane.b32.xlu0 %v7281, 96
    %v7523 = vpop.permute.xlu0 %7522
    %7524 = vrot.lane.b32.xlu0 %v7282, 96
    %v7525 = vpop.permute.xlu0 %7524
    %7526 = vrot.lane.b32.xlu0 %v7283, 96
    %v7527 = vpop.permute.xlu0 %7526
    %7528 = vrot.lane.b32.xlu0 %v7284, 96
    %v7529 = vpop.permute.xlu0 %7528
    %7530 = vrot.lane.b32.xlu0 %v7285, 96
    %v7531 = vpop.permute.xlu0 %7530
    %7532 = vrot.lane.b32.xlu0 %v7286, 96
    %v7533 = vpop.permute.xlu0 %7532
    %7534 = vrot.lane.b32.xlu0 %v7287, 96
    %v7535 = vpop.permute.xlu0 %7534
    %7536 = vrot.lane.b32.xlu0 %v7288, 96
    %v7537 = vpop.permute.xlu0 %7536
    %7538 = vrot.lane.b32.xlu0 %v7289, 96
    %v7539 = vpop.permute.xlu0 %7538
    %7540 = vrot.lane.b32.xlu0 %v7290, 96
    %v7541 = vpop.permute.xlu0 %7540
    %v7567 = vsel %vm109, %v7215, %v7317
    %v7568 = vsel %vm109, %v7216, %v7319
    %v7569 = vsel %vm109, %v7217, %v7321
    %v7570 = vsel %vm109, %v7218, %v7323
    %v7571 = vsel %vm109, %v7219, %v7325
    %v7572 = vsel %vm109, %v7220, %v7327
    %v7573 = vsel %vm109, %v7221, %v7329
    %v7574 = vsel %vm109, %v7222, %v7331
    %v7575 = vsel %vm109, %v7223, %v7333
    %v7576 = vsel %vm109, %v7224, %v7335
    %v7577 = vsel %vm109, %v7225, %v7337
    %v7578 = vsel %vm109, %v7226, %v7339
    %v7579 = vsel %vm109, %v7227, %v7341
    %v7580 = vsel %vm109, %v7228, %v7343
    %v7581 = vsel %vm109, %v7229, %v7345
    %v7582 = vsel %vm109, %v7230, %v7347
    %v7583 = vsel %vm109, %v7231, %v7349
    %v7584 = vsel %vm109, %v7232, %v7351
    %v7585 = vsel %vm109, %v7233, %v7353
    %v7586 = vsel %vm109, %v7234, %v7355
    %v7587 = vsel %vm109, %v7235, %v7357
    %v7588 = vsel %vm109, %v7236, %v7359
    %v7589 = vsel %vm109, %v7237, %v7361
    %v7590 = vsel %vm109, %v7238, %v7363
    %v7591 = vsel %vm109, %v7239, %v7365
    %v7592 = vsel %vm1156, %v7567, %v7417
    %v7593 = vsel %vm1156, %v7568, %v7419
    %v7594 = vsel %vm1156, %v7569, %v7421
    %v7595 = vsel %vm1156, %v7570, %v7423
    %v7596 = vsel %vm1156, %v7571, %v7425
    %v7597 = vsel %vm1156, %v7572, %v7427
    %v7598 = vsel %vm1156, %v7573, %v7429
    %v7599 = vsel %vm1156, %v7574, %v7431
    %v7600 = vsel %vm1156, %v7575, %v7433
    %v7601 = vsel %vm1156, %v7576, %v7435
    %v7602 = vsel %vm1156, %v7577, %v7437
    %v7603 = vsel %vm1156, %v7578, %v7439
    %v7604 = vsel %vm1156, %v7579, %v7441
    %v7605 = vsel %vm1156, %v7580, %v7443
    %v7606 = vsel %vm1156, %v7581, %v7445
    %v7607 = vsel %vm1156, %v7582, %v7447
    %v7608 = vsel %vm1156, %v7583, %v7449
    %v7609 = vsel %vm1156, %v7584, %v7451
    %v7610 = vsel %vm1156, %v7585, %v7453
    %v7611 = vsel %vm1156, %v7586, %v7455
    %v7612 = vsel %vm1156, %v7587, %v7457
    %v7613 = vsel %vm1156, %v7588, %v7459
    %v7614 = vsel %vm1156, %v7589, %v7461
    %v7615 = vsel %vm1156, %v7590, %v7463
    %v7616 = vsel %vm1156, %v7591, %v7465
    %v7617 = vsel %vm1182, %v7592, %v7493
    %v7618 = vsel %vm1182, %v7593, %v7495
    %v7619 = vsel %vm1182, %v7594, %v7497
    %v7620 = vsel %vm1182, %v7595, %v7499
    %v7621 = vsel %vm1182, %v7596, %v7501
    %v7622 = vsel %vm1182, %v7597, %v7503
    %v7623 = vsel %vm1182, %v7598, %v7505
    %v7624 = vsel %vm1182, %v7599, %v7507
    %v7625 = vsel %vm1182, %v7600, %v7509
    %v7626 = vsel %vm1182, %v7601, %v7511
    %v7627 = vsel %vm1182, %v7602, %v7513
    %v7628 = vsel %vm1182, %v7603, %v7515
    %v7629 = vsel %vm1182, %v7604, %v7517
    %v7630 = vsel %vm1182, %v7605, %v7519
    %v7631 = vsel %vm1182, %v7606, %v7521
    %v7632 = vsel %vm1182, %v7607, %v7523
    %v7633 = vsel %vm1182, %v7608, %v7525
    %v7634 = vsel %vm1182, %v7609, %v7527
    %v7635 = vsel %vm1182, %v7610, %v7529
    %v7636 = vsel %vm1182, %v7611, %v7531
    %v7637 = vsel %vm1182, %v7612, %v7533
    %v7638 = vsel %vm1182, %v7613, %v7535
    %v7639 = vsel %vm1182, %v7614, %v7537
    %v7640 = vsel %vm1182, %v7615, %v7539
    %v7641 = vsel %vm1182, %v7616, %v7541
    %v7642 = vpack.c.bf16 %v7618, %v7617
    %v7643 = vpack.c.bf16 %v7620, %v7619
    %v7644 = vpack.c.bf16 %v7622, %v7621
    %v7645 = vpack.c.bf16 %v7624, %v7623
    %v7646 = vpack.c.bf16 %v7626, %v7625
    %v7647 = vpack.c.bf16 %v7628, %v7627
    %v7648 = vpack.c.bf16 %v7630, %v7629
    %v7649 = vpack.c.bf16 %v7632, %v7631
    %v7650 = vpack.c.bf16 %v7634, %v7633
    %v7651 = vpack.c.bf16 %v7636, %v7635
    %v7652 = vpack.c.bf16 %v7638, %v7637
    %v7653 = vpack.c.bf16 %v7640, %v7639
    %v7654 = vpack.c.bf16 %v7641, %v7641
    %v7668 = vunpack.c.l.b16 %v7642
    %v7669 = vunpack.c.h.b16 %v7642
    %v7670 = vunpack.c.l.b16 %v7643
    %v7671 = vunpack.c.h.b16 %v7643
    %v7672 = vunpack.c.l.b16 %v7644
    %v7673 = vunpack.c.h.b16 %v7644
    %v7674 = vunpack.c.l.b16 %v7645
    %v7675 = vunpack.c.h.b16 %v7645
    %v7676 = vunpack.c.l.b16 %v7646
    %v7677 = vunpack.c.h.b16 %v7646
    %v7678 = vunpack.c.l.b16 %v7647
    %v7679 = vunpack.c.h.b16 %v7647
    %v7680 = vunpack.c.l.b16 %v7648
    %v7681 = vunpack.c.h.b16 %v7648
    %v7682 = vunpack.c.l.b16 %v7649
    %v7683 = vunpack.c.h.b16 %v7649
    %v7684 = vunpack.c.l.b16 %v7650
    %v7685 = vunpack.c.h.b16 %v7650
    %v7686 = vunpack.c.l.b16 %v7651
    %v7687 = vunpack.c.h.b16 %v7651
    %v7688 = vunpack.c.l.b16 %v7652
    %v7689 = vunpack.c.h.b16 %v7652
    %v7690 = vunpack.c.l.b16 %v7653
    %v7691 = vunpack.c.h.b16 %v7653
    %v7692 = vunpack.c.l.b16 %v7654
    %v7693 = vpack.c.b16 %v7668, %v7668
    %v7694 = vpack.c.b16 %v7669, %v7669
    %v7695 = vpack.c.b16 %v7670, %v7670
    %v7696 = vpack.c.b16 %v7671, %v7671
    %v7697 = vpack.c.b16 %v7672, %v7672
    %v7698 = vpack.c.b16 %v7673, %v7673
    %v7699 = vpack.c.b16 %v7674, %v7674
    %v7700 = vpack.c.b16 %v7675, %v7675
    %v7701 = vpack.c.b16 %v7676, %v7676
    %v7702 = vpack.c.b16 %v7677, %v7677
    %v7703 = vpack.c.b16 %v7678, %v7678
    %v7704 = vpack.c.b16 %v7679, %v7679
    %v7705 = vpack.c.b16 %v7680, %v7680
    %v7706 = vpack.c.b16 %v7681, %v7681
    %v7707 = vpack.c.b16 %v7682, %v7682
    %v7708 = vpack.c.b16 %v7683, %v7683
    %v7709 = vpack.c.b16 %v7684, %v7684
    %v7710 = vpack.c.b16 %v7685, %v7685
    %v7711 = vpack.c.b16 %v7686, %v7686
    %v7712 = vpack.c.b16 %v7687, %v7687
    %v7713 = vpack.c.b16 %v7688, %v7688
    %v7714 = vpack.c.b16 %v7689, %v7689
    %v7715 = vpack.c.b16 %v7690, %v7690
    %v7716 = vpack.c.b16 %v7691, %v7691
    %v7717 = vpack.c.b16 %v7692, %v7692
    %7743 = vst [vmem:[#allocation3] sm:$0xf] %v7693
    %7744 = vst [vmem:[#allocation3 + $0xc] sm:$0xf] %v7694
    %7745 = vst [vmem:[#allocation3 + $0x18] sm:$0xf] %v7695
    %7746 = vst [vmem:[#allocation3 + $0x24] sm:$0xf] %v7696
    %7747 = vst [vmem:[#allocation3 + $0x30] sm:$0xf] %v7697
    %7748 = vst [vmem:[#allocation3 + $0x3c] sm:$0xf] %v7698
    %7749 = vst [vmem:[#allocation3 + $0x48] sm:$0xf] %v7699
    %7750 = vst [vmem:[#allocation3 + $0x54] sm:$0xf] %v7700
    %7751 = vst [vmem:[#allocation3 + $0x60] sm:$0xf] %v7701
    %7752 = vst [vmem:[#allocation3 + $0x6c] sm:$0xf] %v7702
    %7753 = vst [vmem:[#allocation3 + $0x78] sm:$0xf] %v7703
    %7754 = vst [vmem:[#allocation3 + $0x84] sm:$0xf] %v7704
    %7755 = vst [vmem:[#allocation3 + $0x90] sm:$0xf] %v7705
    %7756 = vst [vmem:[#allocation3 + $0x9c] sm:$0xf] %v7706
    %7757 = vst [vmem:[#allocation3 + $0xa8] sm:$0xf] %v7707
    %7758 = vst [vmem:[#allocation3 + $0xb4] sm:$0xf] %v7708
    %7759 = vst [vmem:[#allocation3 + $0xc0] sm:$0xf] %v7709
    %7760 = vst [vmem:[#allocation3 + $0xcc] sm:$0xf] %v7710
    %7761 = vst [vmem:[#allocation3 + $0xd8] sm:$0xf] %v7711
    %7762 = vst [vmem:[#allocation3 + $0xe4] sm:$0xf] %v7712
    %7763 = vst [vmem:[#allocation3 + $0xf0] sm:$0xf] %v7713
    %7764 = vst [vmem:[#allocation3 + $0xfc] sm:$0xf] %v7714
    %7765 = vst [vmem:[#allocation3 + $0x108] sm:$0xf] %v7715
    %7766 = vst [vmem:[#allocation3 + $0x114] sm:$0xf] %v7716
    %7767 = vst [vmem:[#allocation3 + $0x120] sm:$0xf] %v7717
    %v7768 = vld [vmem:[#allocation2 + $0x10] sm:$0xff]
    %v7769 = vld [vmem:[#allocation2 + $0x18] sm:$0xff]
    %v7770 = vld [vmem:[#allocation2 + $0x20] sm:$0xff]
    %v7771 = vld [vmem:[#allocation2 + $0x28] sm:$0xff]
    %v7772 = vld [vmem:[#allocation2 + $0x30] sm:$0xff]
    %v7773 = vld [vmem:[#allocation2 + $0x38] sm:$0xff]
    %v7774 = vld [vmem:[#allocation2 + $0x40] sm:$0xff]
    %v7775 = vld [vmem:[#allocation2 + $0x48] sm:$0xff]
    %v7776 = vld [vmem:[#allocation2 + $0x50] sm:$0xff]
    %v7777 = vld [vmem:[#allocation2 + $0x58] sm:$0xff]
    %v7778 = vld [vmem:[#allocation2 + $0x60] sm:$0xff]
    %v7779 = vld [vmem:[#allocation2 + $0x68] sm:$0xff]
    %v7780 = vld [vmem:[#allocation2 + $0x70] sm:$0xff]
    %v7781 = vld [vmem:[#allocation2 + $0x78] sm:$0xff]
    %v7782 = vld [vmem:[#allocation2 + $0x80] sm:$0xff]
    %v7783 = vld [vmem:[#allocation2 + $0x88] sm:$0xff]
    %v7784 = vld [vmem:[#allocation2 + $0x90] sm:$0xff]
    %v7785 = vld [vmem:[#allocation2 + $0x98] sm:$0xff]
    %v7786 = vld [vmem:[#allocation2 + $0xa0] sm:$0xff]
    %v7787 = vld [vmem:[#allocation2 + $0xa8] sm:$0xff]
    %v7788 = vld [vmem:[#allocation2 + $0xb0] sm:$0xff]
    %v7789 = vld [vmem:[#allocation2 + $0xb8] sm:$0xff]
    %v7790 = vld [vmem:[#allocation2 + $0xc0] sm:$0xff]
    %v7791 = vld [vmem:[#allocation2 + $0xc8] sm:$0xff]
    %v7792 = vld [vmem:[#allocation2 + $0xd0] sm:$0xff]
    %v7793 = vld [vmem:[#allocation2 + $0x11] sm:$0xff]
    %v7794 = vld [vmem:[#allocation2 + $0x19] sm:$0xff]
    %v7795 = vld [vmem:[#allocation2 + $0x21] sm:$0xff]
    %v7796 = vld [vmem:[#allocation2 + $0x29] sm:$0xff]
    %v7797 = vld [vmem:[#allocation2 + $0x31] sm:$0xff]
    %v7798 = vld [vmem:[#allocation2 + $0x39] sm:$0xff]
    %v7799 = vld [vmem:[#allocation2 + $0x41] sm:$0xff]
    %v7800 = vld [vmem:[#allocation2 + $0x49] sm:$0xff]
    %v7801 = vld [vmem:[#allocation2 + $0x51] sm:$0xff]
    %v7802 = vld [vmem:[#allocation2 + $0x59] sm:$0xff]
    %v7803 = vld [vmem:[#allocation2 + $0x61] sm:$0xff]
    %v7804 = vld [vmem:[#allocation2 + $0x69] sm:$0xff]
    %v7805 = vld [vmem:[#allocation2 + $0x71] sm:$0xff]
    %v7806 = vld [vmem:[#allocation2 + $0x79] sm:$0xff]
    %v7807 = vld [vmem:[#allocation2 + $0x81] sm:$0xff]
    %v7808 = vld [vmem:[#allocation2 + $0x89] sm:$0xff]
    %v7809 = vld [vmem:[#allocation2 + $0x91] sm:$0xff]
    %v7810 = vld [vmem:[#allocation2 + $0x99] sm:$0xff]
    %v7811 = vld [vmem:[#allocation2 + $0xa1] sm:$0xff]
    %v7812 = vld [vmem:[#allocation2 + $0xa9] sm:$0xff]
    %v7813 = vld [vmem:[#allocation2 + $0xb1] sm:$0xff]
    %v7814 = vld [vmem:[#allocation2 + $0xb9] sm:$0xff]
    %v7815 = vld [vmem:[#allocation2 + $0xc1] sm:$0xff]
    %v7816 = vld [vmem:[#allocation2 + $0xc9] sm:$0xff]
    %v7817 = vld [vmem:[#allocation2 + $0xd1] sm:$0xff]
    %v7818 = vld [vmem:[#allocation2 + $0xd9] sm:$0xff]
    %v7819 = vld [vmem:[#allocation2 + $0x1a] sm:$0xff]
    %v7820 = vld [vmem:[#allocation2 + $0x22] sm:$0xff]
    %v7821 = vld [vmem:[#allocation2 + $0x2a] sm:$0xff]
    %v7822 = vld [vmem:[#allocation2 + $0x32] sm:$0xff]
    %v7823 = vld [vmem:[#allocation2 + $0x3a] sm:$0xff]
    %v7824 = vld [vmem:[#allocation2 + $0x42] sm:$0xff]
    %v7825 = vld [vmem:[#allocation2 + $0x4a] sm:$0xff]
    %v7826 = vld [vmem:[#allocation2 + $0x52] sm:$0xff]
    %v7827 = vld [vmem:[#allocation2 + $0x5a] sm:$0xff]
    %v7828 = vld [vmem:[#allocation2 + $0x62] sm:$0xff]
    %v7829 = vld [vmem:[#allocation2 + $0x6a] sm:$0xff]
    %v7830 = vld [vmem:[#allocation2 + $0x72] sm:$0xff]
    %v7831 = vld [vmem:[#allocation2 + $0x7a] sm:$0xff]
    %v7832 = vld [vmem:[#allocation2 + $0x82] sm:$0xff]
    %v7833 = vld [vmem:[#allocation2 + $0x8a] sm:$0xff]
    %v7834 = vld [vmem:[#allocation2 + $0x92] sm:$0xff]
    %v7835 = vld [vmem:[#allocation2 + $0x9a] sm:$0xff]
    %v7836 = vld [vmem:[#allocation2 + $0xa2] sm:$0xff]
    %v7837 = vld [vmem:[#allocation2 + $0xaa] sm:$0xff]
    %v7838 = vld [vmem:[#allocation2 + $0xb2] sm:$0xff]
    %v7839 = vld [vmem:[#allocation2 + $0xba] sm:$0xff]
    %v7840 = vld [vmem:[#allocation2 + $0xc2] sm:$0xff]
    %v7841 = vld [vmem:[#allocation2 + $0xca] sm:$0xff]
    %v7842 = vld [vmem:[#allocation2 + $0xd2] sm:$0xff]
    %v7843 = vld [vmem:[#allocation2 + $0xda] sm:$0xff]
    %7869 = vrot.lane.b32.xlu0 %v7793, 32
    %v7870 = vpop.permute.xlu0 %7869
    %7871 = vrot.lane.b32.xlu0 %v7794, 32
    %v7872 = vpop.permute.xlu0 %7871
    %7873 = vrot.lane.b32.xlu0 %v7795, 32
    %v7874 = vpop.permute.xlu0 %7873
    %7875 = vrot.lane.b32.xlu0 %v7796, 32
    %v7876 = vpop.permute.xlu0 %7875
    %7877 = vrot.lane.b32.xlu0 %v7797, 32
    %v7878 = vpop.permute.xlu0 %7877
    %7879 = vrot.lane.b32.xlu0 %v7798, 32
    %v7880 = vpop.permute.xlu0 %7879
    %7881 = vrot.lane.b32.xlu0 %v7799, 32
    %v7882 = vpop.permute.xlu0 %7881
    %7883 = vrot.lane.b32.xlu0 %v7800, 32
    %v7884 = vpop.permute.xlu0 %7883
    %7885 = vrot.lane.b32.xlu0 %v7801, 32
    %v7886 = vpop.permute.xlu0 %7885
    %7887 = vrot.lane.b32.xlu0 %v7802, 32
    %v7888 = vpop.permute.xlu0 %7887
    %7889 = vrot.lane.b32.xlu0 %v7803, 32
    %v7890 = vpop.permute.xlu0 %7889
    %7891 = vrot.lane.b32.xlu0 %v7804, 32
    %v7892 = vpop.permute.xlu0 %7891
    %7893 = vrot.lane.b32.xlu0 %v7805, 32
    %v7894 = vpop.permute.xlu0 %7893
    %7895 = vrot.lane.b32.xlu0 %v7806, 32
    %v7896 = vpop.permute.xlu0 %7895
    %7897 = vrot.lane.b32.xlu0 %v7807, 32
    %v7898 = vpop.permute.xlu0 %7897
    %7899 = vrot.lane.b32.xlu0 %v7808, 32
    %v7900 = vpop.permute.xlu0 %7899
    %7901 = vrot.lane.b32.xlu0 %v7809, 32
    %v7902 = vpop.permute.xlu0 %7901
    %7903 = vrot.lane.b32.xlu0 %v7810, 32
    %v7904 = vpop.permute.xlu0 %7903
    %7905 = vrot.lane.b32.xlu0 %v7811, 32
    %v7906 = vpop.permute.xlu0 %7905
    %7907 = vrot.lane.b32.xlu0 %v7812, 32
    %v7908 = vpop.permute.xlu0 %7907
    %7909 = vrot.lane.b32.xlu0 %v7813, 32
    %v7910 = vpop.permute.xlu0 %7909
    %7911 = vrot.lane.b32.xlu0 %v7814, 32
    %v7912 = vpop.permute.xlu0 %7911
    %7913 = vrot.lane.b32.xlu0 %v7815, 32
    %v7914 = vpop.permute.xlu0 %7913
    %7915 = vrot.lane.b32.xlu0 %v7816, 32
    %v7916 = vpop.permute.xlu0 %7915
    %7917 = vrot.lane.b32.xlu0 %v7817, 32
    %v7918 = vpop.permute.xlu0 %7917
    %7945 = vrot.lane.b32.xlu0 %v7794, 64
    %v7946 = vpop.permute.xlu0 %7945
    %7947 = vrot.lane.b32.xlu0 %v7795, 64
    %v7948 = vpop.permute.xlu0 %7947
    %7949 = vrot.lane.b32.xlu0 %v7796, 64
    %v7950 = vpop.permute.xlu0 %7949
    %7951 = vrot.lane.b32.xlu0 %v7797, 64
    %v7952 = vpop.permute.xlu0 %7951
    %7953 = vrot.lane.b32.xlu0 %v7798, 64
    %v7954 = vpop.permute.xlu0 %7953
    %7955 = vrot.lane.b32.xlu0 %v7799, 64
    %v7956 = vpop.permute.xlu0 %7955
    %7957 = vrot.lane.b32.xlu0 %v7800, 64
    %v7958 = vpop.permute.xlu0 %7957
    %7959 = vrot.lane.b32.xlu0 %v7801, 64
    %v7960 = vpop.permute.xlu0 %7959
    %7961 = vrot.lane.b32.xlu0 %v7802, 64
    %v7962 = vpop.permute.xlu0 %7961
    %7963 = vrot.lane.b32.xlu0 %v7803, 64
    %v7964 = vpop.permute.xlu0 %7963
    %7965 = vrot.lane.b32.xlu0 %v7804, 64
    %v7966 = vpop.permute.xlu0 %7965
    %7967 = vrot.lane.b32.xlu0 %v7805, 64
    %v7968 = vpop.permute.xlu0 %7967
    %7969 = vrot.lane.b32.xlu0 %v7806, 64
    %v7970 = vpop.permute.xlu0 %7969
    %7971 = vrot.lane.b32.xlu0 %v7807, 64
    %v7972 = vpop.permute.xlu0 %7971
    %7973 = vrot.lane.b32.xlu0 %v7808, 64
    %v7974 = vpop.permute.xlu0 %7973
    %7975 = vrot.lane.b32.xlu0 %v7809, 64
    %v7976 = vpop.permute.xlu0 %7975
    %7977 = vrot.lane.b32.xlu0 %v7810, 64
    %v7978 = vpop.permute.xlu0 %7977
    %7979 = vrot.lane.b32.xlu0 %v7811, 64
    %v7980 = vpop.permute.xlu0 %7979
    %7981 = vrot.lane.b32.xlu0 %v7812, 64
    %v7982 = vpop.permute.xlu0 %7981
    %7983 = vrot.lane.b32.xlu0 %v7813, 64
    %v7984 = vpop.permute.xlu0 %7983
    %7985 = vrot.lane.b32.xlu0 %v7814, 64
    %v7986 = vpop.permute.xlu0 %7985
    %7987 = vrot.lane.b32.xlu0 %v7815, 64
    %v7988 = vpop.permute.xlu0 %7987
    %7989 = vrot.lane.b32.xlu0 %v7816, 64
    %v7990 = vpop.permute.xlu0 %7989
    %7991 = vrot.lane.b32.xlu0 %v7817, 64
    %v7992 = vpop.permute.xlu0 %7991
    %7993 = vrot.lane.b32.xlu0 %v7818, 64
    %v7994 = vpop.permute.xlu0 %7993
    %8045 = vrot.lane.b32.xlu0 %v7819, 96
    %v8046 = vpop.permute.xlu0 %8045
    %8047 = vrot.lane.b32.xlu0 %v7820, 96
    %v8048 = vpop.permute.xlu0 %8047
    %8049 = vrot.lane.b32.xlu0 %v7821, 96
    %v8050 = vpop.permute.xlu0 %8049
    %8051 = vrot.lane.b32.xlu0 %v7822, 96
    %v8052 = vpop.permute.xlu0 %8051
    %8053 = vrot.lane.b32.xlu0 %v7823, 96
    %v8054 = vpop.permute.xlu0 %8053
    %8055 = vrot.lane.b32.xlu0 %v7824, 96
    %v8056 = vpop.permute.xlu0 %8055
    %8057 = vrot.lane.b32.xlu0 %v7825, 96
    %v8058 = vpop.permute.xlu0 %8057
    %8059 = vrot.lane.b32.xlu0 %v7826, 96
    %v8060 = vpop.permute.xlu0 %8059
    %8061 = vrot.lane.b32.xlu0 %v7827, 96
    %v8062 = vpop.permute.xlu0 %8061
    %8063 = vrot.lane.b32.xlu0 %v7828, 96
    %v8064 = vpop.permute.xlu0 %8063
    %8065 = vrot.lane.b32.xlu0 %v7829, 96
    %v8066 = vpop.permute.xlu0 %8065
    %8067 = vrot.lane.b32.xlu0 %v7830, 96
    %v8068 = vpop.permute.xlu0 %8067
    %8069 = vrot.lane.b32.xlu0 %v7831, 96
    %v8070 = vpop.permute.xlu0 %8069
    %8071 = vrot.lane.b32.xlu0 %v7832, 96
    %v8072 = vpop.permute.xlu0 %8071
    %8073 = vrot.lane.b32.xlu0 %v7833, 96
    %v8074 = vpop.permute.xlu0 %8073
    %8075 = vrot.lane.b32.xlu0 %v7834, 96
    %v8076 = vpop.permute.xlu0 %8075
    %8077 = vrot.lane.b32.xlu0 %v7835, 96
    %v8078 = vpop.permute.xlu0 %8077
    %8079 = vrot.lane.b32.xlu0 %v7836, 96
    %v8080 = vpop.permute.xlu0 %8079
    %8081 = vrot.lane.b32.xlu0 %v7837, 96
    %v8082 = vpop.permute.xlu0 %8081
    %8083 = vrot.lane.b32.xlu0 %v7838, 96
    %v8084 = vpop.permute.xlu0 %8083
    %8085 = vrot.lane.b32.xlu0 %v7839, 96
    %v8086 = vpop.permute.xlu0 %8085
    %8087 = vrot.lane.b32.xlu0 %v7840, 96
    %v8088 = vpop.permute.xlu0 %8087
    %8089 = vrot.lane.b32.xlu0 %v7841, 96
    %v8090 = vpop.permute.xlu0 %8089
    %8091 = vrot.lane.b32.xlu0 %v7842, 96
    %v8092 = vpop.permute.xlu0 %8091
    %8093 = vrot.lane.b32.xlu0 %v7843, 96
    %v8094 = vpop.permute.xlu0 %8093
    %v8120 = vsel %vm109, %v7768, %v7870
    %v8121 = vsel %vm109, %v7769, %v7872
    %v8122 = vsel %vm109, %v7770, %v7874
    %v8123 = vsel %vm109, %v7771, %v7876
    %v8124 = vsel %vm109, %v7772, %v7878
    %v8125 = vsel %vm109, %v7773, %v7880
    %v8126 = vsel %vm109, %v7774, %v7882
    %v8127 = vsel %vm109, %v7775, %v7884
    %v8128 = vsel %vm109, %v7776, %v7886
    %v8129 = vsel %vm109, %v7777, %v7888
    %v8130 = vsel %vm109, %v7778, %v7890
    %v8131 = vsel %vm109, %v7779, %v7892
    %v8132 = vsel %vm109, %v7780, %v7894
    %v8133 = vsel %vm109, %v7781, %v7896
    %v8134 = vsel %vm109, %v7782, %v7898
    %v8135 = vsel %vm109, %v7783, %v7900
    %v8136 = vsel %vm109, %v7784, %v7902
    %v8137 = vsel %vm109, %v7785, %v7904
    %v8138 = vsel %vm109, %v7786, %v7906
    %v8139 = vsel %vm109, %v7787, %v7908
    %v8140 = vsel %vm109, %v7788, %v7910
    %v8141 = vsel %vm109, %v7789, %v7912
    %v8142 = vsel %vm109, %v7790, %v7914
    %v8143 = vsel %vm109, %v7791, %v7916
    %v8144 = vsel %vm109, %v7792, %v7918
    %v8145 = vsel %vm1156, %v8120, %v7946
    %v8146 = vsel %vm1156, %v8121, %v7948
    %v8147 = vsel %vm1156, %v8122, %v7950
    %v8148 = vsel %vm1156, %v8123, %v7952
    %v8149 = vsel %vm1156, %v8124, %v7954
    %v8150 = vsel %vm1156, %v8125, %v7956
    %v8151 = vsel %vm1156, %v8126, %v7958
    %v8152 = vsel %vm1156, %v8127, %v7960
    %v8153 = vsel %vm1156, %v8128, %v7962
    %v8154 = vsel %vm1156, %v8129, %v7964
    %v8155 = vsel %vm1156, %v8130, %v7966
    %v8156 = vsel %vm1156, %v8131, %v7968
    %v8157 = vsel %vm1156, %v8132, %v7970
    %v8158 = vsel %vm1156, %v8133, %v7972
    %v8159 = vsel %vm1156, %v8134, %v7974
    %v8160 = vsel %vm1156, %v8135, %v7976
    %v8161 = vsel %vm1156, %v8136, %v7978
    %v8162 = vsel %vm1156, %v8137, %v7980
    %v8163 = vsel %vm1156, %v8138, %v7982
    %v8164 = vsel %vm1156, %v8139, %v7984
    %v8165 = vsel %vm1156, %v8140, %v7986
    %v8166 = vsel %vm1156, %v8141, %v7988
    %v8167 = vsel %vm1156, %v8142, %v7990
    %v8168 = vsel %vm1156, %v8143, %v7992
    %v8169 = vsel %vm1156, %v8144, %v7994
    %v8170 = vsel %vm1182, %v8145, %v8046
    %v8171 = vsel %vm1182, %v8146, %v8048
    %v8172 = vsel %vm1182, %v8147, %v8050
    %v8173 = vsel %vm1182, %v8148, %v8052
    %v8174 = vsel %vm1182, %v8149, %v8054
    %v8175 = vsel %vm1182, %v8150, %v8056
    %v8176 = vsel %vm1182, %v8151, %v8058
    %v8177 = vsel %vm1182, %v8152, %v8060
    %v8178 = vsel %vm1182, %v8153, %v8062
    %v8179 = vsel %vm1182, %v8154, %v8064
    %v8180 = vsel %vm1182, %v8155, %v8066
    %v8181 = vsel %vm1182, %v8156, %v8068
    %v8182 = vsel %vm1182, %v8157, %v8070
    %v8183 = vsel %vm1182, %v8158, %v8072
    %v8184 = vsel %vm1182, %v8159, %v8074
    %v8185 = vsel %vm1182, %v8160, %v8076
    %v8186 = vsel %vm1182, %v8161, %v8078
    %v8187 = vsel %vm1182, %v8162, %v8080
    %v8188 = vsel %vm1182, %v8163, %v8082
    %v8189 = vsel %vm1182, %v8164, %v8084
    %v8190 = vsel %vm1182, %v8165, %v8086
    %v8191 = vsel %vm1182, %v8166, %v8088
    %v8192 = vsel %vm1182, %v8167, %v8090
    %v8193 = vsel %vm1182, %v8168, %v8092
    %v8194 = vsel %vm1182, %v8169, %v8094
    %v8195 = vpack.c.bf16 %v8171, %v8170
    %v8196 = vpack.c.bf16 %v8173, %v8172
    %v8197 = vpack.c.bf16 %v8175, %v8174
    %v8198 = vpack.c.bf16 %v8177, %v8176
    %v8199 = vpack.c.bf16 %v8179, %v8178
    %v8200 = vpack.c.bf16 %v8181, %v8180
    %v8201 = vpack.c.bf16 %v8183, %v8182
    %v8202 = vpack.c.bf16 %v8185, %v8184
    %v8203 = vpack.c.bf16 %v8187, %v8186
    %v8204 = vpack.c.bf16 %v8189, %v8188
    %v8205 = vpack.c.bf16 %v8191, %v8190
    %v8206 = vpack.c.bf16 %v8193, %v8192
    %v8207 = vpack.c.bf16 %v8194, %v8194
    %v8221 = vunpack.c.l.b16 %v8195
    %v8222 = vunpack.c.h.b16 %v8195
    %v8223 = vunpack.c.l.b16 %v8196
    %v8224 = vunpack.c.h.b16 %v8196
    %v8225 = vunpack.c.l.b16 %v8197
    %v8226 = vunpack.c.h.b16 %v8197
    %v8227 = vunpack.c.l.b16 %v8198
    %v8228 = vunpack.c.h.b16 %v8198
    %v8229 = vunpack.c.l.b16 %v8199
    %v8230 = vunpack.c.h.b16 %v8199
    %v8231 = vunpack.c.l.b16 %v8200
    %v8232 = vunpack.c.h.b16 %v8200
    %v8233 = vunpack.c.l.b16 %v8201
    %v8234 = vunpack.c.h.b16 %v8201
    %v8235 = vunpack.c.l.b16 %v8202
    %v8236 = vunpack.c.h.b16 %v8202
    %v8237 = vunpack.c.l.b16 %v8203
    %v8238 = vunpack.c.h.b16 %v8203
    %v8239 = vunpack.c.l.b16 %v8204
    %v8240 = vunpack.c.h.b16 %v8204
    %v8241 = vunpack.c.l.b16 %v8205
    %v8242 = vunpack.c.h.b16 %v8205
    %v8243 = vunpack.c.l.b16 %v8206
    %v8244 = vunpack.c.h.b16 %v8206
    %v8245 = vunpack.c.l.b16 %v8207
    %v8246 = vpack.c.b16 %v8221, %v8221
    %v8247 = vpack.c.b16 %v8222, %v8222
    %v8248 = vpack.c.b16 %v8223, %v8223
    %v8249 = vpack.c.b16 %v8224, %v8224
    %v8250 = vpack.c.b16 %v8225, %v8225
    %v8251 = vpack.c.b16 %v8226, %v8226
    %v8252 = vpack.c.b16 %v8227, %v8227
    %v8253 = vpack.c.b16 %v8228, %v8228
    %v8254 = vpack.c.b16 %v8229, %v8229
    %v8255 = vpack.c.b16 %v8230, %v8230
    %v8256 = vpack.c.b16 %v8231, %v8231
    %v8257 = vpack.c.b16 %v8232, %v8232
    %v8258 = vpack.c.b16 %v8233, %v8233
    %v8259 = vpack.c.b16 %v8234, %v8234
    %v8260 = vpack.c.b16 %v8235, %v8235
    %v8261 = vpack.c.b16 %v8236, %v8236
    %v8262 = vpack.c.b16 %v8237, %v8237
    %v8263 = vpack.c.b16 %v8238, %v8238
    %v8264 = vpack.c.b16 %v8239, %v8239
    %v8265 = vpack.c.b16 %v8240, %v8240
    %v8266 = vpack.c.b16 %v8241, %v8241
    %v8267 = vpack.c.b16 %v8242, %v8242
    %v8268 = vpack.c.b16 %v8243, %v8243
    %v8269 = vpack.c.b16 %v8244, %v8244
    %v8270 = vpack.c.b16 %v8245, %v8245
    %8296 = vst [vmem:[#allocation3 + $0x4] sm:$0xf] %v8246
    %8297 = vst [vmem:[#allocation3 + $0x10] sm:$0xf] %v8247
    %8298 = vst [vmem:[#allocation3 + $0x1c] sm:$0xf] %v8248
    %8299 = vst [vmem:[#allocation3 + $0x28] sm:$0xf] %v8249
    %8300 = vst [vmem:[#allocation3 + $0x34] sm:$0xf] %v8250
    %8301 = vst [vmem:[#allocation3 + $0x40] sm:$0xf] %v8251
    %8302 = vst [vmem:[#allocation3 + $0x4c] sm:$0xf] %v8252
    %8303 = vst [vmem:[#allocation3 + $0x58] sm:$0xf] %v8253
    %8304 = vst [vmem:[#allocation3 + $0x64] sm:$0xf] %v8254
    %8305 = vst [vmem:[#allocation3 + $0x70] sm:$0xf] %v8255
    %8306 = vst [vmem:[#allocation3 + $0x7c] sm:$0xf] %v8256
    %8307 = vst [vmem:[#allocation3 + $0x88] sm:$0xf] %v8257
    %8308 = vst [vmem:[#allocation3 + $0x94] sm:$0xf] %v8258
    %8309 = vst [vmem:[#allocation3 + $0xa0] sm:$0xf] %v8259
    %8310 = vst [vmem:[#allocation3 + $0xac] sm:$0xf] %v8260
    %8311 = vst [vmem:[#allocation3 + $0xb8] sm:$0xf] %v8261
    %8312 = vst [vmem:[#allocation3 + $0xc4] sm:$0xf] %v8262
    %8313 = vst [vmem:[#allocation3 + $0xd0] sm:$0xf] %v8263
    %8314 = vst [vmem:[#allocation3 + $0xdc] sm:$0xf] %v8264
    %8315 = vst [vmem:[#allocation3 + $0xe8] sm:$0xf] %v8265
    %8316 = vst [vmem:[#allocation3 + $0xf4] sm:$0xf] %v8266
    %8317 = vst [vmem:[#allocation3 + $0x100] sm:$0xf] %v8267
    %8318 = vst [vmem:[#allocation3 + $0x10c] sm:$0xf] %v8268
    %8319 = vst [vmem:[#allocation3 + $0x118] sm:$0xf] %v8269
    %8320 = vst [vmem:[#allocation3 + $0x124] sm:$0xf] %v8270
    %v8321 = vld [vmem:[#allocation2 + $0x1b] sm:$0xff]
    %v8322 = vld [vmem:[#allocation2 + $0x23] sm:$0xff]
    %v8323 = vld [vmem:[#allocation2 + $0x2b] sm:$0xff]
    %v8324 = vld [vmem:[#allocation2 + $0x33] sm:$0xff]
    %v8325 = vld [vmem:[#allocation2 + $0x3b] sm:$0xff]
    %v8326 = vld [vmem:[#allocation2 + $0x43] sm:$0xff]
    %v8327 = vld [vmem:[#allocation2 + $0x4b] sm:$0xff]
    %v8328 = vld [vmem:[#allocation2 + $0x53] sm:$0xff]
    %v8329 = vld [vmem:[#allocation2 + $0x5b] sm:$0xff]
    %v8330 = vld [vmem:[#allocation2 + $0x63] sm:$0xff]
    %v8331 = vld [vmem:[#allocation2 + $0x6b] sm:$0xff]
    %v8332 = vld [vmem:[#allocation2 + $0x73] sm:$0xff]
    %v8333 = vld [vmem:[#allocation2 + $0x7b] sm:$0xff]
    %v8334 = vld [vmem:[#allocation2 + $0x83] sm:$0xff]
    %v8335 = vld [vmem:[#allocation2 + $0x8b] sm:$0xff]
    %v8336 = vld [vmem:[#allocation2 + $0x93] sm:$0xff]
    %v8337 = vld [vmem:[#allocation2 + $0x9b] sm:$0xff]
    %v8338 = vld [vmem:[#allocation2 + $0xa3] sm:$0xff]
    %v8339 = vld [vmem:[#allocation2 + $0xab] sm:$0xff]
    %v8340 = vld [vmem:[#allocation2 + $0xb3] sm:$0xff]
    %v8341 = vld [vmem:[#allocation2 + $0xbb] sm:$0xff]
    %v8342 = vld [vmem:[#allocation2 + $0xc3] sm:$0xff]
    %v8343 = vld [vmem:[#allocation2 + $0xcb] sm:$0xff]
    %v8344 = vld [vmem:[#allocation2 + $0xd3] sm:$0xff]
    %v8345 = vld [vmem:[#allocation2 + $0xdb] sm:$0xff]
    %v8346 = vpack.c.bf16 %v8322, %v8321
    %v8347 = vpack.c.bf16 %v8324, %v8323
    %v8348 = vpack.c.bf16 %v8326, %v8325
    %v8349 = vpack.c.bf16 %v8328, %v8327
    %v8350 = vpack.c.bf16 %v8330, %v8329
    %v8351 = vpack.c.bf16 %v8332, %v8331
    %v8352 = vpack.c.bf16 %v8334, %v8333
    %v8353 = vpack.c.bf16 %v8336, %v8335
    %v8354 = vpack.c.bf16 %v8338, %v8337
    %v8355 = vpack.c.bf16 %v8340, %v8339
    %v8356 = vpack.c.bf16 %v8342, %v8341
    %v8357 = vpack.c.bf16 %v8344, %v8343
    %v8358 = vpack.c.bf16 %v8345, %v8345
    %v8372 = vunpack.c.l.b16 %v8346
    %v8373 = vunpack.c.h.b16 %v8346
    %v8374 = vunpack.c.l.b16 %v8347
    %v8375 = vunpack.c.h.b16 %v8347
    %v8376 = vunpack.c.l.b16 %v8348
    %v8377 = vunpack.c.h.b16 %v8348
    %v8378 = vunpack.c.l.b16 %v8349
    %v8379 = vunpack.c.h.b16 %v8349
    %v8380 = vunpack.c.l.b16 %v8350
    %v8381 = vunpack.c.h.b16 %v8350
    %v8382 = vunpack.c.l.b16 %v8351
    %v8383 = vunpack.c.h.b16 %v8351
    %v8384 = vunpack.c.l.b16 %v8352
    %v8385 = vunpack.c.h.b16 %v8352
    %v8386 = vunpack.c.l.b16 %v8353
    %v8387 = vunpack.c.h.b16 %v8353
    %v8388 = vunpack.c.l.b16 %v8354
    %v8389 = vunpack.c.h.b16 %v8354
    %v8390 = vunpack.c.l.b16 %v8355
    %v8391 = vunpack.c.h.b16 %v8355
    %v8392 = vunpack.c.l.b16 %v8356
    %v8393 = vunpack.c.h.b16 %v8356
    %v8394 = vunpack.c.l.b16 %v8357
    %v8395 = vunpack.c.h.b16 %v8357
    %v8396 = vunpack.c.l.b16 %v8358
    %v8397 = vpack.c.b16 %v8372, %v8372
    %v8398 = vpack.c.b16 %v8373, %v8373
    %v8399 = vpack.c.b16 %v8374, %v8374
    %v8400 = vpack.c.b16 %v8375, %v8375
    %v8401 = vpack.c.b16 %v8376, %v8376
    %v8402 = vpack.c.b16 %v8377, %v8377
    %v8403 = vpack.c.b16 %v8378, %v8378
    %v8404 = vpack.c.b16 %v8379, %v8379
    %v8405 = vpack.c.b16 %v8380, %v8380
    %v8406 = vpack.c.b16 %v8381, %v8381
    %v8407 = vpack.c.b16 %v8382, %v8382
    %v8408 = vpack.c.b16 %v8383, %v8383
    %v8409 = vpack.c.b16 %v8384, %v8384
    %v8410 = vpack.c.b16 %v8385, %v8385
    %v8411 = vpack.c.b16 %v8386, %v8386
    %v8412 = vpack.c.b16 %v8387, %v8387
    %v8413 = vpack.c.b16 %v8388, %v8388
    %v8414 = vpack.c.b16 %v8389, %v8389
    %v8415 = vpack.c.b16 %v8390, %v8390
    %v8416 = vpack.c.b16 %v8391, %v8391
    %v8417 = vpack.c.b16 %v8392, %v8392
    %v8418 = vpack.c.b16 %v8393, %v8393
    %v8419 = vpack.c.b16 %v8394, %v8394
    %v8420 = vpack.c.b16 %v8395, %v8395
    %v8421 = vpack.c.b16 %v8396, %v8396
    %8447 = vst.msk [vmem:[#allocation3 + $0x8] sm:$0xf] %vm2013, %v8397
    %8448 = vst.msk [vmem:[#allocation3 + $0x14] sm:$0xf] %vm2013, %v8398
    %8449 = vst.msk [vmem:[#allocation3 + $0x20] sm:$0xf] %vm2013, %v8399
    %8450 = vst.msk [vmem:[#allocation3 + $0x2c] sm:$0xf] %vm2013, %v8400
    %8451 = vst.msk [vmem:[#allocation3 + $0x38] sm:$0xf] %vm2013, %v8401
    %8452 = vst.msk [vmem:[#allocation3 + $0x44] sm:$0xf] %vm2013, %v8402
    %8453 = vst.msk [vmem:[#allocation3 + $0x50] sm:$0xf] %vm2013, %v8403
    %8454 = vst.msk [vmem:[#allocation3 + $0x5c] sm:$0xf] %vm2013, %v8404
    %8455 = vst.msk [vmem:[#allocation3 + $0x68] sm:$0xf] %vm2013, %v8405
    %8456 = vst.msk [vmem:[#allocation3 + $0x74] sm:$0xf] %vm2013, %v8406
    %8457 = vst.msk [vmem:[#allocation3 + $0x80] sm:$0xf] %vm2013, %v8407
    %8458 = vst.msk [vmem:[#allocation3 + $0x8c] sm:$0xf] %vm2013, %v8408
    %8459 = vst.msk [vmem:[#allocation3 + $0x98] sm:$0xf] %vm2013, %v8409
    %8460 = vst.msk [vmem:[#allocation3 + $0xa4] sm:$0xf] %vm2013, %v8410
    %8461 = vst.msk [vmem:[#allocation3 + $0xb0] sm:$0xf] %vm2013, %v8411
    %8462 = vst.msk [vmem:[#allocation3 + $0xbc] sm:$0xf] %vm2013, %v8412
    %8463 = vst.msk [vmem:[#allocation3 + $0xc8] sm:$0xf] %vm2013, %v8413
    %8464 = vst.msk [vmem:[#allocation3 + $0xd4] sm:$0xf] %vm2013, %v8414
    %8465 = vst.msk [vmem:[#allocation3 + $0xe0] sm:$0xf] %vm2013, %v8415
    %8466 = vst.msk [vmem:[#allocation3 + $0xec] sm:$0xf] %vm2013, %v8416
    %8467 = vst.msk [vmem:[#allocation3 + $0xf8] sm:$0xf] %vm2013, %v8417
    %8468 = vst.msk [vmem:[#allocation3 + $0x104] sm:$0xf] %vm2013, %v8418
    %8469 = vst.msk [vmem:[#allocation3 + $0x110] sm:$0xf] %vm2013, %v8419
    %8470 = vst.msk [vmem:[#allocation3 + $0x11c] sm:$0xf] %vm2013, %v8420
    %8471 = vst.msk [vmem:[#allocation3 + $0x128] sm:$0xf] %vm2013, %v8421
    %v8472 = vld [vmem:[#allocation3] sm:$0xff]
    %v8473 = vld [vmem:[#allocation3 + $0x8] sm:$0xf]
    %v8474 = vld [vmem:[#allocation3 + $0xc] sm:$0xff]
    %v8475 = vld [vmem:[#allocation3 + $0x14] sm:$0xf]
    %v8476 = vld [vmem:[#allocation3 + $0x18] sm:$0xff]
    %v8477 = vld [vmem:[#allocation3 + $0x20] sm:$0xf]
    %v8478 = vld [vmem:[#allocation3 + $0x24] sm:$0xff]
    %v8479 = vld [vmem:[#allocation3 + $0x2c] sm:$0xf]
    %v8480 = vld [vmem:[#allocation3 + $0x30] sm:$0xff]
    %v8481 = vld [vmem:[#allocation3 + $0x38] sm:$0xf]
    %v8482 = vld [vmem:[#allocation3 + $0x3c] sm:$0xff]
    %v8483 = vld [vmem:[#allocation3 + $0x44] sm:$0xf]
    %v8484 = vld [vmem:[#allocation3 + $0x48] sm:$0xff]
    %v8485 = vld [vmem:[#allocation3 + $0x50] sm:$0xf]
    %v8486 = vld [vmem:[#allocation3 + $0x54] sm:$0xff]
    %v8487 = vld [vmem:[#allocation3 + $0x5c] sm:$0xf]
    %v8488 = vld [vmem:[#allocation3 + $0x60] sm:$0xff]
    %v8489 = vld [vmem:[#allocation3 + $0x68] sm:$0xf]
    %v8490 = vld [vmem:[#allocation3 + $0x6c] sm:$0xff]
    %v8491 = vld [vmem:[#allocation3 + $0x74] sm:$0xf]
    %v8492 = vld [vmem:[#allocation3 + $0x78] sm:$0xff]
    %v8493 = vld [vmem:[#allocation3 + $0x80] sm:$0xf]
    %v8494 = vld [vmem:[#allocation3 + $0x84] sm:$0xff]
    %v8495 = vld [vmem:[#allocation3 + $0x8c] sm:$0xf]
    %v8496 = vld [vmem:[#allocation3 + $0x90] sm:$0xff]
    %v8497 = vld [vmem:[#allocation3 + $0x98] sm:$0xf]
    %v8498 = vld [vmem:[#allocation3 + $0x9c] sm:$0xff]
    %v8499 = vld [vmem:[#allocation3 + $0xa4] sm:$0xf]
    %v8500 = vld [vmem:[#allocation3 + $0xa8] sm:$0xff]
    %v8501 = vld [vmem:[#allocation3 + $0xb0] sm:$0xf]
    %v8502 = vld [vmem:[#allocation3 + $0xb4] sm:$0xff]
    %v8503 = vld [vmem:[#allocation3 + $0xbc] sm:$0xf]
    %v8504 = vld [vmem:[#allocation3 + $0xc0] sm:$0xff]
    %v8505 = vld [vmem:[#allocation3 + $0xc8] sm:$0xf]
    %v8506 = vld [vmem:[#allocation3 + $0xcc] sm:$0xff]
    %v8507 = vld [vmem:[#allocation3 + $0xd4] sm:$0xf]
    %v8508 = vld [vmem:[#allocation3 + $0xd8] sm:$0xff]
    %v8509 = vld [vmem:[#allocation3 + $0xe0] sm:$0xf]
    %v8510 = vld [vmem:[#allocation3 + $0xe4] sm:$0xff]
    %v8511 = vld [vmem:[#allocation3 + $0xec] sm:$0xf]
    %v8512 = vld [vmem:[#allocation3 + $0xf0] sm:$0xff]
    %v8513 = vld [vmem:[#allocation3 + $0xf8] sm:$0xf]
    %v8514 = vld [vmem:[#allocation3 + $0xfc] sm:$0xff]
    %v8515 = vld [vmem:[#allocation3 + $0x104] sm:$0xf]
    %v8516 = vld [vmem:[#allocation3 + $0x108] sm:$0xff]
    %v8517 = vld [vmem:[#allocation3 + $0x110] sm:$0xf]
    %v8518 = vld [vmem:[#allocation3 + $0x114] sm:$0xff]
    %v8519 = vld [vmem:[#allocation3 + $0x11c] sm:$0xf]
    %v8520 = vld [vmem:[#allocation3 + $0x120] sm:$0xff]
    %v8521 = vld [vmem:[#allocation3 + $0x128] sm:$0xf]
    %v8572 = vunpack.c.l.b16 %v8472
    %v8573 = vunpack.c.h.b16 %v8472
    %v8574 = vunpack.c.l.b16 %v8473
    %v8575 = vunpack.c.l.b16 %v8474
    %v8576 = vunpack.c.h.b16 %v8474
    %v8577 = vunpack.c.l.b16 %v8475
    %v8578 = vunpack.c.l.b16 %v8476
    %v8579 = vunpack.c.h.b16 %v8476
    %v8580 = vunpack.c.l.b16 %v8477
    %v8581 = vunpack.c.l.b16 %v8478
    %v8582 = vunpack.c.h.b16 %v8478
    %v8583 = vunpack.c.l.b16 %v8479
    %v8584 = vunpack.c.l.b16 %v8480
    %v8585 = vunpack.c.h.b16 %v8480
    %v8586 = vunpack.c.l.b16 %v8481
    %v8587 = vunpack.c.l.b16 %v8482
    %v8588 = vunpack.c.h.b16 %v8482
    %v8589 = vunpack.c.l.b16 %v8483
    %v8590 = vunpack.c.l.b16 %v8484
    %v8591 = vunpack.c.h.b16 %v8484
    %v8592 = vunpack.c.l.b16 %v8485
    %v8593 = vunpack.c.l.b16 %v8486
    %v8594 = vunpack.c.h.b16 %v8486
    %v8595 = vunpack.c.l.b16 %v8487
    %v8596 = vunpack.c.l.b16 %v8488
    %v8597 = vunpack.c.h.b16 %v8488
    %v8598 = vunpack.c.l.b16 %v8489
    %v8599 = vunpack.c.l.b16 %v8490
    %v8600 = vunpack.c.h.b16 %v8490
    %v8601 = vunpack.c.l.b16 %v8491
    %v8602 = vunpack.c.l.b16 %v8492
    %v8603 = vunpack.c.h.b16 %v8492
    %v8604 = vunpack.c.l.b16 %v8493
    %v8605 = vunpack.c.l.b16 %v8494
    %v8606 = vunpack.c.h.b16 %v8494
    %v8607 = vunpack.c.l.b16 %v8495
    %v8608 = vunpack.c.l.b16 %v8496
    %v8609 = vunpack.c.h.b16 %v8496
    %v8610 = vunpack.c.l.b16 %v8497
    %v8611 = vunpack.c.l.b16 %v8498
    %v8612 = vunpack.c.h.b16 %v8498
    %v8613 = vunpack.c.l.b16 %v8499
    %v8614 = vunpack.c.l.b16 %v8500
    %v8615 = vunpack.c.h.b16 %v8500
    %v8616 = vunpack.c.l.b16 %v8501
    %v8617 = vunpack.c.l.b16 %v8502
    %v8618 = vunpack.c.h.b16 %v8502
    %v8619 = vunpack.c.l.b16 %v8503
    %v8620 = vunpack.c.l.b16 %v8504
    %v8621 = vunpack.c.h.b16 %v8504
    %v8622 = vunpack.c.l.b16 %v8505
    %v8623 = vunpack.c.l.b16 %v8506
    %v8624 = vunpack.c.h.b16 %v8506
    %v8625 = vunpack.c.l.b16 %v8507
    %v8626 = vunpack.c.l.b16 %v8508
    %v8627 = vunpack.c.h.b16 %v8508
    %v8628 = vunpack.c.l.b16 %v8509
    %v8629 = vunpack.c.l.b16 %v8510
    %v8630 = vunpack.c.h.b16 %v8510
    %v8631 = vunpack.c.l.b16 %v8511
    %v8632 = vunpack.c.l.b16 %v8512
    %v8633 = vunpack.c.h.b16 %v8512
    %v8634 = vunpack.c.l.b16 %v8513
    %v8635 = vunpack.c.l.b16 %v8514
    %v8636 = vunpack.c.h.b16 %v8514
    %v8637 = vunpack.c.l.b16 %v8515
    %v8638 = vunpack.c.l.b16 %v8516
    %v8639 = vunpack.c.h.b16 %v8516
    %v8640 = vunpack.c.l.b16 %v8517
    %v8641 = vunpack.c.l.b16 %v8518
    %v8642 = vunpack.c.h.b16 %v8518
    %v8643 = vunpack.c.l.b16 %v8519
    %v8644 = vunpack.c.l.b16 %v8520
    %v8645 = vunpack.c.h.b16 %v8520
    %v8646 = vunpack.c.l.b16 %v8521
    %v8647 = vpack.c.b16 %v8575, %v8572
    %v8648 = vpack.c.b16 %v8576, %v8573
    %v8649 = vpack.c.b16 %v8577, %v8574
    %v8650 = vpack.c.b16 %v8581, %v8578
    %v8651 = vpack.c.b16 %v8582, %v8579
    %v8652 = vpack.c.b16 %v8583, %v8580
    %v8653 = vpack.c.b16 %v8587, %v8584
    %v8654 = vpack.c.b16 %v8588, %v8585
    %v8655 = vpack.c.b16 %v8589, %v8586
    %v8656 = vpack.c.b16 %v8593, %v8590
    %v8657 = vpack.c.b16 %v8594, %v8591
    %v8658 = vpack.c.b16 %v8595, %v8592
    %v8659 = vpack.c.b16 %v8599, %v8596
    %v8660 = vpack.c.b16 %v8600, %v8597
    %v8661 = vpack.c.b16 %v8601, %v8598
    %v8662 = vpack.c.b16 %v8605, %v8602
    %v8663 = vpack.c.b16 %v8606, %v8603
    %v8664 = vpack.c.b16 %v8607, %v8604
    %v8665 = vpack.c.b16 %v8611, %v8608
    %v8666 = vpack.c.b16 %v8612, %v8609
    %v8667 = vpack.c.b16 %v8613, %v8610
    %v8668 = vpack.c.b16 %v8617, %v8614
    %v8669 = vpack.c.b16 %v8618, %v8615
    %v8670 = vpack.c.b16 %v8619, %v8616
    %v8671 = vpack.c.b16 %v8623, %v8620
    %v8672 = vpack.c.b16 %v8624, %v8621
    %v8673 = vpack.c.b16 %v8625, %v8622
    %v8674 = vpack.c.b16 %v8629, %v8626
    %v8675 = vpack.c.b16 %v8630, %v8627
    %v8676 = vpack.c.b16 %v8631, %v8628
    %v8677 = vpack.c.b16 %v8635, %v8632
    %v8678 = vpack.c.b16 %v8636, %v8633
    %v8679 = vpack.c.b16 %v8637, %v8634
    %v8680 = vpack.c.b16 %v8641, %v8638
    %v8681 = vpack.c.b16 %v8642, %v8639
    %v8682 = vpack.c.b16 %v8643, %v8640
    %v8683 = vpack.c.b16 %v8644, %v8644
    %v8684 = vpack.c.b16 %v8645, %v8645
    %v8685 = vpack.c.b16 %v8646, %v8646
    %v8748 = vunpack.c.l.b16 %v7150
    %v8749 = vunpack.c.l.b16 %v7151
    %v8750 = vunpack.c.l.b16 %v7152
    %v8751 = vunpack.c.l.b16 %v7153
    %v8752 = vunpack.c.l.b16 %v7154
    %v8753 = vunpack.c.l.b16 %v7155
    %v8754 = vunpack.c.l.b16 %v7156
    %v8755 = vunpack.c.l.b16 %v7157
    %v8756 = vunpack.c.l.b16 %v7158
    %v8757 = vunpack.c.l.b16 %v7159
    %v8758 = vunpack.c.l.b16 %v7160
    %v8759 = vunpack.c.l.b16 %v7161
    %v8760 = vunpack.c.l.b16 %v7162
    %v8761 = vunpack.c.l.b16 %v7163
    %v8762 = vunpack.c.l.b16 %v7164
    %v8763 = vunpack.c.l.b16 %v7165
    %v8764 = vunpack.c.l.b16 %v7166
    %v8765 = vunpack.c.l.b16 %v7167
    %v8766 = vunpack.c.l.b16 %v7168
    %v8767 = vunpack.c.l.b16 %v7169
    %v8768 = vunpack.c.l.b16 %v7170
    %v8769 = vunpack.c.l.b16 %v7171
    %v8770 = vunpack.c.l.b16 %v7172
    %v8771 = vunpack.c.l.b16 %v7173
    %v8772 = vunpack.c.l.b16 %v7174
    %v8773 = vunpack.c.l.b16 %v7175
    %v8774 = vunpack.c.l.b16 %v7176
    %v8775 = vunpack.c.l.b16 %v7177
    %v8776 = vunpack.c.l.b16 %v7178
    %v8777 = vunpack.c.l.b16 %v7179
    %v8778 = vunpack.c.l.b16 %v7180
    %v8779 = vunpack.c.l.b16 %v7181
    %v8780 = vunpack.c.l.b16 %v7182
    %v8781 = vunpack.c.l.b16 %v7183
    %v8782 = vunpack.c.l.b16 %v7184
    %v8783 = vunpack.c.l.b16 %v7185
    %v8784 = vpack.c.b16 %v8749, %v8748
    %v8785 = vpack.c.b16 %v8751, %v8750
    %v8786 = vpack.c.b16 %v8753, %v8752
    %v8787 = vpack.c.b16 %v8755, %v8754
    %v8788 = vpack.c.b16 %v8757, %v8756
    %v8789 = vpack.c.b16 %v8759, %v8758
    %v8790 = vpack.c.b16 %v8761, %v8760
    %v8791 = vpack.c.b16 %v8763, %v8762
    %v8792 = vpack.c.b16 %v8765, %v8764
    %v8793 = vpack.c.b16 %v8767, %v8766
    %v8794 = vpack.c.b16 %v8769, %v8768
    %v8795 = vpack.c.b16 %v8771, %v8770
    %v8796 = vpack.c.b16 %v8773, %v8772
    %v8797 = vpack.c.b16 %v8775, %v8774
    %v8798 = vpack.c.b16 %v8777, %v8776
    %v8799 = vpack.c.b16 %v8779, %v8778
    %v8800 = vpack.c.b16 %v8781, %v8780
    %v8801 = vpack.c.b16 %v8783, %v8782
    %v8821 = vsel %vm109, %v8649, 0
    %v8824 = vsel %vm109, %v8652, 0
    %v8827 = vsel %vm109, %v8655, 0
    %v8830 = vsel %vm109, %v8658, 0
    %v8833 = vsel %vm109, %v8661, 0
    %v8836 = vsel %vm109, %v8664, 0
    %v8839 = vsel %vm109, %v8667, 0
    %v8842 = vsel %vm109, %v8670, 0
    %v8845 = vsel %vm109, %v8673, 0
    %v8848 = vsel %vm109, %v8676, 0
    %v8851 = vsel %vm109, %v8679, 0
    %v8854 = vsel %vm109, %v8682, 0
    %v8857 = vsel %vm109, %v8685, 0
    %8859 = vmatprep.subr.bf16.mxu0 0
    %8860 = vmatpush1.bf16.msra.mxu0 %v8791
    %8861 = vmatprep.subr.bf16.mxu0 0
    %8862 = vmatpush1.bf16.msra.mxu0 %v8790
    %8863 = vmatprep.subr.bf16.mxu0 0
    %8864 = vmatpush1.bf16.msra.mxu0 %v8789
    %8865 = vmatprep.subr.bf16.mxu0 0
    %8866 = vmatpush1.bf16.msra.mxu0 %v8788
    %8867 = vmatprep.subr.bf16.mxu0 0
    %8868 = vmatpush1.bf16.msra.mxu0 %v8787
    %8869 = vmatprep.subr.bf16.mxu0 0
    %8870 = vmatpush1.bf16.msra.mxu0 %v8786
    %8871 = vmatprep.subr.bf16.mxu0 0
    %8872 = vmatpush1.bf16.msra.mxu0 %v8785
    %8873 = vmatprep.subr.bf16.mxu0 0
    %8874 = vmatpush1.bf16.msra.mxu0 %v8784
    %8875 = vmatprep.subr.bf16.mxu0 0
    %8876 = vmatpush2.bf16.msra.mxu0 %v8799
    %8877 = vmatprep.subr.bf16.mxu0 0
    %8878 = vmatpush2.bf16.msra.mxu0 %v8798
    %8879 = vmatprep.subr.bf16.mxu0 0
    %8880 = vmatpush2.bf16.msra.mxu0 %v8797
    %8881 = vmatprep.subr.bf16.mxu0 0
    %8882 = vmatpush2.bf16.msra.mxu0 %v8796
    %8883 = vmatprep.subr.bf16.mxu0 0
    %8884 = vmatpush2.bf16.msra.mxu0 %v8795
    %8885 = vmatprep.subr.bf16.mxu0 0
    %8886 = vmatpush2.bf16.msra.mxu0 %v8794
    %8887 = vmatprep.subr.bf16.mxu0 0
    %8888 = vmatpush2.bf16.msra.mxu0 %v8793
    %8889 = vmatprep.subr.bf16.mxu0 0
    %8890 = vmatpush2.bf16.msra.mxu0 %v8792
    %8891 = vmatprep.mubr.bf16.mxu0 %v8648
    %8892 = vmatmul.mubr.bf16.gmra.mxu0 %v8647
    %v8893 = vpop.f32.mrf.mxu0
    %v8894 = vadd.f32 0.0, %v8893
    %v8895 = vpop.f32.mrf.mxu0
    %v8896 = vpop.f32.mrf.mxu0
    %v8897 = vadd.f32 0.0, %v8896
    %v8898 = vpop.f32.mrf.mxu0
    %8899 = vmatprep.mubr.bf16.mxu0 %v8651
    %8900 = vmatmul.mubr.bf16.gmra.mxu0 %v8650
    %v8901 = vpop.f32.mrf.mxu0
    %v8902 = vadd.f32 0.0, %v8901
    %v8903 = vpop.f32.mrf.mxu0
    %v8904 = vpop.f32.mrf.mxu0
    %v8905 = vadd.f32 0.0, %v8904
    %v8906 = vpop.f32.mrf.mxu0
    %8907 = vmatprep.mubr.bf16.mxu0 %v8654
    %8908 = vmatmul.mubr.bf16.gmra.mxu0 %v8653
    %v8909 = vpop.f32.mrf.mxu0
    %v8910 = vadd.f32 0.0, %v8909
    %v8911 = vpop.f32.mrf.mxu0
    %v8912 = vpop.f32.mrf.mxu0
    %v8913 = vadd.f32 0.0, %v8912
    %v8914 = vpop.f32.mrf.mxu0
    %8915 = vmatprep.mubr.bf16.mxu0 %v8657
    %8916 = vmatmul.mubr.bf16.gmra.mxu0 %v8656
    %v8917 = vpop.f32.mrf.mxu0
    %v8918 = vadd.f32 0.0, %v8917
    %v8919 = vpop.f32.mrf.mxu0
    %v8920 = vpop.f32.mrf.mxu0
    %v8921 = vadd.f32 0.0, %v8920
    %v8922 = vpop.f32.mrf.mxu0
    %8923 = vmatprep.mubr.bf16.mxu0 %v8660
    %8924 = vmatmul.mubr.bf16.gmra.mxu0 %v8659
    %v8925 = vpop.f32.mrf.mxu0
    %v8926 = vadd.f32 0.0, %v8925
    %v8927 = vpop.f32.mrf.mxu0
    %v8928 = vpop.f32.mrf.mxu0
    %v8929 = vadd.f32 0.0, %v8928
    %v8930 = vpop.f32.mrf.mxu0
    %8931 = vmatprep.mubr.bf16.mxu0 %v8663
    %8932 = vmatmul.mubr.bf16.gmra.mxu0 %v8662
    %v8933 = vpop.f32.mrf.mxu0
    %v8934 = vadd.f32 0.0, %v8933
    %v8935 = vpop.f32.mrf.mxu0
    %v8936 = vpop.f32.mrf.mxu0
    %v8937 = vadd.f32 0.0, %v8936
    %v8938 = vpop.f32.mrf.mxu0
    %8939 = vmatprep.mubr.bf16.mxu0 %v8666
    %8940 = vmatmul.mubr.bf16.gmra.mxu0 %v8665
    %v8941 = vpop.f32.mrf.mxu0
    %v8942 = vadd.f32 0.0, %v8941
    %v8943 = vpop.f32.mrf.mxu0
    %v8944 = vpop.f32.mrf.mxu0
    %v8945 = vadd.f32 0.0, %v8944
    %v8946 = vpop.f32.mrf.mxu0
    %8947 = vmatprep.mubr.bf16.mxu0 %v8669
    %8948 = vmatmul.mubr.bf16.gmra.mxu0 %v8668
    %v8949 = vpop.f32.mrf.mxu0
    %v8950 = vadd.f32 0.0, %v8949
    %v8951 = vpop.f32.mrf.mxu0
    %v8952 = vpop.f32.mrf.mxu0
    %v8953 = vadd.f32 0.0, %v8952
    %v8954 = vpop.f32.mrf.mxu0
    %8955 = vmatprep.mubr.bf16.mxu0 %v8672
    %8956 = vmatmul.mubr.bf16.gmra.mxu0 %v8671
    %v8957 = vpop.f32.mrf.mxu0
    %v8958 = vadd.f32 0.0, %v8957
    %v8959 = vpop.f32.mrf.mxu0
    %v8960 = vpop.f32.mrf.mxu0
    %v8961 = vadd.f32 0.0, %v8960
    %v8962 = vpop.f32.mrf.mxu0
    %8963 = vmatprep.mubr.bf16.mxu0 %v8675
    %8964 = vmatmul.mubr.bf16.gmra.mxu0 %v8674
    %v8965 = vpop.f32.mrf.mxu0
    %v8966 = vadd.f32 0.0, %v8965
    %v8967 = vpop.f32.mrf.mxu0
    %v8968 = vpop.f32.mrf.mxu0
    %v8969 = vadd.f32 0.0, %v8968
    %v8970 = vpop.f32.mrf.mxu0
    %8971 = vmatprep.mubr.bf16.mxu0 %v8678
    %8972 = vmatmul.mubr.bf16.gmra.mxu0 %v8677
    %v8973 = vpop.f32.mrf.mxu0
    %v8974 = vadd.f32 0.0, %v8973
    %v8975 = vpop.f32.mrf.mxu0
    %v8976 = vpop.f32.mrf.mxu0
    %v8977 = vadd.f32 0.0, %v8976
    %v8978 = vpop.f32.mrf.mxu0
    %8979 = vmatprep.mubr.bf16.mxu0 %v8681
    %8980 = vmatmul.mubr.bf16.gmra.mxu0 %v8680
    %v8981 = vpop.f32.mrf.mxu0
    %v8982 = vadd.f32 0.0, %v8981
    %v8983 = vpop.f32.mrf.mxu0
    %v8984 = vpop.f32.mrf.mxu0
    %v8985 = vadd.f32 0.0, %v8984
    %v8986 = vpop.f32.mrf.mxu0
    %8987 = vmatprep.mubr.bf16.mxu0 %v8684
    %8988 = vmatmul.mubr.bf16.gmra.mxu0 %v8683
    %v8989 = vpop.f32.mrf.mxu0
    %v8990 = vadd.f32 0.0, %v8989
    %v8991 = vpop.f32.mrf.mxu0
    %v8992 = vpop.f32.mrf.mxu0
    %v8993 = vpop.f32.mrf.mxu0
    %8994 = vdwg.mxu0
    %8995 = vmatprep.subr.bf16.mxu0 0
    %8996 = vmatpush1.bf16.msra.mxu0 0
    %8997 = vmatprep.subr.bf16.mxu0 0
    %8998 = vmatpush1.bf16.msra.mxu0 0
    %8999 = vmatprep.subr.bf16.mxu0 0
    %9000 = vmatpush1.bf16.msra.mxu0 0
    %9001 = vmatprep.subr.bf16.mxu0 0
    %9002 = vmatpush1.bf16.msra.mxu0 0
    %9003 = vmatprep.subr.bf16.mxu0 0
    %9004 = vmatpush1.bf16.msra.mxu0 0
    %9005 = vmatprep.subr.bf16.mxu0 0
    %9006 = vmatpush1.bf16.msra.mxu0 0
    %9007 = vmatprep.subr.bf16.mxu0 0
    %9008 = vmatpush1.bf16.msra.mxu0 %v8801
    %9009 = vmatprep.subr.bf16.mxu0 0
    %9010 = vmatpush1.bf16.msra.mxu0 %v8800
    %9011 = vmatprep.subr.bf16.mxu0 0
    %9012 = vmatpush2.bf16.msra.mxu0 0
    %9013 = vmatprep.subr.bf16.mxu0 0
    %9014 = vmatpush2.bf16.msra.mxu0 0
    %9015 = vmatprep.subr.bf16.mxu0 0
    %9016 = vmatpush2.bf16.msra.mxu0 0
    %9017 = vmatprep.subr.bf16.mxu0 0
    %9018 = vmatpush2.bf16.msra.mxu0 0
    %9019 = vmatprep.subr.bf16.mxu0 0
    %9020 = vmatpush2.bf16.msra.mxu0 0
    %9021 = vmatprep.subr.bf16.mxu0 0
    %9022 = vmatpush2.bf16.msra.mxu0 0
    %9023 = vmatprep.subr.bf16.mxu0 0
    %9024 = vmatpush2.bf16.msra.mxu0 0
    %9025 = vmatprep.subr.bf16.mxu0 0
    %9026 = vmatpush2.bf16.msra.mxu0 0
    %9027 = vmatprep.mubr.bf16.mxu0 0
    %9028 = vmatmul.mubr.bf16.gmra.mxu0 %v8821
    %v9029 = vpop.f32.mrf.mxu0
    %v9030 = vadd.f32 %v8894, %v9029
    %v9031 = vpop.f32.mrf.mxu0
    %v9032 = vpop.f32.mrf.mxu0
    %v9033 = vadd.f32 %v8897, %v9032
    %v9034 = vpop.f32.mrf.mxu0
    %9035 = vmatprep.mubr.bf16.mxu0 0
    %9036 = vmatmul.mubr.bf16.gmra.mxu0 %v8824
    %v9037 = vpop.f32.mrf.mxu0
    %v9038 = vadd.f32 %v8902, %v9037
    %v9039 = vpop.f32.mrf.mxu0
    %v9040 = vpop.f32.mrf.mxu0
    %v9041 = vadd.f32 %v8905, %v9040
    %v9042 = vpop.f32.mrf.mxu0
    %9043 = vmatprep.mubr.bf16.mxu0 0
    %9044 = vmatmul.mubr.bf16.gmra.mxu0 %v8827
    %v9045 = vpop.f32.mrf.mxu0
    %v9046 = vadd.f32 %v8910, %v9045
    %v9047 = vpop.f32.mrf.mxu0
    %v9048 = vpop.f32.mrf.mxu0
    %v9049 = vadd.f32 %v8913, %v9048
    %v9050 = vpop.f32.mrf.mxu0
    %9051 = vmatprep.mubr.bf16.mxu0 0
    %9052 = vmatmul.mubr.bf16.gmra.mxu0 %v8830
    %v9053 = vpop.f32.mrf.mxu0
    %v9054 = vadd.f32 %v8918, %v9053
    %v9055 = vpop.f32.mrf.mxu0
    %v9056 = vpop.f32.mrf.mxu0
    %v9057 = vadd.f32 %v8921, %v9056
    %v9058 = vpop.f32.mrf.mxu0
    %9059 = vmatprep.mubr.bf16.mxu0 0
    %9060 = vmatmul.mubr.bf16.gmra.mxu0 %v8833
    %v9061 = vpop.f32.mrf.mxu0
    %v9062 = vadd.f32 %v8926, %v9061
    %v9063 = vpop.f32.mrf.mxu0
    %v9064 = vpop.f32.mrf.mxu0
    %v9065 = vadd.f32 %v8929, %v9064
    %v9066 = vpop.f32.mrf.mxu0
    %9067 = vmatprep.mubr.bf16.mxu0 0
    %9068 = vmatmul.mubr.bf16.gmra.mxu0 %v8836
    %v9069 = vpop.f32.mrf.mxu0
    %v9070 = vadd.f32 %v8934, %v9069
    %v9071 = vpop.f32.mrf.mxu0
    %v9072 = vpop.f32.mrf.mxu0
    %v9073 = vadd.f32 %v8937, %v9072
    %v9074 = vpop.f32.mrf.mxu0
    %9075 = vmatprep.mubr.bf16.mxu0 0
    %9076 = vmatmul.mubr.bf16.gmra.mxu0 %v8839
    %v9077 = vpop.f32.mrf.mxu0
    %v9078 = vadd.f32 %v8942, %v9077
    %v9079 = vpop.f32.mrf.mxu0
    %v9080 = vpop.f32.mrf.mxu0
    %v9081 = vadd.f32 %v8945, %v9080
    %v9082 = vpop.f32.mrf.mxu0
    %9083 = vmatprep.mubr.bf16.mxu0 0
    %9084 = vmatmul.mubr.bf16.gmra.mxu0 %v8842
    %v9085 = vpop.f32.mrf.mxu0
    %v9086 = vadd.f32 %v8950, %v9085
    %v9087 = vpop.f32.mrf.mxu0
    %v9088 = vpop.f32.mrf.mxu0
    %v9089 = vadd.f32 %v8953, %v9088
    %v9090 = vpop.f32.mrf.mxu0
    %9091 = vmatprep.mubr.bf16.mxu0 0
    %9092 = vmatmul.mubr.bf16.gmra.mxu0 %v8845
    %v9093 = vpop.f32.mrf.mxu0
    %v9094 = vadd.f32 %v8958, %v9093
    %v9095 = vpop.f32.mrf.mxu0
    %v9096 = vpop.f32.mrf.mxu0
    %v9097 = vadd.f32 %v8961, %v9096
    %v9098 = vpop.f32.mrf.mxu0
    %9099 = vmatprep.mubr.bf16.mxu0 0
    %9100 = vmatmul.mubr.bf16.gmra.mxu0 %v8848
    %v9101 = vpop.f32.mrf.mxu0
    %v9102 = vadd.f32 %v8966, %v9101
    %v9103 = vpop.f32.mrf.mxu0
    %v9104 = vpop.f32.mrf.mxu0
    %v9105 = vadd.f32 %v8969, %v9104
    %v9106 = vpop.f32.mrf.mxu0
    %9107 = vmatprep.mubr.bf16.mxu0 0
    %9108 = vmatmul.mubr.bf16.gmra.mxu0 %v8851
    %v9109 = vpop.f32.mrf.mxu0
    %v9110 = vadd.f32 %v8974, %v9109
    %v9111 = vpop.f32.mrf.mxu0
    %v9112 = vpop.f32.mrf.mxu0
    %v9113 = vadd.f32 %v8977, %v9112
    %v9114 = vpop.f32.mrf.mxu0
    %9115 = vmatprep.mubr.bf16.mxu0 0
    %9116 = vmatmul.mubr.bf16.gmra.mxu0 %v8854
    %v9117 = vpop.f32.mrf.mxu0
    %v9118 = vadd.f32 %v8982, %v9117
    %v9119 = vpop.f32.mrf.mxu0
    %v9120 = vpop.f32.mrf.mxu0
    %v9121 = vadd.f32 %v8985, %v9120
    %v9122 = vpop.f32.mrf.mxu0
    %9123 = vmatprep.mubr.bf16.mxu0 0
    %9124 = vmatmul.mubr.bf16.gmra.mxu0 %v8857
    %v9125 = vpop.f32.mrf.mxu0
    %v9126 = vadd.f32 %v8990, %v9125
    %v9127 = vpop.f32.mrf.mxu0
    %v9128 = vpop.f32.mrf.mxu0
    %v9129 = vpop.f32.mrf.mxu0
    %9130 = vdwg.mxu0
    %v9132 = vlaneseq
    %v9133 = vshrl.u32 %v9132, 7
    %v9134 = vsub.s32 0, %v9133
    %v9135 = vrot.slane %v7187, %v9134
    %v9137 = vmul.f32 %v9030, %v9135
    %v9138 = vmul.f32 %v9033, %v9135
    %v9139 = vmul.f32 %v9038, %v9135
    %v9140 = vmul.f32 %v9041, %v9135
    %v9141 = vmul.f32 %v9046, %v9135
    %v9142 = vmul.f32 %v9049, %v9135
    %v9143 = vmul.f32 %v9054, %v9135
    %v9144 = vmul.f32 %v9057, %v9135
    %v9145 = vmul.f32 %v9062, %v9135
    %v9146 = vmul.f32 %v9065, %v9135
    %v9147 = vmul.f32 %v9070, %v9135
    %v9148 = vmul.f32 %v9073, %v9135
    %v9149 = vmul.f32 %v9078, %v9135
    %v9150 = vmul.f32 %v9081, %v9135
    %v9151 = vmul.f32 %v9086, %v9135
    %v9152 = vmul.f32 %v9089, %v9135
    %v9153 = vmul.f32 %v9094, %v9135
    %v9154 = vmul.f32 %v9097, %v9135
    %v9155 = vmul.f32 %v9102, %v9135
    %v9156 = vmul.f32 %v9105, %v9135
    %v9157 = vmul.f32 %v9110, %v9135
    %v9158 = vmul.f32 %v9113, %v9135
    %v9159 = vmul.f32 %v9118, %v9135
    %v9160 = vmul.f32 %v9121, %v9135
    %v9161 = vmul.f32 %v9126, %v9135
    %v9163 = vlaneseq
    %v9164 = vshrl.u32 %v9163, 7
    %v9165 = vsub.s32 0, %v9164
    %v9166 = vrot.slane %v7189, %v9165
    %v9168 = vadd.f32 %v9137, %v9166
    %v9169 = vadd.f32 %v9138, %v9166
    %v9170 = vadd.f32 %v9139, %v9166
    %v9171 = vadd.f32 %v9140, %v9166
    %v9172 = vadd.f32 %v9141, %v9166
    %v9173 = vadd.f32 %v9142, %v9166
    %v9174 = vadd.f32 %v9143, %v9166
    %v9175 = vadd.f32 %v9144, %v9166
    %v9176 = vadd.f32 %v9145, %v9166
    %v9177 = vadd.f32 %v9146, %v9166
    %v9178 = vadd.f32 %v9147, %v9166
    %v9179 = vadd.f32 %v9148, %v9166
    %v9180 = vadd.f32 %v9149, %v9166
    %v9181 = vadd.f32 %v9150, %v9166
    %v9182 = vadd.f32 %v9151, %v9166
    %v9183 = vadd.f32 %v9152, %v9166
    %v9184 = vadd.f32 %v9153, %v9166
    %v9185 = vadd.f32 %v9154, %v9166
    %v9186 = vadd.f32 %v9155, %v9166
    %v9187 = vadd.f32 %v9156, %v9166
    %v9188 = vadd.f32 %v9157, %v9166
    %v9189 = vadd.f32 %v9158, %v9166
    %v9190 = vadd.f32 %v9159, %v9166
    %v9191 = vadd.f32 %v9160, %v9166
    %v9192 = vadd.f32 %v9161, %v9166
    %v9193 = vmul.f32 %v9168, %v519
    %v9194 = vmul.f32 %v9169, %v524
    %v9195 = vmul.f32 %v9170, %v529
    %v9196 = vmul.f32 %v9171, %v534
    %v9197 = vmul.f32 %v9172, %v539
    %v9198 = vmul.f32 %v9173, %v544
    %v9199 = vmul.f32 %v9174, %v549
    %v9200 = vmul.f32 %v9175, %v554
    %v9201 = vmul.f32 %v9176, %v559
    %v9202 = vmul.f32 %v9177, %v564
    %v9203 = vmul.f32 %v9178, %v569
    %v9204 = vmul.f32 %v9179, %v574
    %v9205 = vmul.f32 %v9180, %v579
    %v9206 = vmul.f32 %v9181, %v584
    %v9207 = vmul.f32 %v9182, %v589
    %v9208 = vmul.f32 %v9183, %v594
    %v9209 = vmul.f32 %v9184, %v599
    %v9210 = vmul.f32 %v9185, %v604
    %v9211 = vmul.f32 %v9186, %v609
    %v9212 = vmul.f32 %v9187, %v614
    %v9213 = vmul.f32 %v9188, %v619
    %v9214 = vmul.f32 %v9189, %v624
    %v9215 = vmul.f32 %v9190, %v629
    %v9216 = vmul.f32 %v9191, %v634
    %v9217 = vmul.f32 %v9192, %v639
    %v9218 = vadd.f32 %v5030, %v9193
    %v9219 = vadd.f32 %v5031, %v9194
    %v9220 = vadd.f32 %v5032, %v9195
    %v9221 = vadd.f32 %v5033, %v9196
    %v9222 = vadd.f32 %v5034, %v9197
    %v9223 = vadd.f32 %v5035, %v9198
    %v9224 = vadd.f32 %v5036, %v9199
    %v9225 = vadd.f32 %v5037, %v9200
    %v9226 = vadd.f32 %v5038, %v9201
    %v9227 = vadd.f32 %v5039, %v9202
    %v9228 = vadd.f32 %v5040, %v9203
    %v9229 = vadd.f32 %v5041, %v9204
    %v9230 = vadd.f32 %v5042, %v9205
    %v9231 = vadd.f32 %v5043, %v9206
    %v9232 = vadd.f32 %v5044, %v9207
    %v9233 = vadd.f32 %v5045, %v9208
    %v9234 = vadd.f32 %v5046, %v9209
    %v9235 = vadd.f32 %v5047, %v9210
    %v9236 = vadd.f32 %v5048, %v9211
    %v9237 = vadd.f32 %v5049, %v9212
    %v9238 = vadd.f32 %v5050, %v9213
    %v9239 = vadd.f32 %v5051, %v9214
    %v9240 = vadd.f32 %v5052, %v9215
    %v9241 = vadd.f32 %v5053, %v9216
    %v9242 = vadd.f32 %v5054, %v9217
    %v9243 = vmax.f32 %v9218, 0.0
    %v9244 = vmax.f32 %v9219, 0.0
    %v9245 = vmax.f32 %v9220, 0.0
    %v9246 = vmax.f32 %v9221, 0.0
    %v9247 = vmax.f32 %v9222, 0.0
    %v9248 = vmax.f32 %v9223, 0.0
    %v9249 = vmax.f32 %v9224, 0.0
    %v9250 = vmax.f32 %v9225, 0.0
    %v9251 = vmax.f32 %v9226, 0.0
    %v9252 = vmax.f32 %v9227, 0.0
    %v9253 = vmax.f32 %v9228, 0.0
    %v9254 = vmax.f32 %v9229, 0.0
    %v9255 = vmax.f32 %v9230, 0.0
    %v9256 = vmax.f32 %v9231, 0.0
    %v9257 = vmax.f32 %v9232, 0.0
    %v9258 = vmax.f32 %v9233, 0.0
    %v9259 = vmax.f32 %v9234, 0.0
    %v9260 = vmax.f32 %v9235, 0.0
    %v9261 = vmax.f32 %v9236, 0.0
    %v9262 = vmax.f32 %v9237, 0.0
    %v9263 = vmax.f32 %v9238, 0.0
    %v9264 = vmax.f32 %v9239, 0.0
    %v9265 = vmax.f32 %v9240, 0.0
    %v9266 = vmax.f32 %v9241, 0.0
    %v9267 = vmax.f32 %v9242, 0.0
    %v9268 = vsub.f32 %v9243, %v5030
    %v9269 = vsub.f32 %v9244, %v5031
    %v9270 = vsub.f32 %v9245, %v5032
    %v9271 = vsub.f32 %v9246, %v5033
    %v9272 = vsub.f32 %v9247, %v5034
    %v9273 = vsub.f32 %v9248, %v5035
    %v9274 = vsub.f32 %v9249, %v5036
    %v9275 = vsub.f32 %v9250, %v5037
    %v9276 = vsub.f32 %v9251, %v5038
    %v9277 = vsub.f32 %v9252, %v5039
    %v9278 = vsub.f32 %v9253, %v5040
    %v9279 = vsub.f32 %v9254, %v5041
    %v9280 = vsub.f32 %v9255, %v5042
    %v9281 = vsub.f32 %v9256, %v5043
    %v9282 = vsub.f32 %v9257, %v5044
    %v9283 = vsub.f32 %v9258, %v5045
    %v9284 = vsub.f32 %v9259, %v5046
    %v9285 = vsub.f32 %v9260, %v5047
    %v9286 = vsub.f32 %v9261, %v5048
    %v9287 = vsub.f32 %v9262, %v5049
    %v9288 = vsub.f32 %v9263, %v5050
    %v9289 = vsub.f32 %v9264, %v5051
    %v9290 = vsub.f32 %v9265, %v5052
    %v9291 = vsub.f32 %v9266, %v5053
    %v9292 = vsub.f32 %v9267, %v5054
    %s9293 = scalar_lea.vmem %s25, 200
    %9294 = vst.msk [vmem:[%s9293] sm:$0xff] %vm109, %v9268
    %9295 = vst.msk [vmem:[%s9293 + $0x8] sm:$0xff] %vm109, %v9269
    %9296 = vst.msk [vmem:[%s9293 + $0x10] sm:$0xff] %vm109, %v9270
    %9297 = vst.msk [vmem:[%s9293 + $0x18] sm:$0xff] %vm109, %v9271
    %9298 = vst.msk [vmem:[%s9293 + $0x20] sm:$0xff] %vm109, %v9272
    %9299 = vst.msk [vmem:[%s9293 + $0x28] sm:$0xff] %vm109, %v9273
    %9300 = vst.msk [vmem:[%s9293 + $0x30] sm:$0xff] %vm109, %v9274
    %9301 = vst.msk [vmem:[%s9293 + $0x38] sm:$0xff] %vm109, %v9275
    %9302 = vst.msk [vmem:[%s9293 + $0x40] sm:$0xff] %vm109, %v9276
    %9303 = vst.msk [vmem:[%s9293 + $0x48] sm:$0xff] %vm109, %v9277
    %9304 = vst.msk [vmem:[%s9293 + $0x50] sm:$0xff] %vm109, %v9278
    %9305 = vst.msk [vmem:[%s9293 + $0x58] sm:$0xff] %vm109, %v9279
    %9306 = vst.msk [vmem:[%s9293 + $0x60] sm:$0xff] %vm109, %v9280
    %9307 = vst.msk [vmem:[%s9293 + $0x68] sm:$0xff] %vm109, %v9281
    %9308 = vst.msk [vmem:[%s9293 + $0x70] sm:$0xff] %vm109, %v9282
    %9309 = vst.msk [vmem:[%s9293 + $0x78] sm:$0xff] %vm109, %v9283
    %9310 = vst.msk [vmem:[%s9293 + $0x80] sm:$0xff] %vm109, %v9284
    %9311 = vst.msk [vmem:[%s9293 + $0x88] sm:$0xff] %vm109, %v9285
    %9312 = vst.msk [vmem:[%s9293 + $0x90] sm:$0xff] %vm109, %v9286
    %9313 = vst.msk [vmem:[%s9293 + $0x98] sm:$0xff] %vm109, %v9287
    %9314 = vst.msk [vmem:[%s9293 + $0xa0] sm:$0xff] %vm109, %v9288
    %9315 = vst.msk [vmem:[%s9293 + $0xa8] sm:$0xff] %vm109, %v9289
    %9316 = vst.msk [vmem:[%s9293 + $0xb0] sm:$0xff] %vm109, %v9290
    %9317 = vst.msk [vmem:[%s9293 + $0xb8] sm:$0xff] %vm109, %v9291
    %9318 = vst.msk [vmem:[%s9293 + $0xc0] sm:$0xff] %vm109, %v9292
    %s9319 = scalar_lea.vmem %s26, 200
    %9320 = vst.msk [vmem:[%s9319] sm:$0xff] %vm109, %v7124
    %9321 = vst.msk [vmem:[%s9319 + $0x8] sm:$0xff] %vm109, %v7125
    %9322 = vst.msk [vmem:[%s9319 + $0x10] sm:$0xff] %vm109, %v7126
    %9323 = vst.msk [vmem:[%s9319 + $0x18] sm:$0xff] %vm109, %v7127
    %9324 = vst.msk [vmem:[%s9319 + $0x20] sm:$0xff] %vm109, %v7128
    %9325 = vst.msk [vmem:[%s9319 + $0x28] sm:$0xff] %vm109, %v7129
    %9326 = vst.msk [vmem:[%s9319 + $0x30] sm:$0xff] %vm109, %v7130
    %9327 = vst.msk [vmem:[%s9319 + $0x38] sm:$0xff] %vm109, %v7131
    %9328 = vst.msk [vmem:[%s9319 + $0x40] sm:$0xff] %vm109, %v7132
    %9329 = vst.msk [vmem:[%s9319 + $0x48] sm:$0xff] %vm109, %v7133
    %9330 = vst.msk [vmem:[%s9319 + $0x50] sm:$0xff] %vm109, %v7134
    %9331 = vst.msk [vmem:[%s9319 + $0x58] sm:$0xff] %vm109, %v7135
    %9332 = vst.msk [vmem:[%s9319 + $0x60] sm:$0xff] %vm109, %v7136
    %9333 = vst.msk [vmem:[%s9319 + $0x68] sm:$0xff] %vm109, %v7137
    %9334 = vst.msk [vmem:[%s9319 + $0x70] sm:$0xff] %vm109, %v7138
    %9335 = vst.msk [vmem:[%s9319 + $0x78] sm:$0xff] %vm109, %v7139
    %9336 = vst.msk [vmem:[%s9319 + $0x80] sm:$0xff] %vm109, %v7140
    %9337 = vst.msk [vmem:[%s9319 + $0x88] sm:$0xff] %vm109, %v7141
    %9338 = vst.msk [vmem:[%s9319 + $0x90] sm:$0xff] %vm109, %v7142
    %9339 = vst.msk [vmem:[%s9319 + $0x98] sm:$0xff] %vm109, %v7143
    %9340 = vst.msk [vmem:[%s9319 + $0xa0] sm:$0xff] %vm109, %v7144
    %9341 = vst.msk [vmem:[%s9319 + $0xa8] sm:$0xff] %vm109, %v7145
    %9342 = vst.msk [vmem:[%s9319 + $0xb0] sm:$0xff] %vm109, %v7146
    %9343 = vst.msk [vmem:[%s9319 + $0xb8] sm:$0xff] %vm109, %v7147
    %9344 = vst.msk [vmem:[%s9319 + $0xc0] sm:$0xff] %vm109, %v7148
    %s9345 = scalar_lea.vmem %s24, 400
    %9346 = vst.msk [vmem:[%s9345] sm:$0xff] %vm109, %v9243
    %9347 = vst.msk [vmem:[%s9345 + $0x8] sm:$0xff] %vm109, %v9244
    %9348 = vst.msk [vmem:[%s9345 + $0x10] sm:$0xff] %vm109, %v9245
    %9349 = vst.msk [vmem:[%s9345 + $0x18] sm:$0xff] %vm109, %v9246
    %9350 = vst.msk [vmem:[%s9345 + $0x20] sm:$0xff] %vm109, %v9247
    %9351 = vst.msk [vmem:[%s9345 + $0x28] sm:$0xff] %vm109, %v9248
    %9352 = vst.msk [vmem:[%s9345 + $0x30] sm:$0xff] %vm109, %v9249
    %9353 = vst.msk [vmem:[%s9345 + $0x38] sm:$0xff] %vm109, %v9250
    %9354 = vst.msk [vmem:[%s9345 + $0x40] sm:$0xff] %vm109, %v9251
    %9355 = vst.msk [vmem:[%s9345 + $0x48] sm:$0xff] %vm109, %v9252
    %9356 = vst.msk [vmem:[%s9345 + $0x50] sm:$0xff] %vm109, %v9253
    %9357 = vst.msk [vmem:[%s9345 + $0x58] sm:$0xff] %vm109, %v9254
    %9358 = vst.msk [vmem:[%s9345 + $0x60] sm:$0xff] %vm109, %v9255
    %9359 = vst.msk [vmem:[%s9345 + $0x68] sm:$0xff] %vm109, %v9256
    %9360 = vst.msk [vmem:[%s9345 + $0x70] sm:$0xff] %vm109, %v9257
    %9361 = vst.msk [vmem:[%s9345 + $0x78] sm:$0xff] %vm109, %v9258
    %9362 = vst.msk [vmem:[%s9345 + $0x80] sm:$0xff] %vm109, %v9259
    %9363 = vst.msk [vmem:[%s9345 + $0x88] sm:$0xff] %vm109, %v9260
    %9364 = vst.msk [vmem:[%s9345 + $0x90] sm:$0xff] %vm109, %v9261
    %9365 = vst.msk [vmem:[%s9345 + $0x98] sm:$0xff] %vm109, %v9262
    %9366 = vst.msk [vmem:[%s9345 + $0xa0] sm:$0xff] %vm109, %v9263
    %9367 = vst.msk [vmem:[%s9345 + $0xa8] sm:$0xff] %vm109, %v9264
    %9368 = vst.msk [vmem:[%s9345 + $0xb0] sm:$0xff] %vm109, %v9265
    %9369 = vst.msk [vmem:[%s9345 + $0xb8] sm:$0xff] %vm109, %v9266
    %9370 = vst.msk [vmem:[%s9345 + $0xc0] sm:$0xff] %vm109, %v9267
    %v9371 = vld [vmem:[%s9345] sm:$0xff]
    %v9372 = vld [vmem:[%s9345 + $0x8] sm:$0xff]
    %v9373 = vld [vmem:[%s9345 + $0x10] sm:$0xff]
    %v9374 = vld [vmem:[%s9345 + $0x18] sm:$0xff]
    %v9375 = vld [vmem:[%s9345 + $0x20] sm:$0xff]
    %v9376 = vld [vmem:[%s9345 + $0x28] sm:$0xff]
    %v9377 = vld [vmem:[%s9345 + $0x30] sm:$0xff]
    %v9378 = vld [vmem:[%s9345 + $0x38] sm:$0xff]
    %v9379 = vld [vmem:[%s9345 + $0x40] sm:$0xff]
    %v9380 = vld [vmem:[%s9345 + $0x48] sm:$0xff]
    %v9381 = vld [vmem:[%s9345 + $0x50] sm:$0xff]
    %v9382 = vld [vmem:[%s9345 + $0x58] sm:$0xff]
    %v9383 = vld [vmem:[%s9345 + $0x60] sm:$0xff]
    %v9384 = vld [vmem:[%s9345 + $0x68] sm:$0xff]
    %v9385 = vld [vmem:[%s9345 + $0x70] sm:$0xff]
    %v9386 = vld [vmem:[%s9345 + $0x78] sm:$0xff]
    %v9387 = vld [vmem:[%s9345 + $0x80] sm:$0xff]
    %v9388 = vld [vmem:[%s9345 + $0x88] sm:$0xff]
    %v9389 = vld [vmem:[%s9345 + $0x90] sm:$0xff]
    %v9390 = vld [vmem:[%s9345 + $0x98] sm:$0xff]
    %v9391 = vld [vmem:[%s9345 + $0xa0] sm:$0xff]
    %v9392 = vld [vmem:[%s9345 + $0xa8] sm:$0xff]
    %v9393 = vld [vmem:[%s9345 + $0xb0] sm:$0xff]
    %v9394 = vld [vmem:[%s9345 + $0xb8] sm:$0xff]
    %v9395 = vld [vmem:[%s9345 + $0xc0] sm:$0xff]
    %v9396 = vld [vmem:[%s9] sm:$0xff]
    %v9397 = vld [vmem:[%s9 + $0x8] sm:$0xff]
    %v9398 = vld [vmem:[%s9 + $0x10] sm:$0xff]
    %v9399 = vld [vmem:[%s9 + $0x18] sm:$0xff]
    %v9401 = vsel %vm109, %v9371, 0
    %v9404 = vsel %vm109, %v9372, 0
    %v9407 = vsel %vm109, %v9373, 0
    %v9410 = vsel %vm109, %v9374, 0
    %v9413 = vsel %vm109, %v9375, 0
    %v9416 = vsel %vm109, %v9376, 0
    %v9419 = vsel %vm109, %v9377, 0
    %v9422 = vsel %vm109, %v9378, 0
    %v9425 = vsel %vm109, %v9379, 0
    %v9428 = vsel %vm109, %v9380, 0
    %v9431 = vsel %vm109, %v9381, 0
    %v9434 = vsel %vm109, %v9382, 0
    %v9437 = vsel %vm109, %v9383, 0
    %v9440 = vsel %vm109, %v9384, 0
    %v9443 = vsel %vm109, %v9385, 0
    %v9446 = vsel %vm109, %v9386, 0
    %v9449 = vsel %vm109, %v9387, 0
    %v9452 = vsel %vm109, %v9388, 0
    %v9455 = vsel %vm109, %v9389, 0
    %v9458 = vsel %vm109, %v9390, 0
    %v9461 = vsel %vm109, %v9391, 0
    %v9464 = vsel %vm109, %v9392, 0
    %v9467 = vsel %vm109, %v9393, 0
    %v9470 = vsel %vm109, %v9394, 0
    %v9473 = vsel %vm109, %v9395, 0
    %9475 = vmatprep.subr.mxu0 0.0
    %9476 = vmatpush1.msra.mxu0 0.0
    %9477 = vmatprep.subr.mxu0 0.0
    %9478 = vmatpush1.msra.mxu0 0.0
    %9479 = vmatprep.subr.mxu0 0.0
    %9480 = vmatpush1.msra.mxu0 0.0
    %9481 = vmatprep.subr.mxu0 0.0
    %9482 = vmatpush1.msra.mxu0 0.0
    %9483 = vmatprep.subr.mxu0 0.0
    %9484 = vmatpush1.msra.mxu0 0.0
    %9485 = vmatprep.subr.mxu0 0.0
    %9486 = vmatpush1.msra.mxu0 0.0
    %9487 = vmatprep.subr.mxu0 0.0
    %9488 = vmatpush1.msra.mxu0 0.0
    %9489 = vmatprep.subr.mxu0 0.0
    %9490 = vmatpush1.msra.mxu0 0.0
    %9491 = vmatprep.subr.mxu0 0.0
    %9492 = vmatpush1.msra.mxu0 0.0
    %9493 = vmatprep.subr.mxu0 0.0
    %9494 = vmatpush1.msra.mxu0 0.0
    %9495 = vmatprep.subr.mxu0 0.0
    %9496 = vmatpush1.msra.mxu0 0.0
    %9497 = vmatprep.subr.mxu0 0.0
    %9498 = vmatpush1.msra.mxu0 0.0
    %9499 = vmatprep.subr.mxu0 0.0
    %9500 = vmatpush1.msra.mxu0 %v9399
    %9501 = vmatprep.subr.mxu0 0.0
    %9502 = vmatpush1.msra.mxu0 %v9398
    %9503 = vmatprep.subr.mxu0 0.0
    %9504 = vmatpush1.msra.mxu0 %v9397
    %9505 = vmatprep.subr.mxu0 0.0
    %9506 = vmatpush1.msra.mxu0 %v9396
    %9507 = vmatprep.subr.mxu0 0.0
    %9508 = vmatpush2.msra.mxu0 0.0
    %9509 = vmatprep.subr.mxu0 0.0
    %9510 = vmatpush2.msra.mxu0 0.0
    %9511 = vmatprep.subr.mxu0 0.0
    %9512 = vmatpush2.msra.mxu0 0.0
    %9513 = vmatprep.subr.mxu0 0.0
    %9514 = vmatpush2.msra.mxu0 0.0
    %9515 = vmatprep.subr.mxu0 0.0
    %9516 = vmatpush2.msra.mxu0 0.0
    %9517 = vmatprep.subr.mxu0 0.0
    %9518 = vmatpush2.msra.mxu0 0.0
    %9519 = vmatprep.subr.mxu0 0.0
    %9520 = vmatpush2.msra.mxu0 0.0
    %9521 = vmatprep.subr.mxu0 0.0
    %9522 = vmatpush2.msra.mxu0 0.0
    %9523 = vmatprep.subr.mxu0 0.0
    %9524 = vmatpush2.msra.mxu0 0.0
    %9525 = vmatprep.subr.mxu0 0.0
    %9526 = vmatpush2.msra.mxu0 0.0
    %9527 = vmatprep.subr.mxu0 0.0
    %9528 = vmatpush2.msra.mxu0 0.0
    %9529 = vmatprep.subr.mxu0 0.0
    %9530 = vmatpush2.msra.mxu0 0.0
    %9531 = vmatprep.subr.mxu0 0.0
    %9532 = vmatpush2.msra.mxu0 0.0
    %9533 = vmatprep.subr.mxu0 0.0
    %9534 = vmatpush2.msra.mxu0 0.0
    %9535 = vmatprep.subr.mxu0 0.0
    %9536 = vmatpush2.msra.mxu0 0.0
    %9537 = vmatprep.subr.mxu0 0.0
    %9538 = vmatpush2.msra.mxu0 0.0
    %9539 = vmatprep.mubr.f32.mxu0 0.0
    %9540 = vmatmul.mubr.f32.gmra.mxu0 %v9401
    %v9541 = vpop.f32.mrf.mxu0
    %v9542 = vadd.f32 0.0, %v9541
    %v9543 = vpop.f32.mrf.mxu0
    %9544 = vmatprep.mubr.f32.mxu0 0.0
    %9545 = vmatmul.mubr.f32.gmra.mxu0 %v9404
    %v9546 = vpop.f32.mrf.mxu0
    %v9547 = vadd.f32 0.0, %v9546
    %v9548 = vpop.f32.mrf.mxu0
    %9549 = vmatprep.mubr.f32.mxu0 0.0
    %9550 = vmatmul.mubr.f32.gmra.mxu0 %v9407
    %v9551 = vpop.f32.mrf.mxu0
    %v9552 = vadd.f32 0.0, %v9551
    %v9553 = vpop.f32.mrf.mxu0
    %9554 = vmatprep.mubr.f32.mxu0 0.0
    %9555 = vmatmul.mubr.f32.gmra.mxu0 %v9410
    %v9556 = vpop.f32.mrf.mxu0
    %v9557 = vadd.f32 0.0, %v9556
    %v9558 = vpop.f32.mrf.mxu0
    %9559 = vmatprep.mubr.f32.mxu0 0.0
    %9560 = vmatmul.mubr.f32.gmra.mxu0 %v9413
    %v9561 = vpop.f32.mrf.mxu0
    %v9562 = vadd.f32 0.0, %v9561
    %v9563 = vpop.f32.mrf.mxu0
    %9564 = vmatprep.mubr.f32.mxu0 0.0
    %9565 = vmatmul.mubr.f32.gmra.mxu0 %v9416
    %v9566 = vpop.f32.mrf.mxu0
    %v9567 = vadd.f32 0.0, %v9566
    %v9568 = vpop.f32.mrf.mxu0
    %9569 = vmatprep.mubr.f32.mxu0 0.0
    %9570 = vmatmul.mubr.f32.gmra.mxu0 %v9419
    %v9571 = vpop.f32.mrf.mxu0
    %v9572 = vadd.f32 0.0, %v9571
    %v9573 = vpop.f32.mrf.mxu0
    %9574 = vmatprep.mubr.f32.mxu0 0.0
    %9575 = vmatmul.mubr.f32.gmra.mxu0 %v9422
    %v9576 = vpop.f32.mrf.mxu0
    %v9577 = vadd.f32 0.0, %v9576
    %v9578 = vpop.f32.mrf.mxu0
    %9579 = vmatprep.mubr.f32.mxu0 0.0
    %9580 = vmatmul.mubr.f32.gmra.mxu0 %v9425
    %v9581 = vpop.f32.mrf.mxu0
    %v9582 = vadd.f32 0.0, %v9581
    %v9583 = vpop.f32.mrf.mxu0
    %9584 = vmatprep.mubr.f32.mxu0 0.0
    %9585 = vmatmul.mubr.f32.gmra.mxu0 %v9428
    %v9586 = vpop.f32.mrf.mxu0
    %v9587 = vadd.f32 0.0, %v9586
    %v9588 = vpop.f32.mrf.mxu0
    %9589 = vmatprep.mubr.f32.mxu0 0.0
    %9590 = vmatmul.mubr.f32.gmra.mxu0 %v9431
    %v9591 = vpop.f32.mrf.mxu0
    %v9592 = vadd.f32 0.0, %v9591
    %v9593 = vpop.f32.mrf.mxu0
    %9594 = vmatprep.mubr.f32.mxu0 0.0
    %9595 = vmatmul.mubr.f32.gmra.mxu0 %v9434
    %v9596 = vpop.f32.mrf.mxu0
    %v9597 = vadd.f32 0.0, %v9596
    %v9598 = vpop.f32.mrf.mxu0
    %9599 = vmatprep.mubr.f32.mxu0 0.0
    %9600 = vmatmul.mubr.f32.gmra.mxu0 %v9437
    %v9601 = vpop.f32.mrf.mxu0
    %v9602 = vadd.f32 0.0, %v9601
    %v9603 = vpop.f32.mrf.mxu0
    %9604 = vmatprep.mubr.f32.mxu0 0.0
    %9605 = vmatmul.mubr.f32.gmra.mxu0 %v9440
    %v9606 = vpop.f32.mrf.mxu0
    %v9607 = vadd.f32 0.0, %v9606
    %v9608 = vpop.f32.mrf.mxu0
    %9609 = vmatprep.mubr.f32.mxu0 0.0
    %9610 = vmatmul.mubr.f32.gmra.mxu0 %v9443
    %v9611 = vpop.f32.mrf.mxu0
    %v9612 = vadd.f32 0.0, %v9611
    %v9613 = vpop.f32.mrf.mxu0
    %9614 = vmatprep.mubr.f32.mxu0 0.0
    %9615 = vmatmul.mubr.f32.gmra.mxu0 %v9446
    %v9616 = vpop.f32.mrf.mxu0
    %v9617 = vadd.f32 0.0, %v9616
    %v9618 = vpop.f32.mrf.mxu0
    %9619 = vmatprep.mubr.f32.mxu0 0.0
    %9620 = vmatmul.mubr.f32.gmra.mxu0 %v9449
    %v9621 = vpop.f32.mrf.mxu0
    %v9622 = vadd.f32 0.0, %v9621
    %v9623 = vpop.f32.mrf.mxu0
    %9624 = vmatprep.mubr.f32.mxu0 0.0
    %9625 = vmatmul.mubr.f32.gmra.mxu0 %v9452
    %v9626 = vpop.f32.mrf.mxu0
    %v9627 = vadd.f32 0.0, %v9626
    %v9628 = vpop.f32.mrf.mxu0
    %9629 = vmatprep.mubr.f32.mxu0 0.0
    %9630 = vmatmul.mubr.f32.gmra.mxu0 %v9455
    %v9631 = vpop.f32.mrf.mxu0
    %v9632 = vadd.f32 0.0, %v9631
    %v9633 = vpop.f32.mrf.mxu0
    %9634 = vmatprep.mubr.f32.mxu0 0.0
    %9635 = vmatmul.mubr.f32.gmra.mxu0 %v9458
    %v9636 = vpop.f32.mrf.mxu0
    %v9637 = vadd.f32 0.0, %v9636
    %v9638 = vpop.f32.mrf.mxu0
    %9639 = vmatprep.mubr.f32.mxu0 0.0
    %9640 = vmatmul.mubr.f32.gmra.mxu0 %v9461
    %v9641 = vpop.f32.mrf.mxu0
    %v9642 = vadd.f32 0.0, %v9641
    %v9643 = vpop.f32.mrf.mxu0
    %9644 = vmatprep.mubr.f32.mxu0 0.0
    %9645 = vmatmul.mubr.f32.gmra.mxu0 %v9464
    %v9646 = vpop.f32.mrf.mxu0
    %v9647 = vadd.f32 0.0, %v9646
    %v9648 = vpop.f32.mrf.mxu0
    %9649 = vmatprep.mubr.f32.mxu0 0.0
    %9650 = vmatmul.mubr.f32.gmra.mxu0 %v9467
    %v9651 = vpop.f32.mrf.mxu0
    %v9652 = vadd.f32 0.0, %v9651
    %v9653 = vpop.f32.mrf.mxu0
    %9654 = vmatprep.mubr.f32.mxu0 0.0
    %9655 = vmatmul.mubr.f32.gmra.mxu0 %v9470
    %v9656 = vpop.f32.mrf.mxu0
    %v9657 = vadd.f32 0.0, %v9656
    %v9658 = vpop.f32.mrf.mxu0
    %9659 = vmatprep.mubr.f32.mxu0 0.0
    %9660 = vmatmul.mubr.f32.gmra.mxu0 %v9473
    %v9661 = vpop.f32.mrf.mxu0
    %v9662 = vadd.f32 0.0, %v9661
    %v9663 = vpop.f32.mrf.mxu0
    %9664 = vdwg.mxu0
    %v9665 = vld [vmem:[%s10] sm:$0x1]
    %v9667 = vlaneseq
    %v9668 = vshrl.u32 %v9667, 7
    %v9669 = vsub.s32 0, %v9668
    %v9670 = vrot.slane %v9665, %v9669
    %v9672 = vmul.f32 %v9542, %v9670
    %v9673 = vmul.f32 %v9547, %v9670
    %v9674 = vmul.f32 %v9552, %v9670
    %v9675 = vmul.f32 %v9557, %v9670
    %v9676 = vmul.f32 %v9562, %v9670
    %v9677 = vmul.f32 %v9567, %v9670
    %v9678 = vmul.f32 %v9572, %v9670
    %v9679 = vmul.f32 %v9577, %v9670
    %v9680 = vmul.f32 %v9582, %v9670
    %v9681 = vmul.f32 %v9587, %v9670
    %v9682 = vmul.f32 %v9592, %v9670
    %v9683 = vmul.f32 %v9597, %v9670
    %v9684 = vmul.f32 %v9602, %v9670
    %v9685 = vmul.f32 %v9607, %v9670
    %v9686 = vmul.f32 %v9612, %v9670
    %v9687 = vmul.f32 %v9617, %v9670
    %v9688 = vmul.f32 %v9622, %v9670
    %v9689 = vmul.f32 %v9627, %v9670
    %v9690 = vmul.f32 %v9632, %v9670
    %v9691 = vmul.f32 %v9637, %v9670
    %v9692 = vmul.f32 %v9642, %v9670
    %v9693 = vmul.f32 %v9647, %v9670
    %v9694 = vmul.f32 %v9652, %v9670
    %v9695 = vmul.f32 %v9657, %v9670
    %v9696 = vmul.f32 %v9662, %v9670
    %v9697 = vld [vmem:[%s11] sm:$0x1]
    %v9699 = vlaneseq
    %v9700 = vshrl.u32 %v9699, 7
    %v9701 = vsub.s32 0, %v9700
    %v9702 = vrot.slane %v9697, %v9701
    %v9704 = vadd.f32 %v9672, %v9702
    %v9705 = vadd.f32 %v9673, %v9702
    %v9706 = vadd.f32 %v9674, %v9702
    %v9707 = vadd.f32 %v9675, %v9702
    %v9708 = vadd.f32 %v9676, %v9702
    %v9709 = vadd.f32 %v9677, %v9702
    %v9710 = vadd.f32 %v9678, %v9702
    %v9711 = vadd.f32 %v9679, %v9702
    %v9712 = vadd.f32 %v9680, %v9702
    %v9713 = vadd.f32 %v9681, %v9702
    %v9714 = vadd.f32 %v9682, %v9702
    %v9715 = vadd.f32 %v9683, %v9702
    %v9716 = vadd.f32 %v9684, %v9702
    %v9717 = vadd.f32 %v9685, %v9702
    %v9718 = vadd.f32 %v9686, %v9702
    %v9719 = vadd.f32 %v9687, %v9702
    %v9720 = vadd.f32 %v9688, %v9702
    %v9721 = vadd.f32 %v9689, %v9702
    %v9722 = vadd.f32 %v9690, %v9702
    %v9723 = vadd.f32 %v9691, %v9702
    %v9724 = vadd.f32 %v9692, %v9702
    %v9725 = vadd.f32 %v9693, %v9702
    %v9726 = vadd.f32 %v9694, %v9702
    %v9727 = vadd.f32 %v9695, %v9702
    %v9728 = vadd.f32 %v9696, %v9702
    %v9729 = vmax.f32 %v9704, 0.0
    %v9730 = vmax.f32 %v9705, 0.0
    %v9731 = vmax.f32 %v9706, 0.0
    %v9732 = vmax.f32 %v9707, 0.0
    %v9733 = vmax.f32 %v9708, 0.0
    %v9734 = vmax.f32 %v9709, 0.0
    %v9735 = vmax.f32 %v9710, 0.0
    %v9736 = vmax.f32 %v9711, 0.0
    %v9737 = vmax.f32 %v9712, 0.0
    %v9738 = vmax.f32 %v9713, 0.0
    %v9739 = vmax.f32 %v9714, 0.0
    %v9740 = vmax.f32 %v9715, 0.0
    %v9741 = vmax.f32 %v9716, 0.0
    %v9742 = vmax.f32 %v9717, 0.0
    %v9743 = vmax.f32 %v9718, 0.0
    %v9744 = vmax.f32 %v9719, 0.0
    %v9745 = vmax.f32 %v9720, 0.0
    %v9746 = vmax.f32 %v9721, 0.0
    %v9747 = vmax.f32 %v9722, 0.0
    %v9748 = vmax.f32 %v9723, 0.0
    %v9749 = vmax.f32 %v9724, 0.0
    %v9750 = vmax.f32 %v9725, 0.0
    %v9751 = vmax.f32 %v9726, 0.0
    %v9752 = vmax.f32 %v9727, 0.0
    %v9753 = vmax.f32 %v9728, 0.0
    %v9754 = vld [vmem:[%s12] sm:$0xff]
    %v9755 = vld [vmem:[%s12 + $0x8] sm:$0xff]
    %v9756 = vld [vmem:[%s12 + $0x10] sm:$0xff]
    %v9757 = vld [vmem:[%s12 + $0x18] sm:$0xff]
    %v9758 = vld [vmem:[%s12 + $0x20] sm:$0xff]
    %v9759 = vld [vmem:[%s12 + $0x28] sm:$0xff]
    %v9760 = vld [vmem:[%s12 + $0x30] sm:$0xff]
    %v9761 = vld [vmem:[%s12 + $0x38] sm:$0xff]
    %v9762 = vld [vmem:[%s12 + $0x40] sm:$0xff]
    %v9763 = vld [vmem:[%s12 + $0x48] sm:$0xff]
    %v9764 = vld [vmem:[%s12 + $0x50] sm:$0xff]
    %v9765 = vld [vmem:[%s12 + $0x58] sm:$0xff]
    %v9766 = vld [vmem:[%s12 + $0x60] sm:$0xff]
    %v9767 = vld [vmem:[%s12 + $0x68] sm:$0xff]
    %v9768 = vld [vmem:[%s12 + $0x70] sm:$0xff]
    %v9769 = vld [vmem:[%s12 + $0x78] sm:$0xff]
    %v9770 = vld [vmem:[%s12 + $0x80] sm:$0xff]
    %v9771 = vld [vmem:[%s12 + $0x88] sm:$0xff]
    %v9772 = vld [vmem:[%s12 + $0x90] sm:$0xff]
    %v9773 = vld [vmem:[%s12 + $0x98] sm:$0xff]
    %v9774 = vld [vmem:[%s12 + $0xa0] sm:$0xff]
    %v9775 = vld [vmem:[%s12 + $0xa8] sm:$0xff]
    %v9776 = vld [vmem:[%s12 + $0xb0] sm:$0xff]
    %v9777 = vld [vmem:[%s12 + $0xb8] sm:$0xff]
    %v9778 = vld [vmem:[%s12 + $0xc0] sm:$0xff]
    %9780 = vset.pattern.permute.xlu0 0
    %9781 = vperm.xlu0 %9780, %v9729
    %v9782 = vpop.permute.xlu0 %9781
    %9785 = vset.pattern.permute.xlu0 0
    %9786 = vperm.xlu0 %9785, %v9730
    %v9787 = vpop.permute.xlu0 %9786
    %9790 = vset.pattern.permute.xlu0 0
    %9791 = vperm.xlu0 %9790, %v9731
    %v9792 = vpop.permute.xlu0 %9791
    %9795 = vset.pattern.permute.xlu0 0
    %9796 = vperm.xlu0 %9795, %v9732
    %v9797 = vpop.permute.xlu0 %9796
    %9800 = vset.pattern.permute.xlu0 0
    %9801 = vperm.xlu0 %9800, %v9733
    %v9802 = vpop.permute.xlu0 %9801
    %9805 = vset.pattern.permute.xlu0 0
    %9806 = vperm.xlu0 %9805, %v9734
    %v9807 = vpop.permute.xlu0 %9806
    %9810 = vset.pattern.permute.xlu0 0
    %9811 = vperm.xlu0 %9810, %v9735
    %v9812 = vpop.permute.xlu0 %9811
    %9815 = vset.pattern.permute.xlu0 0
    %9816 = vperm.xlu0 %9815, %v9736
    %v9817 = vpop.permute.xlu0 %9816
    %9820 = vset.pattern.permute.xlu0 0
    %9821 = vperm.xlu0 %9820, %v9737
    %v9822 = vpop.permute.xlu0 %9821
    %9825 = vset.pattern.permute.xlu0 0
    %9826 = vperm.xlu0 %9825, %v9738
    %v9827 = vpop.permute.xlu0 %9826
    %9830 = vset.pattern.permute.xlu0 0
    %9831 = vperm.xlu0 %9830, %v9739
    %v9832 = vpop.permute.xlu0 %9831
    %9835 = vset.pattern.permute.xlu0 0
    %9836 = vperm.xlu0 %9835, %v9740
    %v9837 = vpop.permute.xlu0 %9836
    %9840 = vset.pattern.permute.xlu0 0
    %9841 = vperm.xlu0 %9840, %v9741
    %v9842 = vpop.permute.xlu0 %9841
    %9845 = vset.pattern.permute.xlu0 0
    %9846 = vperm.xlu0 %9845, %v9742
    %v9847 = vpop.permute.xlu0 %9846
    %9850 = vset.pattern.permute.xlu0 0
    %9851 = vperm.xlu0 %9850, %v9743
    %v9852 = vpop.permute.xlu0 %9851
    %9855 = vset.pattern.permute.xlu0 0
    %9856 = vperm.xlu0 %9855, %v9744
    %v9857 = vpop.permute.xlu0 %9856
    %9860 = vset.pattern.permute.xlu0 0
    %9861 = vperm.xlu0 %9860, %v9745
    %v9862 = vpop.permute.xlu0 %9861
    %9865 = vset.pattern.permute.xlu0 0
    %9866 = vperm.xlu0 %9865, %v9746
    %v9867 = vpop.permute.xlu0 %9866
    %9870 = vset.pattern.permute.xlu0 0
    %9871 = vperm.xlu0 %9870, %v9747
    %v9872 = vpop.permute.xlu0 %9871
    %9875 = vset.pattern.permute.xlu0 0
    %9876 = vperm.xlu0 %9875, %v9748
    %v9877 = vpop.permute.xlu0 %9876
    %9880 = vset.pattern.permute.xlu0 0
    %9881 = vperm.xlu0 %9880, %v9749
    %v9882 = vpop.permute.xlu0 %9881
    %9885 = vset.pattern.permute.xlu0 0
    %9886 = vperm.xlu0 %9885, %v9750
    %v9887 = vpop.permute.xlu0 %9886
    %9890 = vset.pattern.permute.xlu0 0
    %9891 = vperm.xlu0 %9890, %v9751
    %v9892 = vpop.permute.xlu0 %9891
    %9895 = vset.pattern.permute.xlu0 0
    %9896 = vperm.xlu0 %9895, %v9752
    %v9897 = vpop.permute.xlu0 %9896
    %9900 = vset.pattern.permute.xlu0 0
    %9901 = vperm.xlu0 %9900, %v9753
    %v9902 = vpop.permute.xlu0 %9901
    %v9904 = vmul.f32 %v9782, %v9754
    %v9905 = vmul.f32 %v9787, %v9755
    %v9906 = vmul.f32 %v9792, %v9756
    %v9907 = vmul.f32 %v9797, %v9757
    %v9908 = vmul.f32 %v9802, %v9758
    %v9909 = vmul.f32 %v9807, %v9759
    %v9910 = vmul.f32 %v9812, %v9760
    %v9911 = vmul.f32 %v9817, %v9761
    %v9912 = vmul.f32 %v9822, %v9762
    %v9913 = vmul.f32 %v9827, %v9763
    %v9914 = vmul.f32 %v9832, %v9764
    %v9915 = vmul.f32 %v9837, %v9765
    %v9916 = vmul.f32 %v9842, %v9766
    %v9917 = vmul.f32 %v9847, %v9767
    %v9918 = vmul.f32 %v9852, %v9768
    %v9919 = vmul.f32 %v9857, %v9769
    %v9920 = vmul.f32 %v9862, %v9770
    %v9921 = vmul.f32 %v9867, %v9771
    %v9922 = vmul.f32 %v9872, %v9772
    %v9923 = vmul.f32 %v9877, %v9773
    %v9924 = vmul.f32 %v9882, %v9774
    %v9925 = vmul.f32 %v9887, %v9775
    %v9926 = vmul.f32 %v9892, %v9776
    %v9927 = vmul.f32 %v9897, %v9777
    %v9928 = vmul.f32 %v9902, %v9778
    %v9929 = vld [vmem:[%s13] sm:$0xff]
    %v9930 = vld [vmem:[%s13 + $0x8] sm:$0xff]
    %v9931 = vld [vmem:[%s13 + $0x10] sm:$0xff]
    %v9932 = vld [vmem:[%s13 + $0x18] sm:$0xff]
    %v9933 = vld [vmem:[%s13 + $0x20] sm:$0xff]
    %v9934 = vld [vmem:[%s13 + $0x28] sm:$0xff]
    %v9935 = vld [vmem:[%s13 + $0x30] sm:$0xff]
    %v9936 = vld [vmem:[%s13 + $0x38] sm:$0xff]
    %v9937 = vld [vmem:[%s13 + $0x40] sm:$0xff]
    %v9938 = vld [vmem:[%s13 + $0x48] sm:$0xff]
    %v9939 = vld [vmem:[%s13 + $0x50] sm:$0xff]
    %v9940 = vld [vmem:[%s13 + $0x58] sm:$0xff]
    %v9941 = vld [vmem:[%s13 + $0x60] sm:$0xff]
    %v9942 = vld [vmem:[%s13 + $0x68] sm:$0xff]
    %v9943 = vld [vmem:[%s13 + $0x70] sm:$0xff]
    %v9944 = vld [vmem:[%s13 + $0x78] sm:$0xff]
    %v9945 = vld [vmem:[%s13 + $0x80] sm:$0xff]
    %v9946 = vld [vmem:[%s13 + $0x88] sm:$0xff]
    %v9947 = vld [vmem:[%s13 + $0x90] sm:$0xff]
    %v9948 = vld [vmem:[%s13 + $0x98] sm:$0xff]
    %v9949 = vld [vmem:[%s13 + $0xa0] sm:$0xff]
    %v9950 = vld [vmem:[%s13 + $0xa8] sm:$0xff]
    %v9951 = vld [vmem:[%s13 + $0xb0] sm:$0xff]
    %v9952 = vld [vmem:[%s13 + $0xb8] sm:$0xff]
    %v9953 = vld [vmem:[%s13 + $0xc0] sm:$0xff]
    %9954 = vset.pattern.permute.xlu0 1
    %9955 = vperm.xlu0 %9954, %v9729
    %v9956 = vpop.permute.xlu0 %9955
    %9958 = vset.pattern.permute.xlu0 1
    %9959 = vperm.xlu0 %9958, %v9730
    %v9960 = vpop.permute.xlu0 %9959
    %9962 = vset.pattern.permute.xlu0 1
    %9963 = vperm.xlu0 %9962, %v9731
    %v9964 = vpop.permute.xlu0 %9963
    %9966 = vset.pattern.permute.xlu0 1
    %9967 = vperm.xlu0 %9966, %v9732
    %v9968 = vpop.permute.xlu0 %9967
    %9970 = vset.pattern.permute.xlu0 1
    %9971 = vperm.xlu0 %9970, %v9733
    %v9972 = vpop.permute.xlu0 %9971
    %9974 = vset.pattern.permute.xlu0 1
    %9975 = vperm.xlu0 %9974, %v9734
    %v9976 = vpop.permute.xlu0 %9975
    %9978 = vset.pattern.permute.xlu0 1
    %9979 = vperm.xlu0 %9978, %v9735
    %v9980 = vpop.permute.xlu0 %9979
    %9982 = vset.pattern.permute.xlu0 1
    %9983 = vperm.xlu0 %9982, %v9736
    %v9984 = vpop.permute.xlu0 %9983
    %9986 = vset.pattern.permute.xlu0 1
    %9987 = vperm.xlu0 %9986, %v9737
    %v9988 = vpop.permute.xlu0 %9987
    %9990 = vset.pattern.permute.xlu0 1
    %9991 = vperm.xlu0 %9990, %v9738
    %v9992 = vpop.permute.xlu0 %9991
    %9994 = vset.pattern.permute.xlu0 1
    %9995 = vperm.xlu0 %9994, %v9739
    %v9996 = vpop.permute.xlu0 %9995
    %9998 = vset.pattern.permute.xlu0 1
    %9999 = vperm.xlu0 %9998, %v9740
    %v10000 = vpop.permute.xlu0 %9999
    %10002 = vset.pattern.permute.xlu0 1
    %10003 = vperm.xlu0 %10002, %v9741
    %v10004 = vpop.permute.xlu0 %10003
    %10006 = vset.pattern.permute.xlu0 1
    %10007 = vperm.xlu0 %10006, %v9742
    %v10008 = vpop.permute.xlu0 %10007
    %10010 = vset.pattern.permute.xlu0 1
    %10011 = vperm.xlu0 %10010, %v9743
    %v10012 = vpop.permute.xlu0 %10011
    %10014 = vset.pattern.permute.xlu0 1
    %10015 = vperm.xlu0 %10014, %v9744
    %v10016 = vpop.permute.xlu0 %10015
    %10018 = vset.pattern.permute.xlu0 1
    %10019 = vperm.xlu0 %10018, %v9745
    %v10020 = vpop.permute.xlu0 %10019
    %10022 = vset.pattern.permute.xlu0 1
    %10023 = vperm.xlu0 %10022, %v9746
    %v10024 = vpop.permute.xlu0 %10023
    %10026 = vset.pattern.permute.xlu0 1
    %10027 = vperm.xlu0 %10026, %v9747
    %v10028 = vpop.permute.xlu0 %10027
    %10030 = vset.pattern.permute.xlu0 1
    %10031 = vperm.xlu0 %10030, %v9748
    %v10032 = vpop.permute.xlu0 %10031
    %10034 = vset.pattern.permute.xlu0 1
    %10035 = vperm.xlu0 %10034, %v9749
    %v10036 = vpop.permute.xlu0 %10035
    %10038 = vset.pattern.permute.xlu0 1
    %10039 = vperm.xlu0 %10038, %v9750
    %v10040 = vpop.permute.xlu0 %10039
    %10042 = vset.pattern.permute.xlu0 1
    %10043 = vperm.xlu0 %10042, %v9751
    %v10044 = vpop.permute.xlu0 %10043
    %10046 = vset.pattern.permute.xlu0 1
    %10047 = vperm.xlu0 %10046, %v9752
    %v10048 = vpop.permute.xlu0 %10047
    %10050 = vset.pattern.permute.xlu0 1
    %10051 = vperm.xlu0 %10050, %v9753
    %v10052 = vpop.permute.xlu0 %10051
    %v10054 = vmul.f32 %v9956, %v9929
    %v10055 = vmul.f32 %v9960, %v9930
    %v10056 = vmul.f32 %v9964, %v9931
    %v10057 = vmul.f32 %v9968, %v9932
    %v10058 = vmul.f32 %v9972, %v9933
    %v10059 = vmul.f32 %v9976, %v9934
    %v10060 = vmul.f32 %v9980, %v9935
    %v10061 = vmul.f32 %v9984, %v9936
    %v10062 = vmul.f32 %v9988, %v9937
    %v10063 = vmul.f32 %v9992, %v9938
    %v10064 = vmul.f32 %v9996, %v9939
    %v10065 = vmul.f32 %v10000, %v9940
    %v10066 = vmul.f32 %v10004, %v9941
    %v10067 = vmul.f32 %v10008, %v9942
    %v10068 = vmul.f32 %v10012, %v9943
    %v10069 = vmul.f32 %v10016, %v9944
    %v10070 = vmul.f32 %v10020, %v9945
    %v10071 = vmul.f32 %v10024, %v9946
    %v10072 = vmul.f32 %v10028, %v9947
    %v10073 = vmul.f32 %v10032, %v9948
    %v10074 = vmul.f32 %v10036, %v9949
    %v10075 = vmul.f32 %v10040, %v9950
    %v10076 = vmul.f32 %v10044, %v9951
    %v10077 = vmul.f32 %v10048, %v9952
    %v10078 = vmul.f32 %v10052, %v9953
    %v10079 = vadd.f32 %v9904, %v10054
    %v10080 = vadd.f32 %v9905, %v10055
    %v10081 = vadd.f32 %v9906, %v10056
    %v10082 = vadd.f32 %v9907, %v10057
    %v10083 = vadd.f32 %v9908, %v10058
    %v10084 = vadd.f32 %v9909, %v10059
    %v10085 = vadd.f32 %v9910, %v10060
    %v10086 = vadd.f32 %v9911, %v10061
    %v10087 = vadd.f32 %v9912, %v10062
    %v10088 = vadd.f32 %v9913, %v10063
    %v10089 = vadd.f32 %v9914, %v10064
    %v10090 = vadd.f32 %v9915, %v10065
    %v10091 = vadd.f32 %v9916, %v10066
    %v10092 = vadd.f32 %v9917, %v10067
    %v10093 = vadd.f32 %v9918, %v10068
    %v10094 = vadd.f32 %v9919, %v10069
    %v10095 = vadd.f32 %v9920, %v10070
    %v10096 = vadd.f32 %v9921, %v10071
    %v10097 = vadd.f32 %v9922, %v10072
    %v10098 = vadd.f32 %v9923, %v10073
    %v10099 = vadd.f32 %v9924, %v10074
    %v10100 = vadd.f32 %v9925, %v10075
    %v10101 = vadd.f32 %v9926, %v10076
    %v10102 = vadd.f32 %v9927, %v10077
    %v10103 = vadd.f32 %v9928, %v10078
    %v10104 = vld [vmem:[%s2] sm:$0xf]
    %v10105 = vld [vmem:[%s14] sm:$0x1]
    %v10107 = vlaneseq
    %v10108 = vshrl.u32 %v10107, 7
    %v10109 = vsub.s32 0, %v10108
    %v10110 = vrot.slane %v10105, %v10109
    %v10114 = vunpack.c.l.s4 1983009808
    %v10115 = vunpack.c.0.s8 %v10114
    %v10116 = vlaneseq
    %v10117 = vshrl.u32 %v10116, 7
    %v10118 = vsub.s32 %v10115, %v10117
    %v10119 = vrot.slane %v10104, %v10118
    %v10120 = vcombine.high %v10119, %v10119
    %vm10122 = vcmask 588800
    %v10123 = vsel %vm10122, %v10120, 0
    %10125 = vmatprep.subr.mxu0 0.0
    %10126 = vmatpush1.msra.mxu0 %v10094
    %10127 = vmatprep.subr.mxu0 0.0
    %10128 = vmatpush1.msra.mxu0 %v10093
    %10129 = vmatprep.subr.mxu0 0.0
    %10130 = vmatpush1.msra.mxu0 %v10092
    %10131 = vmatprep.subr.mxu0 0.0
    %10132 = vmatpush1.msra.mxu0 %v10091
    %10133 = vmatprep.subr.mxu0 0.0
    %10134 = vmatpush1.msra.mxu0 %v10090
    %10135 = vmatprep.subr.mxu0 0.0
    %10136 = vmatpush1.msra.mxu0 %v10089
    %10137 = vmatprep.subr.mxu0 0.0
    %10138 = vmatpush1.msra.mxu0 %v10088
    %10139 = vmatprep.subr.mxu0 0.0
    %10140 = vmatpush1.msra.mxu0 %v10087
    %10141 = vmatprep.subr.mxu0 0.0
    %10142 = vmatpush1.msra.mxu0 %v10086
    %10143 = vmatprep.subr.mxu0 0.0
    %10144 = vmatpush1.msra.mxu0 %v10085
    %10145 = vmatprep.subr.mxu0 0.0
    %10146 = vmatpush1.msra.mxu0 %v10084
    %10147 = vmatprep.subr.mxu0 0.0
    %10148 = vmatpush1.msra.mxu0 %v10083
    %10149 = vmatprep.subr.mxu0 0.0
    %10150 = vmatpush1.msra.mxu0 %v10082
    %10151 = vmatprep.subr.mxu0 0.0
    %10152 = vmatpush1.msra.mxu0 %v10081
    %10153 = vmatprep.subr.mxu0 0.0
    %10154 = vmatpush1.msra.mxu0 %v10080
    %10155 = vmatprep.subr.mxu0 0.0
    %10156 = vmatpush1.msra.mxu0 %v10079
    %10157 = vmatprep.subr.mxu0 0.0
    %10158 = vmatpush2.msra.mxu0 0.0
    %10159 = vmatprep.subr.mxu0 0.0
    %10160 = vmatpush2.msra.mxu0 0.0
    %10161 = vmatprep.subr.mxu0 0.0
    %10162 = vmatpush2.msra.mxu0 0.0
    %10163 = vmatprep.subr.mxu0 0.0
    %10164 = vmatpush2.msra.mxu0 0.0
    %10165 = vmatprep.subr.mxu0 0.0
    %10166 = vmatpush2.msra.mxu0 0.0
    %10167 = vmatprep.subr.mxu0 0.0
    %10168 = vmatpush2.msra.mxu0 0.0
    %10169 = vmatprep.subr.mxu0 0.0
    %10170 = vmatpush2.msra.mxu0 0.0
    %10171 = vmatprep.subr.mxu0 0.0
    %10172 = vmatpush2.msra.mxu0 %v10103
    %10173 = vmatprep.subr.mxu0 0.0
    %10174 = vmatpush2.msra.mxu0 %v10102
    %10175 = vmatprep.subr.mxu0 0.0
    %10176 = vmatpush2.msra.mxu0 %v10101
    %10177 = vmatprep.subr.mxu0 0.0
    %10178 = vmatpush2.msra.mxu0 %v10100
    %10179 = vmatprep.subr.mxu0 0.0
    %10180 = vmatpush2.msra.mxu0 %v10099
    %10181 = vmatprep.subr.mxu0 0.0
    %10182 = vmatpush2.msra.mxu0 %v10098
    %10183 = vmatprep.subr.mxu0 0.0
    %10184 = vmatpush2.msra.mxu0 %v10097
    %10185 = vmatprep.subr.mxu0 0.0
    %10186 = vmatpush2.msra.mxu0 %v10096
    %10187 = vmatprep.subr.mxu0 0.0
    %10188 = vmatpush2.msra.mxu0 %v10095
    %10189 = vmatprep.mubr.f32.mxu0 %v10123
    %10190 = vmatmul.mubr.f32.gmra.mxu0 %v10119
    %v10191 = vpop.f32.mrf.mxu0
    %v10192 = vadd.f32 %v10110, %v10191
    %v10193 = vpop.f32.mrf.mxu0
    %10194 = vdwg.mxu0
    %vm10195 = vcmask 525312
    %10196 = vst.msk [vmem:[#allocation7] sm:$0x3] %vm10195, %v10192
    %v10197 = vld [vmem:[%s15] sm:$0xff]
    %v10198 = vld [vmem:[%s15 + $0x8] sm:$0xff]
    %v10199 = vld [vmem:[%s15 + $0x10] sm:$0xff]
    %v10200 = vld [vmem:[%s15 + $0x18] sm:$0xff]
    %10201 = vmatprep.subr.mxu0 0.0
    %10202 = vmatpush1.msra.mxu0 0.0
    %10203 = vmatprep.subr.mxu0 0.0
    %10204 = vmatpush1.msra.mxu0 0.0
    %10205 = vmatprep.subr.mxu0 0.0
    %10206 = vmatpush1.msra.mxu0 0.0
    %10207 = vmatprep.subr.mxu0 0.0
    %10208 = vmatpush1.msra.mxu0 0.0
    %10209 = vmatprep.subr.mxu0 0.0
    %10210 = vmatpush1.msra.mxu0 0.0
    %10211 = vmatprep.subr.mxu0 0.0
    %10212 = vmatpush1.msra.mxu0 0.0
    %10213 = vmatprep.subr.mxu0 0.0
    %10214 = vmatpush1.msra.mxu0 0.0
    %10215 = vmatprep.subr.mxu0 0.0
    %10216 = vmatpush1.msra.mxu0 0.0
    %10217 = vmatprep.subr.mxu0 0.0
    %10218 = vmatpush1.msra.mxu0 0.0
    %10219 = vmatprep.subr.mxu0 0.0
    %10220 = vmatpush1.msra.mxu0 0.0
    %10221 = vmatprep.subr.mxu0 0.0
    %10222 = vmatpush1.msra.mxu0 0.0
    %10223 = vmatprep.subr.mxu0 0.0
    %10224 = vmatpush1.msra.mxu0 0.0
    %10225 = vmatprep.subr.mxu0 0.0
    %10226 = vmatpush1.msra.mxu0 %v10200
    %10227 = vmatprep.subr.mxu0 0.0
    %10228 = vmatpush1.msra.mxu0 %v10199
    %10229 = vmatprep.subr.mxu0 0.0
    %10230 = vmatpush1.msra.mxu0 %v10198
    %10231 = vmatprep.subr.mxu0 0.0
    %10232 = vmatpush1.msra.mxu0 %v10197
    %10233 = vmatprep.subr.mxu0 0.0
    %10234 = vmatpush2.msra.mxu0 0.0
    %10235 = vmatprep.subr.mxu0 0.0
    %10236 = vmatpush2.msra.mxu0 0.0
    %10237 = vmatprep.subr.mxu0 0.0
    %10238 = vmatpush2.msra.mxu0 0.0
    %10239 = vmatprep.subr.mxu0 0.0
    %10240 = vmatpush2.msra.mxu0 0.0
    %10241 = vmatprep.subr.mxu0 0.0
    %10242 = vmatpush2.msra.mxu0 0.0
    %10243 = vmatprep.subr.mxu0 0.0
    %10244 = vmatpush2.msra.mxu0 0.0
    %10245 = vmatprep.subr.mxu0 0.0
    %10246 = vmatpush2.msra.mxu0 0.0
    %10247 = vmatprep.subr.mxu0 0.0
    %10248 = vmatpush2.msra.mxu0 0.0
    %10249 = vmatprep.subr.mxu0 0.0
    %10250 = vmatpush2.msra.mxu0 0.0
    %10251 = vmatprep.subr.mxu0 0.0
    %10252 = vmatpush2.msra.mxu0 0.0
    %10253 = vmatprep.subr.mxu0 0.0
    %10254 = vmatpush2.msra.mxu0 0.0
    %10255 = vmatprep.subr.mxu0 0.0
    %10256 = vmatpush2.msra.mxu0 0.0
    %10257 = vmatprep.subr.mxu0 0.0
    %10258 = vmatpush2.msra.mxu0 0.0
    %10259 = vmatprep.subr.mxu0 0.0
    %10260 = vmatpush2.msra.mxu0 0.0
    %10261 = vmatprep.subr.mxu0 0.0
    %10262 = vmatpush2.msra.mxu0 0.0
    %10263 = vmatprep.subr.mxu0 0.0
    %10264 = vmatpush2.msra.mxu0 0.0
    %10265 = vmatprep.mubr.f32.mxu0 0.0
    %10266 = vmatmul.mubr.f32.gmra.mxu0 %v9401
    %v10267 = vpop.f32.mrf.mxu0
    %v10268 = vadd.f32 0.0, %v10267
    %v10269 = vpop.f32.mrf.mxu0
    %10270 = vmatprep.mubr.f32.mxu0 0.0
    %10271 = vmatmul.mubr.f32.gmra.mxu0 %v9404
    %v10272 = vpop.f32.mrf.mxu0
    %v10273 = vadd.f32 0.0, %v10272
    %v10274 = vpop.f32.mrf.mxu0
    %10275 = vmatprep.mubr.f32.mxu0 0.0
    %10276 = vmatmul.mubr.f32.gmra.mxu0 %v9407
    %v10277 = vpop.f32.mrf.mxu0
    %v10278 = vadd.f32 0.0, %v10277
    %v10279 = vpop.f32.mrf.mxu0
    %10280 = vmatprep.mubr.f32.mxu0 0.0
    %10281 = vmatmul.mubr.f32.gmra.mxu0 %v9410
    %v10282 = vpop.f32.mrf.mxu0
    %v10283 = vadd.f32 0.0, %v10282
    %v10284 = vpop.f32.mrf.mxu0
    %10285 = vmatprep.mubr.f32.mxu0 0.0
    %10286 = vmatmul.mubr.f32.gmra.mxu0 %v9413
    %v10287 = vpop.f32.mrf.mxu0
    %v10288 = vadd.f32 0.0, %v10287
    %v10289 = vpop.f32.mrf.mxu0
    %10290 = vmatprep.mubr.f32.mxu0 0.0
    %10291 = vmatmul.mubr.f32.gmra.mxu0 %v9416
    %v10292 = vpop.f32.mrf.mxu0
    %v10293 = vadd.f32 0.0, %v10292
    %v10294 = vpop.f32.mrf.mxu0
    %10295 = vmatprep.mubr.f32.mxu0 0.0
    %10296 = vmatmul.mubr.f32.gmra.mxu0 %v9419
    %v10297 = vpop.f32.mrf.mxu0
    %v10298 = vadd.f32 0.0, %v10297
    %v10299 = vpop.f32.mrf.mxu0
    %10300 = vmatprep.mubr.f32.mxu0 0.0
    %10301 = vmatmul.mubr.f32.gmra.mxu0 %v9422
    %v10302 = vpop.f32.mrf.mxu0
    %v10303 = vadd.f32 0.0, %v10302
    %v10304 = vpop.f32.mrf.mxu0
    %10305 = vmatprep.mubr.f32.mxu0 0.0
    %10306 = vmatmul.mubr.f32.gmra.mxu0 %v9425
    %v10307 = vpop.f32.mrf.mxu0
    %v10308 = vadd.f32 0.0, %v10307
    %v10309 = vpop.f32.mrf.mxu0
    %10310 = vmatprep.mubr.f32.mxu0 0.0
    %10311 = vmatmul.mubr.f32.gmra.mxu0 %v9428
    %v10312 = vpop.f32.mrf.mxu0
    %v10313 = vadd.f32 0.0, %v10312
    %v10314 = vpop.f32.mrf.mxu0
    %10315 = vmatprep.mubr.f32.mxu0 0.0
    %10316 = vmatmul.mubr.f32.gmra.mxu0 %v9431
    %v10317 = vpop.f32.mrf.mxu0
    %v10318 = vadd.f32 0.0, %v10317
    %v10319 = vpop.f32.mrf.mxu0
    %10320 = vmatprep.mubr.f32.mxu0 0.0
    %10321 = vmatmul.mubr.f32.gmra.mxu0 %v9434
    %v10322 = vpop.f32.mrf.mxu0
    %v10323 = vadd.f32 0.0, %v10322
    %v10324 = vpop.f32.mrf.mxu0
    %10325 = vmatprep.mubr.f32.mxu0 0.0
    %10326 = vmatmul.mubr.f32.gmra.mxu0 %v9437
    %v10327 = vpop.f32.mrf.mxu0
    %v10328 = vadd.f32 0.0, %v10327
    %v10329 = vpop.f32.mrf.mxu0
    %10330 = vmatprep.mubr.f32.mxu0 0.0
    %10331 = vmatmul.mubr.f32.gmra.mxu0 %v9440
    %v10332 = vpop.f32.mrf.mxu0
    %v10333 = vadd.f32 0.0, %v10332
    %v10334 = vpop.f32.mrf.mxu0
    %10335 = vmatprep.mubr.f32.mxu0 0.0
    %10336 = vmatmul.mubr.f32.gmra.mxu0 %v9443
    %v10337 = vpop.f32.mrf.mxu0
    %v10338 = vadd.f32 0.0, %v10337
    %v10339 = vpop.f32.mrf.mxu0
    %10340 = vmatprep.mubr.f32.mxu0 0.0
    %10341 = vmatmul.mubr.f32.gmra.mxu0 %v9446
    %v10342 = vpop.f32.mrf.mxu0
    %v10343 = vadd.f32 0.0, %v10342
    %v10344 = vpop.f32.mrf.mxu0
    %10345 = vmatprep.mubr.f32.mxu0 0.0
    %10346 = vmatmul.mubr.f32.gmra.mxu0 %v9449
    %v10347 = vpop.f32.mrf.mxu0
    %v10348 = vadd.f32 0.0, %v10347
    %v10349 = vpop.f32.mrf.mxu0
    %10350 = vmatprep.mubr.f32.mxu0 0.0
    %10351 = vmatmul.mubr.f32.gmra.mxu0 %v9452
    %v10352 = vpop.f32.mrf.mxu0
    %v10353 = vadd.f32 0.0, %v10352
    %v10354 = vpop.f32.mrf.mxu0
    %10355 = vmatprep.mubr.f32.mxu0 0.0
    %10356 = vmatmul.mubr.f32.gmra.mxu0 %v9455
    %v10357 = vpop.f32.mrf.mxu0
    %v10358 = vadd.f32 0.0, %v10357
    %v10359 = vpop.f32.mrf.mxu0
    %10360 = vmatprep.mubr.f32.mxu0 0.0
    %10361 = vmatmul.mubr.f32.gmra.mxu0 %v9458
    %v10362 = vpop.f32.mrf.mxu0
    %v10363 = vadd.f32 0.0, %v10362
    %v10364 = vpop.f32.mrf.mxu0
    %10365 = vmatprep.mubr.f32.mxu0 0.0
    %10366 = vmatmul.mubr.f32.gmra.mxu0 %v9461
    %v10367 = vpop.f32.mrf.mxu0
    %v10368 = vadd.f32 0.0, %v10367
    %v10369 = vpop.f32.mrf.mxu0
    %10370 = vmatprep.mubr.f32.mxu0 0.0
    %10371 = vmatmul.mubr.f32.gmra.mxu0 %v9464
    %v10372 = vpop.f32.mrf.mxu0
    %v10373 = vadd.f32 0.0, %v10372
    %v10374 = vpop.f32.mrf.mxu0
    %10375 = vmatprep.mubr.f32.mxu0 0.0
    %10376 = vmatmul.mubr.f32.gmra.mxu0 %v9467
    %v10377 = vpop.f32.mrf.mxu0
    %v10378 = vadd.f32 0.0, %v10377
    %v10379 = vpop.f32.mrf.mxu0
    %10380 = vmatprep.mubr.f32.mxu0 0.0
    %10381 = vmatmul.mubr.f32.gmra.mxu0 %v9470
    %v10382 = vpop.f32.mrf.mxu0
    %v10383 = vadd.f32 0.0, %v10382
    %v10384 = vpop.f32.mrf.mxu0
    %10385 = vmatprep.mubr.f32.mxu0 0.0
    %10386 = vmatmul.mubr.f32.gmra.mxu0 %v9473
    %v10387 = vpop.f32.mrf.mxu0
    %v10388 = vadd.f32 0.0, %v10387
    %v10389 = vpop.f32.mrf.mxu0
    %10390 = vdwg.mxu0
    %v10391 = vld [vmem:[#allocation4] sm:$0x1]
    %v10393 = vlaneseq
    %v10394 = vshrl.u32 %v10393, 7
    %v10395 = vsub.s32 0, %v10394
    %v10396 = vrot.slane %v10391, %v10395
    %v10398 = vmul.f32 %v10268, %v10396
    %v10399 = vmul.f32 %v10273, %v10396
    %v10400 = vmul.f32 %v10278, %v10396
    %v10401 = vmul.f32 %v10283, %v10396
    %v10402 = vmul.f32 %v10288, %v10396
    %v10403 = vmul.f32 %v10293, %v10396
    %v10404 = vmul.f32 %v10298, %v10396
    %v10405 = vmul.f32 %v10303, %v10396
    %v10406 = vmul.f32 %v10308, %v10396
    %v10407 = vmul.f32 %v10313, %v10396
    %v10408 = vmul.f32 %v10318, %v10396
    %v10409 = vmul.f32 %v10323, %v10396
    %v10410 = vmul.f32 %v10328, %v10396
    %v10411 = vmul.f32 %v10333, %v10396
    %v10412 = vmul.f32 %v10338, %v10396
    %v10413 = vmul.f32 %v10343, %v10396
    %v10414 = vmul.f32 %v10348, %v10396
    %v10415 = vmul.f32 %v10353, %v10396
    %v10416 = vmul.f32 %v10358, %v10396
    %v10417 = vmul.f32 %v10363, %v10396
    %v10418 = vmul.f32 %v10368, %v10396
    %v10419 = vmul.f32 %v10373, %v10396
    %v10420 = vmul.f32 %v10378, %v10396
    %v10421 = vmul.f32 %v10383, %v10396
    %v10422 = vmul.f32 %v10388, %v10396
    %v10423 = vld [vmem:[#allocation5] sm:$0x1]
    %v10425 = vlaneseq
    %v10426 = vshrl.u32 %v10425, 7
    %v10427 = vsub.s32 0, %v10426
    %v10428 = vrot.slane %v10423, %v10427
    %v10430 = vadd.f32 %v10398, %v10428
    %v10431 = vadd.f32 %v10399, %v10428
    %v10432 = vadd.f32 %v10400, %v10428
    %v10433 = vadd.f32 %v10401, %v10428
    %v10434 = vadd.f32 %v10402, %v10428
    %v10435 = vadd.f32 %v10403, %v10428
    %v10436 = vadd.f32 %v10404, %v10428
    %v10437 = vadd.f32 %v10405, %v10428
    %v10438 = vadd.f32 %v10406, %v10428
    %v10439 = vadd.f32 %v10407, %v10428
    %v10440 = vadd.f32 %v10408, %v10428
    %v10441 = vadd.f32 %v10409, %v10428
    %v10442 = vadd.f32 %v10410, %v10428
    %v10443 = vadd.f32 %v10411, %v10428
    %v10444 = vadd.f32 %v10412, %v10428
    %v10445 = vadd.f32 %v10413, %v10428
    %v10446 = vadd.f32 %v10414, %v10428
    %v10447 = vadd.f32 %v10415, %v10428
    %v10448 = vadd.f32 %v10416, %v10428
    %v10449 = vadd.f32 %v10417, %v10428
    %v10450 = vadd.f32 %v10418, %v10428
    %v10451 = vadd.f32 %v10419, %v10428
    %v10452 = vadd.f32 %v10420, %v10428
    %v10453 = vadd.f32 %v10421, %v10428
    %v10454 = vadd.f32 %v10422, %v10428
    %v10455 = vmax.f32 %v10430, 0.0
    %v10456 = vmax.f32 %v10431, 0.0
    %v10457 = vmax.f32 %v10432, 0.0
    %v10458 = vmax.f32 %v10433, 0.0
    %v10459 = vmax.f32 %v10434, 0.0
    %v10460 = vmax.f32 %v10435, 0.0
    %v10461 = vmax.f32 %v10436, 0.0
    %v10462 = vmax.f32 %v10437, 0.0
    %v10463 = vmax.f32 %v10438, 0.0
    %v10464 = vmax.f32 %v10439, 0.0
    %v10465 = vmax.f32 %v10440, 0.0
    %v10466 = vmax.f32 %v10441, 0.0
    %v10467 = vmax.f32 %v10442, 0.0
    %v10468 = vmax.f32 %v10443, 0.0
    %v10469 = vmax.f32 %v10444, 0.0
    %v10470 = vmax.f32 %v10445, 0.0
    %v10471 = vmax.f32 %v10446, 0.0
    %v10472 = vmax.f32 %v10447, 0.0
    %v10473 = vmax.f32 %v10448, 0.0
    %v10474 = vmax.f32 %v10449, 0.0
    %v10475 = vmax.f32 %v10450, 0.0
    %v10476 = vmax.f32 %v10451, 0.0
    %v10477 = vmax.f32 %v10452, 0.0
    %v10478 = vmax.f32 %v10453, 0.0
    %v10479 = vmax.f32 %v10454, 0.0
    %v10480 = vld [vmem:[%s2] sm:$0xf]
    %v10481 = vld [vmem:[%s18] sm:$0xff]
    %v10482 = vld [vmem:[%s18 + $0x8] sm:$0xff]
    %v10483 = vld [vmem:[%s18 + $0x10] sm:$0xff]
    %v10484 = vld [vmem:[%s18 + $0x18] sm:$0xff]
    %v10485 = vld [vmem:[%s18 + $0x20] sm:$0xff]
    %v10486 = vld [vmem:[%s18 + $0x28] sm:$0xff]
    %v10487 = vld [vmem:[%s18 + $0x30] sm:$0xff]
    %v10488 = vld [vmem:[%s18 + $0x38] sm:$0xff]
    %v10489 = vld [vmem:[%s18 + $0x40] sm:$0xff]
    %v10490 = vld [vmem:[%s18 + $0x48] sm:$0xff]
    %v10491 = vld [vmem:[%s18 + $0x50] sm:$0xff]
    %v10492 = vld [vmem:[%s18 + $0x58] sm:$0xff]
    %v10493 = vld [vmem:[%s18 + $0x60] sm:$0xff]
    %v10494 = vld [vmem:[%s18 + $0x68] sm:$0xff]
    %v10495 = vld [vmem:[%s18 + $0x70] sm:$0xff]
    %v10496 = vld [vmem:[%s18 + $0x78] sm:$0xff]
    %v10497 = vld [vmem:[%s18 + $0x80] sm:$0xff]
    %v10498 = vld [vmem:[%s18 + $0x88] sm:$0xff]
    %v10499 = vld [vmem:[%s18 + $0x90] sm:$0xff]
    %v10500 = vld [vmem:[%s18 + $0x98] sm:$0xff]
    %v10501 = vld [vmem:[%s18 + $0xa0] sm:$0xff]
    %v10502 = vld [vmem:[%s18 + $0xa8] sm:$0xff]
    %v10503 = vld [vmem:[%s18 + $0xb0] sm:$0xff]
    %v10504 = vld [vmem:[%s18 + $0xb8] sm:$0xff]
    %v10505 = vld [vmem:[%s18 + $0xc0] sm:$0xff]
    %v10506 = vld [vmem:[%s18 + $0xc8] sm:$0xff]
    %v10507 = vld [vmem:[%s18 + $0xd0] sm:$0xff]
    %v10508 = vld [vmem:[%s18 + $0xd8] sm:$0xff]
    %v10509 = vld [vmem:[%s18 + $0xe0] sm:$0xff]
    %v10510 = vld [vmem:[%s18 + $0xe8] sm:$0xff]
    %v10511 = vld [vmem:[%s18 + $0xf0] sm:$0xff]
    %v10512 = vld [vmem:[%s18 + $0xf8] sm:$0xff]
    %v10513 = vld [vmem:[%s18 + $0x100] sm:$0xff]
    %v10514 = vld [vmem:[%s18 + $0x108] sm:$0xff]
    %v10515 = vld [vmem:[%s18 + $0x110] sm:$0xff]
    %v10516 = vld [vmem:[%s18 + $0x118] sm:$0xff]
    %v10517 = vld [vmem:[%s18 + $0x120] sm:$0xff]
    %v10518 = vld [vmem:[%s18 + $0x128] sm:$0xff]
    %v10519 = vld [vmem:[%s18 + $0x130] sm:$0xff]
    %v10520 = vld [vmem:[%s18 + $0x138] sm:$0xff]
    %v10521 = vld [vmem:[%s18 + $0x140] sm:$0xff]
    %v10522 = vld [vmem:[%s18 + $0x148] sm:$0xff]
    %v10523 = vld [vmem:[%s18 + $0x150] sm:$0xff]
    %v10524 = vld [vmem:[%s18 + $0x158] sm:$0xff]
    %v10525 = vld [vmem:[%s18 + $0x160] sm:$0xff]
    %v10526 = vld [vmem:[%s18 + $0x168] sm:$0xff]
    %v10527 = vld [vmem:[%s18 + $0x170] sm:$0xff]
    %v10528 = vld [vmem:[%s18 + $0x178] sm:$0xff]
    %v10529 = vld [vmem:[%s18 + $0x180] sm:$0xff]
    %v10530 = vld [vmem:[%s18 + $0x188] sm:$0xff]
    %10532 = vset.pattern.permute.xlu0 0
    %10533 = vperm.xlu0 %10532, %v10455
    %v10534 = vpop.permute.xlu0 %10533
    %10537 = vset.pattern.permute.xlu0 0
    %10538 = vperm.xlu0 %10537, %v10456
    %v10539 = vpop.permute.xlu0 %10538
    %10542 = vset.pattern.permute.xlu0 0
    %10543 = vperm.xlu0 %10542, %v10457
    %v10544 = vpop.permute.xlu0 %10543
    %10547 = vset.pattern.permute.xlu0 0
    %10548 = vperm.xlu0 %10547, %v10458
    %v10549 = vpop.permute.xlu0 %10548
    %10552 = vset.pattern.permute.xlu0 0
    %10553 = vperm.xlu0 %10552, %v10459
    %v10554 = vpop.permute.xlu0 %10553
    %10557 = vset.pattern.permute.xlu0 0
    %10558 = vperm.xlu0 %10557, %v10460
    %v10559 = vpop.permute.xlu0 %10558
    %10562 = vset.pattern.permute.xlu0 0
    %10563 = vperm.xlu0 %10562, %v10461
    %v10564 = vpop.permute.xlu0 %10563
    %10567 = vset.pattern.permute.xlu0 0
    %10568 = vperm.xlu0 %10567, %v10462
    %v10569 = vpop.permute.xlu0 %10568
    %10572 = vset.pattern.permute.xlu0 0
    %10573 = vperm.xlu0 %10572, %v10463
    %v10574 = vpop.permute.xlu0 %10573
    %10577 = vset.pattern.permute.xlu0 0
    %10578 = vperm.xlu0 %10577, %v10464
    %v10579 = vpop.permute.xlu0 %10578
    %10582 = vset.pattern.permute.xlu0 0
    %10583 = vperm.xlu0 %10582, %v10465
    %v10584 = vpop.permute.xlu0 %10583
    %10587 = vset.pattern.permute.xlu0 0
    %10588 = vperm.xlu0 %10587, %v10466
    %v10589 = vpop.permute.xlu0 %10588
    %10592 = vset.pattern.permute.xlu0 0
    %10593 = vperm.xlu0 %10592, %v10467
    %v10594 = vpop.permute.xlu0 %10593
    %10597 = vset.pattern.permute.xlu0 0
    %10598 = vperm.xlu0 %10597, %v10468
    %v10599 = vpop.permute.xlu0 %10598
    %10602 = vset.pattern.permute.xlu0 0
    %10603 = vperm.xlu0 %10602, %v10469
    %v10604 = vpop.permute.xlu0 %10603
    %10607 = vset.pattern.permute.xlu0 0
    %10608 = vperm.xlu0 %10607, %v10470
    %v10609 = vpop.permute.xlu0 %10608
    %10612 = vset.pattern.permute.xlu0 0
    %10613 = vperm.xlu0 %10612, %v10471
    %v10614 = vpop.permute.xlu0 %10613
    %10617 = vset.pattern.permute.xlu0 0
    %10618 = vperm.xlu0 %10617, %v10472
    %v10619 = vpop.permute.xlu0 %10618
    %10622 = vset.pattern.permute.xlu0 0
    %10623 = vperm.xlu0 %10622, %v10473
    %v10624 = vpop.permute.xlu0 %10623
    %10627 = vset.pattern.permute.xlu0 0
    %10628 = vperm.xlu0 %10627, %v10474
    %v10629 = vpop.permute.xlu0 %10628
    %10632 = vset.pattern.permute.xlu0 0
    %10633 = vperm.xlu0 %10632, %v10475
    %v10634 = vpop.permute.xlu0 %10633
    %10637 = vset.pattern.permute.xlu0 0
    %10638 = vperm.xlu0 %10637, %v10476
    %v10639 = vpop.permute.xlu0 %10638
    %10642 = vset.pattern.permute.xlu0 0
    %10643 = vperm.xlu0 %10642, %v10477
    %v10644 = vpop.permute.xlu0 %10643
    %10647 = vset.pattern.permute.xlu0 0
    %10648 = vperm.xlu0 %10647, %v10478
    %v10649 = vpop.permute.xlu0 %10648
    %10652 = vset.pattern.permute.xlu0 0
    %10653 = vperm.xlu0 %10652, %v10479
    %v10654 = vpop.permute.xlu0 %10653
    %v10656 = vmul.f32 %v10534, %v10481
    %v10657 = vmul.f32 %v10534, %v10482
    %v10658 = vmul.f32 %v10539, %v10483
    %v10659 = vmul.f32 %v10539, %v10484
    %v10660 = vmul.f32 %v10544, %v10485
    %v10661 = vmul.f32 %v10544, %v10486
    %v10662 = vmul.f32 %v10549, %v10487
    %v10663 = vmul.f32 %v10549, %v10488
    %v10664 = vmul.f32 %v10554, %v10489
    %v10665 = vmul.f32 %v10554, %v10490
    %v10666 = vmul.f32 %v10559, %v10491
    %v10667 = vmul.f32 %v10559, %v10492
    %v10668 = vmul.f32 %v10564, %v10493
    %v10669 = vmul.f32 %v10564, %v10494
    %v10670 = vmul.f32 %v10569, %v10495
    %v10671 = vmul.f32 %v10569, %v10496
    %v10672 = vmul.f32 %v10574, %v10497
    %v10673 = vmul.f32 %v10574, %v10498
    %v10674 = vmul.f32 %v10579, %v10499
    %v10675 = vmul.f32 %v10579, %v10500
    %v10676 = vmul.f32 %v10584, %v10501
    %v10677 = vmul.f32 %v10584, %v10502
    %v10678 = vmul.f32 %v10589, %v10503
    %v10679 = vmul.f32 %v10589, %v10504
    %v10680 = vmul.f32 %v10594, %v10505
    %v10681 = vmul.f32 %v10594, %v10506
    %v10682 = vmul.f32 %v10599, %v10507
    %v10683 = vmul.f32 %v10599, %v10508
    %v10684 = vmul.f32 %v10604, %v10509
    %v10685 = vmul.f32 %v10604, %v10510
    %v10686 = vmul.f32 %v10609, %v10511
    %v10687 = vmul.f32 %v10609, %v10512
    %v10688 = vmul.f32 %v10614, %v10513
    %v10689 = vmul.f32 %v10614, %v10514
    %v10690 = vmul.f32 %v10619, %v10515
    %v10691 = vmul.f32 %v10619, %v10516
    %v10692 = vmul.f32 %v10624, %v10517
    %v10693 = vmul.f32 %v10624, %v10518
    %v10694 = vmul.f32 %v10629, %v10519
    %v10695 = vmul.f32 %v10629, %v10520
    %v10696 = vmul.f32 %v10634, %v10521
    %v10697 = vmul.f32 %v10634, %v10522
    %v10698 = vmul.f32 %v10639, %v10523
    %v10699 = vmul.f32 %v10639, %v10524
    %v10700 = vmul.f32 %v10644, %v10525
    %v10701 = vmul.f32 %v10644, %v10526
    %v10702 = vmul.f32 %v10649, %v10527
    %v10703 = vmul.f32 %v10649, %v10528
    %v10704 = vmul.f32 %v10654, %v10529
    %v10705 = vmul.f32 %v10654, %v10530
    %v10706 = vld [vmem:[%s19] sm:$0x3]
    %v10708 = vlaneseq
    %v10709 = vshrl.u32 %v10708, 7
    %v10710 = vsub.s32 0, %v10709
    %v10711 = vrot.slane %v10706, %v10710
    %v10712 = vlaneseq
    %v10713 = vshrl.u32 %v10712, 7
    %v10714 = vsub.s32 1, %v10713
    %v10715 = vrot.slane %v10706, %v10714
    %v10720 = vunpack.c.l.s4 1983009808
    %v10721 = vunpack.c.0.s8 %v10720
    %v10722 = vlaneseq
    %v10723 = vshrl.u32 %v10722, 7
    %v10724 = vsub.s32 %v10721, %v10723
    %v10725 = vrot.slane %v10480, %v10724
    %v10726 = vcombine.high %v10725, %v10725
    %v10728 = vsel %vm10122, %v10726, 0
    %10730 = vmatprep.subr.mxu0 %v10687
    %10731 = vmatpush1.msra.mxu0 %v10686
    %10732 = vmatprep.subr.mxu0 %v10685
    %10733 = vmatpush1.msra.mxu0 %v10684
    %10734 = vmatprep.subr.mxu0 %v10683
    %10735 = vmatpush1.msra.mxu0 %v10682
    %10736 = vmatprep.subr.mxu0 %v10681
    %10737 = vmatpush1.msra.mxu0 %v10680
    %10738 = vmatprep.subr.mxu0 %v10679
    %10739 = vmatpush1.msra.mxu0 %v10678
    %10740 = vmatprep.subr.mxu0 %v10677
    %10741 = vmatpush1.msra.mxu0 %v10676
    %10742 = vmatprep.subr.mxu0 %v10675
    %10743 = vmatpush1.msra.mxu0 %v10674
    %10744 = vmatprep.subr.mxu0 %v10673
    %10745 = vmatpush1.msra.mxu0 %v10672
    %10746 = vmatprep.subr.mxu0 %v10671
    %10747 = vmatpush1.msra.mxu0 %v10670
    %10748 = vmatprep.subr.mxu0 %v10669
    %10749 = vmatpush1.msra.mxu0 %v10668
    %10750 = vmatprep.subr.mxu0 %v10667
    %10751 = vmatpush1.msra.mxu0 %v10666
    %10752 = vmatprep.subr.mxu0 %v10665
    %10753 = vmatpush1.msra.mxu0 %v10664
    %10754 = vmatprep.subr.mxu0 %v10663
    %10755 = vmatpush1.msra.mxu0 %v10662
    %10756 = vmatprep.subr.mxu0 %v10661
    %10757 = vmatpush1.msra.mxu0 %v10660
    %10758 = vmatprep.subr.mxu0 %v10659
    %10759 = vmatpush1.msra.mxu0 %v10658
    %10760 = vmatprep.subr.mxu0 %v10657
    %10761 = vmatpush1.msra.mxu0 %v10656
    %10762 = vmatprep.subr.mxu0 0.0
    %10763 = vmatpush2.msra.mxu0 0.0
    %10764 = vmatprep.subr.mxu0 0.0
    %10765 = vmatpush2.msra.mxu0 0.0
    %10766 = vmatprep.subr.mxu0 0.0
    %10767 = vmatpush2.msra.mxu0 0.0
    %10768 = vmatprep.subr.mxu0 0.0
    %10769 = vmatpush2.msra.mxu0 0.0
    %10770 = vmatprep.subr.mxu0 0.0
    %10771 = vmatpush2.msra.mxu0 0.0
    %10772 = vmatprep.subr.mxu0 0.0
    %10773 = vmatpush2.msra.mxu0 0.0
    %10774 = vmatprep.subr.mxu0 0.0
    %10775 = vmatpush2.msra.mxu0 0.0
    %10776 = vmatprep.subr.mxu0 %v10705
    %10777 = vmatpush2.msra.mxu0 %v10704
    %10778 = vmatprep.subr.mxu0 %v10703
    %10779 = vmatpush2.msra.mxu0 %v10702
    %10780 = vmatprep.subr.mxu0 %v10701
    %10781 = vmatpush2.msra.mxu0 %v10700
    %10782 = vmatprep.subr.mxu0 %v10699
    %10783 = vmatpush2.msra.mxu0 %v10698
    %10784 = vmatprep.subr.mxu0 %v10697
    %10785 = vmatpush2.msra.mxu0 %v10696
    %10786 = vmatprep.subr.mxu0 %v10695
    %10787 = vmatpush2.msra.mxu0 %v10694
    %10788 = vmatprep.subr.mxu0 %v10693
    %10789 = vmatpush2.msra.mxu0 %v10692
    %10790 = vmatprep.subr.mxu0 %v10691
    %10791 = vmatpush2.msra.mxu0 %v10690
    %10792 = vmatprep.subr.mxu0 %v10689
    %10793 = vmatpush2.msra.mxu0 %v10688
    %10794 = vmatprep.mubr.f32.mxu0 %v10728
    %10795 = vmatmul.mubr.f32.gmra.mxu0 %v10725
    %v10796 = vpop.f32.mrf.mxu0
    %v10797 = vadd.f32 %v10711, %v10796
    %v10798 = vpop.f32.mrf.mxu0
    %v10799 = vadd.f32 %v10715, %v10798
    %10800 = vdwg.mxu0
    %v10801 = vmax.f32 %v10797, 0.0
    %v10802 = vmax.f32 %v10799, 0.0
    %v10803 = vld [vmem:[%s20] sm:$0xff]
    %v10804 = vld [vmem:[%s20 + $0x8] sm:$0xff]
    %v10805 = vld [vmem:[%s20 + $0x10] sm:$0xff]
    %v10806 = vld [vmem:[%s20 + $0x18] sm:$0xff]
    %v10807 = vld [vmem:[%s20 + $0x20] sm:$0xff]
    %v10808 = vld [vmem:[%s20 + $0x28] sm:$0xff]
    %v10809 = vld [vmem:[%s20 + $0x30] sm:$0xff]
    %v10810 = vld [vmem:[%s20 + $0x38] sm:$0xff]
    %v10811 = vld [vmem:[%s20 + $0x40] sm:$0xff]
    %v10812 = vld [vmem:[%s20 + $0x48] sm:$0xff]
    %v10813 = vld [vmem:[%s20 + $0x50] sm:$0xff]
    %v10814 = vld [vmem:[%s20 + $0x58] sm:$0xff]
    %v10815 = vld [vmem:[%s20 + $0x60] sm:$0xff]
    %v10816 = vld [vmem:[%s20 + $0x68] sm:$0xff]
    %v10817 = vld [vmem:[%s20 + $0x70] sm:$0xff]
    %v10818 = vld [vmem:[%s20 + $0x78] sm:$0xff]
    %v10819 = vld [vmem:[%s20 + $0x80] sm:$0xff]
    %v10820 = vld [vmem:[%s20 + $0x88] sm:$0xff]
    %v10821 = vld [vmem:[%s20 + $0x90] sm:$0xff]
    %v10822 = vld [vmem:[%s20 + $0x98] sm:$0xff]
    %v10823 = vld [vmem:[%s20 + $0xa0] sm:$0xff]
    %v10824 = vld [vmem:[%s20 + $0xa8] sm:$0xff]
    %v10825 = vld [vmem:[%s20 + $0xb0] sm:$0xff]
    %v10826 = vld [vmem:[%s20 + $0xb8] sm:$0xff]
    %v10827 = vld [vmem:[%s20 + $0xc0] sm:$0xff]
    %v10828 = vld [vmem:[%s20 + $0xc8] sm:$0xff]
    %v10829 = vld [vmem:[%s20 + $0xd0] sm:$0xff]
    %v10830 = vld [vmem:[%s20 + $0xd8] sm:$0xff]
    %v10831 = vld [vmem:[%s20 + $0xe0] sm:$0xff]
    %v10832 = vld [vmem:[%s20 + $0xe8] sm:$0xff]
    %v10833 = vld [vmem:[%s20 + $0xf0] sm:$0xff]
    %v10834 = vld [vmem:[%s20 + $0xf8] sm:$0xff]
    %v10835 = vld [vmem:[#allocation6] sm:$0x1]
    %v10837 = vlaneseq
    %v10838 = vshrl.u32 %v10837, 7
    %v10839 = vsub.s32 0, %v10838
    %v10840 = vrot.slane %v10835, %v10839
    %10842 = vmatprep.subr.mxu0 0.0
    %10843 = vmatpush1.msra.mxu0 %v10818
    %10844 = vmatprep.subr.mxu0 0.0
    %10845 = vmatpush1.msra.mxu0 %v10817
    %10846 = vmatprep.subr.mxu0 0.0
    %10847 = vmatpush1.msra.mxu0 %v10816
    %10848 = vmatprep.subr.mxu0 0.0
    %10849 = vmatpush1.msra.mxu0 %v10815
    %10850 = vmatprep.subr.mxu0 0.0
    %10851 = vmatpush1.msra.mxu0 %v10814
    %10852 = vmatprep.subr.mxu0 0.0
    %10853 = vmatpush1.msra.mxu0 %v10813
    %10854 = vmatprep.subr.mxu0 0.0
    %10855 = vmatpush1.msra.mxu0 %v10812
    %10856 = vmatprep.subr.mxu0 0.0
    %10857 = vmatpush1.msra.mxu0 %v10811
    %10858 = vmatprep.subr.mxu0 0.0
    %10859 = vmatpush1.msra.mxu0 %v10810
    %10860 = vmatprep.subr.mxu0 0.0
    %10861 = vmatpush1.msra.mxu0 %v10809
    %10862 = vmatprep.subr.mxu0 0.0
    %10863 = vmatpush1.msra.mxu0 %v10808
    %10864 = vmatprep.subr.mxu0 0.0
    %10865 = vmatpush1.msra.mxu0 %v10807
    %10866 = vmatprep.subr.mxu0 0.0
    %10867 = vmatpush1.msra.mxu0 %v10806
    %10868 = vmatprep.subr.mxu0 0.0
    %10869 = vmatpush1.msra.mxu0 %v10805
    %10870 = vmatprep.subr.mxu0 0.0
    %10871 = vmatpush1.msra.mxu0 %v10804
    %10872 = vmatprep.subr.mxu0 0.0
    %10873 = vmatpush1.msra.mxu0 %v10803
    %10874 = vmatprep.subr.mxu0 0.0
    %10875 = vmatpush2.msra.mxu0 %v10834
    %10876 = vmatprep.subr.mxu0 0.0
    %10877 = vmatpush2.msra.mxu0 %v10833
    %10878 = vmatprep.subr.mxu0 0.0
    %10879 = vmatpush2.msra.mxu0 %v10832
    %10880 = vmatprep.subr.mxu0 0.0
    %10881 = vmatpush2.msra.mxu0 %v10831
    %10882 = vmatprep.subr.mxu0 0.0
    %10883 = vmatpush2.msra.mxu0 %v10830
    %10884 = vmatprep.subr.mxu0 0.0
    %10885 = vmatpush2.msra.mxu0 %v10829
    %10886 = vmatprep.subr.mxu0 0.0
    %10887 = vmatpush2.msra.mxu0 %v10828
    %10888 = vmatprep.subr.mxu0 0.0
    %10889 = vmatpush2.msra.mxu0 %v10827
    %10890 = vmatprep.subr.mxu0 0.0
    %10891 = vmatpush2.msra.mxu0 %v10826
    %10892 = vmatprep.subr.mxu0 0.0
    %10893 = vmatpush2.msra.mxu0 %v10825
    %10894 = vmatprep.subr.mxu0 0.0
    %10895 = vmatpush2.msra.mxu0 %v10824
    %10896 = vmatprep.subr.mxu0 0.0
    %10897 = vmatpush2.msra.mxu0 %v10823
    %10898 = vmatprep.subr.mxu0 0.0
    %10899 = vmatpush2.msra.mxu0 %v10822
    %10900 = vmatprep.subr.mxu0 0.0
    %10901 = vmatpush2.msra.mxu0 %v10821
    %10902 = vmatprep.subr.mxu0 0.0
    %10903 = vmatpush2.msra.mxu0 %v10820
    %10904 = vmatprep.subr.mxu0 0.0
    %10905 = vmatpush2.msra.mxu0 %v10819
    %10906 = vmatprep.mubr.f32.mxu0 %v10802
    %10907 = vmatmul.mubr.f32.gmra.mxu0 %v10801
    %v10908 = vpop.f32.mrf.mxu0
    %v10909 = vadd.f32 %v10840, %v10908
    %v10910 = vpop.f32.mrf.mxu0
    %10911 = vdwg.mxu0
    %v10912 = vtanh.pop %v10909
    %vm10913 = vcmask 1024
    %10914 = vst.msk [vmem:[%s23] sm:$0x3] %vm10913, %v10912
    // Predicated region
    $region90: #{_lambda_.1} parent=1 // pred_check
      _
    $region91: #{_lambda_.1} parent=1 // pred_check_branch
      %10916 = sbr.rel (0) target = $region93
    $region92: #{_lambda_.1} parent=1 // pred_region
      %s10918 = ssub.s32 32, 32
      %10919 = vsyncadd [#allocation8], %s10918
      %s10921 = sshll.u32 [#allocation7], 4
      %s10922 = int_to_ptr.vmem [resolvable:$true] %s10921
      %10924 = dma.vmem_to_hbm [thread:$0]  %s10922, 32, %s22, [#allocation8]
    $region93: #{_lambda_.1} parent=1 // pred_fallthru
      _
    // Predicated region
    $region94: #{_lambda_.1} parent=1 // pred_check
      _
    $region95: #{_lambda_.1} parent=1 // pred_check_branch
      %10926 = sbr.rel (0) target = $region97
    $region96: #{_lambda_.1} parent=1 // pred_region
      _
    $region97: #{_lambda_.1} parent=1 // pred_fallthru
      _
    // Predicated region
    $region98: #{_lambda_.1} parent=1 // pred_check
      _
    $region99: #{_lambda_.1} parent=1 // pred_check_branch
      %10928 = sbr.rel (0) target = $region101
    $region100: #{_lambda_.1} parent=1 // pred_region
      _
    $region101: #{_lambda_.1} parent=1 // pred_fallthru
      _
    // Predicated region
    $region102: #{_lambda_.1} parent=1 // pred_check
      _
    $region103: #{_lambda_.1} parent=1 // pred_check_branch
      %10930 = sbr.rel (0) target = $region105
    $region104: #{_lambda_.1} parent=1 // pred_region
      _
    $region105: #{_lambda_.1} parent=1 // pred_fallthru
      _
    // Predicated region
    $region106: #{_lambda_.1} parent=1 // pred_check
      _
    $region107: #{_lambda_.1} parent=1 // pred_check_branch
      %10932 = sbr.rel (0) target = $region109
    $region108: #{_lambda_.1} parent=1 // pred_region
      _
    $region109: #{_lambda_.1} parent=1 // pred_fallthru
      _
    // Predicated region
    $region110: #{_lambda_.1} parent=1 // pred_check
      _
    $region111: #{_lambda_.1} parent=1 // pred_check_branch
      %10934 = sbr.rel (0) target = $region113
    $region112: #{_lambda_.1} parent=1 // pred_region
      %10935 = dma.done [#allocation8], 32
    $region113: #{_lambda_.1} parent=1 // pred_fallthru
      _
    // Predicated region
    $region114: #{_lambda_.1} parent=1 // pred_check
      _
    $region115: #{_lambda_.1} parent=1 // pred_check_branch
      %10937 = sbr.rel (0) target = $region117
    $region116: #{_lambda_.1} parent=1 // pred_region
      _
    $region117: #{_lambda_.1} parent=1 // pred_fallthru
      _
    // Predicated region
    $region118: #{_lambda_.1} parent=1 // pred_check
      _
    $region119: #{_lambda_.1} parent=1 // pred_check_branch
      %10939 = sbr.rel (0) target = $region121
    $region120: #{_lambda_.1} parent=1 // pred_region
      _
    $region121: #{_lambda_.1} parent=1 // pred_fallthru
      _
    // Predicated region
    $region122: #{_lambda_.1} parent=1 // pred_check
      _
    $region123: #{_lambda_.1} parent=1 // pred_check_branch
      %10941 = sbr.rel (0) target = $region125
    $region124: #{_lambda_.1} parent=1 // pred_region
      _
    $region125: #{_lambda_.1} parent=1 // pred_fallthru
      _
    // Predicated region
    $region126: #{_lambda_.1} parent=1 // pred_check
      _
    $region127: #{_lambda_.1} parent=1 // pred_check_branch
      %10943 = sbr.rel (0) target = $region129
    $region128: #{_lambda_.1} parent=1 // pred_region
      _
    $region129: #{_lambda_.1} parent=1 // pred_fallthru
      _
    %10944 = vsyncpa [#allocation8], 1

</llo_original>
